<compile_context>
chip_gen: v6e
topology: v6e:2x2x1
jax: 0.10.0
libtpu: 0.0.40
codegen_flags: <defaults>
</compile_context>

<pallas_src>
import functools

import jax
import jax.numpy as jnp
from jax.experimental import pallas as pl
from jax.experimental.pallas import tpu as pltpu


# ----------------------------------------------------------------------------
# Fused kernel: 2-layer LSTM recurrence over one (batch block, time chunk)
# tile + classifier/log_softmax epilogue.  Recurrent state lives in scratch
# and persists across the (inner, "arbitrary") time grid axis.
# ----------------------------------------------------------------------------
def _lstm_asr_kernel(x_ref,        # (Tc, Bb, D)   embedded inputs, time-major
                     w_ref,        # (D+3H, 4H)  = [wih0; wih1; whh0; whh1]
                     b_ref,        # (2, 4H)     = [b0; b1]
                     wcls_ref,     # (H, OP)     classifier weight, OP = 128
                     bcls_ref,     # (1, OP)     classifier bias (-1e30 on pads)
                     out_ref,      # (Tc, Bb, OP) log-probs
                     gx_ref,       # scratch (Tc*Bb, 4H)  hoisted input gates
                     h1seq_ref,    # scratch (Tc*Bb, H)   per-step layer-1 h
                     h0_ref, c0_ref, h1_ref, c1_ref):   # scratch (Bb, H) state
    Tc, Bb, D = x_ref.shape
    H = h0_ref.shape[-1]
    OP = out_ref.shape[-1]

    # Reset recurrent state at the first time chunk of every batch block.
    @pl.when(pl.program_id(1) == 0)
    def _():
        h0_ref[...] = jnp.zeros_like(h0_ref)
        c0_ref[...] = jnp.zeros_like(c0_ref)
        h1_ref[...] = jnp.zeros_like(h1_ref)
        c1_ref[...] = jnp.zeros_like(c1_ref)

    # ---- hoisted off the per-timestep serial path ---------------------------
    # Layer-0 input projection for the whole chunk (one MXU matmul, b0 folded).
    x_flat = x_ref[...].reshape(Tc * Bb, D)
    gx_ref[...] = (
        jnp.dot(x_flat, w_ref[0:D, :], preferred_element_type=jnp.float32)
        + b_ref[0:1, :])

    # Chunk-constant weights, loaded once (off the per-step path).
    wih1 = w_ref[D:D + H, :]                 # (H, 4H)
    whh0 = w_ref[D + H:D + 2 * H, :]         # (H, 4H)
    whh1 = w_ref[D + 2 * H:D + 3 * H, :]     # (H, 4H)
    b1 = b_ref[1:2, :]                       # (1, 4H)

    def gates(g):                            # PyTorch gate order: i | f | g | o
        i = jax.nn.sigmoid(g[:, 0 * H:1 * H])
        f = jax.nn.sigmoid(g[:, 1 * H:2 * H])
        c = jnp.tanh(g[:, 2 * H:3 * H])
        o = jax.nn.sigmoid(g[:, 3 * H:4 * H])
        return i, f, c, o

    def step(tt, carry):
        h0, c0, h1, c1 = carry
        rows = pl.ds(tt * Bb, Bb)            # aligned: Bb is a multiple of 8
        # layer 0 — recurrent projection issues as soon as h0 is known.
        g0 = gx_ref[rows, :] + jnp.dot(h0, whh0,
                                       preferred_element_type=jnp.float32)
        i0, f0, gg0, o0 = gates(g0)
        c0n = f0 * c0 + i0 * gg0
        h0n = o0 * jnp.tanh(c0n)
        # layer 1 (depends on h0n -> inherently serial).
        g1 = (jnp.dot(h0n, wih1, preferred_element_type=jnp.float32)
              + jnp.dot(h1, whh1, preferred_element_type=jnp.float32) + b1)
        i1, f1, gg1, o1 = gates(g1)
        c1n = f1 * c1 + i1 * gg1
        h1n = o1 * jnp.tanh(c1n)
        h1seq_ref[rows, :] = h1n
        return h0n, c0n, h1n, c1n

    # Full unroll for small chunks (static indices); partial unroll otherwise.
    unroll = True if Tc <= 32 else 16
    h0, c0, h1, c1 = jax.lax.fori_loop(
        0, Tc, step,
        (h0_ref[...], c0_ref[...], h1_ref[...], c1_ref[...]),
        unroll=unroll)
    h0_ref[...] = h0
    c0_ref[...] = c0
    h1_ref[...] = h1
    c1_ref[...] = c1

    # ---- fused classifier + log_softmax epilogue (off the serial path) ------
    # One (Tc*Bb, H) x (H, 128) MXU matmul; padded classes carry a -1e30 bias
    # so they vanish from the softmax; output store is lane-dense (128 wide).
    logits = (jnp.dot(h1seq_ref[...], wcls_ref[...],
                      preferred_element_type=jnp.float32) + bcls_ref[...])
    m = jnp.max(logits, axis=-1, keepdims=True)
    s = logits - m
    lse = jnp.log(jnp.sum(jnp.exp(s), axis=-1, keepdims=True))
    out_ref[...] = (s - lse).reshape(Tc, Bb, OP)


def _round_up(x, m):
    return ((x + m - 1) // m) * m


@functools.partial(jax.jit, static_argnames=("time_chunk", "batch_block"))
def lstm_asr_forward(token_ids, params, *, time_chunk=None, batch_block=None):
    """token_ids: (B, T) int32. Returns (B, T, O) float32 log-probs.

    batch_block: None -> one block of round_up(B, 8) rows (best on the
      single-TensorCore v5e/v6e).  On v7x pass B_pad // 2 so two "parallel"
      batch blocks shard across the two TensorCores.
    time_chunk: None -> whole sequence in one grid step (capped at 64).
    """
    emb = params["embedding"]                   # (V, D)
    B, T = token_ids.shape
    D = emb.shape[1]
    H = params["whh0"].shape[0]
    O = params["wlin"].shape[1]
    OP = 128                                    # lane-dense padded class dim

    Bb = batch_block if batch_block is not None else _round_up(B, 8)
    B_pad = _round_up(max(B, Bb), Bb)
    Tc = time_chunk if time_chunk is not None else (T if T <= 64 else 64)
    T_pad = _round_up(T, Tc)

    # --- glue -----------------------------------------------------------------
    # TODO(synk): nn.Embedding gather stays in XLA (data-dependent HBM gather).
    # Transpose ids BEFORE the gather so the result is time-major directly.
    ids_t = jnp.pad(token_ids, ((0, B_pad - B), (0, T_pad - T))).T  # (T_pad,B_pad)
    x_tm = jnp.take(emb, ids_t, axis=0).astype(jnp.float32)        # (T_pad,B_pad,D)

    # Pre-stacked weights (few inputs -> few DMA descriptors).
    w_lstm = jnp.concatenate([params["wih0"], params["wih1"],
                              params["whh0"], params["whh1"]], axis=0)  # (D+3H,4H)
    b_lstm = jnp.concatenate([params["b0"], params["b1"]], axis=0)      # (2, 4H)
    wcls_p = jnp.pad(params["wlin"], ((0, 0), (0, OP - O)))             # (H, 128)
    # -1e30 is safe in f32; use a dtype-aware large-negative if this ever moves
    # to bf16.
    bcls_p = jnp.pad(params["blin"], ((0, 0), (0, OP - O)),
                     constant_values=-1e30)                              # (1, 128)

    n_bblk = B_pad // Bb
    n_tblk = T_pad // Tc

    logp_tm = pl.pallas_call(
        _lstm_asr_kernel,
        out_shape=jax.ShapeDtypeStruct((T_pad, B_pad, OP), jnp.float32),
        grid_spec=pltpu.PrefetchScalarGridSpec(
            num_scalar_prefetch=0,
            grid=(n_bblk, n_tblk),              # batch outer, time inner
            in_specs=[
                pl.BlockSpec((Tc, Bb, D), lambda bi, ti: (ti, bi, 0)),
                pl.BlockSpec(w_lstm.shape, lambda bi, ti: (0, 0)),
                pl.BlockSpec(b_lstm.shape, lambda bi, ti: (0, 0)),
                pl.BlockSpec(wcls_p.shape, lambda bi, ti: (0, 0)),
                pl.BlockSpec(bcls_p.shape, lambda bi, ti: (0, 0)),
            ],
            out_specs=pl.BlockSpec((Tc, Bb, OP), lambda bi, ti: (ti, bi, 0)),
            scratch_shapes=[
                pltpu.VMEM((Tc * Bb, 4 * H), jnp.float32),   # chunk input gates
                pltpu.VMEM((Tc * Bb, H), jnp.float32),       # layer-1 h per step
                pltpu.VMEM((Bb, H), jnp.float32),            # h0
                pltpu.VMEM((Bb, H), jnp.float32),            # c0
                pltpu.VMEM((Bb, H), jnp.float32),            # h1
                pltpu.VMEM((Bb, H), jnp.float32),            # c1
            ]),
        compiler_params=pltpu.CompilerParams(
            # batch blocks independent (-> v7x 2-TC sharding); time sequential
            dimension_semantics=("parallel", "arbitrary")),
    )(x_tm, w_lstm, b_lstm, wcls_p, bcls_p)

    logp = logp_tm[:T, :B, :O]                  # strip time/batch/class padding
    return jnp.transpose(logp, (1, 0, 2))       # (B, T, O)


# ----------------------------------------------------------------------------
# Pure-JAX reference matching torch.nn.LSTM (gate order i,f,g,o) + Linear +
# log_softmax.
# ----------------------------------------------------------------------------
def _reference_forward(token_ids, params):
    x = jnp.take(params["embedding"], token_ids, axis=0)   # (B, T, D)
    B, T, D = x.shape
    H = params["whh0"].shape[0]

    def cell(xin, h, c, wih, whh, b):
        g = xin @ wih + h @ whh + b
        i = jax.nn.sigmoid(g[:, 0 * H:1 * H])
        f = jax.nn.sigmoid(g[:, 1 * H:2 * H])
        gg = jnp.tanh(g[:, 2 * H:3 * H])
        o = jax.nn.sigmoid(g[:, 3 * H:4 * H])
        c = f * c + i * gg
        h = o * jnp.tanh(c)
        return h, c

    def step(carry, xt):
        h0, c0, h1, c1 = carry
        h0, c0 = cell(xt, h0, c0, params["wih0"], params["whh0"], params["b0"])
        h1, c1 = cell(h0, h1, c1, params["wih1"], params["whh1"], params["b1"])
        return (h0, c0, h1, c1), h1

    z = jnp.zeros((B, H), jnp.float32)
    _, hs = jax.lax.scan(step, (z, z, z, z), jnp.transpose(x, (1, 0, 2)))
    hs = jnp.transpose(hs, (1, 0, 2))                       # (B, T, H)
    logits = hs @ params["wlin"] + params["blin"]
    return jax.nn.log_softmax(logits, axis=-1)


def init_params(key, vocab_size=257, input_size=64, hidden_size=32,
                output_size=28):
    """Deterministic synthetic parameters (shapes per LSTM_ASR.__init__)."""
    ks = jax.random.split(key, 10)
    D, H, O, V = input_size, hidden_size, output_size, vocab_size
    sc = 1.0 / jnp.sqrt(jnp.float32(H))
    u = lambda k, shape: jax.random.uniform(k, shape, jnp.float32, -sc, sc)
    return {
        "embedding": jax.random.normal(ks[0], (V, D), jnp.float32) * 0.1,
        # stored pre-transposed: (in, 4H) so kernels compute x @ W
        "wih0": u(ks[1], (D, 4 * H)),
        "whh0": u(ks[2], (H, 4 * H)),
        "b0":  (u(ks[3], (1, 4 * H)) + u(ks[4], (1, 4 * H))),  # b_ih + b_hh
        "wih1": u(ks[5], (H, 4 * H)),
        "whh1": u(ks[6], (H, 4 * H)),
        "b1":  (u(ks[7], (1, 4 * H)) + u(ks[8], (1, 4 * H))),
        "wlin": u(ks[9], (H, O)),
        "blin": jnp.zeros((1, O), jnp.float32),
    }


if __name__ == "__main__":
    key = jax.random.PRNGKey(0)
    k_param, k_ids1, k_ids2 = jax.random.split(key, 3)

    VOCAB, D, H, O = 257, 64, 32, 28
    params = init_params(k_param, VOCAB, D, H, O)

    # Configs: defaults (single block/chunk), multi-time-chunk state carry,
    # and multi-batch-block + padding (v7x-style 2 "parallel" blocks).
    cases = [
        ((2, 16), k_ids1, {}),
        ((2, 16), k_ids1, {"time_chunk": 8}),
        ((12, 13), k_ids2, {"batch_block": 8}),
    ]
    for (B, T), k, kwargs in cases:
        ids = jax.random.randint(k, (B, T), 0, VOCAB, dtype=jnp.int32)
        out = jax.block_until_ready(lstm_asr_forward(ids, params, **kwargs))
        ref = _reference_forward(ids, params)
        assert out.shape == (B, T, O)
        err = float(jnp.max(jnp.abs(out - ref)))
        assert jnp.allclose(out, ref, atol=1e-4, rtol=1e-4), err
        # log_softmax sanity: each row sums (in prob space) to ~1
        assert jnp.allclose(jnp.sum(jnp.exp(out), axis=-1), 1.0, atol=1e-4)

    print("KERNEL_OK")
</pallas_src>

<mosaic_0001>
module attributes {stable_mosaic.version = 11 : i64} {
  func.func @_lstm_asr_kernel(%arg0: i32, %arg1: i32, %arg2: memref<16x8x64xf32, #tpu.memory_space<vmem>>, %arg3: memref<160x128xf32, #tpu.memory_space<vmem>>, %arg4: memref<2x128xf32, #tpu.memory_space<vmem>>, %arg5: memref<32x128xf32, #tpu.memory_space<vmem>>, %arg6: memref<1x128xf32, #tpu.memory_space<vmem>>, %arg7: memref<16x8x128xf32, #tpu.memory_space<vmem>>, %arg8: memref<128x128xf32, #tpu.memory_space<vmem>>, %arg9: memref<128x32xf32, #tpu.memory_space<vmem>>, %arg10: memref<8x32xf32, #tpu.memory_space<vmem>>, %arg11: memref<8x32xf32, #tpu.memory_space<vmem>>, %arg12: memref<8x32xf32, #tpu.memory_space<vmem>>, %arg13: memref<8x32xf32, #tpu.memory_space<vmem>>) attributes {dimension_semantics = [#tpu.dimension_semantics<parallel>, #tpu.dimension_semantics<arbitrary>], iteration_bounds = array<i64: 1, 1>, scalar_prefetch = 0 : i64, scratch_operands = 6 : i64, tpu.core_type = #tpu.core_type<tc>, window_params = [{transform_indices = @transform_0, window_bounds = array<i64: 16, 8, 64>}, {pipeline_mode = #tpu.pipeline_mode<synchronous>, transform_indices = @transform_1, window_bounds = array<i64: 160, 128>}, {pipeline_mode = #tpu.pipeline_mode<synchronous>, transform_indices = @transform_2, window_bounds = array<i64: 2, 128>}, {pipeline_mode = #tpu.pipeline_mode<synchronous>, transform_indices = @transform_3, window_bounds = array<i64: 32, 128>}, {pipeline_mode = #tpu.pipeline_mode<synchronous>, transform_indices = @transform_4, window_bounds = array<i64: 1, 128>}, {transform_indices = @transform_5, window_bounds = array<i64: 16, 8, 128>}]} {
    %c0_i32 = arith.constant 0 : i32
    %0 = arith.cmpi eq, %arg1, %c0_i32 : i32
    %1 = arith.extui %0 : i1 to i32
    %c0_i32_0 = arith.constant 0 : i32
    %2 = arith.cmpi ne, %1, %c0_i32_0 : i32
    scf.if %2 {
      %cst_234 = arith.constant 0.000000e+00 : f32
      %1033 = vector.broadcast %cst_234 : f32 to vector<8x32xf32>
      %c0_235 = arith.constant 0 : index
      %c0_236 = arith.constant 0 : index
      %1034 = vector.load %arg10[%c0_235, %c0_236] : memref<8x32xf32, #tpu.memory_space<vmem>>, vector<8x32xf32>
      tpu.vector_store %arg10[%c0_235, %c0_236], %1033 {strides = array<i32>} : memref<8x32xf32, #tpu.memory_space<vmem>>, vector<8x32xf32>,
      %cst_237 = arith.constant 0.000000e+00 : f32
      %1035 = vector.broadcast %cst_237 : f32 to vector<8x32xf32>
      %c0_238 = arith.constant 0 : index
      %c0_239 = arith.constant 0 : index
      %1036 = vector.load %arg11[%c0_238, %c0_239] : memref<8x32xf32, #tpu.memory_space<vmem>>, vector<8x32xf32>
      tpu.vector_store %arg11[%c0_238, %c0_239], %1035 {strides = array<i32>} : memref<8x32xf32, #tpu.memory_space<vmem>>, vector<8x32xf32>,
      %cst_240 = arith.constant 0.000000e+00 : f32
      %1037 = vector.broadcast %cst_240 : f32 to vector<8x32xf32>
      %c0_241 = arith.constant 0 : index
      %c0_242 = arith.constant 0 : index
      %1038 = vector.load %arg12[%c0_241, %c0_242] : memref<8x32xf32, #tpu.memory_space<vmem>>, vector<8x32xf32>
      tpu.vector_store %arg12[%c0_241, %c0_242], %1037 {strides = array<i32>} : memref<8x32xf32, #tpu.memory_space<vmem>>, vector<8x32xf32>,
      %cst_243 = arith.constant 0.000000e+00 : f32
      %1039 = vector.broadcast %cst_243 : f32 to vector<8x32xf32>
      %c0_244 = arith.constant 0 : index
      %c0_245 = arith.constant 0 : index
      %1040 = vector.load %arg13[%c0_244, %c0_245] : memref<8x32xf32, #tpu.memory_space<vmem>>, vector<8x32xf32>
      tpu.vector_store %arg13[%c0_244, %c0_245], %1039 {strides = array<i32>} : memref<8x32xf32, #tpu.memory_space<vmem>>, vector<8x32xf32>,
    } else {
    }
    %c0 = arith.constant 0 : index
    %c0_1 = arith.constant 0 : index
    %c0_2 = arith.constant 0 : index
    %3 = vector.load %arg2[%c0, %c0_1, %c0_2] : memref<16x8x64xf32, #tpu.memory_space<vmem>>, vector<16x8x64xf32>
    %4 = vector.shape_cast %3 : vector<16x8x64xf32> to vector<128x64xf32>
    %c0_3 = arith.constant 0 : index
    %c0_4 = arith.constant 0 : index
    %5 = vector.load %arg3[%c0_3, %c0_4] : memref<160x128xf32, #tpu.memory_space<vmem>>, vector<64x128xf32>
    %cst = arith.constant dense<0.000000e+00> : vector<128x128xf32>
    %6 = tpu.matmul %4, %5, %cst {dimension_numbers = #tpu.dot_dimension_numbers<[1], [0], [0], [1], [0, 0, 1, 1], [], []>} : vector<128x64xf32>, vector<64x128xf32>, vector<128x128xf32> -> vector<128x128xf32>
    %c0_5 = arith.constant 0 : index
    %c0_6 = arith.constant 0 : index
    %7 = vector.load %arg4[%c0_5, %c0_6] : memref<2x128xf32, #tpu.memory_space<vmem>>, vector<1x128xf32>
    %8 = vector.broadcast %7 : vector<1x128xf32> to vector<128x128xf32>
    %9 = arith.addf %6, %8 : vector<128x128xf32>
    %c0_7 = arith.constant 0 : index
    %c0_8 = arith.constant 0 : index
    %10 = vector.load %arg8[%c0_7, %c0_8] : memref<128x128xf32, #tpu.memory_space<vmem>>, vector<128x128xf32>
    tpu.vector_store %arg8[%c0_7, %c0_8], %9 {strides = array<i32>} : memref<128x128xf32, #tpu.memory_space<vmem>>, vector<128x128xf32>,
    %c64 = arith.constant 64 : index
    %c0_9 = arith.constant 0 : index
    %11 = vector.load %arg3[%c64, %c0_9] : memref<160x128xf32, #tpu.memory_space<vmem>>, vector<32x128xf32>
    %c96 = arith.constant 96 : index
    %c0_10 = arith.constant 0 : index
    %12 = vector.load %arg3[%c96, %c0_10] : memref<160x128xf32, #tpu.memory_space<vmem>>, vector<32x128xf32>
    %c128 = arith.constant 128 : index
    %c0_11 = arith.constant 0 : index
    %13 = vector.load %arg3[%c128, %c0_11] : memref<160x128xf32, #tpu.memory_space<vmem>>, vector<32x128xf32>
    %c1 = arith.constant 1 : index
    %c0_12 = arith.constant 0 : index
    %14 = vector.load %arg4[%c1, %c0_12] : memref<2x128xf32, #tpu.memory_space<vmem>>, vector<1x128xf32>
    %c0_13 = arith.constant 0 : index
    %c0_14 = arith.constant 0 : index
    %15 = vector.load %arg10[%c0_13, %c0_14] : memref<8x32xf32, #tpu.memory_space<vmem>>, vector<8x32xf32>
    %c0_15 = arith.constant 0 : index
    %c0_16 = arith.constant 0 : index
    %16 = vector.load %arg11[%c0_15, %c0_16] : memref<8x32xf32, #tpu.memory_space<vmem>>, vector<8x32xf32>
    %c0_17 = arith.constant 0 : index
    %c0_18 = arith.constant 0 : index
    %17 = vector.load %arg12[%c0_17, %c0_18] : memref<8x32xf32, #tpu.memory_space<vmem>>, vector<8x32xf32>
    %c0_19 = arith.constant 0 : index
    %c0_20 = arith.constant 0 : index
    %18 = vector.load %arg13[%c0_19, %c0_20] : memref<8x32xf32, #tpu.memory_space<vmem>>, vector<8x32xf32>
    %c0_i32_21 = arith.constant 0 : i32
    %c8_i32 = arith.constant 8 : i32
    %19 = arith.muli %c0_i32_21, %c8_i32 : i32
    %20 = arith.index_cast %19 : i32 to index
    %c0_22 = arith.constant 0 : index
    %21 = vector.load %arg8[%20, %c0_22] : memref<128x128xf32, #tpu.memory_space<vmem>>, vector<8x128xf32>
    %cst_23 = arith.constant dense<0.000000e+00> : vector<8x128xf32>
    %22 = tpu.matmul %15, %12, %cst_23 {dimension_numbers = #tpu.dot_dimension_numbers<[1], [0], [0], [1], [0, 0, 1, 1], [], []>} : vector<8x32xf32>, vector<32x128xf32>, vector<8x128xf32> -> vector<8x128xf32>
    %23 = arith.addf %21, %22 : vector<8x128xf32>
    %24 = vector.extract_strided_slice %23 {offsets = [0, 0], sizes = [8, 32], strides = [1, 1]} : vector<8x128xf32> to vector<8x32xf32>
    %25 = arith.negf %24 : vector<8x32xf32>
    %26 = math.exp %25 : vector<8x32xf32>
    %cst_24 = arith.constant 1.000000e+00 : f32
    %27 = vector.broadcast %cst_24 : f32 to vector<8x32xf32>
    %28 = arith.addf %27, %26 : vector<8x32xf32>
    %29 = arith.divf %27, %28 : vector<8x32xf32>
    %30 = vector.extract_strided_slice %23 {offsets = [0, 32], sizes = [8, 32], strides = [1, 1]} : vector<8x128xf32> to vector<8x32xf32>
    %31 = arith.negf %30 : vector<8x32xf32>
    %32 = math.exp %31 : vector<8x32xf32>
    %cst_25 = arith.constant 1.000000e+00 : f32
    %33 = vector.broadcast %cst_25 : f32 to vector<8x32xf32>
    %34 = arith.addf %33, %32 : vector<8x32xf32>
    %35 = arith.divf %33, %34 : vector<8x32xf32>
    %36 = vector.extract_strided_slice %23 {offsets = [0, 64], sizes = [8, 32], strides = [1, 1]} : vector<8x128xf32> to vector<8x32xf32>
    %37 = math.tanh %36 : vector<8x32xf32>
    %38 = vector.extract_strided_slice %23 {offsets = [0, 96], sizes = [8, 32], strides = [1, 1]} : vector<8x128xf32> to vector<8x32xf32>
    %39 = arith.negf %38 : vector<8x32xf32>
    %40 = math.exp %39 : vector<8x32xf32>
    %cst_26 = arith.constant 1.000000e+00 : f32
    %41 = vector.broadcast %cst_26 : f32 to vector<8x32xf32>
    %42 = arith.addf %41, %40 : vector<8x32xf32>
    %43 = arith.divf %41, %42 : vector<8x32xf32>
    %44 = arith.mulf %35, %16 : vector<8x32xf32>
    %45 = arith.mulf %29, %37 : vector<8x32xf32>
    %46 = arith.addf %44, %45 : vector<8x32xf32>
    %47 = math.tanh %46 : vector<8x32xf32>
    %48 = arith.mulf %43, %47 : vector<8x32xf32>
    %cst_27 = arith.constant dense<0.000000e+00> : vector<8x128xf32>
    %49 = tpu.matmul %48, %11, %cst_27 {dimension_numbers = #tpu.dot_dimension_numbers<[1], [0], [0], [1], [0, 0, 1, 1], [], []>} : vector<8x32xf32>, vector<32x128xf32>, vector<8x128xf32> -> vector<8x128xf32>
    %cst_28 = arith.constant dense<0.000000e+00> : vector<8x128xf32>
    %50 = tpu.matmul %17, %13, %cst_28 {dimension_numbers = #tpu.dot_dimension_numbers<[1], [0], [0], [1], [0, 0, 1, 1], [], []>} : vector<8x32xf32>, vector<32x128xf32>, vector<8x128xf32> -> vector<8x128xf32>
    %51 = arith.addf %49, %50 : vector<8x128xf32>
    %52 = vector.broadcast %14 : vector<1x128xf32> to vector<8x128xf32>
    %53 = arith.addf %51, %52 : vector<8x128xf32>
    %54 = vector.extract_strided_slice %53 {offsets = [0, 0], sizes = [8, 32], strides = [1, 1]} : vector<8x128xf32> to vector<8x32xf32>
    %55 = arith.negf %54 : vector<8x32xf32>
    %56 = math.exp %55 : vector<8x32xf32>
    %cst_29 = arith.constant 1.000000e+00 : f32
    %57 = vector.broadcast %cst_29 : f32 to vector<8x32xf32>
    %58 = arith.addf %57, %56 : vector<8x32xf32>
    %59 = arith.divf %57, %58 : vector<8x32xf32>
    %60 = vector.extract_strided_slice %53 {offsets = [0, 32], sizes = [8, 32], strides = [1, 1]} : vector<8x128xf32> to vector<8x32xf32>
    %61 = arith.negf %60 : vector<8x32xf32>
    %62 = math.exp %61 : vector<8x32xf32>
    %cst_30 = arith.constant 1.000000e+00 : f32
    %63 = vector.broadcast %cst_30 : f32 to vector<8x32xf32>
    %64 = arith.addf %63, %62 : vector<8x32xf32>
    %65 = arith.divf %63, %64 : vector<8x32xf32>
    %66 = vector.extract_strided_slice %53 {offsets = [0, 64], sizes = [8, 32], strides = [1, 1]} : vector<8x128xf32> to vector<8x32xf32>
    %67 = math.tanh %66 : vector<8x32xf32>
    %68 = vector.extract_strided_slice %53 {offsets = [0, 96], sizes = [8, 32], strides = [1, 1]} : vector<8x128xf32> to vector<8x32xf32>
    %69 = arith.negf %68 : vector<8x32xf32>
    %70 = math.exp %69 : vector<8x32xf32>
    %cst_31 = arith.constant 1.000000e+00 : f32
    %71 = vector.broadcast %cst_31 : f32 to vector<8x32xf32>
    %72 = arith.addf %71, %70 : vector<8x32xf32>
    %73 = arith.divf %71, %72 : vector<8x32xf32>
    %74 = arith.mulf %65, %18 : vector<8x32xf32>
    %75 = arith.mulf %59, %67 : vector<8x32xf32>
    %76 = arith.addf %74, %75 : vector<8x32xf32>
    %77 = math.tanh %76 : vector<8x32xf32>
    %78 = arith.mulf %73, %77 : vector<8x32xf32>
    %79 = arith.index_cast %19 : i32 to index
    %c0_32 = arith.constant 0 : index
    %80 = vector.load %arg9[%79, %c0_32] : memref<128x32xf32, #tpu.memory_space<vmem>>, vector<8x32xf32>
    tpu.vector_store %arg9[%79, %c0_32], %78 {strides = array<i32>} : memref<128x32xf32, #tpu.memory_space<vmem>>, vector<8x32xf32>,
    %c1_i32 = arith.constant 1 : i32
    %c8_i32_33 = arith.constant 8 : i32
    %81 = arith.muli %c1_i32, %c8_i32_33 : i32
    %82 = arith.index_cast %81 : i32 to index
    %c0_34 = arith.constant 0 : index
    %83 = vector.load %arg8[%82, %c0_34] : memref<128x128xf32, #tpu.memory_space<vmem>>, vector<8x128xf32>
    %cst_35 = arith.constant dense<0.000000e+00> : vector<8x128xf32>
    %84 = tpu.matmul %48, %12, %cst_35 {dimension_numbers = #tpu.dot_dimension_numbers<[1], [0], [0], [1], [0, 0, 1, 1], [], []>} : vector<8x32xf32>, vector<32x128xf32>, vector<8x128xf32> -> vector<8x128xf32>
    %85 = arith.addf %83, %84 : vector<8x128xf32>
    %86 = vector.extract_strided_slice %85 {offsets = [0, 0], sizes = [8, 32], strides = [1, 1]} : vector<8x128xf32> to vector<8x32xf32>
    %87 = arith.negf %86 : vector<8x32xf32>
    %88 = math.exp %87 : vector<8x32xf32>
    %cst_36 = arith.constant 1.000000e+00 : f32
    %89 = vector.broadcast %cst_36 : f32 to vector<8x32xf32>
    %90 = arith.addf %89, %88 : vector<8x32xf32>
    %91 = arith.divf %89, %90 : vector<8x32xf32>
    %92 = vector.extract_strided_slice %85 {offsets = [0, 32], sizes = [8, 32], strides = [1, 1]} : vector<8x128xf32> to vector<8x32xf32>
    %93 = arith.negf %92 : vector<8x32xf32>
    %94 = math.exp %93 : vector<8x32xf32>
    %cst_37 = arith.constant 1.000000e+00 : f32
    %95 = vector.broadcast %cst_37 : f32 to vector<8x32xf32>
    %96 = arith.addf %95, %94 : vector<8x32xf32>
    %97 = arith.divf %95, %96 : vector<8x32xf32>
    %98 = vector.extract_strided_slice %85 {offsets = [0, 64], sizes = [8, 32], strides = [1, 1]} : vector<8x128xf32> to vector<8x32xf32>
    %99 = math.tanh %98 : vector<8x32xf32>
    %100 = vector.extract_strided_slice %85 {offsets = [0, 96], sizes = [8, 32], strides = [1, 1]} : vector<8x128xf32> to vector<8x32xf32>
    %101 = arith.negf %100 : vector<8x32xf32>
    %102 = math.exp %101 : vector<8x32xf32>
    %cst_38 = arith.constant 1.000000e+00 : f32
    %103 = vector.broadcast %cst_38 : f32 to vector<8x32xf32>
    %104 = arith.addf %103, %102 : vector<8x32xf32>
    %105 = arith.divf %103, %104 : vector<8x32xf32>
    %106 = arith.mulf %97, %46 : vector<8x32xf32>
    %107 = arith.mulf %91, %99 : vector<8x32xf32>
    %108 = arith.addf %106, %107 : vector<8x32xf32>
    %109 = math.tanh %108 : vector<8x32xf32>
    %110 = arith.mulf %105, %109 : vector<8x32xf32>
    %cst_39 = arith.constant dense<0.000000e+00> : vector<8x128xf32>
    %111 = tpu.matmul %110, %11, %cst_39 {dimension_numbers = #tpu.dot_dimension_numbers<[1], [0], [0], [1], [0, 0, 1, 1], [], []>} : vector<8x32xf32>, vector<32x128xf32>, vector<8x128xf32> -> vector<8x128xf32>
    %cst_40 = arith.constant dense<0.000000e+00> : vector<8x128xf32>
    %112 = tpu.matmul %78, %13, %cst_40 {dimension_numbers = #tpu.dot_dimension_numbers<[1], [0], [0], [1], [0, 0, 1, 1], [], []>} : vector<8x32xf32>, vector<32x128xf32>, vector<8x128xf32> -> vector<8x128xf32>
    %113 = arith.addf %111, %112 : vector<8x128xf32>
    %114 = vector.broadcast %14 : vector<1x128xf32> to vector<8x128xf32>
    %115 = arith.addf %113, %114 : vector<8x128xf32>
    %116 = vector.extract_strided_slice %115 {offsets = [0, 0], sizes = [8, 32], strides = [1, 1]} : vector<8x128xf32> to vector<8x32xf32>
    %117 = arith.negf %116 : vector<8x32xf32>
    %118 = math.exp %117 : vector<8x32xf32>
    %cst_41 = arith.constant 1.000000e+00 : f32
    %119 = vector.broadcast %cst_41 : f32 to vector<8x32xf32>
    %120 = arith.addf %119, %118 : vector<8x32xf32>
    %121 = arith.divf %119, %120 : vector<8x32xf32>
    %122 = vector.extract_strided_slice %115 {offsets = [0, 32], sizes = [8, 32], strides = [1, 1]} : vector<8x128xf32> to vector<8x32xf32>
    %123 = arith.negf %122 : vector<8x32xf32>
    %124 = math.exp %123 : vector<8x32xf32>
    %cst_42 = arith.constant 1.000000e+00 : f32
    %125 = vector.broadcast %cst_42 : f32 to vector<8x32xf32>
    %126 = arith.addf %125, %124 : vector<8x32xf32>
    %127 = arith.divf %125, %126 : vector<8x32xf32>
    %128 = vector.extract_strided_slice %115 {offsets = [0, 64], sizes = [8, 32], strides = [1, 1]} : vector<8x128xf32> to vector<8x32xf32>
    %129 = math.tanh %128 : vector<8x32xf32>
    %130 = vector.extract_strided_slice %115 {offsets = [0, 96], sizes = [8, 32], strides = [1, 1]} : vector<8x128xf32> to vector<8x32xf32>
    %131 = arith.negf %130 : vector<8x32xf32>
    %132 = math.exp %131 : vector<8x32xf32>
    %cst_43 = arith.constant 1.000000e+00 : f32
    %133 = vector.broadcast %cst_43 : f32 to vector<8x32xf32>
    %134 = arith.addf %133, %132 : vector<8x32xf32>
    %135 = arith.divf %133, %134 : vector<8x32xf32>
    %136 = arith.mulf %127, %76 : vector<8x32xf32>
    %137 = arith.mulf %121, %129 : vector<8x32xf32>
    %138 = arith.addf %136, %137 : vector<8x32xf32>
    %139 = math.tanh %138 : vector<8x32xf32>
    %140 = arith.mulf %135, %139 : vector<8x32xf32>
    %141 = arith.index_cast %81 : i32 to index
    %c0_44 = arith.constant 0 : index
    %142 = vector.load %arg9[%141, %c0_44] : memref<128x32xf32, #tpu.memory_space<vmem>>, vector<8x32xf32>
    tpu.vector_store %arg9[%141, %c0_44], %140 {strides = array<i32>} : memref<128x32xf32, #tpu.memory_space<vmem>>, vector<8x32xf32>,
    %c2_i32 = arith.constant 2 : i32
    %c8_i32_45 = arith.constant 8 : i32
    %143 = arith.muli %c2_i32, %c8_i32_45 : i32
    %144 = arith.index_cast %143 : i32 to index
    %c0_46 = arith.constant 0 : index
    %145 = vector.load %arg8[%144, %c0_46] : memref<128x128xf32, #tpu.memory_space<vmem>>, vector<8x128xf32>
    %cst_47 = arith.constant dense<0.000000e+00> : vector<8x128xf32>
    %146 = tpu.matmul %110, %12, %cst_47 {dimension_numbers = #tpu.dot_dimension_numbers<[1], [0], [0], [1], [0, 0, 1, 1], [], []>} : vector<8x32xf32>, vector<32x128xf32>, vector<8x128xf32> -> vector<8x128xf32>
    %147 = arith.addf %145, %146 : vector<8x128xf32>
    %148 = vector.extract_strided_slice %147 {offsets = [0, 0], sizes = [8, 32], strides = [1, 1]} : vector<8x128xf32> to vector<8x32xf32>
    %149 = arith.negf %148 : vector<8x32xf32>
    %150 = math.exp %149 : vector<8x32xf32>
    %cst_48 = arith.constant 1.000000e+00 : f32
    %151 = vector.broadcast %cst_48 : f32 to vector<8x32xf32>
    %152 = arith.addf %151, %150 : vector<8x32xf32>
    %153 = arith.divf %151, %152 : vector<8x32xf32>
    %154 = vector.extract_strided_slice %147 {offsets = [0, 32], sizes = [8, 32], strides = [1, 1]} : vector<8x128xf32> to vector<8x32xf32>
    %155 = arith.negf %154 : vector<8x32xf32>
    %156 = math.exp %155 : vector<8x32xf32>
    %cst_49 = arith.constant 1.000000e+00 : f32
    %157 = vector.broadcast %cst_49 : f32 to vector<8x32xf32>
    %158 = arith.addf %157, %156 : vector<8x32xf32>
    %159 = arith.divf %157, %158 : vector<8x32xf32>
    %160 = vector.extract_strided_slice %147 {offsets = [0, 64], sizes = [8, 32], strides = [1, 1]} : vector<8x128xf32> to vector<8x32xf32>
    %161 = math.tanh %160 : vector<8x32xf32>
    %162 = vector.extract_strided_slice %147 {offsets = [0, 96], sizes = [8, 32], strides = [1, 1]} : vector<8x128xf32> to vector<8x32xf32>
    %163 = arith.negf %162 : vector<8x32xf32>
    %164 = math.exp %163 : vector<8x32xf32>
    %cst_50 = arith.constant 1.000000e+00 : f32
    %165 = vector.broadcast %cst_50 : f32 to vector<8x32xf32>
    %166 = arith.addf %165, %164 : vector<8x32xf32>
    %167 = arith.divf %165, %166 : vector<8x32xf32>
    %168 = arith.mulf %159, %108 : vector<8x32xf32>
    %169 = arith.mulf %153, %161 : vector<8x32xf32>
    %170 = arith.addf %168, %169 : vector<8x32xf32>
    %171 = math.tanh %170 : vector<8x32xf32>
    %172 = arith.mulf %167, %171 : vector<8x32xf32>
    %cst_51 = arith.constant dense<0.000000e+00> : vector<8x128xf32>
    %173 = tpu.matmul %172, %11, %cst_51 {dimension_numbers = #tpu.dot_dimension_numbers<[1], [0], [0], [1], [0, 0, 1, 1], [], []>} : vector<8x32xf32>, vector<32x128xf32>, vector<8x128xf32> -> vector<8x128xf32>
    %cst_52 = arith.constant dense<0.000000e+00> : vector<8x128xf32>
    %174 = tpu.matmul %140, %13, %cst_52 {dimension_numbers = #tpu.dot_dimension_numbers<[1], [0], [0], [1], [0, 0, 1, 1], [], []>} : vector<8x32xf32>, vector<32x128xf32>, vector<8x128xf32> -> vector<8x128xf32>
    %175 = arith.addf %173, %174 : vector<8x128xf32>
    %176 = vector.broadcast %14 : vector<1x128xf32> to vector<8x128xf32>
    %177 = arith.addf %175, %176 : vector<8x128xf32>
    %178 = vector.extract_strided_slice %177 {offsets = [0, 0], sizes = [8, 32], strides = [1, 1]} : vector<8x128xf32> to vector<8x32xf32>
    %179 = arith.negf %178 : vector<8x32xf32>
    %180 = math.exp %179 : vector<8x32xf32>
    %cst_53 = arith.constant 1.000000e+00 : f32
    %181 = vector.broadcast %cst_53 : f32 to vector<8x32xf32>
    %182 = arith.addf %181, %180 : vector<8x32xf32>
    %183 = arith.divf %181, %182 : vector<8x32xf32>
    %184 = vector.extract_strided_slice %177 {offsets = [0, 32], sizes = [8, 32], strides = [1, 1]} : vector<8x128xf32> to vector<8x32xf32>
    %185 = arith.negf %184 : vector<8x32xf32>
    %186 = math.exp %185 : vector<8x32xf32>
    %cst_54 = arith.constant 1.000000e+00 : f32
    %187 = vector.broadcast %cst_54 : f32 to vector<8x32xf32>
    %188 = arith.addf %187, %186 : vector<8x32xf32>
    %189 = arith.divf %187, %188 : vector<8x32xf32>
    %190 = vector.extract_strided_slice %177 {offsets = [0, 64], sizes = [8, 32], strides = [1, 1]} : vector<8x128xf32> to vector<8x32xf32>
    %191 = math.tanh %190 : vector<8x32xf32>
    %192 = vector.extract_strided_slice %177 {offsets = [0, 96], sizes = [8, 32], strides = [1, 1]} : vector<8x128xf32> to vector<8x32xf32>
    %193 = arith.negf %192 : vector<8x32xf32>
    %194 = math.exp %193 : vector<8x32xf32>
    %cst_55 = arith.constant 1.000000e+00 : f32
    %195 = vector.broadcast %cst_55 : f32 to vector<8x32xf32>
    %196 = arith.addf %195, %194 : vector<8x32xf32>
    %197 = arith.divf %195, %196 : vector<8x32xf32>
    %198 = arith.mulf %189, %138 : vector<8x32xf32>
    %199 = arith.mulf %183, %191 : vector<8x32xf32>
    %200 = arith.addf %198, %199 : vector<8x32xf32>
    %201 = math.tanh %200 : vector<8x32xf32>
    %202 = arith.mulf %197, %201 : vector<8x32xf32>
    %203 = arith.index_cast %143 : i32 to index
    %c0_56 = arith.constant 0 : index
    %204 = vector.load %arg9[%203, %c0_56] : memref<128x32xf32, #tpu.memory_space<vmem>>, vector<8x32xf32>
    tpu.vector_store %arg9[%203, %c0_56], %202 {strides = array<i32>} : memref<128x32xf32, #tpu.memory_space<vmem>>, vector<8x32xf32>,
    %c3_i32 = arith.constant 3 : i32
    %c8_i32_57 = arith.constant 8 : i32
    %205 = arith.muli %c3_i32, %c8_i32_57 : i32
    %206 = arith.index_cast %205 : i32 to index
    %c0_58 = arith.constant 0 : index
    %207 = vector.load %arg8[%206, %c0_58] : memref<128x128xf32, #tpu.memory_space<vmem>>, vector<8x128xf32>
    %cst_59 = arith.constant dense<0.000000e+00> : vector<8x128xf32>
    %208 = tpu.matmul %172, %12, %cst_59 {dimension_numbers = #tpu.dot_dimension_numbers<[1], [0], [0], [1], [0, 0, 1, 1], [], []>} : vector<8x32xf32>, vector<32x128xf32>, vector<8x128xf32> -> vector<8x128xf32>
    %209 = arith.addf %207, %208 : vector<8x128xf32>
    %210 = vector.extract_strided_slice %209 {offsets = [0, 0], sizes = [8, 32], strides = [1, 1]} : vector<8x128xf32> to vector<8x32xf32>
    %211 = arith.negf %210 : vector<8x32xf32>
    %212 = math.exp %211 : vector<8x32xf32>
    %cst_60 = arith.constant 1.000000e+00 : f32
    %213 = vector.broadcast %cst_60 : f32 to vector<8x32xf32>
    %214 = arith.addf %213, %212 : vector<8x32xf32>
    %215 = arith.divf %213, %214 : vector<8x32xf32>
    %216 = vector.extract_strided_slice %209 {offsets = [0, 32], sizes = [8, 32], strides = [1, 1]} : vector<8x128xf32> to vector<8x32xf32>
    %217 = arith.negf %216 : vector<8x32xf32>
    %218 = math.exp %217 : vector<8x32xf32>
    %cst_61 = arith.constant 1.000000e+00 : f32
    %219 = vector.broadcast %cst_61 : f32 to vector<8x32xf32>
    %220 = arith.addf %219, %218 : vector<8x32xf32>
    %221 = arith.divf %219, %220 : vector<8x32xf32>
    %222 = vector.extract_strided_slice %209 {offsets = [0, 64], sizes = [8, 32], strides = [1, 1]} : vector<8x128xf32> to vector<8x32xf32>
    %223 = math.tanh %222 : vector<8x32xf32>
    %224 = vector.extract_strided_slice %209 {offsets = [0, 96], sizes = [8, 32], strides = [1, 1]} : vector<8x128xf32> to vector<8x32xf32>
    %225 = arith.negf %224 : vector<8x32xf32>
    %226 = math.exp %225 : vector<8x32xf32>
    %cst_62 = arith.constant 1.000000e+00 : f32
    %227 = vector.broadcast %cst_62 : f32 to vector<8x32xf32>
    %228 = arith.addf %227, %226 : vector<8x32xf32>
    %229 = arith.divf %227, %228 : vector<8x32xf32>
    %230 = arith.mulf %221, %170 : vector<8x32xf32>
    %231 = arith.mulf %215, %223 : vector<8x32xf32>
    %232 = arith.addf %230, %231 : vector<8x32xf32>
    %233 = math.tanh %232 : vector<8x32xf32>
    %234 = arith.mulf %229, %233 : vector<8x32xf32>
    %cst_63 = arith.constant dense<0.000000e+00> : vector<8x128xf32>
    %235 = tpu.matmul %234, %11, %cst_63 {dimension_numbers = #tpu.dot_dimension_numbers<[1], [0], [0], [1], [0, 0, 1, 1], [], []>} : vector<8x32xf32>, vector<32x128xf32>, vector<8x128xf32> -> vector<8x128xf32>
    %cst_64 = arith.constant dense<0.000000e+00> : vector<8x128xf32>
    %236 = tpu.matmul %202, %13, %cst_64 {dimension_numbers = #tpu.dot_dimension_numbers<[1], [0], [0], [1], [0, 0, 1, 1], [], []>} : vector<8x32xf32>, vector<32x128xf32>, vector<8x128xf32> -> vector<8x128xf32>
    %237 = arith.addf %235, %236 : vector<8x128xf32>
    %238 = vector.broadcast %14 : vector<1x128xf32> to vector<8x128xf32>
    %239 = arith.addf %237, %238 : vector<8x128xf32>
    %240 = vector.extract_strided_slice %239 {offsets = [0, 0], sizes = [8, 32], strides = [1, 1]} : vector<8x128xf32> to vector<8x32xf32>
    %241 = arith.negf %240 : vector<8x32xf32>
    %242 = math.exp %241 : vector<8x32xf32>
    %cst_65 = arith.constant 1.000000e+00 : f32
    %243 = vector.broadcast %cst_65 : f32 to vector<8x32xf32>
    %244 = arith.addf %243, %242 : vector<8x32xf32>
    %245 = arith.divf %243, %244 : vector<8x32xf32>
    %246 = vector.extract_strided_slice %239 {offsets = [0, 32], sizes = [8, 32], strides = [1, 1]} : vector<8x128xf32> to vector<8x32xf32>
    %247 = arith.negf %246 : vector<8x32xf32>
    %248 = math.exp %247 : vector<8x32xf32>
    %cst_66 = arith.constant 1.000000e+00 : f32
    %249 = vector.broadcast %cst_66 : f32 to vector<8x32xf32>
    %250 = arith.addf %249, %248 : vector<8x32xf32>
    %251 = arith.divf %249, %250 : vector<8x32xf32>
    %252 = vector.extract_strided_slice %239 {offsets = [0, 64], sizes = [8, 32], strides = [1, 1]} : vector<8x128xf32> to vector<8x32xf32>
    %253 = math.tanh %252 : vector<8x32xf32>
    %254 = vector.extract_strided_slice %239 {offsets = [0, 96], sizes = [8, 32], strides = [1, 1]} : vector<8x128xf32> to vector<8x32xf32>
    %255 = arith.negf %254 : vector<8x32xf32>
    %256 = math.exp %255 : vector<8x32xf32>
    %cst_67 = arith.constant 1.000000e+00 : f32
    %257 = vector.broadcast %cst_67 : f32 to vector<8x32xf32>
    %258 = arith.addf %257, %256 : vector<8x32xf32>
    %259 = arith.divf %257, %258 : vector<8x32xf32>
    %260 = arith.mulf %251, %200 : vector<8x32xf32>
    %261 = arith.mulf %245, %253 : vector<8x32xf32>
    %262 = arith.addf %260, %261 : vector<8x32xf32>
    %263 = math.tanh %262 : vector<8x32xf32>
    %264 = arith.mulf %259, %263 : vector<8x32xf32>
    %265 = arith.index_cast %205 : i32 to index
    %c0_68 = arith.constant 0 : index
    %266 = vector.load %arg9[%265, %c0_68] : memref<128x32xf32, #tpu.memory_space<vmem>>, vector<8x32xf32>
    tpu.vector_store %arg9[%265, %c0_68], %264 {strides = array<i32>} : memref<128x32xf32, #tpu.memory_space<vmem>>, vector<8x32xf32>,
    %c4_i32 = arith.constant 4 : i32
    %c8_i32_69 = arith.constant 8 : i32
    %267 = arith.muli %c4_i32, %c8_i32_69 : i32
    %268 = arith.index_cast %267 : i32 to index
    %c0_70 = arith.constant 0 : index
    %269 = vector.load %arg8[%268, %c0_70] : memref<128x128xf32, #tpu.memory_space<vmem>>, vector<8x128xf32>
    %cst_71 = arith.constant dense<0.000000e+00> : vector<8x128xf32>
    %270 = tpu.matmul %234, %12, %cst_71 {dimension_numbers = #tpu.dot_dimension_numbers<[1], [0], [0], [1], [0, 0, 1, 1], [], []>} : vector<8x32xf32>, vector<32x128xf32>, vector<8x128xf32> -> vector<8x128xf32>
    %271 = arith.addf %269, %270 : vector<8x128xf32>
    %272 = vector.extract_strided_slice %271 {offsets = [0, 0], sizes = [8, 32], strides = [1, 1]} : vector<8x128xf32> to vector<8x32xf32>
    %273 = arith.negf %272 : vector<8x32xf32>
    %274 = math.exp %273 : vector<8x32xf32>
    %cst_72 = arith.constant 1.000000e+00 : f32
    %275 = vector.broadcast %cst_72 : f32 to vector<8x32xf32>
    %276 = arith.addf %275, %274 : vector<8x32xf32>
    %277 = arith.divf %275, %276 : vector<8x32xf32>
    %278 = vector.extract_strided_slice %271 {offsets = [0, 32], sizes = [8, 32], strides = [1, 1]} : vector<8x128xf32> to vector<8x32xf32>
    %279 = arith.negf %278 : vector<8x32xf32>
    %280 = math.exp %279 : vector<8x32xf32>
    %cst_73 = arith.constant 1.000000e+00 : f32
    %281 = vector.broadcast %cst_73 : f32 to vector<8x32xf32>
    %282 = arith.addf %281, %280 : vector<8x32xf32>
    %283 = arith.divf %281, %282 : vector<8x32xf32>
    %284 = vector.extract_strided_slice %271 {offsets = [0, 64], sizes = [8, 32], strides = [1, 1]} : vector<8x128xf32> to vector<8x32xf32>
    %285 = math.tanh %284 : vector<8x32xf32>
    %286 = vector.extract_strided_slice %271 {offsets = [0, 96], sizes = [8, 32], strides = [1, 1]} : vector<8x128xf32> to vector<8x32xf32>
    %287 = arith.negf %286 : vector<8x32xf32>
    %288 = math.exp %287 : vector<8x32xf32>
    %cst_74 = arith.constant 1.000000e+00 : f32
    %289 = vector.broadcast %cst_74 : f32 to vector<8x32xf32>
    %290 = arith.addf %289, %288 : vector<8x32xf32>
    %291 = arith.divf %289, %290 : vector<8x32xf32>
    %292 = arith.mulf %283, %232 : vector<8x32xf32>
    %293 = arith.mulf %277, %285 : vector<8x32xf32>
    %294 = arith.addf %292, %293 : vector<8x32xf32>
    %295 = math.tanh %294 : vector<8x32xf32>
    %296 = arith.mulf %291, %295 : vector<8x32xf32>
    %cst_75 = arith.constant dense<0.000000e+00> : vector<8x128xf32>
    %297 = tpu.matmul %296, %11, %cst_75 {dimension_numbers = #tpu.dot_dimension_numbers<[1], [0], [0], [1], [0, 0, 1, 1], [], []>} : vector<8x32xf32>, vector<32x128xf32>, vector<8x128xf32> -> vector<8x128xf32>
    %cst_76 = arith.constant dense<0.000000e+00> : vector<8x128xf32>
    %298 = tpu.matmul %264, %13, %cst_76 {dimension_numbers = #tpu.dot_dimension_numbers<[1], [0], [0], [1], [0, 0, 1, 1], [], []>} : vector<8x32xf32>, vector<32x128xf32>, vector<8x128xf32> -> vector<8x128xf32>
    %299 = arith.addf %297, %298 : vector<8x128xf32>
    %300 = vector.broadcast %14 : vector<1x128xf32> to vector<8x128xf32>
    %301 = arith.addf %299, %300 : vector<8x128xf32>
    %302 = vector.extract_strided_slice %301 {offsets = [0, 0], sizes = [8, 32], strides = [1, 1]} : vector<8x128xf32> to vector<8x32xf32>
    %303 = arith.negf %302 : vector<8x32xf32>
    %304 = math.exp %303 : vector<8x32xf32>
    %cst_77 = arith.constant 1.000000e+00 : f32
    %305 = vector.broadcast %cst_77 : f32 to vector<8x32xf32>
    %306 = arith.addf %305, %304 : vector<8x32xf32>
    %307 = arith.divf %305, %306 : vector<8x32xf32>
    %308 = vector.extract_strided_slice %301 {offsets = [0, 32], sizes = [8, 32], strides = [1, 1]} : vector<8x128xf32> to vector<8x32xf32>
    %309 = arith.negf %308 : vector<8x32xf32>
    %310 = math.exp %309 : vector<8x32xf32>
    %cst_78 = arith.constant 1.000000e+00 : f32
    %311 = vector.broadcast %cst_78 : f32 to vector<8x32xf32>
    %312 = arith.addf %311, %310 : vector<8x32xf32>
    %313 = arith.divf %311, %312 : vector<8x32xf32>
    %314 = vector.extract_strided_slice %301 {offsets = [0, 64], sizes = [8, 32], strides = [1, 1]} : vector<8x128xf32> to vector<8x32xf32>
    %315 = math.tanh %314 : vector<8x32xf32>
    %316 = vector.extract_strided_slice %301 {offsets = [0, 96], sizes = [8, 32], strides = [1, 1]} : vector<8x128xf32> to vector<8x32xf32>
    %317 = arith.negf %316 : vector<8x32xf32>
    %318 = math.exp %317 : vector<8x32xf32>
    %cst_79 = arith.constant 1.000000e+00 : f32
    %319 = vector.broadcast %cst_79 : f32 to vector<8x32xf32>
    %320 = arith.addf %319, %318 : vector<8x32xf32>
    %321 = arith.divf %319, %320 : vector<8x32xf32>
    %322 = arith.mulf %313, %262 : vector<8x32xf32>
    %323 = arith.mulf %307, %315 : vector<8x32xf32>
    %324 = arith.addf %322, %323 : vector<8x32xf32>
    %325 = math.tanh %324 : vector<8x32xf32>
    %326 = arith.mulf %321, %325 : vector<8x32xf32>
    %327 = arith.index_cast %267 : i32 to index
    %c0_80 = arith.constant 0 : index
    %328 = vector.load %arg9[%327, %c0_80] : memref<128x32xf32, #tpu.memory_space<vmem>>, vector<8x32xf32>
    tpu.vector_store %arg9[%327, %c0_80], %326 {strides = array<i32>} : memref<128x32xf32, #tpu.memory_space<vmem>>, vector<8x32xf32>,
    %c5_i32 = arith.constant 5 : i32
    %c8_i32_81 = arith.constant 8 : i32
    %329 = arith.muli %c5_i32, %c8_i32_81 : i32
    %330 = arith.index_cast %329 : i32 to index
    %c0_82 = arith.constant 0 : index
    %331 = vector.load %arg8[%330, %c0_82] : memref<128x128xf32, #tpu.memory_space<vmem>>, vector<8x128xf32>
    %cst_83 = arith.constant dense<0.000000e+00> : vector<8x128xf32>
    %332 = tpu.matmul %296, %12, %cst_83 {dimension_numbers = #tpu.dot_dimension_numbers<[1], [0], [0], [1], [0, 0, 1, 1], [], []>} : vector<8x32xf32>, vector<32x128xf32>, vector<8x128xf32> -> vector<8x128xf32>
    %333 = arith.addf %331, %332 : vector<8x128xf32>
    %334 = vector.extract_strided_slice %333 {offsets = [0, 0], sizes = [8, 32], strides = [1, 1]} : vector<8x128xf32> to vector<8x32xf32>
    %335 = arith.negf %334 : vector<8x32xf32>
    %336 = math.exp %335 : vector<8x32xf32>
    %cst_84 = arith.constant 1.000000e+00 : f32
    %337 = vector.broadcast %cst_84 : f32 to vector<8x32xf32>
    %338 = arith.addf %337, %336 : vector<8x32xf32>
    %339 = arith.divf %337, %338 : vector<8x32xf32>
    %340 = vector.extract_strided_slice %333 {offsets = [0, 32], sizes = [8, 32], strides = [1, 1]} : vector<8x128xf32> to vector<8x32xf32>
    %341 = arith.negf %340 : vector<8x32xf32>
    %342 = math.exp %341 : vector<8x32xf32>
    %cst_85 = arith.constant 1.000000e+00 : f32
    %343 = vector.broadcast %cst_85 : f32 to vector<8x32xf32>
    %344 = arith.addf %343, %342 : vector<8x32xf32>
    %345 = arith.divf %343, %344 : vector<8x32xf32>
    %346 = vector.extract_strided_slice %333 {offsets = [0, 64], sizes = [8, 32], strides = [1, 1]} : vector<8x128xf32> to vector<8x32xf32>
    %347 = math.tanh %346 : vector<8x32xf32>
    %348 = vector.extract_strided_slice %333 {offsets = [0, 96], sizes = [8, 32], strides = [1, 1]} : vector<8x128xf32> to vector<8x32xf32>
    %349 = arith.negf %348 : vector<8x32xf32>
    %350 = math.exp %349 : vector<8x32xf32>
    %cst_86 = arith.constant 1.000000e+00 : f32
    %351 = vector.broadcast %cst_86 : f32 to vector<8x32xf32>
    %352 = arith.addf %351, %350 : vector<8x32xf32>
    %353 = arith.divf %351, %352 : vector<8x32xf32>
    %354 = arith.mulf %345, %294 : vector<8x32xf32>
    %355 = arith.mulf %339, %347 : vector<8x32xf32>
    %356 = arith.addf %354, %355 : vector<8x32xf32>
    %357 = math.tanh %356 : vector<8x32xf32>
    %358 = arith.mulf %353, %357 : vector<8x32xf32>
    %cst_87 = arith.constant dense<0.000000e+00> : vector<8x128xf32>
    %359 = tpu.matmul %358, %11, %cst_87 {dimension_numbers = #tpu.dot_dimension_numbers<[1], [0], [0], [1], [0, 0, 1, 1], [], []>} : vector<8x32xf32>, vector<32x128xf32>, vector<8x128xf32> -> vector<8x128xf32>
    %cst_88 = arith.constant dense<0.000000e+00> : vector<8x128xf32>
    %360 = tpu.matmul %326, %13, %cst_88 {dimension_numbers = #tpu.dot_dimension_numbers<[1], [0], [0], [1], [0, 0, 1, 1], [], []>} : vector<8x32xf32>, vector<32x128xf32>, vector<8x128xf32> -> vector<8x128xf32>
    %361 = arith.addf %359, %360 : vector<8x128xf32>
    %362 = vector.broadcast %14 : vector<1x128xf32> to vector<8x128xf32>
    %363 = arith.addf %361, %362 : vector<8x128xf32>
    %364 = vector.extract_strided_slice %363 {offsets = [0, 0], sizes = [8, 32], strides = [1, 1]} : vector<8x128xf32> to vector<8x32xf32>
    %365 = arith.negf %364 : vector<8x32xf32>
    %366 = math.exp %365 : vector<8x32xf32>
    %cst_89 = arith.constant 1.000000e+00 : f32
    %367 = vector.broadcast %cst_89 : f32 to vector<8x32xf32>
    %368 = arith.addf %367, %366 : vector<8x32xf32>
    %369 = arith.divf %367, %368 : vector<8x32xf32>
    %370 = vector.extract_strided_slice %363 {offsets = [0, 32], sizes = [8, 32], strides = [1, 1]} : vector<8x128xf32> to vector<8x32xf32>
    %371 = arith.negf %370 : vector<8x32xf32>
    %372 = math.exp %371 : vector<8x32xf32>
    %cst_90 = arith.constant 1.000000e+00 : f32
    %373 = vector.broadcast %cst_90 : f32 to vector<8x32xf32>
    %374 = arith.addf %373, %372 : vector<8x32xf32>
    %375 = arith.divf %373, %374 : vector<8x32xf32>
    %376 = vector.extract_strided_slice %363 {offsets = [0, 64], sizes = [8, 32], strides = [1, 1]} : vector<8x128xf32> to vector<8x32xf32>
    %377 = math.tanh %376 : vector<8x32xf32>
    %378 = vector.extract_strided_slice %363 {offsets = [0, 96], sizes = [8, 32], strides = [1, 1]} : vector<8x128xf32> to vector<8x32xf32>
    %379 = arith.negf %378 : vector<8x32xf32>
    %380 = math.exp %379 : vector<8x32xf32>
    %cst_91 = arith.constant 1.000000e+00 : f32
    %381 = vector.broadcast %cst_91 : f32 to vector<8x32xf32>
    %382 = arith.addf %381, %380 : vector<8x32xf32>
    %383 = arith.divf %381, %382 : vector<8x32xf32>
    %384 = arith.mulf %375, %324 : vector<8x32xf32>
    %385 = arith.mulf %369, %377 : vector<8x32xf32>
    %386 = arith.addf %384, %385 : vector<8x32xf32>
    %387 = math.tanh %386 : vector<8x32xf32>
    %388 = arith.mulf %383, %387 : vector<8x32xf32>
    %389 = arith.index_cast %329 : i32 to index
    %c0_92 = arith.constant 0 : index
    %390 = vector.load %arg9[%389, %c0_92] : memref<128x32xf32, #tpu.memory_space<vmem>>, vector<8x32xf32>
    tpu.vector_store %arg9[%389, %c0_92], %388 {strides = array<i32>} : memref<128x32xf32, #tpu.memory_space<vmem>>, vector<8x32xf32>,
    %c6_i32 = arith.constant 6 : i32
    %c8_i32_93 = arith.constant 8 : i32
    %391 = arith.muli %c6_i32, %c8_i32_93 : i32
    %392 = arith.index_cast %391 : i32 to index
    %c0_94 = arith.constant 0 : index
    %393 = vector.load %arg8[%392, %c0_94] : memref<128x128xf32, #tpu.memory_space<vmem>>, vector<8x128xf32>
    %cst_95 = arith.constant dense<0.000000e+00> : vector<8x128xf32>
    %394 = tpu.matmul %358, %12, %cst_95 {dimension_numbers = #tpu.dot_dimension_numbers<[1], [0], [0], [1], [0, 0, 1, 1], [], []>} : vector<8x32xf32>, vector<32x128xf32>, vector<8x128xf32> -> vector<8x128xf32>
    %395 = arith.addf %393, %394 : vector<8x128xf32>
    %396 = vector.extract_strided_slice %395 {offsets = [0, 0], sizes = [8, 32], strides = [1, 1]} : vector<8x128xf32> to vector<8x32xf32>
    %397 = arith.negf %396 : vector<8x32xf32>
    %398 = math.exp %397 : vector<8x32xf32>
    %cst_96 = arith.constant 1.000000e+00 : f32
    %399 = vector.broadcast %cst_96 : f32 to vector<8x32xf32>
    %400 = arith.addf %399, %398 : vector<8x32xf32>
    %401 = arith.divf %399, %400 : vector<8x32xf32>
    %402 = vector.extract_strided_slice %395 {offsets = [0, 32], sizes = [8, 32], strides = [1, 1]} : vector<8x128xf32> to vector<8x32xf32>
    %403 = arith.negf %402 : vector<8x32xf32>
    %404 = math.exp %403 : vector<8x32xf32>
    %cst_97 = arith.constant 1.000000e+00 : f32
    %405 = vector.broadcast %cst_97 : f32 to vector<8x32xf32>
    %406 = arith.addf %405, %404 : vector<8x32xf32>
    %407 = arith.divf %405, %406 : vector<8x32xf32>
    %408 = vector.extract_strided_slice %395 {offsets = [0, 64], sizes = [8, 32], strides = [1, 1]} : vector<8x128xf32> to vector<8x32xf32>
    %409 = math.tanh %408 : vector<8x32xf32>
    %410 = vector.extract_strided_slice %395 {offsets = [0, 96], sizes = [8, 32], strides = [1, 1]} : vector<8x128xf32> to vector<8x32xf32>
    %411 = arith.negf %410 : vector<8x32xf32>
    %412 = math.exp %411 : vector<8x32xf32>
    %cst_98 = arith.constant 1.000000e+00 : f32
    %413 = vector.broadcast %cst_98 : f32 to vector<8x32xf32>
    %414 = arith.addf %413, %412 : vector<8x32xf32>
    %415 = arith.divf %413, %414 : vector<8x32xf32>
    %416 = arith.mulf %407, %356 : vector<8x32xf32>
    %417 = arith.mulf %401, %409 : vector<8x32xf32>
    %418 = arith.addf %416, %417 : vector<8x32xf32>
    %419 = math.tanh %418 : vector<8x32xf32>
    %420 = arith.mulf %415, %419 : vector<8x32xf32>
    %cst_99 = arith.constant dense<0.000000e+00> : vector<8x128xf32>
    %421 = tpu.matmul %420, %11, %cst_99 {dimension_numbers = #tpu.dot_dimension_numbers<[1], [0], [0], [1], [0, 0, 1, 1], [], []>} : vector<8x32xf32>, vector<32x128xf32>, vector<8x128xf32> -> vector<8x128xf32>
    %cst_100 = arith.constant dense<0.000000e+00> : vector<8x128xf32>
    %422 = tpu.matmul %388, %13, %cst_100 {dimension_numbers = #tpu.dot_dimension_numbers<[1], [0], [0], [1], [0, 0, 1, 1], [], []>} : vector<8x32xf32>, vector<32x128xf32>, vector<8x128xf32> -> vector<8x128xf32>
    %423 = arith.addf %421, %422 : vector<8x128xf32>
    %424 = vector.broadcast %14 : vector<1x128xf32> to vector<8x128xf32>
    %425 = arith.addf %423, %424 : vector<8x128xf32>
    %426 = vector.extract_strided_slice %425 {offsets = [0, 0], sizes = [8, 32], strides = [1, 1]} : vector<8x128xf32> to vector<8x32xf32>
    %427 = arith.negf %426 : vector<8x32xf32>
    %428 = math.exp %427 : vector<8x32xf32>
    %cst_101 = arith.constant 1.000000e+00 : f32
    %429 = vector.broadcast %cst_101 : f32 to vector<8x32xf32>
    %430 = arith.addf %429, %428 : vector<8x32xf32>
    %431 = arith.divf %429, %430 : vector<8x32xf32>
    %432 = vector.extract_strided_slice %425 {offsets = [0, 32], sizes = [8, 32], strides = [1, 1]} : vector<8x128xf32> to vector<8x32xf32>
    %433 = arith.negf %432 : vector<8x32xf32>
    %434 = math.exp %433 : vector<8x32xf32>
    %cst_102 = arith.constant 1.000000e+00 : f32
    %435 = vector.broadcast %cst_102 : f32 to vector<8x32xf32>
    %436 = arith.addf %435, %434 : vector<8x32xf32>
    %437 = arith.divf %435, %436 : vector<8x32xf32>
    %438 = vector.extract_strided_slice %425 {offsets = [0, 64], sizes = [8, 32], strides = [1, 1]} : vector<8x128xf32> to vector<8x32xf32>
    %439 = math.tanh %438 : vector<8x32xf32>
    %440 = vector.extract_strided_slice %425 {offsets = [0, 96], sizes = [8, 32], strides = [1, 1]} : vector<8x128xf32> to vector<8x32xf32>
    %441 = arith.negf %440 : vector<8x32xf32>
    %442 = math.exp %441 : vector<8x32xf32>
    %cst_103 = arith.constant 1.000000e+00 : f32
    %443 = vector.broadcast %cst_103 : f32 to vector<8x32xf32>
    %444 = arith.addf %443, %442 : vector<8x32xf32>
    %445 = arith.divf %443, %444 : vector<8x32xf32>
    %446 = arith.mulf %437, %386 : vector<8x32xf32>
    %447 = arith.mulf %431, %439 : vector<8x32xf32>
    %448 = arith.addf %446, %447 : vector<8x32xf32>
    %449 = math.tanh %448 : vector<8x32xf32>
    %450 = arith.mulf %445, %449 : vector<8x32xf32>
    %451 = arith.index_cast %391 : i32 to index
    %c0_104 = arith.constant 0 : index
    %452 = vector.load %arg9[%451, %c0_104] : memref<128x32xf32, #tpu.memory_space<vmem>>, vector<8x32xf32>
    tpu.vector_store %arg9[%451, %c0_104], %450 {strides = array<i32>} : memref<128x32xf32, #tpu.memory_space<vmem>>, vector<8x32xf32>,
    %c7_i32 = arith.constant 7 : i32
    %c8_i32_105 = arith.constant 8 : i32
    %453 = arith.muli %c7_i32, %c8_i32_105 : i32
    %454 = arith.index_cast %453 : i32 to index
    %c0_106 = arith.constant 0 : index
    %455 = vector.load %arg8[%454, %c0_106] : memref<128x128xf32, #tpu.memory_space<vmem>>, vector<8x128xf32>
    %cst_107 = arith.constant dense<0.000000e+00> : vector<8x128xf32>
    %456 = tpu.matmul %420, %12, %cst_107 {dimension_numbers = #tpu.dot_dimension_numbers<[1], [0], [0], [1], [0, 0, 1, 1], [], []>} : vector<8x32xf32>, vector<32x128xf32>, vector<8x128xf32> -> vector<8x128xf32>
    %457 = arith.addf %455, %456 : vector<8x128xf32>
    %458 = vector.extract_strided_slice %457 {offsets = [0, 0], sizes = [8, 32], strides = [1, 1]} : vector<8x128xf32> to vector<8x32xf32>
    %459 = arith.negf %458 : vector<8x32xf32>
    %460 = math.exp %459 : vector<8x32xf32>
    %cst_108 = arith.constant 1.000000e+00 : f32
    %461 = vector.broadcast %cst_108 : f32 to vector<8x32xf32>
    %462 = arith.addf %461, %460 : vector<8x32xf32>
    %463 = arith.divf %461, %462 : vector<8x32xf32>
    %464 = vector.extract_strided_slice %457 {offsets = [0, 32], sizes = [8, 32], strides = [1, 1]} : vector<8x128xf32> to vector<8x32xf32>
    %465 = arith.negf %464 : vector<8x32xf32>
    %466 = math.exp %465 : vector<8x32xf32>
    %cst_109 = arith.constant 1.000000e+00 : f32
    %467 = vector.broadcast %cst_109 : f32 to vector<8x32xf32>
    %468 = arith.addf %467, %466 : vector<8x32xf32>
    %469 = arith.divf %467, %468 : vector<8x32xf32>
    %470 = vector.extract_strided_slice %457 {offsets = [0, 64], sizes = [8, 32], strides = [1, 1]} : vector<8x128xf32> to vector<8x32xf32>
    %471 = math.tanh %470 : vector<8x32xf32>
    %472 = vector.extract_strided_slice %457 {offsets = [0, 96], sizes = [8, 32], strides = [1, 1]} : vector<8x128xf32> to vector<8x32xf32>
    %473 = arith.negf %472 : vector<8x32xf32>
    %474 = math.exp %473 : vector<8x32xf32>
    %cst_110 = arith.constant 1.000000e+00 : f32
    %475 = vector.broadcast %cst_110 : f32 to vector<8x32xf32>
    %476 = arith.addf %475, %474 : vector<8x32xf32>
    %477 = arith.divf %475, %476 : vector<8x32xf32>
    %478 = arith.mulf %469, %418 : vector<8x32xf32>
    %479 = arith.mulf %463, %471 : vector<8x32xf32>
    %480 = arith.addf %478, %479 : vector<8x32xf32>
    %481 = math.tanh %480 : vector<8x32xf32>
    %482 = arith.mulf %477, %481 : vector<8x32xf32>
    %cst_111 = arith.constant dense<0.000000e+00> : vector<8x128xf32>
    %483 = tpu.matmul %482, %11, %cst_111 {dimension_numbers = #tpu.dot_dimension_numbers<[1], [0], [0], [1], [0, 0, 1, 1], [], []>} : vector<8x32xf32>, vector<32x128xf32>, vector<8x128xf32> -> vector<8x128xf32>
    %cst_112 = arith.constant dense<0.000000e+00> : vector<8x128xf32>
    %484 = tpu.matmul %450, %13, %cst_112 {dimension_numbers = #tpu.dot_dimension_numbers<[1], [0], [0], [1], [0, 0, 1, 1], [], []>} : vector<8x32xf32>, vector<32x128xf32>, vector<8x128xf32> -> vector<8x128xf32>
    %485 = arith.addf %483, %484 : vector<8x128xf32>
    %486 = vector.broadcast %14 : vector<1x128xf32> to vector<8x128xf32>
    %487 = arith.addf %485, %486 : vector<8x128xf32>
    %488 = vector.extract_strided_slice %487 {offsets = [0, 0], sizes = [8, 32], strides = [1, 1]} : vector<8x128xf32> to vector<8x32xf32>
    %489 = arith.negf %488 : vector<8x32xf32>
    %490 = math.exp %489 : vector<8x32xf32>
    %cst_113 = arith.constant 1.000000e+00 : f32
    %491 = vector.broadcast %cst_113 : f32 to vector<8x32xf32>
    %492 = arith.addf %491, %490 : vector<8x32xf32>
    %493 = arith.divf %491, %492 : vector<8x32xf32>
    %494 = vector.extract_strided_slice %487 {offsets = [0, 32], sizes = [8, 32], strides = [1, 1]} : vector<8x128xf32> to vector<8x32xf32>
    %495 = arith.negf %494 : vector<8x32xf32>
    %496 = math.exp %495 : vector<8x32xf32>
    %cst_114 = arith.constant 1.000000e+00 : f32
    %497 = vector.broadcast %cst_114 : f32 to vector<8x32xf32>
    %498 = arith.addf %497, %496 : vector<8x32xf32>
    %499 = arith.divf %497, %498 : vector<8x32xf32>
    %500 = vector.extract_strided_slice %487 {offsets = [0, 64], sizes = [8, 32], strides = [1, 1]} : vector<8x128xf32> to vector<8x32xf32>
    %501 = math.tanh %500 : vector<8x32xf32>
    %502 = vector.extract_strided_slice %487 {offsets = [0, 96], sizes = [8, 32], strides = [1, 1]} : vector<8x128xf32> to vector<8x32xf32>
    %503 = arith.negf %502 : vector<8x32xf32>
    %504 = math.exp %503 : vector<8x32xf32>
    %cst_115 = arith.constant 1.000000e+00 : f32
    %505 = vector.broadcast %cst_115 : f32 to vector<8x32xf32>
    %506 = arith.addf %505, %504 : vector<8x32xf32>
    %507 = arith.divf %505, %506 : vector<8x32xf32>
    %508 = arith.mulf %499, %448 : vector<8x32xf32>
    %509 = arith.mulf %493, %501 : vector<8x32xf32>
    %510 = arith.addf %508, %509 : vector<8x32xf32>
    %511 = math.tanh %510 : vector<8x32xf32>
    %512 = arith.mulf %507, %511 : vector<8x32xf32>
    %513 = arith.index_cast %453 : i32 to index
    %c0_116 = arith.constant 0 : index
    %514 = vector.load %arg9[%513, %c0_116] : memref<128x32xf32, #tpu.memory_space<vmem>>, vector<8x32xf32>
    tpu.vector_store %arg9[%513, %c0_116], %512 {strides = array<i32>} : memref<128x32xf32, #tpu.memory_space<vmem>>, vector<8x32xf32>,
    %c8_i32_117 = arith.constant 8 : i32
    %c8_i32_118 = arith.constant 8 : i32
    %515 = arith.muli %c8_i32_117, %c8_i32_118 : i32
    %516 = arith.index_cast %515 : i32 to index
    %c0_119 = arith.constant 0 : index
    %517 = vector.load %arg8[%516, %c0_119] : memref<128x128xf32, #tpu.memory_space<vmem>>, vector<8x128xf32>
    %cst_120 = arith.constant dense<0.000000e+00> : vector<8x128xf32>
    %518 = tpu.matmul %482, %12, %cst_120 {dimension_numbers = #tpu.dot_dimension_numbers<[1], [0], [0], [1], [0, 0, 1, 1], [], []>} : vector<8x32xf32>, vector<32x128xf32>, vector<8x128xf32> -> vector<8x128xf32>
    %519 = arith.addf %517, %518 : vector<8x128xf32>
    %520 = vector.extract_strided_slice %519 {offsets = [0, 0], sizes = [8, 32], strides = [1, 1]} : vector<8x128xf32> to vector<8x32xf32>
    %521 = arith.negf %520 : vector<8x32xf32>
    %522 = math.exp %521 : vector<8x32xf32>
    %cst_121 = arith.constant 1.000000e+00 : f32
    %523 = vector.broadcast %cst_121 : f32 to vector<8x32xf32>
    %524 = arith.addf %523, %522 : vector<8x32xf32>
    %525 = arith.divf %523, %524 : vector<8x32xf32>
    %526 = vector.extract_strided_slice %519 {offsets = [0, 32], sizes = [8, 32], strides = [1, 1]} : vector<8x128xf32> to vector<8x32xf32>
    %527 = arith.negf %526 : vector<8x32xf32>
    %528 = math.exp %527 : vector<8x32xf32>
    %cst_122 = arith.constant 1.000000e+00 : f32
    %529 = vector.broadcast %cst_122 : f32 to vector<8x32xf32>
    %530 = arith.addf %529, %528 : vector<8x32xf32>
    %531 = arith.divf %529, %530 : vector<8x32xf32>
    %532 = vector.extract_strided_slice %519 {offsets = [0, 64], sizes = [8, 32], strides = [1, 1]} : vector<8x128xf32> to vector<8x32xf32>
    %533 = math.tanh %532 : vector<8x32xf32>
    %534 = vector.extract_strided_slice %519 {offsets = [0, 96], sizes = [8, 32], strides = [1, 1]} : vector<8x128xf32> to vector<8x32xf32>
    %535 = arith.negf %534 : vector<8x32xf32>
    %536 = math.exp %535 : vector<8x32xf32>
    %cst_123 = arith.constant 1.000000e+00 : f32
    %537 = vector.broadcast %cst_123 : f32 to vector<8x32xf32>
    %538 = arith.addf %537, %536 : vector<8x32xf32>
    %539 = arith.divf %537, %538 : vector<8x32xf32>
    %540 = arith.mulf %531, %480 : vector<8x32xf32>
    %541 = arith.mulf %525, %533 : vector<8x32xf32>
    %542 = arith.addf %540, %541 : vector<8x32xf32>
    %543 = math.tanh %542 : vector<8x32xf32>
    %544 = arith.mulf %539, %543 : vector<8x32xf32>
    %cst_124 = arith.constant dense<0.000000e+00> : vector<8x128xf32>
    %545 = tpu.matmul %544, %11, %cst_124 {dimension_numbers = #tpu.dot_dimension_numbers<[1], [0], [0], [1], [0, 0, 1, 1], [], []>} : vector<8x32xf32>, vector<32x128xf32>, vector<8x128xf32> -> vector<8x128xf32>
    %cst_125 = arith.constant dense<0.000000e+00> : vector<8x128xf32>
    %546 = tpu.matmul %512, %13, %cst_125 {dimension_numbers = #tpu.dot_dimension_numbers<[1], [0], [0], [1], [0, 0, 1, 1], [], []>} : vector<8x32xf32>, vector<32x128xf32>, vector<8x128xf32> -> vector<8x128xf32>
    %547 = arith.addf %545, %546 : vector<8x128xf32>
    %548 = vector.broadcast %14 : vector<1x128xf32> to vector<8x128xf32>
    %549 = arith.addf %547, %548 : vector<8x128xf32>
    %550 = vector.extract_strided_slice %549 {offsets = [0, 0], sizes = [8, 32], strides = [1, 1]} : vector<8x128xf32> to vector<8x32xf32>
    %551 = arith.negf %550 : vector<8x32xf32>
    %552 = math.exp %551 : vector<8x32xf32>
    %cst_126 = arith.constant 1.000000e+00 : f32
    %553 = vector.broadcast %cst_126 : f32 to vector<8x32xf32>
    %554 = arith.addf %553, %552 : vector<8x32xf32>
    %555 = arith.divf %553, %554 : vector<8x32xf32>
    %556 = vector.extract_strided_slice %549 {offsets = [0, 32], sizes = [8, 32], strides = [1, 1]} : vector<8x128xf32> to vector<8x32xf32>
    %557 = arith.negf %556 : vector<8x32xf32>
    %558 = math.exp %557 : vector<8x32xf32>
    %cst_127 = arith.constant 1.000000e+00 : f32
    %559 = vector.broadcast %cst_127 : f32 to vector<8x32xf32>
    %560 = arith.addf %559, %558 : vector<8x32xf32>
    %561 = arith.divf %559, %560 : vector<8x32xf32>
    %562 = vector.extract_strided_slice %549 {offsets = [0, 64], sizes = [8, 32], strides = [1, 1]} : vector<8x128xf32> to vector<8x32xf32>
    %563 = math.tanh %562 : vector<8x32xf32>
    %564 = vector.extract_strided_slice %549 {offsets = [0, 96], sizes = [8, 32], strides = [1, 1]} : vector<8x128xf32> to vector<8x32xf32>
    %565 = arith.negf %564 : vector<8x32xf32>
    %566 = math.exp %565 : vector<8x32xf32>
    %cst_128 = arith.constant 1.000000e+00 : f32
    %567 = vector.broadcast %cst_128 : f32 to vector<8x32xf32>
    %568 = arith.addf %567, %566 : vector<8x32xf32>
    %569 = arith.divf %567, %568 : vector<8x32xf32>
    %570 = arith.mulf %561, %510 : vector<8x32xf32>
    %571 = arith.mulf %555, %563 : vector<8x32xf32>
    %572 = arith.addf %570, %571 : vector<8x32xf32>
    %573 = math.tanh %572 : vector<8x32xf32>
    %574 = arith.mulf %569, %573 : vector<8x32xf32>
    %575 = arith.index_cast %515 : i32 to index
    %c0_129 = arith.constant 0 : index
    %576 = vector.load %arg9[%575, %c0_129] : memref<128x32xf32, #tpu.memory_space<vmem>>, vector<8x32xf32>
    tpu.vector_store %arg9[%575, %c0_129], %574 {strides = array<i32>} : memref<128x32xf32, #tpu.memory_space<vmem>>, vector<8x32xf32>,
    %c9_i32 = arith.constant 9 : i32
    %c8_i32_130 = arith.constant 8 : i32
    %577 = arith.muli %c9_i32, %c8_i32_130 : i32
    %578 = arith.index_cast %577 : i32 to index
    %c0_131 = arith.constant 0 : index
    %579 = vector.load %arg8[%578, %c0_131] : memref<128x128xf32, #tpu.memory_space<vmem>>, vector<8x128xf32>
    %cst_132 = arith.constant dense<0.000000e+00> : vector<8x128xf32>
    %580 = tpu.matmul %544, %12, %cst_132 {dimension_numbers = #tpu.dot_dimension_numbers<[1], [0], [0], [1], [0, 0, 1, 1], [], []>} : vector<8x32xf32>, vector<32x128xf32>, vector<8x128xf32> -> vector<8x128xf32>
    %581 = arith.addf %579, %580 : vector<8x128xf32>
    %582 = vector.extract_strided_slice %581 {offsets = [0, 0], sizes = [8, 32], strides = [1, 1]} : vector<8x128xf32> to vector<8x32xf32>
    %583 = arith.negf %582 : vector<8x32xf32>
    %584 = math.exp %583 : vector<8x32xf32>
    %cst_133 = arith.constant 1.000000e+00 : f32
    %585 = vector.broadcast %cst_133 : f32 to vector<8x32xf32>
    %586 = arith.addf %585, %584 : vector<8x32xf32>
    %587 = arith.divf %585, %586 : vector<8x32xf32>
    %588 = vector.extract_strided_slice %581 {offsets = [0, 32], sizes = [8, 32], strides = [1, 1]} : vector<8x128xf32> to vector<8x32xf32>
    %589 = arith.negf %588 : vector<8x32xf32>
    %590 = math.exp %589 : vector<8x32xf32>
    %cst_134 = arith.constant 1.000000e+00 : f32
    %591 = vector.broadcast %cst_134 : f32 to vector<8x32xf32>
    %592 = arith.addf %591, %590 : vector<8x32xf32>
    %593 = arith.divf %591, %592 : vector<8x32xf32>
    %594 = vector.extract_strided_slice %581 {offsets = [0, 64], sizes = [8, 32], strides = [1, 1]} : vector<8x128xf32> to vector<8x32xf32>
    %595 = math.tanh %594 : vector<8x32xf32>
    %596 = vector.extract_strided_slice %581 {offsets = [0, 96], sizes = [8, 32], strides = [1, 1]} : vector<8x128xf32> to vector<8x32xf32>
    %597 = arith.negf %596 : vector<8x32xf32>
    %598 = math.exp %597 : vector<8x32xf32>
    %cst_135 = arith.constant 1.000000e+00 : f32
    %599 = vector.broadcast %cst_135 : f32 to vector<8x32xf32>
    %600 = arith.addf %599, %598 : vector<8x32xf32>
    %601 = arith.divf %599, %600 : vector<8x32xf32>
    %602 = arith.mulf %593, %542 : vector<8x32xf32>
    %603 = arith.mulf %587, %595 : vector<8x32xf32>
    %604 = arith.addf %602, %603 : vector<8x32xf32>
    %605 = math.tanh %604 : vector<8x32xf32>
    %606 = arith.mulf %601, %605 : vector<8x32xf32>
    %cst_136 = arith.constant dense<0.000000e+00> : vector<8x128xf32>
    %607 = tpu.matmul %606, %11, %cst_136 {dimension_numbers = #tpu.dot_dimension_numbers<[1], [0], [0], [1], [0, 0, 1, 1], [], []>} : vector<8x32xf32>, vector<32x128xf32>, vector<8x128xf32> -> vector<8x128xf32>
    %cst_137 = arith.constant dense<0.000000e+00> : vector<8x128xf32>
    %608 = tpu.matmul %574, %13, %cst_137 {dimension_numbers = #tpu.dot_dimension_numbers<[1], [0], [0], [1], [0, 0, 1, 1], [], []>} : vector<8x32xf32>, vector<32x128xf32>, vector<8x128xf32> -> vector<8x128xf32>
    %609 = arith.addf %607, %608 : vector<8x128xf32>
    %610 = vector.broadcast %14 : vector<1x128xf32> to vector<8x128xf32>
    %611 = arith.addf %609, %610 : vector<8x128xf32>
    %612 = vector.extract_strided_slice %611 {offsets = [0, 0], sizes = [8, 32], strides = [1, 1]} : vector<8x128xf32> to vector<8x32xf32>
    %613 = arith.negf %612 : vector<8x32xf32>
    %614 = math.exp %613 : vector<8x32xf32>
    %cst_138 = arith.constant 1.000000e+00 : f32
    %615 = vector.broadcast %cst_138 : f32 to vector<8x32xf32>
    %616 = arith.addf %615, %614 : vector<8x32xf32>
    %617 = arith.divf %615, %616 : vector<8x32xf32>
    %618 = vector.extract_strided_slice %611 {offsets = [0, 32], sizes = [8, 32], strides = [1, 1]} : vector<8x128xf32> to vector<8x32xf32>
    %619 = arith.negf %618 : vector<8x32xf32>
    %620 = math.exp %619 : vector<8x32xf32>
    %cst_139 = arith.constant 1.000000e+00 : f32
    %621 = vector.broadcast %cst_139 : f32 to vector<8x32xf32>
    %622 = arith.addf %621, %620 : vector<8x32xf32>
    %623 = arith.divf %621, %622 : vector<8x32xf32>
    %624 = vector.extract_strided_slice %611 {offsets = [0, 64], sizes = [8, 32], strides = [1, 1]} : vector<8x128xf32> to vector<8x32xf32>
    %625 = math.tanh %624 : vector<8x32xf32>
    %626 = vector.extract_strided_slice %611 {offsets = [0, 96], sizes = [8, 32], strides = [1, 1]} : vector<8x128xf32> to vector<8x32xf32>
    %627 = arith.negf %626 : vector<8x32xf32>
    %628 = math.exp %627 : vector<8x32xf32>
    %cst_140 = arith.constant 1.000000e+00 : f32
    %629 = vector.broadcast %cst_140 : f32 to vector<8x32xf32>
    %630 = arith.addf %629, %628 : vector<8x32xf32>
    %631 = arith.divf %629, %630 : vector<8x32xf32>
    %632 = arith.mulf %623, %572 : vector<8x32xf32>
    %633 = arith.mulf %617, %625 : vector<8x32xf32>
    %634 = arith.addf %632, %633 : vector<8x32xf32>
    %635 = math.tanh %634 : vector<8x32xf32>
    %636 = arith.mulf %631, %635 : vector<8x32xf32>
    %637 = arith.index_cast %577 : i32 to index
    %c0_141 = arith.constant 0 : index
    %638 = vector.load %arg9[%637, %c0_141] : memref<128x32xf32, #tpu.memory_space<vmem>>, vector<8x32xf32>
    tpu.vector_store %arg9[%637, %c0_141], %636 {strides = array<i32>} : memref<128x32xf32, #tpu.memory_space<vmem>>, vector<8x32xf32>,
    %c10_i32 = arith.constant 10 : i32
    %c8_i32_142 = arith.constant 8 : i32
    %639 = arith.muli %c10_i32, %c8_i32_142 : i32
    %640 = arith.index_cast %639 : i32 to index
    %c0_143 = arith.constant 0 : index
    %641 = vector.load %arg8[%640, %c0_143] : memref<128x128xf32, #tpu.memory_space<vmem>>, vector<8x128xf32>
    %cst_144 = arith.constant dense<0.000000e+00> : vector<8x128xf32>
    %642 = tpu.matmul %606, %12, %cst_144 {dimension_numbers = #tpu.dot_dimension_numbers<[1], [0], [0], [1], [0, 0, 1, 1], [], []>} : vector<8x32xf32>, vector<32x128xf32>, vector<8x128xf32> -> vector<8x128xf32>
    %643 = arith.addf %641, %642 : vector<8x128xf32>
    %644 = vector.extract_strided_slice %643 {offsets = [0, 0], sizes = [8, 32], strides = [1, 1]} : vector<8x128xf32> to vector<8x32xf32>
    %645 = arith.negf %644 : vector<8x32xf32>
    %646 = math.exp %645 : vector<8x32xf32>
    %cst_145 = arith.constant 1.000000e+00 : f32
    %647 = vector.broadcast %cst_145 : f32 to vector<8x32xf32>
    %648 = arith.addf %647, %646 : vector<8x32xf32>
    %649 = arith.divf %647, %648 : vector<8x32xf32>
    %650 = vector.extract_strided_slice %643 {offsets = [0, 32], sizes = [8, 32], strides = [1, 1]} : vector<8x128xf32> to vector<8x32xf32>
    %651 = arith.negf %650 : vector<8x32xf32>
    %652 = math.exp %651 : vector<8x32xf32>
    %cst_146 = arith.constant 1.000000e+00 : f32
    %653 = vector.broadcast %cst_146 : f32 to vector<8x32xf32>
    %654 = arith.addf %653, %652 : vector<8x32xf32>
    %655 = arith.divf %653, %654 : vector<8x32xf32>
    %656 = vector.extract_strided_slice %643 {offsets = [0, 64], sizes = [8, 32], strides = [1, 1]} : vector<8x128xf32> to vector<8x32xf32>
    %657 = math.tanh %656 : vector<8x32xf32>
    %658 = vector.extract_strided_slice %643 {offsets = [0, 96], sizes = [8, 32], strides = [1, 1]} : vector<8x128xf32> to vector<8x32xf32>
    %659 = arith.negf %658 : vector<8x32xf32>
    %660 = math.exp %659 : vector<8x32xf32>
    %cst_147 = arith.constant 1.000000e+00 : f32
    %661 = vector.broadcast %cst_147 : f32 to vector<8x32xf32>
    %662 = arith.addf %661, %660 : vector<8x32xf32>
    %663 = arith.divf %661, %662 : vector<8x32xf32>
    %664 = arith.mulf %655, %604 : vector<8x32xf32>
    %665 = arith.mulf %649, %657 : vector<8x32xf32>
    %666 = arith.addf %664, %665 : vector<8x32xf32>
    %667 = math.tanh %666 : vector<8x32xf32>
    %668 = arith.mulf %663, %667 : vector<8x32xf32>
    %cst_148 = arith.constant dense<0.000000e+00> : vector<8x128xf32>
    %669 = tpu.matmul %668, %11, %cst_148 {dimension_numbers = #tpu.dot_dimension_numbers<[1], [0], [0], [1], [0, 0, 1, 1], [], []>} : vector<8x32xf32>, vector<32x128xf32>, vector<8x128xf32> -> vector<8x128xf32>
    %cst_149 = arith.constant dense<0.000000e+00> : vector<8x128xf32>
    %670 = tpu.matmul %636, %13, %cst_149 {dimension_numbers = #tpu.dot_dimension_numbers<[1], [0], [0], [1], [0, 0, 1, 1], [], []>} : vector<8x32xf32>, vector<32x128xf32>, vector<8x128xf32> -> vector<8x128xf32>
    %671 = arith.addf %669, %670 : vector<8x128xf32>
    %672 = vector.broadcast %14 : vector<1x128xf32> to vector<8x128xf32>
    %673 = arith.addf %671, %672 : vector<8x128xf32>
    %674 = vector.extract_strided_slice %673 {offsets = [0, 0], sizes = [8, 32], strides = [1, 1]} : vector<8x128xf32> to vector<8x32xf32>
    %675 = arith.negf %674 : vector<8x32xf32>
    %676 = math.exp %675 : vector<8x32xf32>
    %cst_150 = arith.constant 1.000000e+00 : f32
    %677 = vector.broadcast %cst_150 : f32 to vector<8x32xf32>
    %678 = arith.addf %677, %676 : vector<8x32xf32>
    %679 = arith.divf %677, %678 : vector<8x32xf32>
    %680 = vector.extract_strided_slice %673 {offsets = [0, 32], sizes = [8, 32], strides = [1, 1]} : vector<8x128xf32> to vector<8x32xf32>
    %681 = arith.negf %680 : vector<8x32xf32>
    %682 = math.exp %681 : vector<8x32xf32>
    %cst_151 = arith.constant 1.000000e+00 : f32
    %683 = vector.broadcast %cst_151 : f32 to vector<8x32xf32>
    %684 = arith.addf %683, %682 : vector<8x32xf32>
    %685 = arith.divf %683, %684 : vector<8x32xf32>
    %686 = vector.extract_strided_slice %673 {offsets = [0, 64], sizes = [8, 32], strides = [1, 1]} : vector<8x128xf32> to vector<8x32xf32>
    %687 = math.tanh %686 : vector<8x32xf32>
    %688 = vector.extract_strided_slice %673 {offsets = [0, 96], sizes = [8, 32], strides = [1, 1]} : vector<8x128xf32> to vector<8x32xf32>
    %689 = arith.negf %688 : vector<8x32xf32>
    %690 = math.exp %689 : vector<8x32xf32>
    %cst_152 = arith.constant 1.000000e+00 : f32
    %691 = vector.broadcast %cst_152 : f32 to vector<8x32xf32>
    %692 = arith.addf %691, %690 : vector<8x32xf32>
    %693 = arith.divf %691, %692 : vector<8x32xf32>
    %694 = arith.mulf %685, %634 : vector<8x32xf32>
    %695 = arith.mulf %679, %687 : vector<8x32xf32>
    %696 = arith.addf %694, %695 : vector<8x32xf32>
    %697 = math.tanh %696 : vector<8x32xf32>
    %698 = arith.mulf %693, %697 : vector<8x32xf32>
    %699 = arith.index_cast %639 : i32 to index
    %c0_153 = arith.constant 0 : index
    %700 = vector.load %arg9[%699, %c0_153] : memref<128x32xf32, #tpu.memory_space<vmem>>, vector<8x32xf32>
    tpu.vector_store %arg9[%699, %c0_153], %698 {strides = array<i32>} : memref<128x32xf32, #tpu.memory_space<vmem>>, vector<8x32xf32>,
    %c11_i32 = arith.constant 11 : i32
    %c8_i32_154 = arith.constant 8 : i32
    %701 = arith.muli %c11_i32, %c8_i32_154 : i32
    %702 = arith.index_cast %701 : i32 to index
    %c0_155 = arith.constant 0 : index
    %703 = vector.load %arg8[%702, %c0_155] : memref<128x128xf32, #tpu.memory_space<vmem>>, vector<8x128xf32>
    %cst_156 = arith.constant dense<0.000000e+00> : vector<8x128xf32>
    %704 = tpu.matmul %668, %12, %cst_156 {dimension_numbers = #tpu.dot_dimension_numbers<[1], [0], [0], [1], [0, 0, 1, 1], [], []>} : vector<8x32xf32>, vector<32x128xf32>, vector<8x128xf32> -> vector<8x128xf32>
    %705 = arith.addf %703, %704 : vector<8x128xf32>
    %706 = vector.extract_strided_slice %705 {offsets = [0, 0], sizes = [8, 32], strides = [1, 1]} : vector<8x128xf32> to vector<8x32xf32>
    %707 = arith.negf %706 : vector<8x32xf32>
    %708 = math.exp %707 : vector<8x32xf32>
    %cst_157 = arith.constant 1.000000e+00 : f32
    %709 = vector.broadcast %cst_157 : f32 to vector<8x32xf32>
    %710 = arith.addf %709, %708 : vector<8x32xf32>
    %711 = arith.divf %709, %710 : vector<8x32xf32>
    %712 = vector.extract_strided_slice %705 {offsets = [0, 32], sizes = [8, 32], strides = [1, 1]} : vector<8x128xf32> to vector<8x32xf32>
    %713 = arith.negf %712 : vector<8x32xf32>
    %714 = math.exp %713 : vector<8x32xf32>
    %cst_158 = arith.constant 1.000000e+00 : f32
    %715 = vector.broadcast %cst_158 : f32 to vector<8x32xf32>
    %716 = arith.addf %715, %714 : vector<8x32xf32>
    %717 = arith.divf %715, %716 : vector<8x32xf32>
    %718 = vector.extract_strided_slice %705 {offsets = [0, 64], sizes = [8, 32], strides = [1, 1]} : vector<8x128xf32> to vector<8x32xf32>
    %719 = math.tanh %718 : vector<8x32xf32>
    %720 = vector.extract_strided_slice %705 {offsets = [0, 96], sizes = [8, 32], strides = [1, 1]} : vector<8x128xf32> to vector<8x32xf32>
    %721 = arith.negf %720 : vector<8x32xf32>
    %722 = math.exp %721 : vector<8x32xf32>
    %cst_159 = arith.constant 1.000000e+00 : f32
    %723 = vector.broadcast %cst_159 : f32 to vector<8x32xf32>
    %724 = arith.addf %723, %722 : vector<8x32xf32>
    %725 = arith.divf %723, %724 : vector<8x32xf32>
    %726 = arith.mulf %717, %666 : vector<8x32xf32>
    %727 = arith.mulf %711, %719 : vector<8x32xf32>
    %728 = arith.addf %726, %727 : vector<8x32xf32>
    %729 = math.tanh %728 : vector<8x32xf32>
    %730 = arith.mulf %725, %729 : vector<8x32xf32>
    %cst_160 = arith.constant dense<0.000000e+00> : vector<8x128xf32>
    %731 = tpu.matmul %730, %11, %cst_160 {dimension_numbers = #tpu.dot_dimension_numbers<[1], [0], [0], [1], [0, 0, 1, 1], [], []>} : vector<8x32xf32>, vector<32x128xf32>, vector<8x128xf32> -> vector<8x128xf32>
    %cst_161 = arith.constant dense<0.000000e+00> : vector<8x128xf32>
    %732 = tpu.matmul %698, %13, %cst_161 {dimension_numbers = #tpu.dot_dimension_numbers<[1], [0], [0], [1], [0, 0, 1, 1], [], []>} : vector<8x32xf32>, vector<32x128xf32>, vector<8x128xf32> -> vector<8x128xf32>
    %733 = arith.addf %731, %732 : vector<8x128xf32>
    %734 = vector.broadcast %14 : vector<1x128xf32> to vector<8x128xf32>
    %735 = arith.addf %733, %734 : vector<8x128xf32>
    %736 = vector.extract_strided_slice %735 {offsets = [0, 0], sizes = [8, 32], strides = [1, 1]} : vector<8x128xf32> to vector<8x32xf32>
    %737 = arith.negf %736 : vector<8x32xf32>
    %738 = math.exp %737 : vector<8x32xf32>
    %cst_162 = arith.constant 1.000000e+00 : f32
    %739 = vector.broadcast %cst_162 : f32 to vector<8x32xf32>
    %740 = arith.addf %739, %738 : vector<8x32xf32>
    %741 = arith.divf %739, %740 : vector<8x32xf32>
    %742 = vector.extract_strided_slice %735 {offsets = [0, 32], sizes = [8, 32], strides = [1, 1]} : vector<8x128xf32> to vector<8x32xf32>
    %743 = arith.negf %742 : vector<8x32xf32>
    %744 = math.exp %743 : vector<8x32xf32>
    %cst_163 = arith.constant 1.000000e+00 : f32
    %745 = vector.broadcast %cst_163 : f32 to vector<8x32xf32>
    %746 = arith.addf %745, %744 : vector<8x32xf32>
    %747 = arith.divf %745, %746 : vector<8x32xf32>
    %748 = vector.extract_strided_slice %735 {offsets = [0, 64], sizes = [8, 32], strides = [1, 1]} : vector<8x128xf32> to vector<8x32xf32>
    %749 = math.tanh %748 : vector<8x32xf32>
    %750 = vector.extract_strided_slice %735 {offsets = [0, 96], sizes = [8, 32], strides = [1, 1]} : vector<8x128xf32> to vector<8x32xf32>
    %751 = arith.negf %750 : vector<8x32xf32>
    %752 = math.exp %751 : vector<8x32xf32>
    %cst_164 = arith.constant 1.000000e+00 : f32
    %753 = vector.broadcast %cst_164 : f32 to vector<8x32xf32>
    %754 = arith.addf %753, %752 : vector<8x32xf32>
    %755 = arith.divf %753, %754 : vector<8x32xf32>
    %756 = arith.mulf %747, %696 : vector<8x32xf32>
    %757 = arith.mulf %741, %749 : vector<8x32xf32>
    %758 = arith.addf %756, %757 : vector<8x32xf32>
    %759 = math.tanh %758 : vector<8x32xf32>
    %760 = arith.mulf %755, %759 : vector<8x32xf32>
    %761 = arith.index_cast %701 : i32 to index
    %c0_165 = arith.constant 0 : index
    %762 = vector.load %arg9[%761, %c0_165] : memref<128x32xf32, #tpu.memory_space<vmem>>, vector<8x32xf32>
    tpu.vector_store %arg9[%761, %c0_165], %760 {strides = array<i32>} : memref<128x32xf32, #tpu.memory_space<vmem>>, vector<8x32xf32>,
    %c12_i32 = arith.constant 12 : i32
    %c8_i32_166 = arith.constant 8 : i32
    %763 = arith.muli %c12_i32, %c8_i32_166 : i32
    %764 = arith.index_cast %763 : i32 to index
    %c0_167 = arith.constant 0 : index
    %765 = vector.load %arg8[%764, %c0_167] : memref<128x128xf32, #tpu.memory_space<vmem>>, vector<8x128xf32>
    %cst_168 = arith.constant dense<0.000000e+00> : vector<8x128xf32>
    %766 = tpu.matmul %730, %12, %cst_168 {dimension_numbers = #tpu.dot_dimension_numbers<[1], [0], [0], [1], [0, 0, 1, 1], [], []>} : vector<8x32xf32>, vector<32x128xf32>, vector<8x128xf32> -> vector<8x128xf32>
    %767 = arith.addf %765, %766 : vector<8x128xf32>
    %768 = vector.extract_strided_slice %767 {offsets = [0, 0], sizes = [8, 32], strides = [1, 1]} : vector<8x128xf32> to vector<8x32xf32>
    %769 = arith.negf %768 : vector<8x32xf32>
    %770 = math.exp %769 : vector<8x32xf32>
    %cst_169 = arith.constant 1.000000e+00 : f32
    %771 = vector.broadcast %cst_169 : f32 to vector<8x32xf32>
    %772 = arith.addf %771, %770 : vector<8x32xf32>
    %773 = arith.divf %771, %772 : vector<8x32xf32>
    %774 = vector.extract_strided_slice %767 {offsets = [0, 32], sizes = [8, 32], strides = [1, 1]} : vector<8x128xf32> to vector<8x32xf32>
    %775 = arith.negf %774 : vector<8x32xf32>
    %776 = math.exp %775 : vector<8x32xf32>
    %cst_170 = arith.constant 1.000000e+00 : f32
    %777 = vector.broadcast %cst_170 : f32 to vector<8x32xf32>
    %778 = arith.addf %777, %776 : vector<8x32xf32>
    %779 = arith.divf %777, %778 : vector<8x32xf32>
    %780 = vector.extract_strided_slice %767 {offsets = [0, 64], sizes = [8, 32], strides = [1, 1]} : vector<8x128xf32> to vector<8x32xf32>
    %781 = math.tanh %780 : vector<8x32xf32>
    %782 = vector.extract_strided_slice %767 {offsets = [0, 96], sizes = [8, 32], strides = [1, 1]} : vector<8x128xf32> to vector<8x32xf32>
    %783 = arith.negf %782 : vector<8x32xf32>
    %784 = math.exp %783 : vector<8x32xf32>
    %cst_171 = arith.constant 1.000000e+00 : f32
    %785 = vector.broadcast %cst_171 : f32 to vector<8x32xf32>
    %786 = arith.addf %785, %784 : vector<8x32xf32>
    %787 = arith.divf %785, %786 : vector<8x32xf32>
    %788 = arith.mulf %779, %728 : vector<8x32xf32>
    %789 = arith.mulf %773, %781 : vector<8x32xf32>
    %790 = arith.addf %788, %789 : vector<8x32xf32>
    %791 = math.tanh %790 : vector<8x32xf32>
    %792 = arith.mulf %787, %791 : vector<8x32xf32>
    %cst_172 = arith.constant dense<0.000000e+00> : vector<8x128xf32>
    %793 = tpu.matmul %792, %11, %cst_172 {dimension_numbers = #tpu.dot_dimension_numbers<[1], [0], [0], [1], [0, 0, 1, 1], [], []>} : vector<8x32xf32>, vector<32x128xf32>, vector<8x128xf32> -> vector<8x128xf32>
    %cst_173 = arith.constant dense<0.000000e+00> : vector<8x128xf32>
    %794 = tpu.matmul %760, %13, %cst_173 {dimension_numbers = #tpu.dot_dimension_numbers<[1], [0], [0], [1], [0, 0, 1, 1], [], []>} : vector<8x32xf32>, vector<32x128xf32>, vector<8x128xf32> -> vector<8x128xf32>
    %795 = arith.addf %793, %794 : vector<8x128xf32>
    %796 = vector.broadcast %14 : vector<1x128xf32> to vector<8x128xf32>
    %797 = arith.addf %795, %796 : vector<8x128xf32>
    %798 = vector.extract_strided_slice %797 {offsets = [0, 0], sizes = [8, 32], strides = [1, 1]} : vector<8x128xf32> to vector<8x32xf32>
    %799 = arith.negf %798 : vector<8x32xf32>
    %800 = math.exp %799 : vector<8x32xf32>
    %cst_174 = arith.constant 1.000000e+00 : f32
    %801 = vector.broadcast %cst_174 : f32 to vector<8x32xf32>
    %802 = arith.addf %801, %800 : vector<8x32xf32>
    %803 = arith.divf %801, %802 : vector<8x32xf32>
    %804 = vector.extract_strided_slice %797 {offsets = [0, 32], sizes = [8, 32], strides = [1, 1]} : vector<8x128xf32> to vector<8x32xf32>
    %805 = arith.negf %804 : vector<8x32xf32>
    %806 = math.exp %805 : vector<8x32xf32>
    %cst_175 = arith.constant 1.000000e+00 : f32
    %807 = vector.broadcast %cst_175 : f32 to vector<8x32xf32>
    %808 = arith.addf %807, %806 : vector<8x32xf32>
    %809 = arith.divf %807, %808 : vector<8x32xf32>
    %810 = vector.extract_strided_slice %797 {offsets = [0, 64], sizes = [8, 32], strides = [1, 1]} : vector<8x128xf32> to vector<8x32xf32>
    %811 = math.tanh %810 : vector<8x32xf32>
    %812 = vector.extract_strided_slice %797 {offsets = [0, 96], sizes = [8, 32], strides = [1, 1]} : vector<8x128xf32> to vector<8x32xf32>
    %813 = arith.negf %812 : vector<8x32xf32>
    %814 = math.exp %813 : vector<8x32xf32>
    %cst_176 = arith.constant 1.000000e+00 : f32
    %815 = vector.broadcast %cst_176 : f32 to vector<8x32xf32>
    %816 = arith.addf %815, %814 : vector<8x32xf32>
    %817 = arith.divf %815, %816 : vector<8x32xf32>
    %818 = arith.mulf %809, %758 : vector<8x32xf32>
    %819 = arith.mulf %803, %811 : vector<8x32xf32>
    %820 = arith.addf %818, %819 : vector<8x32xf32>
    %821 = math.tanh %820 : vector<8x32xf32>
    %822 = arith.mulf %817, %821 : vector<8x32xf32>
    %823 = arith.index_cast %763 : i32 to index
    %c0_177 = arith.constant 0 : index
    %824 = vector.load %arg9[%823, %c0_177] : memref<128x32xf32, #tpu.memory_space<vmem>>, vector<8x32xf32>
    tpu.vector_store %arg9[%823, %c0_177], %822 {strides = array<i32>} : memref<128x32xf32, #tpu.memory_space<vmem>>, vector<8x32xf32>,
    %c13_i32 = arith.constant 13 : i32
    %c8_i32_178 = arith.constant 8 : i32
    %825 = arith.muli %c13_i32, %c8_i32_178 : i32
    %826 = arith.index_cast %825 : i32 to index
    %c0_179 = arith.constant 0 : index
    %827 = vector.load %arg8[%826, %c0_179] : memref<128x128xf32, #tpu.memory_space<vmem>>, vector<8x128xf32>
    %cst_180 = arith.constant dense<0.000000e+00> : vector<8x128xf32>
    %828 = tpu.matmul %792, %12, %cst_180 {dimension_numbers = #tpu.dot_dimension_numbers<[1], [0], [0], [1], [0, 0, 1, 1], [], []>} : vector<8x32xf32>, vector<32x128xf32>, vector<8x128xf32> -> vector<8x128xf32>
    %829 = arith.addf %827, %828 : vector<8x128xf32>
    %830 = vector.extract_strided_slice %829 {offsets = [0, 0], sizes = [8, 32], strides = [1, 1]} : vector<8x128xf32> to vector<8x32xf32>
    %831 = arith.negf %830 : vector<8x32xf32>
    %832 = math.exp %831 : vector<8x32xf32>
    %cst_181 = arith.constant 1.000000e+00 : f32
    %833 = vector.broadcast %cst_181 : f32 to vector<8x32xf32>
    %834 = arith.addf %833, %832 : vector<8x32xf32>
    %835 = arith.divf %833, %834 : vector<8x32xf32>
    %836 = vector.extract_strided_slice %829 {offsets = [0, 32], sizes = [8, 32], strides = [1, 1]} : vector<8x128xf32> to vector<8x32xf32>
    %837 = arith.negf %836 : vector<8x32xf32>
    %838 = math.exp %837 : vector<8x32xf32>
    %cst_182 = arith.constant 1.000000e+00 : f32
    %839 = vector.broadcast %cst_182 : f32 to vector<8x32xf32>
    %840 = arith.addf %839, %838 : vector<8x32xf32>
    %841 = arith.divf %839, %840 : vector<8x32xf32>
    %842 = vector.extract_strided_slice %829 {offsets = [0, 64], sizes = [8, 32], strides = [1, 1]} : vector<8x128xf32> to vector<8x32xf32>
    %843 = math.tanh %842 : vector<8x32xf32>
    %844 = vector.extract_strided_slice %829 {offsets = [0, 96], sizes = [8, 32], strides = [1, 1]} : vector<8x128xf32> to vector<8x32xf32>
    %845 = arith.negf %844 : vector<8x32xf32>
    %846 = math.exp %845 : vector<8x32xf32>
    %cst_183 = arith.constant 1.000000e+00 : f32
    %847 = vector.broadcast %cst_183 : f32 to vector<8x32xf32>
    %848 = arith.addf %847, %846 : vector<8x32xf32>
    %849 = arith.divf %847, %848 : vector<8x32xf32>
    %850 = arith.mulf %841, %790 : vector<8x32xf32>
    %851 = arith.mulf %835, %843 : vector<8x32xf32>
    %852 = arith.addf %850, %851 : vector<8x32xf32>
    %853 = math.tanh %852 : vector<8x32xf32>
    %854 = arith.mulf %849, %853 : vector<8x32xf32>
    %cst_184 = arith.constant dense<0.000000e+00> : vector<8x128xf32>
    %855 = tpu.matmul %854, %11, %cst_184 {dimension_numbers = #tpu.dot_dimension_numbers<[1], [0], [0], [1], [0, 0, 1, 1], [], []>} : vector<8x32xf32>, vector<32x128xf32>, vector<8x128xf32> -> vector<8x128xf32>
    %cst_185 = arith.constant dense<0.000000e+00> : vector<8x128xf32>
    %856 = tpu.matmul %822, %13, %cst_185 {dimension_numbers = #tpu.dot_dimension_numbers<[1], [0], [0], [1], [0, 0, 1, 1], [], []>} : vector<8x32xf32>, vector<32x128xf32>, vector<8x128xf32> -> vector<8x128xf32>
    %857 = arith.addf %855, %856 : vector<8x128xf32>
    %858 = vector.broadcast %14 : vector<1x128xf32> to vector<8x128xf32>
    %859 = arith.addf %857, %858 : vector<8x128xf32>
    %860 = vector.extract_strided_slice %859 {offsets = [0, 0], sizes = [8, 32], strides = [1, 1]} : vector<8x128xf32> to vector<8x32xf32>
    %861 = arith.negf %860 : vector<8x32xf32>
    %862 = math.exp %861 : vector<8x32xf32>
    %cst_186 = arith.constant 1.000000e+00 : f32
    %863 = vector.broadcast %cst_186 : f32 to vector<8x32xf32>
    %864 = arith.addf %863, %862 : vector<8x32xf32>
    %865 = arith.divf %863, %864 : vector<8x32xf32>
    %866 = vector.extract_strided_slice %859 {offsets = [0, 32], sizes = [8, 32], strides = [1, 1]} : vector<8x128xf32> to vector<8x32xf32>
    %867 = arith.negf %866 : vector<8x32xf32>
    %868 = math.exp %867 : vector<8x32xf32>
    %cst_187 = arith.constant 1.000000e+00 : f32
    %869 = vector.broadcast %cst_187 : f32 to vector<8x32xf32>
    %870 = arith.addf %869, %868 : vector<8x32xf32>
    %871 = arith.divf %869, %870 : vector<8x32xf32>
    %872 = vector.extract_strided_slice %859 {offsets = [0, 64], sizes = [8, 32], strides = [1, 1]} : vector<8x128xf32> to vector<8x32xf32>
    %873 = math.tanh %872 : vector<8x32xf32>
    %874 = vector.extract_strided_slice %859 {offsets = [0, 96], sizes = [8, 32], strides = [1, 1]} : vector<8x128xf32> to vector<8x32xf32>
    %875 = arith.negf %874 : vector<8x32xf32>
    %876 = math.exp %875 : vector<8x32xf32>
    %cst_188 = arith.constant 1.000000e+00 : f32
    %877 = vector.broadcast %cst_188 : f32 to vector<8x32xf32>
    %878 = arith.addf %877, %876 : vector<8x32xf32>
    %879 = arith.divf %877, %878 : vector<8x32xf32>
    %880 = arith.mulf %871, %820 : vector<8x32xf32>
    %881 = arith.mulf %865, %873 : vector<8x32xf32>
    %882 = arith.addf %880, %881 : vector<8x32xf32>
    %883 = math.tanh %882 : vector<8x32xf32>
    %884 = arith.mulf %879, %883 : vector<8x32xf32>
    %885 = arith.index_cast %825 : i32 to index
    %c0_189 = arith.constant 0 : index
    %886 = vector.load %arg9[%885, %c0_189] : memref<128x32xf32, #tpu.memory_space<vmem>>, vector<8x32xf32>
    tpu.vector_store %arg9[%885, %c0_189], %884 {strides = array<i32>} : memref<128x32xf32, #tpu.memory_space<vmem>>, vector<8x32xf32>,
    %c14_i32 = arith.constant 14 : i32
    %c8_i32_190 = arith.constant 8 : i32
    %887 = arith.muli %c14_i32, %c8_i32_190 : i32
    %888 = arith.index_cast %887 : i32 to index
    %c0_191 = arith.constant 0 : index
    %889 = vector.load %arg8[%888, %c0_191] : memref<128x128xf32, #tpu.memory_space<vmem>>, vector<8x128xf32>
    %cst_192 = arith.constant dense<0.000000e+00> : vector<8x128xf32>
    %890 = tpu.matmul %854, %12, %cst_192 {dimension_numbers = #tpu.dot_dimension_numbers<[1], [0], [0], [1], [0, 0, 1, 1], [], []>} : vector<8x32xf32>, vector<32x128xf32>, vector<8x128xf32> -> vector<8x128xf32>
    %891 = arith.addf %889, %890 : vector<8x128xf32>
    %892 = vector.extract_strided_slice %891 {offsets = [0, 0], sizes = [8, 32], strides = [1, 1]} : vector<8x128xf32> to vector<8x32xf32>
    %893 = arith.negf %892 : vector<8x32xf32>
    %894 = math.exp %893 : vector<8x32xf32>
    %cst_193 = arith.constant 1.000000e+00 : f32
    %895 = vector.broadcast %cst_193 : f32 to vector<8x32xf32>
    %896 = arith.addf %895, %894 : vector<8x32xf32>
    %897 = arith.divf %895, %896 : vector<8x32xf32>
    %898 = vector.extract_strided_slice %891 {offsets = [0, 32], sizes = [8, 32], strides = [1, 1]} : vector<8x128xf32> to vector<8x32xf32>
    %899 = arith.negf %898 : vector<8x32xf32>
    %900 = math.exp %899 : vector<8x32xf32>
    %cst_194 = arith.constant 1.000000e+00 : f32
    %901 = vector.broadcast %cst_194 : f32 to vector<8x32xf32>
    %902 = arith.addf %901, %900 : vector<8x32xf32>
    %903 = arith.divf %901, %902 : vector<8x32xf32>
    %904 = vector.extract_strided_slice %891 {offsets = [0, 64], sizes = [8, 32], strides = [1, 1]} : vector<8x128xf32> to vector<8x32xf32>
    %905 = math.tanh %904 : vector<8x32xf32>
    %906 = vector.extract_strided_slice %891 {offsets = [0, 96], sizes = [8, 32], strides = [1, 1]} : vector<8x128xf32> to vector<8x32xf32>
    %907 = arith.negf %906 : vector<8x32xf32>
    %908 = math.exp %907 : vector<8x32xf32>
    %cst_195 = arith.constant 1.000000e+00 : f32
    %909 = vector.broadcast %cst_195 : f32 to vector<8x32xf32>
    %910 = arith.addf %909, %908 : vector<8x32xf32>
    %911 = arith.divf %909, %910 : vector<8x32xf32>
    %912 = arith.mulf %903, %852 : vector<8x32xf32>
    %913 = arith.mulf %897, %905 : vector<8x32xf32>
    %914 = arith.addf %912, %913 : vector<8x32xf32>
    %915 = math.tanh %914 : vector<8x32xf32>
    %916 = arith.mulf %911, %915 : vector<8x32xf32>
    %cst_196 = arith.constant dense<0.000000e+00> : vector<8x128xf32>
    %917 = tpu.matmul %916, %11, %cst_196 {dimension_numbers = #tpu.dot_dimension_numbers<[1], [0], [0], [1], [0, 0, 1, 1], [], []>} : vector<8x32xf32>, vector<32x128xf32>, vector<8x128xf32> -> vector<8x128xf32>
    %cst_197 = arith.constant dense<0.000000e+00> : vector<8x128xf32>
    %918 = tpu.matmul %884, %13, %cst_197 {dimension_numbers = #tpu.dot_dimension_numbers<[1], [0], [0], [1], [0, 0, 1, 1], [], []>} : vector<8x32xf32>, vector<32x128xf32>, vector<8x128xf32> -> vector<8x128xf32>
    %919 = arith.addf %917, %918 : vector<8x128xf32>
    %920 = vector.broadcast %14 : vector<1x128xf32> to vector<8x128xf32>
    %921 = arith.addf %919, %920 : vector<8x128xf32>
    %922 = vector.extract_strided_slice %921 {offsets = [0, 0], sizes = [8, 32], strides = [1, 1]} : vector<8x128xf32> to vector<8x32xf32>
    %923 = arith.negf %922 : vector<8x32xf32>
    %924 = math.exp %923 : vector<8x32xf32>
    %cst_198 = arith.constant 1.000000e+00 : f32
    %925 = vector.broadcast %cst_198 : f32 to vector<8x32xf32>
    %926 = arith.addf %925, %924 : vector<8x32xf32>
    %927 = arith.divf %925, %926 : vector<8x32xf32>
    %928 = vector.extract_strided_slice %921 {offsets = [0, 32], sizes = [8, 32], strides = [1, 1]} : vector<8x128xf32> to vector<8x32xf32>
    %929 = arith.negf %928 : vector<8x32xf32>
    %930 = math.exp %929 : vector<8x32xf32>
    %cst_199 = arith.constant 1.000000e+00 : f32
    %931 = vector.broadcast %cst_199 : f32 to vector<8x32xf32>
    %932 = arith.addf %931, %930 : vector<8x32xf32>
    %933 = arith.divf %931, %932 : vector<8x32xf32>
    %934 = vector.extract_strided_slice %921 {offsets = [0, 64], sizes = [8, 32], strides = [1, 1]} : vector<8x128xf32> to vector<8x32xf32>
    %935 = math.tanh %934 : vector<8x32xf32>
    %936 = vector.extract_strided_slice %921 {offsets = [0, 96], sizes = [8, 32], strides = [1, 1]} : vector<8x128xf32> to vector<8x32xf32>
    %937 = arith.negf %936 : vector<8x32xf32>
    %938 = math.exp %937 : vector<8x32xf32>
    %cst_200 = arith.constant 1.000000e+00 : f32
    %939 = vector.broadcast %cst_200 : f32 to vector<8x32xf32>
    %940 = arith.addf %939, %938 : vector<8x32xf32>
    %941 = arith.divf %939, %940 : vector<8x32xf32>
    %942 = arith.mulf %933, %882 : vector<8x32xf32>
    %943 = arith.mulf %927, %935 : vector<8x32xf32>
    %944 = arith.addf %942, %943 : vector<8x32xf32>
    %945 = math.tanh %944 : vector<8x32xf32>
    %946 = arith.mulf %941, %945 : vector<8x32xf32>
    %947 = arith.index_cast %887 : i32 to index
    %c0_201 = arith.constant 0 : index
    %948 = vector.load %arg9[%947, %c0_201] : memref<128x32xf32, #tpu.memory_space<vmem>>, vector<8x32xf32>
    tpu.vector_store %arg9[%947, %c0_201], %946 {strides = array<i32>} : memref<128x32xf32, #tpu.memory_space<vmem>>, vector<8x32xf32>,
    %c15_i32 = arith.constant 15 : i32
    %c8_i32_202 = arith.constant 8 : i32
    %949 = arith.muli %c15_i32, %c8_i32_202 : i32
    %950 = arith.index_cast %949 : i32 to index
    %c0_203 = arith.constant 0 : index
    %951 = vector.load %arg8[%950, %c0_203] : memref<128x128xf32, #tpu.memory_space<vmem>>, vector<8x128xf32>
    %cst_204 = arith.constant dense<0.000000e+00> : vector<8x128xf32>
    %952 = tpu.matmul %916, %12, %cst_204 {dimension_numbers = #tpu.dot_dimension_numbers<[1], [0], [0], [1], [0, 0, 1, 1], [], []>} : vector<8x32xf32>, vector<32x128xf32>, vector<8x128xf32> -> vector<8x128xf32>
    %953 = arith.addf %951, %952 : vector<8x128xf32>
    %954 = vector.extract_strided_slice %953 {offsets = [0, 0], sizes = [8, 32], strides = [1, 1]} : vector<8x128xf32> to vector<8x32xf32>
    %955 = arith.negf %954 : vector<8x32xf32>
    %956 = math.exp %955 : vector<8x32xf32>
    %cst_205 = arith.constant 1.000000e+00 : f32
    %957 = vector.broadcast %cst_205 : f32 to vector<8x32xf32>
    %958 = arith.addf %957, %956 : vector<8x32xf32>
    %959 = arith.divf %957, %958 : vector<8x32xf32>
    %960 = vector.extract_strided_slice %953 {offsets = [0, 32], sizes = [8, 32], strides = [1, 1]} : vector<8x128xf32> to vector<8x32xf32>
    %961 = arith.negf %960 : vector<8x32xf32>
    %962 = math.exp %961 : vector<8x32xf32>
    %cst_206 = arith.constant 1.000000e+00 : f32
    %963 = vector.broadcast %cst_206 : f32 to vector<8x32xf32>
    %964 = arith.addf %963, %962 : vector<8x32xf32>
    %965 = arith.divf %963, %964 : vector<8x32xf32>
    %966 = vector.extract_strided_slice %953 {offsets = [0, 64], sizes = [8, 32], strides = [1, 1]} : vector<8x128xf32> to vector<8x32xf32>
    %967 = math.tanh %966 : vector<8x32xf32>
    %968 = vector.extract_strided_slice %953 {offsets = [0, 96], sizes = [8, 32], strides = [1, 1]} : vector<8x128xf32> to vector<8x32xf32>
    %969 = arith.negf %968 : vector<8x32xf32>
    %970 = math.exp %969 : vector<8x32xf32>
    %cst_207 = arith.constant 1.000000e+00 : f32
    %971 = vector.broadcast %cst_207 : f32 to vector<8x32xf32>
    %972 = arith.addf %971, %970 : vector<8x32xf32>
    %973 = arith.divf %971, %972 : vector<8x32xf32>
    %974 = arith.mulf %965, %914 : vector<8x32xf32>
    %975 = arith.mulf %959, %967 : vector<8x32xf32>
    %976 = arith.addf %974, %975 : vector<8x32xf32>
    %977 = math.tanh %976 : vector<8x32xf32>
    %978 = arith.mulf %973, %977 : vector<8x32xf32>
    %cst_208 = arith.constant dense<0.000000e+00> : vector<8x128xf32>
    %979 = tpu.matmul %978, %11, %cst_208 {dimension_numbers = #tpu.dot_dimension_numbers<[1], [0], [0], [1], [0, 0, 1, 1], [], []>} : vector<8x32xf32>, vector<32x128xf32>, vector<8x128xf32> -> vector<8x128xf32>
    %cst_209 = arith.constant dense<0.000000e+00> : vector<8x128xf32>
    %980 = tpu.matmul %946, %13, %cst_209 {dimension_numbers = #tpu.dot_dimension_numbers<[1], [0], [0], [1], [0, 0, 1, 1], [], []>} : vector<8x32xf32>, vector<32x128xf32>, vector<8x128xf32> -> vector<8x128xf32>
    %981 = arith.addf %979, %980 : vector<8x128xf32>
    %982 = vector.broadcast %14 : vector<1x128xf32> to vector<8x128xf32>
    %983 = arith.addf %981, %982 : vector<8x128xf32>
    %984 = vector.extract_strided_slice %983 {offsets = [0, 0], sizes = [8, 32], strides = [1, 1]} : vector<8x128xf32> to vector<8x32xf32>
    %985 = arith.negf %984 : vector<8x32xf32>
    %986 = math.exp %985 : vector<8x32xf32>
    %cst_210 = arith.constant 1.000000e+00 : f32
    %987 = vector.broadcast %cst_210 : f32 to vector<8x32xf32>
    %988 = arith.addf %987, %986 : vector<8x32xf32>
    %989 = arith.divf %987, %988 : vector<8x32xf32>
    %990 = vector.extract_strided_slice %983 {offsets = [0, 32], sizes = [8, 32], strides = [1, 1]} : vector<8x128xf32> to vector<8x32xf32>
    %991 = arith.negf %990 : vector<8x32xf32>
    %992 = math.exp %991 : vector<8x32xf32>
    %cst_211 = arith.constant 1.000000e+00 : f32
    %993 = vector.broadcast %cst_211 : f32 to vector<8x32xf32>
    %994 = arith.addf %993, %992 : vector<8x32xf32>
    %995 = arith.divf %993, %994 : vector<8x32xf32>
    %996 = vector.extract_strided_slice %983 {offsets = [0, 64], sizes = [8, 32], strides = [1, 1]} : vector<8x128xf32> to vector<8x32xf32>
    %997 = math.tanh %996 : vector<8x32xf32>
    %998 = vector.extract_strided_slice %983 {offsets = [0, 96], sizes = [8, 32], strides = [1, 1]} : vector<8x128xf32> to vector<8x32xf32>
    %999 = arith.negf %998 : vector<8x32xf32>
    %1000 = math.exp %999 : vector<8x32xf32>
    %cst_212 = arith.constant 1.000000e+00 : f32
    %1001 = vector.broadcast %cst_212 : f32 to vector<8x32xf32>
    %1002 = arith.addf %1001, %1000 : vector<8x32xf32>
    %1003 = arith.divf %1001, %1002 : vector<8x32xf32>
    %1004 = arith.mulf %995, %944 : vector<8x32xf32>
    %1005 = arith.mulf %989, %997 : vector<8x32xf32>
    %1006 = arith.addf %1004, %1005 : vector<8x32xf32>
    %1007 = math.tanh %1006 : vector<8x32xf32>
    %1008 = arith.mulf %1003, %1007 : vector<8x32xf32>
    %1009 = arith.index_cast %949 : i32 to index
    %c0_213 = arith.constant 0 : index
    %1010 = vector.load %arg9[%1009, %c0_213] : memref<128x32xf32, #tpu.memory_space<vmem>>, vector<8x32xf32>
    tpu.vector_store %arg9[%1009, %c0_213], %1008 {strides = array<i32>} : memref<128x32xf32, #tpu.memory_space<vmem>>, vector<8x32xf32>,
    %c16_i32 = arith.constant 16 : i32
    %c0_214 = arith.constant 0 : index
    %c0_215 = arith.constant 0 : index
    %1011 = vector.load %arg10[%c0_214, %c0_215] : memref<8x32xf32, #tpu.memory_space<vmem>>, vector<8x32xf32>
    tpu.vector_store %arg10[%c0_214, %c0_215], %978 {strides = array<i32>} : memref<8x32xf32, #tpu.memory_space<vmem>>, vector<8x32xf32>,
    %c0_216 = arith.constant 0 : index
    %c0_217 = arith.constant 0 : index
    %1012 = vector.load %arg11[%c0_216, %c0_217] : memref<8x32xf32, #tpu.memory_space<vmem>>, vector<8x32xf32>
    tpu.vector_store %arg11[%c0_216, %c0_217], %976 {strides = array<i32>} : memref<8x32xf32, #tpu.memory_space<vmem>>, vector<8x32xf32>,
    %c0_218 = arith.constant 0 : index
    %c0_219 = arith.constant 0 : index
    %1013 = vector.load %arg12[%c0_218, %c0_219] : memref<8x32xf32, #tpu.memory_space<vmem>>, vector<8x32xf32>
    tpu.vector_store %arg12[%c0_218, %c0_219], %1008 {strides = array<i32>} : memref<8x32xf32, #tpu.memory_space<vmem>>, vector<8x32xf32>,
    %c0_220 = arith.constant 0 : index
    %c0_221 = arith.constant 0 : index
    %1014 = vector.load %arg13[%c0_220, %c0_221] : memref<8x32xf32, #tpu.memory_space<vmem>>, vector<8x32xf32>
    tpu.vector_store %arg13[%c0_220, %c0_221], %1006 {strides = array<i32>} : memref<8x32xf32, #tpu.memory_space<vmem>>, vector<8x32xf32>,
    %c0_222 = arith.constant 0 : index
    %c0_223 = arith.constant 0 : index
    %1015 = vector.load %arg9[%c0_222, %c0_223] : memref<128x32xf32, #tpu.memory_space<vmem>>, vector<128x32xf32>
    %c0_224 = arith.constant 0 : index
    %c0_225 = arith.constant 0 : index
    %1016 = vector.load %arg5[%c0_224, %c0_225] : memref<32x128xf32, #tpu.memory_space<vmem>>, vector<32x128xf32>
    %cst_226 = arith.constant dense<0.000000e+00> : vector<128x128xf32>
    %1017 = tpu.matmul %1015, %1016, %cst_226 {dimension_numbers = #tpu.dot_dimension_numbers<[1], [0], [0], [1], [0, 0, 1, 1], [], []>} : vector<128x32xf32>, vector<32x128xf32>, vector<128x128xf32> -> vector<128x128xf32>
    %c0_227 = arith.constant 0 : index
    %c0_228 = arith.constant 0 : index
    %1018 = vector.load %arg6[%c0_227, %c0_228] : memref<1x128xf32, #tpu.memory_space<vmem>>, vector<1x128xf32>
    %1019 = vector.broadcast %1018 : vector<1x128xf32> to vector<128x128xf32>
    %1020 = arith.addf %1017, %1019 : vector<128x128xf32>
    %cst_229 = arith.constant dense<0xFF800000> : vector<128xf32>
    %1021 = vector.multi_reduction <maximumf>, %1020, %cst_229 [1] : vector<128x128xf32> to vector<128xf32>
    %1022 = vector.shape_cast %1021 : vector<128xf32> to vector<128x1xf32>
    %1023 = vector.broadcast %1022 : vector<128x1xf32> to vector<128x128xf32>
    %1024 = arith.subf %1020, %1023 : vector<128x128xf32>
    %1025 = math.exp %1024 : vector<128x128xf32>
    %cst_230 = arith.constant dense<0.000000e+00> : vector<128xf32>
    %1026 = vector.multi_reduction <add>, %1025, %cst_230 [1] : vector<128x128xf32> to vector<128xf32>
    %1027 = vector.shape_cast %1026 : vector<128xf32> to vector<128x1xf32>
    %1028 = math.log %1027 : vector<128x1xf32>
    %1029 = vector.broadcast %1028 : vector<128x1xf32> to vector<128x128xf32>
    %1030 = arith.subf %1024, %1029 : vector<128x128xf32>
    %1031 = vector.shape_cast %1030 : vector<128x128xf32> to vector<16x8x128xf32>
    %c0_231 = arith.constant 0 : index
    %c0_232 = arith.constant 0 : index
    %c0_233 = arith.constant 0 : index
    %1032 = vector.load %arg7[%c0_231, %c0_232, %c0_233] : memref<16x8x128xf32, #tpu.memory_space<vmem>>, vector<16x8x128xf32>
    tpu.vector_store %arg7[%c0_231, %c0_232, %c0_233], %1031 {strides = array<i32>} : memref<16x8x128xf32, #tpu.memory_space<vmem>>, vector<16x8x128xf32>,
    return
  }
  func.func @transform_0(%arg0: i32, %arg1: i32) -> (i32, i32, i32) {
    %c0_i32 = arith.constant 0 : i32
    %c0_i32_0 = arith.constant 0 : i32
    return %arg1, %arg0, %c0_i32 : i32, i32, i32
  }
  func.func @transform_1(%arg0: i32, %arg1: i32) -> (i32, i32) {
    %c0_i32 = arith.constant 0 : i32
    %c0_i32_0 = arith.constant 0 : i32
    %c0_i32_1 = arith.constant 0 : i32
    return %c0_i32, %c0_i32_0 : i32, i32
  }
  func.func @transform_2(%arg0: i32, %arg1: i32) -> (i32, i32) {
    %c0_i32 = arith.constant 0 : i32
    %c0_i32_0 = arith.constant 0 : i32
    %c0_i32_1 = arith.constant 0 : i32
    return %c0_i32, %c0_i32_0 : i32, i32
  }
  func.func @transform_3(%arg0: i32, %arg1: i32) -> (i32, i32) {
    %c0_i32 = arith.constant 0 : i32
    %c0_i32_0 = arith.constant 0 : i32
    %c0_i32_1 = arith.constant 0 : i32
    return %c0_i32, %c0_i32_0 : i32, i32
  }
  func.func @transform_4(%arg0: i32, %arg1: i32) -> (i32, i32) {
    %c0_i32 = arith.constant 0 : i32
    %c0_i32_0 = arith.constant 0 : i32
    %c0_i32_1 = arith.constant 0 : i32
    return %c0_i32, %c0_i32_0 : i32, i32
  }
  func.func @transform_5(%arg0: i32, %arg1: i32) -> (i32, i32, i32) {
    %c0_i32 = arith.constant 0 : i32
    %c0_i32_0 = arith.constant 0 : i32
    return %arg1, %arg0, %c0_i32 : i32, i32, i32
  }
}

</mosaic_0001>

<llo_original>
// kernel: lstm_asr_forward.1
$region0: #{lstm_asr_forward.1}
  #allocation0 [shape = 'u32[]', space=smem, size = 0x4, offset = 0x4, fixed_abs, tag = 'smem constant byte address 0x4 - core index']
  #allocation1 [shape = 'u32[144,128]{1,0:T(1,128)}', space=vmem, size = 0x12000, scoped, tag = 'internal scratch']
  #allocation2 [shape = 'f32[128,128]{1,0:T(8,128)}', space=vmem, size = 0x10000, scoped, tag = 'scratch operand']
  #allocation3 [shape = 'f32[128,32]{1,0:T(8,128)}', space=vmem, size = 0x10000, scoped, tag = 'scratch operand']
  #allocation4 [shape = 'f32[8,32]{1,0:T(8,128)}', space=vmem, size = 0x1000, scoped, tag = 'scratch operand']
  #allocation5 [shape = 'f32[8,32]{1,0:T(8,128)}', space=vmem, size = 0x1000, scoped, tag = 'scratch operand']
  #allocation6 [shape = 'f32[8,32]{1,0:T(8,128)}', space=vmem, size = 0x1000, scoped, tag = 'scratch operand']
  #allocation7 [shape = 'f32[8,32]{1,0:T(8,128)}', space=vmem, size = 0x1000, scoped, tag = 'scratch operand']
  %s0 = inlined_call_operand.vmem [shape: f32[16,8,64], index: 0, kind: input, shape index: {}]
  %s1 = inlined_call_operand.vmem [shape: f32[160,128], index: 1, kind: input, shape index: {}]
  %s2 = inlined_call_operand.vmem [shape: f32[2,128], index: 2, kind: input, shape index: {}]
  %s3 = inlined_call_operand.vmem [shape: f32[32,128], index: 3, kind: input, shape index: {}]
  %s4 = inlined_call_operand.vmem [shape: f32[1,128], index: 4, kind: input, shape index: {}]
  %s5 = inlined_call_operand.vmem [shape: f32[16,8,128], index: 5, kind: output, shape index: {}]
  %s6 = sld [smem:[#allocation0]]
  $region34: #{lstm_asr_forward.1} parent=0
    _
  %s8 = ssub.s32 1, %s6
  %s9 = scalar_select 0, %s8, %s6
  // Predicated region
  $region2: #{lstm_asr_forward.1} parent=0 // pred_check
    _
  $region3: #{lstm_asr_forward.1} parent=0 // pred_check_branch
    %11 = sbr.rel (0) target = $region5
  $region4: #{lstm_asr_forward.1} parent=0 // pred_region
    _
  $region5: #{lstm_asr_forward.1} parent=0 // pred_fallthru
    _
  // Predicated region
  $region6: #{lstm_asr_forward.1} parent=0 // pred_check
    _
  $region7: #{lstm_asr_forward.1} parent=0 // pred_check_branch
    %13 = sbr.rel (0) target = $region9
  $region8: #{lstm_asr_forward.1} parent=0 // pred_region
    _
  $region9: #{lstm_asr_forward.1} parent=0 // pred_fallthru
    _
  // Predicated region
  $region10: #{lstm_asr_forward.1} parent=0 // pred_check
    _
  $region11: #{lstm_asr_forward.1} parent=0 // pred_check_branch
    %15 = sbr.rel (0) target = $region13
  $region12: #{lstm_asr_forward.1} parent=0 // pred_region
    _
  $region13: #{lstm_asr_forward.1} parent=0 // pred_fallthru
    _
  // Predicated region
  $region14: #{lstm_asr_forward.1} parent=0 // pred_check
    _
  $region15: #{lstm_asr_forward.1} parent=0 // pred_check_branch
    %17 = sbr.rel (0) target = $region17
  $region16: #{lstm_asr_forward.1} parent=0 // pred_region
    _
  $region17: #{lstm_asr_forward.1} parent=0 // pred_fallthru
    _
  // Predicated region
  $region18: #{lstm_asr_forward.1} parent=0 // pred_check
    _
  $region19: #{lstm_asr_forward.1} parent=0 // pred_check_branch
    %19 = sbr.rel (0) target = $region21
  $region20: #{lstm_asr_forward.1} parent=0 // pred_region
    _
  $region21: #{lstm_asr_forward.1} parent=0 // pred_fallthru
    _
  %p20 = scmp.eq.s32.totalorder 0, 0
  // Predicated region
  $region22: #{lstm_asr_forward.1} parent=0 // pred_check
    %p21 = pneg %p20
  $region23: #{lstm_asr_forward.1} parent=0 // pred_check_branch
    %23 = sbr.rel (%p21) target = $region25
  $region24: #{lstm_asr_forward.1} parent=0 // pred_region
    %vm24 = vcmask 261120
    %25 = vst.msk [vmem:[#allocation4] sm:$0xff] %vm24, 0.0
    %26 = vst.msk [vmem:[#allocation5] sm:$0xff] %vm24, 0.0
    %27 = vst.msk [vmem:[#allocation6] sm:$0xff] %vm24, 0.0
    %28 = vst.msk [vmem:[#allocation7] sm:$0xff] %vm24, 0.0
  $region25: #{lstm_asr_forward.1} parent=0 // pred_fallthru
    _
  %v29 = vld [vmem:[%s0] sm:$0xff]
  %v30 = vld [vmem:[%s0 + $0x8] sm:$0xff]
  %v31 = vld [vmem:[%s0 + $0x10] sm:$0xff]
  %v32 = vld [vmem:[%s0 + $0x18] sm:$0xff]
  %v33 = vld [vmem:[%s0 + $0x20] sm:$0xff]
  %v34 = vld [vmem:[%s0 + $0x28] sm:$0xff]
  %v35 = vld [vmem:[%s0 + $0x30] sm:$0xff]
  %v36 = vld [vmem:[%s0 + $0x38] sm:$0xff]
  %v37 = vld [vmem:[%s0 + $0x40] sm:$0xff]
  %v38 = vld [vmem:[%s0 + $0x48] sm:$0xff]
  %v39 = vld [vmem:[%s0 + $0x50] sm:$0xff]
  %v40 = vld [vmem:[%s0 + $0x58] sm:$0xff]
  %v41 = vld [vmem:[%s0 + $0x60] sm:$0xff]
  %v42 = vld [vmem:[%s0 + $0x68] sm:$0xff]
  %v43 = vld [vmem:[%s0 + $0x70] sm:$0xff]
  %v44 = vld [vmem:[%s0 + $0x78] sm:$0xff]
  %v45 = vld [vmem:[%s1] sm:$0xff]
  %v46 = vld [vmem:[%s1 + $0x8] sm:$0xff]
  %v47 = vld [vmem:[%s1 + $0x10] sm:$0xff]
  %v48 = vld [vmem:[%s1 + $0x18] sm:$0xff]
  %v49 = vld [vmem:[%s1 + $0x20] sm:$0xff]
  %v50 = vld [vmem:[%s1 + $0x28] sm:$0xff]
  %v51 = vld [vmem:[%s1 + $0x30] sm:$0xff]
  %v52 = vld [vmem:[%s1 + $0x38] sm:$0xff]
  %v53 = vld [vmem:[%s2] sm:$0x1]
  %v54 = vlaneseq
  %v55 = vshrl.u32 %v54, 7
  %v56 = vsub.s32 0, %v55
  %v57 = vrot.slane %v53, %v56
  %vm58 = vcmask 523264
  %v60 = vsel %vm58, %v29, 0
  %v63 = vsel %vm58, %v30, 0
  %v66 = vsel %vm58, %v31, 0
  %v69 = vsel %vm58, %v32, 0
  %v72 = vsel %vm58, %v33, 0
  %v75 = vsel %vm58, %v34, 0
  %v78 = vsel %vm58, %v35, 0
  %v81 = vsel %vm58, %v36, 0
  %v84 = vsel %vm58, %v37, 0
  %v87 = vsel %vm58, %v38, 0
  %v90 = vsel %vm58, %v39, 0
  %v93 = vsel %vm58, %v40, 0
  %v96 = vsel %vm58, %v41, 0
  %v99 = vsel %vm58, %v42, 0
  %v102 = vsel %vm58, %v43, 0
  %v105 = vsel %vm58, %v44, 0
  %107 = vmatprep.subr.mxu0 0.0
  %108 = vmatpush1.msra.mxu0 0.0
  %109 = vmatprep.subr.mxu0 0.0
  %110 = vmatpush1.msra.mxu0 0.0
  %111 = vmatprep.subr.mxu0 0.0
  %112 = vmatpush1.msra.mxu0 0.0
  %113 = vmatprep.subr.mxu0 0.0
  %114 = vmatpush1.msra.mxu0 0.0
  %115 = vmatprep.subr.mxu0 0.0
  %116 = vmatpush1.msra.mxu0 0.0
  %117 = vmatprep.subr.mxu0 0.0
  %118 = vmatpush1.msra.mxu0 0.0
  %119 = vmatprep.subr.mxu0 0.0
  %120 = vmatpush1.msra.mxu0 0.0
  %121 = vmatprep.subr.mxu0 0.0
  %122 = vmatpush1.msra.mxu0 0.0
  %123 = vmatprep.subr.mxu0 0.0
  %124 = vmatpush1.msra.mxu0 %v52
  %125 = vmatprep.subr.mxu0 0.0
  %126 = vmatpush1.msra.mxu0 %v51
  %127 = vmatprep.subr.mxu0 0.0
  %128 = vmatpush1.msra.mxu0 %v50
  %129 = vmatprep.subr.mxu0 0.0
  %130 = vmatpush1.msra.mxu0 %v49
  %131 = vmatprep.subr.mxu0 0.0
  %132 = vmatpush1.msra.mxu0 %v48
  %133 = vmatprep.subr.mxu0 0.0
  %134 = vmatpush1.msra.mxu0 %v47
  %135 = vmatprep.subr.mxu0 0.0
  %136 = vmatpush1.msra.mxu0 %v46
  %137 = vmatprep.subr.mxu0 0.0
  %138 = vmatpush1.msra.mxu0 %v45
  %139 = vmatprep.subr.mxu0 0.0
  %140 = vmatpush2.msra.mxu0 0.0
  %141 = vmatprep.subr.mxu0 0.0
  %142 = vmatpush2.msra.mxu0 0.0
  %143 = vmatprep.subr.mxu0 0.0
  %144 = vmatpush2.msra.mxu0 0.0
  %145 = vmatprep.subr.mxu0 0.0
  %146 = vmatpush2.msra.mxu0 0.0
  %147 = vmatprep.subr.mxu0 0.0
  %148 = vmatpush2.msra.mxu0 0.0
  %149 = vmatprep.subr.mxu0 0.0
  %150 = vmatpush2.msra.mxu0 0.0
  %151 = vmatprep.subr.mxu0 0.0
  %152 = vmatpush2.msra.mxu0 0.0
  %153 = vmatprep.subr.mxu0 0.0
  %154 = vmatpush2.msra.mxu0 0.0
  %155 = vmatprep.subr.mxu0 0.0
  %156 = vmatpush2.msra.mxu0 0.0
  %157 = vmatprep.subr.mxu0 0.0
  %158 = vmatpush2.msra.mxu0 0.0
  %159 = vmatprep.subr.mxu0 0.0
  %160 = vmatpush2.msra.mxu0 0.0
  %161 = vmatprep.subr.mxu0 0.0
  %162 = vmatpush2.msra.mxu0 0.0
  %163 = vmatprep.subr.mxu0 0.0
  %164 = vmatpush2.msra.mxu0 0.0
  %165 = vmatprep.subr.mxu0 0.0
  %166 = vmatpush2.msra.mxu0 0.0
  %167 = vmatprep.subr.mxu0 0.0
  %168 = vmatpush2.msra.mxu0 0.0
  %169 = vmatprep.subr.mxu0 0.0
  %170 = vmatpush2.msra.mxu0 0.0
  %171 = vmatprep.mubr.f32.mxu0 0.0
  %172 = vmatmul.mubr.f32.gmra.mxu0 %v60
  %v173 = vpop.f32.mrf.mxu0
  %v174 = vadd.f32 %v57, %v173
  %v175 = vpop.f32.mrf.mxu0
  %176 = vmatprep.mubr.f32.mxu0 0.0
  %177 = vmatmul.mubr.f32.gmra.mxu0 %v63
  %v178 = vpop.f32.mrf.mxu0
  %v179 = vadd.f32 %v57, %v178
  %v180 = vpop.f32.mrf.mxu0
  %181 = vmatprep.mubr.f32.mxu0 0.0
  %182 = vmatmul.mubr.f32.gmra.mxu0 %v66
  %v183 = vpop.f32.mrf.mxu0
  %v184 = vadd.f32 %v57, %v183
  %v185 = vpop.f32.mrf.mxu0
  %186 = vmatprep.mubr.f32.mxu0 0.0
  %187 = vmatmul.mubr.f32.gmra.mxu0 %v69
  %v188 = vpop.f32.mrf.mxu0
  %v189 = vadd.f32 %v57, %v188
  %v190 = vpop.f32.mrf.mxu0
  %191 = vmatprep.mubr.f32.mxu0 0.0
  %192 = vmatmul.mubr.f32.gmra.mxu0 %v72
  %v193 = vpop.f32.mrf.mxu0
  %v194 = vadd.f32 %v57, %v193
  %v195 = vpop.f32.mrf.mxu0
  %196 = vmatprep.mubr.f32.mxu0 0.0
  %197 = vmatmul.mubr.f32.gmra.mxu0 %v75
  %v198 = vpop.f32.mrf.mxu0
  %v199 = vadd.f32 %v57, %v198
  %v200 = vpop.f32.mrf.mxu0
  %201 = vmatprep.mubr.f32.mxu0 0.0
  %202 = vmatmul.mubr.f32.gmra.mxu0 %v78
  %v203 = vpop.f32.mrf.mxu0
  %v204 = vadd.f32 %v57, %v203
  %v205 = vpop.f32.mrf.mxu0
  %206 = vmatprep.mubr.f32.mxu0 0.0
  %207 = vmatmul.mubr.f32.gmra.mxu0 %v81
  %v208 = vpop.f32.mrf.mxu0
  %v209 = vadd.f32 %v57, %v208
  %v210 = vpop.f32.mrf.mxu0
  %211 = vmatprep.mubr.f32.mxu0 0.0
  %212 = vmatmul.mubr.f32.gmra.mxu0 %v84
  %v213 = vpop.f32.mrf.mxu0
  %v214 = vadd.f32 %v57, %v213
  %v215 = vpop.f32.mrf.mxu0
  %216 = vmatprep.mubr.f32.mxu0 0.0
  %217 = vmatmul.mubr.f32.gmra.mxu0 %v87
  %v218 = vpop.f32.mrf.mxu0
  %v219 = vadd.f32 %v57, %v218
  %v220 = vpop.f32.mrf.mxu0
  %221 = vmatprep.mubr.f32.mxu0 0.0
  %222 = vmatmul.mubr.f32.gmra.mxu0 %v90
  %v223 = vpop.f32.mrf.mxu0
  %v224 = vadd.f32 %v57, %v223
  %v225 = vpop.f32.mrf.mxu0
  %226 = vmatprep.mubr.f32.mxu0 0.0
  %227 = vmatmul.mubr.f32.gmra.mxu0 %v93
  %v228 = vpop.f32.mrf.mxu0
  %v229 = vadd.f32 %v57, %v228
  %v230 = vpop.f32.mrf.mxu0
  %231 = vmatprep.mubr.f32.mxu0 0.0
  %232 = vmatmul.mubr.f32.gmra.mxu0 %v96
  %v233 = vpop.f32.mrf.mxu0
  %v234 = vadd.f32 %v57, %v233
  %v235 = vpop.f32.mrf.mxu0
  %236 = vmatprep.mubr.f32.mxu0 0.0
  %237 = vmatmul.mubr.f32.gmra.mxu0 %v99
  %v238 = vpop.f32.mrf.mxu0
  %v239 = vadd.f32 %v57, %v238
  %v240 = vpop.f32.mrf.mxu0
  %241 = vmatprep.mubr.f32.mxu0 0.0
  %242 = vmatmul.mubr.f32.gmra.mxu0 %v102
  %v243 = vpop.f32.mrf.mxu0
  %v244 = vadd.f32 %v57, %v243
  %v245 = vpop.f32.mrf.mxu0
  %246 = vmatprep.mubr.f32.mxu0 0.0
  %247 = vmatmul.mubr.f32.gmra.mxu0 %v105
  %v248 = vpop.f32.mrf.mxu0
  %v249 = vadd.f32 %v57, %v248
  %v250 = vpop.f32.mrf.mxu0
  %251 = vdwg.mxu0
  %252 = vst [vmem:[#allocation2] sm:$0xff] %v174
  %253 = vst [vmem:[#allocation2 + $0x8] sm:$0xff] %v179
  %254 = vst [vmem:[#allocation2 + $0x10] sm:$0xff] %v184
  %255 = vst [vmem:[#allocation2 + $0x18] sm:$0xff] %v189
  %256 = vst [vmem:[#allocation2 + $0x20] sm:$0xff] %v194
  %257 = vst [vmem:[#allocation2 + $0x28] sm:$0xff] %v199
  %258 = vst [vmem:[#allocation2 + $0x30] sm:$0xff] %v204
  %259 = vst [vmem:[#allocation2 + $0x38] sm:$0xff] %v209
  %260 = vst [vmem:[#allocation2 + $0x40] sm:$0xff] %v214
  %261 = vst [vmem:[#allocation2 + $0x48] sm:$0xff] %v219
  %262 = vst [vmem:[#allocation2 + $0x50] sm:$0xff] %v224
  %263 = vst [vmem:[#allocation2 + $0x58] sm:$0xff] %v229
  %264 = vst [vmem:[#allocation2 + $0x60] sm:$0xff] %v234
  %265 = vst [vmem:[#allocation2 + $0x68] sm:$0xff] %v239
  %266 = vst [vmem:[#allocation2 + $0x70] sm:$0xff] %v244
  %267 = vst [vmem:[#allocation2 + $0x78] sm:$0xff] %v249
  %v268 = vld [vmem:[%s1 + $0x40] sm:$0xff]
  %v269 = vld [vmem:[%s1 + $0x48] sm:$0xff]
  %v270 = vld [vmem:[%s1 + $0x50] sm:$0xff]
  %v271 = vld [vmem:[%s1 + $0x58] sm:$0xff]
  %v272 = vld [vmem:[%s1 + $0x60] sm:$0xff]
  %v273 = vld [vmem:[%s1 + $0x68] sm:$0xff]
  %v274 = vld [vmem:[%s1 + $0x70] sm:$0xff]
  %v275 = vld [vmem:[%s1 + $0x78] sm:$0xff]
  %v276 = vld [vmem:[%s1 + $0x80] sm:$0xff]
  %v277 = vld [vmem:[%s1 + $0x88] sm:$0xff]
  %v278 = vld [vmem:[%s1 + $0x90] sm:$0xff]
  %v279 = vld [vmem:[%s1 + $0x98] sm:$0xff]
  %v280 = vld [vmem:[%s2 + $0x1] sm:$0x1]
  %v281 = vld [vmem:[#allocation4] sm:$0xff]
  %v282 = vld [vmem:[#allocation5] sm:$0xff]
  %v283 = vld [vmem:[#allocation6] sm:$0xff]
  %v284 = vld [vmem:[#allocation7] sm:$0xff]
  %v285 = vld [vmem:[#allocation2] sm:$0xff]
  %vm286 = vcmask 261120
  %v288 = vsel %vm286, %v281, 0
  %290 = vmatprep.subr.mxu0 0.0
  %291 = vmatpush1.msra.mxu0 0.0
  %292 = vmatprep.subr.mxu0 0.0
  %293 = vmatpush1.msra.mxu0 0.0
  %294 = vmatprep.subr.mxu0 0.0
  %295 = vmatpush1.msra.mxu0 0.0
  %296 = vmatprep.subr.mxu0 0.0
  %297 = vmatpush1.msra.mxu0 0.0
  %298 = vmatprep.subr.mxu0 0.0
  %299 = vmatpush1.msra.mxu0 0.0
  %300 = vmatprep.subr.mxu0 0.0
  %301 = vmatpush1.msra.mxu0 0.0
  %302 = vmatprep.subr.mxu0 0.0
  %303 = vmatpush1.msra.mxu0 0.0
  %304 = vmatprep.subr.mxu0 0.0
  %305 = vmatpush1.msra.mxu0 0.0
  %306 = vmatprep.subr.mxu0 0.0
  %307 = vmatpush1.msra.mxu0 0.0
  %308 = vmatprep.subr.mxu0 0.0
  %309 = vmatpush1.msra.mxu0 0.0
  %310 = vmatprep.subr.mxu0 0.0
  %311 = vmatpush1.msra.mxu0 0.0
  %312 = vmatprep.subr.mxu0 0.0
  %313 = vmatpush1.msra.mxu0 0.0
  %314 = vmatprep.subr.mxu0 0.0
  %315 = vmatpush1.msra.mxu0 %v275
  %316 = vmatprep.subr.mxu0 0.0
  %317 = vmatpush1.msra.mxu0 %v274
  %318 = vmatprep.subr.mxu0 0.0
  %319 = vmatpush1.msra.mxu0 %v273
  %320 = vmatprep.subr.mxu0 0.0
  %321 = vmatpush1.msra.mxu0 %v272
  %322 = vmatprep.subr.mxu0 0.0
  %323 = vmatpush2.msra.mxu0 0.0
  %324 = vmatprep.subr.mxu0 0.0
  %325 = vmatpush2.msra.mxu0 0.0
  %326 = vmatprep.subr.mxu0 0.0
  %327 = vmatpush2.msra.mxu0 0.0
  %328 = vmatprep.subr.mxu0 0.0
  %329 = vmatpush2.msra.mxu0 0.0
  %330 = vmatprep.subr.mxu0 0.0
  %331 = vmatpush2.msra.mxu0 0.0
  %332 = vmatprep.subr.mxu0 0.0
  %333 = vmatpush2.msra.mxu0 0.0
  %334 = vmatprep.subr.mxu0 0.0
  %335 = vmatpush2.msra.mxu0 0.0
  %336 = vmatprep.subr.mxu0 0.0
  %337 = vmatpush2.msra.mxu0 0.0
  %338 = vmatprep.subr.mxu0 0.0
  %339 = vmatpush2.msra.mxu0 0.0
  %340 = vmatprep.subr.mxu0 0.0
  %341 = vmatpush2.msra.mxu0 0.0
  %342 = vmatprep.subr.mxu0 0.0
  %343 = vmatpush2.msra.mxu0 0.0
  %344 = vmatprep.subr.mxu0 0.0
  %345 = vmatpush2.msra.mxu0 0.0
  %346 = vmatprep.subr.mxu0 0.0
  %347 = vmatpush2.msra.mxu0 0.0
  %348 = vmatprep.subr.mxu0 0.0
  %349 = vmatpush2.msra.mxu0 0.0
  %350 = vmatprep.subr.mxu0 0.0
  %351 = vmatpush2.msra.mxu0 0.0
  %352 = vmatprep.subr.mxu0 0.0
  %353 = vmatpush2.msra.mxu0 0.0
  %354 = vmatprep.mubr.f32.mxu0 0.0
  %355 = vmatmul.mubr.f32.gmra.mxu0 %v288
  %v356 = vpop.f32.mrf.mxu0
  %v357 = vadd.f32 0.0, %v356
  %v358 = vpop.f32.mrf.mxu0
  %359 = vdwg.mxu0
  %v360 = vadd.f32 %v285, %v357
  %v361 = vxor.u32 %v360, 2147483648
  %v362 = vmul.f32 %v361, 1.442695
  %v363 = vpow.pop %v362
  %v364 = vadd.f32 %v363, 1.0
  %v365 = vrcp.pop %v364
  %v366 = vmul.f32 1.0, %v365
  %v367 = vtanh.pop %v360
  %369 = vrot.lane.b32.xlu0 %v282, 32
  %v370 = vpop.permute.xlu0 %369
  %v372 = vmul.f32 %v366, %v370
  %374 = vrot.lane.b32.xlu0 %v367, 64
  %v375 = vpop.permute.xlu0 %374
  %v377 = vmul.f32 %v366, %v375
  %379 = vrot.lane.b32.xlu0 %v377, 32
  %v380 = vpop.permute.xlu0 %379
  %v382 = vadd.f32 %v372, %v380
  %v383 = vtanh.pop %v382
  %385 = vrot.lane.b32.xlu0 %v383, 64
  %v386 = vpop.permute.xlu0 %385
  %v388 = vmul.f32 %v366, %v386
  %v390 = vsel %vm286, %v283, 0
  %392 = vmatprep.subr.mxu0 0.0
  %393 = vmatpush1.msra.mxu0 0.0
  %394 = vmatprep.subr.mxu0 0.0
  %395 = vmatpush1.msra.mxu0 0.0
  %396 = vmatprep.subr.mxu0 0.0
  %397 = vmatpush1.msra.mxu0 0.0
  %398 = vmatprep.subr.mxu0 0.0
  %399 = vmatpush1.msra.mxu0 0.0
  %400 = vmatprep.subr.mxu0 0.0
  %401 = vmatpush1.msra.mxu0 0.0
  %402 = vmatprep.subr.mxu0 0.0
  %403 = vmatpush1.msra.mxu0 0.0
  %404 = vmatprep.subr.mxu0 0.0
  %405 = vmatpush1.msra.mxu0 0.0
  %406 = vmatprep.subr.mxu0 0.0
  %407 = vmatpush1.msra.mxu0 0.0
  %408 = vmatprep.subr.mxu0 0.0
  %409 = vmatpush1.msra.mxu0 0.0
  %410 = vmatprep.subr.mxu0 0.0
  %411 = vmatpush1.msra.mxu0 0.0
  %412 = vmatprep.subr.mxu0 0.0
  %413 = vmatpush1.msra.mxu0 0.0
  %414 = vmatprep.subr.mxu0 0.0
  %415 = vmatpush1.msra.mxu0 0.0
  %416 = vmatprep.subr.mxu0 0.0
  %417 = vmatpush1.msra.mxu0 %v279
  %418 = vmatprep.subr.mxu0 0.0
  %419 = vmatpush1.msra.mxu0 %v278
  %420 = vmatprep.subr.mxu0 0.0
  %421 = vmatpush1.msra.mxu0 %v277
  %422 = vmatprep.subr.mxu0 0.0
  %423 = vmatpush1.msra.mxu0 %v276
  %424 = vmatprep.subr.mxu0 0.0
  %425 = vmatpush2.msra.mxu0 0.0
  %426 = vmatprep.subr.mxu0 0.0
  %427 = vmatpush2.msra.mxu0 0.0
  %428 = vmatprep.subr.mxu0 0.0
  %429 = vmatpush2.msra.mxu0 0.0
  %430 = vmatprep.subr.mxu0 0.0
  %431 = vmatpush2.msra.mxu0 0.0
  %432 = vmatprep.subr.mxu0 0.0
  %433 = vmatpush2.msra.mxu0 0.0
  %434 = vmatprep.subr.mxu0 0.0
  %435 = vmatpush2.msra.mxu0 0.0
  %436 = vmatprep.subr.mxu0 0.0
  %437 = vmatpush2.msra.mxu0 0.0
  %438 = vmatprep.subr.mxu0 0.0
  %439 = vmatpush2.msra.mxu0 0.0
  %440 = vmatprep.subr.mxu0 0.0
  %441 = vmatpush2.msra.mxu0 0.0
  %442 = vmatprep.subr.mxu0 0.0
  %443 = vmatpush2.msra.mxu0 0.0
  %444 = vmatprep.subr.mxu0 0.0
  %445 = vmatpush2.msra.mxu0 0.0
  %446 = vmatprep.subr.mxu0 0.0
  %447 = vmatpush2.msra.mxu0 0.0
  %448 = vmatprep.subr.mxu0 0.0
  %449 = vmatpush2.msra.mxu0 0.0
  %450 = vmatprep.subr.mxu0 0.0
  %451 = vmatpush2.msra.mxu0 0.0
  %452 = vmatprep.subr.mxu0 0.0
  %453 = vmatpush2.msra.mxu0 0.0
  %454 = vmatprep.subr.mxu0 0.0
  %455 = vmatpush2.msra.mxu0 0.0
  %456 = vmatprep.mubr.f32.mxu0 0.0
  %457 = vmatmul.mubr.f32.gmra.mxu0 %v390
  %v458 = vpop.f32.mrf.mxu0
  %v459 = vadd.f32 0.0, %v458
  %v460 = vpop.f32.mrf.mxu0
  %461 = vdwg.mxu0
  %463 = vrot.lane.b32.xlu0 %v388, 32
  %v464 = vpop.permute.xlu0 %463
  %v465 = vsel %vm286, %v464, 0
  %467 = vmatprep.subr.mxu0 0.0
  %468 = vmatpush1.msra.mxu0 0.0
  %469 = vmatprep.subr.mxu0 0.0
  %470 = vmatpush1.msra.mxu0 0.0
  %471 = vmatprep.subr.mxu0 0.0
  %472 = vmatpush1.msra.mxu0 0.0
  %473 = vmatprep.subr.mxu0 0.0
  %474 = vmatpush1.msra.mxu0 0.0
  %475 = vmatprep.subr.mxu0 0.0
  %476 = vmatpush1.msra.mxu0 0.0
  %477 = vmatprep.subr.mxu0 0.0
  %478 = vmatpush1.msra.mxu0 0.0
  %479 = vmatprep.subr.mxu0 0.0
  %480 = vmatpush1.msra.mxu0 0.0
  %481 = vmatprep.subr.mxu0 0.0
  %482 = vmatpush1.msra.mxu0 0.0
  %483 = vmatprep.subr.mxu0 0.0
  %484 = vmatpush1.msra.mxu0 0.0
  %485 = vmatprep.subr.mxu0 0.0
  %486 = vmatpush1.msra.mxu0 0.0
  %487 = vmatprep.subr.mxu0 0.0
  %488 = vmatpush1.msra.mxu0 0.0
  %489 = vmatprep.subr.mxu0 0.0
  %490 = vmatpush1.msra.mxu0 0.0
  %491 = vmatprep.subr.mxu0 0.0
  %492 = vmatpush1.msra.mxu0 %v271
  %493 = vmatprep.subr.mxu0 0.0
  %494 = vmatpush1.msra.mxu0 %v270
  %495 = vmatprep.subr.mxu0 0.0
  %496 = vmatpush1.msra.mxu0 %v269
  %497 = vmatprep.subr.mxu0 0.0
  %498 = vmatpush1.msra.mxu0 %v268
  %499 = vmatprep.subr.mxu0 0.0
  %500 = vmatpush2.msra.mxu0 0.0
  %501 = vmatprep.subr.mxu0 0.0
  %502 = vmatpush2.msra.mxu0 0.0
  %503 = vmatprep.subr.mxu0 0.0
  %504 = vmatpush2.msra.mxu0 0.0
  %505 = vmatprep.subr.mxu0 0.0
  %506 = vmatpush2.msra.mxu0 0.0
  %507 = vmatprep.subr.mxu0 0.0
  %508 = vmatpush2.msra.mxu0 0.0
  %509 = vmatprep.subr.mxu0 0.0
  %510 = vmatpush2.msra.mxu0 0.0
  %511 = vmatprep.subr.mxu0 0.0
  %512 = vmatpush2.msra.mxu0 0.0
  %513 = vmatprep.subr.mxu0 0.0
  %514 = vmatpush2.msra.mxu0 0.0
  %515 = vmatprep.subr.mxu0 0.0
  %516 = vmatpush2.msra.mxu0 0.0
  %517 = vmatprep.subr.mxu0 0.0
  %518 = vmatpush2.msra.mxu0 0.0
  %519 = vmatprep.subr.mxu0 0.0
  %520 = vmatpush2.msra.mxu0 0.0
  %521 = vmatprep.subr.mxu0 0.0
  %522 = vmatpush2.msra.mxu0 0.0
  %523 = vmatprep.subr.mxu0 0.0
  %524 = vmatpush2.msra.mxu0 0.0
  %525 = vmatprep.subr.mxu0 0.0
  %526 = vmatpush2.msra.mxu0 0.0
  %527 = vmatprep.subr.mxu0 0.0
  %528 = vmatpush2.msra.mxu0 0.0
  %529 = vmatprep.subr.mxu0 0.0
  %530 = vmatpush2.msra.mxu0 0.0
  %531 = vmatprep.mubr.f32.mxu0 0.0
  %532 = vmatmul.mubr.f32.gmra.mxu0 %v465
  %v533 = vpop.f32.mrf.mxu0
  %v534 = vadd.f32 %v459, %v533
  %v535 = vpop.f32.mrf.mxu0
  %536 = vdwg.mxu0
  %v537 = vlaneseq
  %v538 = vshrl.u32 %v537, 7
  %v539 = vsub.s32 0, %v538
  %v540 = vrot.slane %v280, %v539
  %v541 = vadd.f32 %v534, %v540
  %v542 = vxor.u32 %v541, 2147483648
  %v543 = vmul.f32 %v542, 1.442695
  %v544 = vpow.pop %v543
  %v545 = vadd.f32 %v544, 1.0
  %v546 = vrcp.pop %v545
  %v547 = vmul.f32 1.0, %v546
  %v548 = vtanh.pop %v541
  %550 = vrot.lane.b32.xlu0 %v284, 32
  %v551 = vpop.permute.xlu0 %550
  %v553 = vmul.f32 %v547, %v551
  %555 = vrot.lane.b32.xlu0 %v548, 64
  %v556 = vpop.permute.xlu0 %555
  %v558 = vmul.f32 %v547, %v556
  %560 = vrot.lane.b32.xlu0 %v558, 32
  %v561 = vpop.permute.xlu0 %560
  %v563 = vadd.f32 %v553, %v561
  %v564 = vtanh.pop %v563
  %566 = vrot.lane.b32.xlu0 %v564, 64
  %v567 = vpop.permute.xlu0 %566
  %v569 = vmul.f32 %v547, %v567
  %571 = vrot.lane.b32.xlu0 %v569, 32
  %v572 = vpop.permute.xlu0 %571
  %574 = vst.msk [vmem:[#allocation3] sm:$0xff] %vm286, %v572
  %v575 = vld [vmem:[#allocation2 + $0x8] sm:$0xff]
  %576 = vmatprep.subr.mxu0 0.0
  %577 = vmatpush1.msra.mxu0 0.0
  %578 = vmatprep.subr.mxu0 0.0
  %579 = vmatpush1.msra.mxu0 0.0
  %580 = vmatprep.subr.mxu0 0.0
  %581 = vmatpush1.msra.mxu0 0.0
  %582 = vmatprep.subr.mxu0 0.0
  %583 = vmatpush1.msra.mxu0 0.0
  %584 = vmatprep.subr.mxu0 0.0
  %585 = vmatpush1.msra.mxu0 0.0
  %586 = vmatprep.subr.mxu0 0.0
  %587 = vmatpush1.msra.mxu0 0.0
  %588 = vmatprep.subr.mxu0 0.0
  %589 = vmatpush1.msra.mxu0 0.0
  %590 = vmatprep.subr.mxu0 0.0
  %591 = vmatpush1.msra.mxu0 0.0
  %592 = vmatprep.subr.mxu0 0.0
  %593 = vmatpush1.msra.mxu0 0.0
  %594 = vmatprep.subr.mxu0 0.0
  %595 = vmatpush1.msra.mxu0 0.0
  %596 = vmatprep.subr.mxu0 0.0
  %597 = vmatpush1.msra.mxu0 0.0
  %598 = vmatprep.subr.mxu0 0.0
  %599 = vmatpush1.msra.mxu0 0.0
  %600 = vmatprep.subr.mxu0 0.0
  %601 = vmatpush1.msra.mxu0 %v275
  %602 = vmatprep.subr.mxu0 0.0
  %603 = vmatpush1.msra.mxu0 %v274
  %604 = vmatprep.subr.mxu0 0.0
  %605 = vmatpush1.msra.mxu0 %v273
  %606 = vmatprep.subr.mxu0 0.0
  %607 = vmatpush1.msra.mxu0 %v272
  %608 = vmatprep.subr.mxu0 0.0
  %609 = vmatpush2.msra.mxu0 0.0
  %610 = vmatprep.subr.mxu0 0.0
  %611 = vmatpush2.msra.mxu0 0.0
  %612 = vmatprep.subr.mxu0 0.0
  %613 = vmatpush2.msra.mxu0 0.0
  %614 = vmatprep.subr.mxu0 0.0
  %615 = vmatpush2.msra.mxu0 0.0
  %616 = vmatprep.subr.mxu0 0.0
  %617 = vmatpush2.msra.mxu0 0.0
  %618 = vmatprep.subr.mxu0 0.0
  %619 = vmatpush2.msra.mxu0 0.0
  %620 = vmatprep.subr.mxu0 0.0
  %621 = vmatpush2.msra.mxu0 0.0
  %622 = vmatprep.subr.mxu0 0.0
  %623 = vmatpush2.msra.mxu0 0.0
  %624 = vmatprep.subr.mxu0 0.0
  %625 = vmatpush2.msra.mxu0 0.0
  %626 = vmatprep.subr.mxu0 0.0
  %627 = vmatpush2.msra.mxu0 0.0
  %628 = vmatprep.subr.mxu0 0.0
  %629 = vmatpush2.msra.mxu0 0.0
  %630 = vmatprep.subr.mxu0 0.0
  %631 = vmatpush2.msra.mxu0 0.0
  %632 = vmatprep.subr.mxu0 0.0
  %633 = vmatpush2.msra.mxu0 0.0
  %634 = vmatprep.subr.mxu0 0.0
  %635 = vmatpush2.msra.mxu0 0.0
  %636 = vmatprep.subr.mxu0 0.0
  %637 = vmatpush2.msra.mxu0 0.0
  %638 = vmatprep.subr.mxu0 0.0
  %639 = vmatpush2.msra.mxu0 0.0
  %640 = vmatprep.mubr.f32.mxu0 0.0
  %641 = vmatmul.mubr.f32.gmra.mxu0 %v465
  %v642 = vpop.f32.mrf.mxu0
  %v643 = vadd.f32 0.0, %v642
  %v644 = vpop.f32.mrf.mxu0
  %645 = vdwg.mxu0
  %v646 = vadd.f32 %v575, %v643
  %v647 = vxor.u32 %v646, 2147483648
  %v648 = vmul.f32 %v647, 1.442695
  %v649 = vpow.pop %v648
  %v650 = vadd.f32 %v649, 1.0
  %v651 = vrcp.pop %v650
  %v652 = vmul.f32 1.0, %v651
  %v653 = vtanh.pop %v646
  %v654 = vmul.f32 %v652, %v382
  %656 = vrot.lane.b32.xlu0 %v653, 64
  %v657 = vpop.permute.xlu0 %656
  %v659 = vmul.f32 %v652, %v657
  %661 = vrot.lane.b32.xlu0 %v659, 32
  %v662 = vpop.permute.xlu0 %661
  %v664 = vadd.f32 %v654, %v662
  %v665 = vtanh.pop %v664
  %667 = vrot.lane.b32.xlu0 %v665, 64
  %v668 = vpop.permute.xlu0 %667
  %v670 = vmul.f32 %v652, %v668
  %v671 = vsel %vm286, %v572, 0
  %673 = vmatprep.subr.mxu0 0.0
  %674 = vmatpush1.msra.mxu0 0.0
  %675 = vmatprep.subr.mxu0 0.0
  %676 = vmatpush1.msra.mxu0 0.0
  %677 = vmatprep.subr.mxu0 0.0
  %678 = vmatpush1.msra.mxu0 0.0
  %679 = vmatprep.subr.mxu0 0.0
  %680 = vmatpush1.msra.mxu0 0.0
  %681 = vmatprep.subr.mxu0 0.0
  %682 = vmatpush1.msra.mxu0 0.0
  %683 = vmatprep.subr.mxu0 0.0
  %684 = vmatpush1.msra.mxu0 0.0
  %685 = vmatprep.subr.mxu0 0.0
  %686 = vmatpush1.msra.mxu0 0.0
  %687 = vmatprep.subr.mxu0 0.0
  %688 = vmatpush1.msra.mxu0 0.0
  %689 = vmatprep.subr.mxu0 0.0
  %690 = vmatpush1.msra.mxu0 0.0
  %691 = vmatprep.subr.mxu0 0.0
  %692 = vmatpush1.msra.mxu0 0.0
  %693 = vmatprep.subr.mxu0 0.0
  %694 = vmatpush1.msra.mxu0 0.0
  %695 = vmatprep.subr.mxu0 0.0
  %696 = vmatpush1.msra.mxu0 0.0
  %697 = vmatprep.subr.mxu0 0.0
  %698 = vmatpush1.msra.mxu0 %v279
  %699 = vmatprep.subr.mxu0 0.0
  %700 = vmatpush1.msra.mxu0 %v278
  %701 = vmatprep.subr.mxu0 0.0
  %702 = vmatpush1.msra.mxu0 %v277
  %703 = vmatprep.subr.mxu0 0.0
  %704 = vmatpush1.msra.mxu0 %v276
  %705 = vmatprep.subr.mxu0 0.0
  %706 = vmatpush2.msra.mxu0 0.0
  %707 = vmatprep.subr.mxu0 0.0
  %708 = vmatpush2.msra.mxu0 0.0
  %709 = vmatprep.subr.mxu0 0.0
  %710 = vmatpush2.msra.mxu0 0.0
  %711 = vmatprep.subr.mxu0 0.0
  %712 = vmatpush2.msra.mxu0 0.0
  %713 = vmatprep.subr.mxu0 0.0
  %714 = vmatpush2.msra.mxu0 0.0
  %715 = vmatprep.subr.mxu0 0.0
  %716 = vmatpush2.msra.mxu0 0.0
  %717 = vmatprep.subr.mxu0 0.0
  %718 = vmatpush2.msra.mxu0 0.0
  %719 = vmatprep.subr.mxu0 0.0
  %720 = vmatpush2.msra.mxu0 0.0
  %721 = vmatprep.subr.mxu0 0.0
  %722 = vmatpush2.msra.mxu0 0.0
  %723 = vmatprep.subr.mxu0 0.0
  %724 = vmatpush2.msra.mxu0 0.0
  %725 = vmatprep.subr.mxu0 0.0
  %726 = vmatpush2.msra.mxu0 0.0
  %727 = vmatprep.subr.mxu0 0.0
  %728 = vmatpush2.msra.mxu0 0.0
  %729 = vmatprep.subr.mxu0 0.0
  %730 = vmatpush2.msra.mxu0 0.0
  %731 = vmatprep.subr.mxu0 0.0
  %732 = vmatpush2.msra.mxu0 0.0
  %733 = vmatprep.subr.mxu0 0.0
  %734 = vmatpush2.msra.mxu0 0.0
  %735 = vmatprep.subr.mxu0 0.0
  %736 = vmatpush2.msra.mxu0 0.0
  %737 = vmatprep.mubr.f32.mxu0 0.0
  %738 = vmatmul.mubr.f32.gmra.mxu0 %v671
  %v739 = vpop.f32.mrf.mxu0
  %v740 = vadd.f32 0.0, %v739
  %v741 = vpop.f32.mrf.mxu0
  %742 = vdwg.mxu0
  %744 = vrot.lane.b32.xlu0 %v670, 32
  %v745 = vpop.permute.xlu0 %744
  %v746 = vsel %vm286, %v745, 0
  %748 = vmatprep.subr.mxu0 0.0
  %749 = vmatpush1.msra.mxu0 0.0
  %750 = vmatprep.subr.mxu0 0.0
  %751 = vmatpush1.msra.mxu0 0.0
  %752 = vmatprep.subr.mxu0 0.0
  %753 = vmatpush1.msra.mxu0 0.0
  %754 = vmatprep.subr.mxu0 0.0
  %755 = vmatpush1.msra.mxu0 0.0
  %756 = vmatprep.subr.mxu0 0.0
  %757 = vmatpush1.msra.mxu0 0.0
  %758 = vmatprep.subr.mxu0 0.0
  %759 = vmatpush1.msra.mxu0 0.0
  %760 = vmatprep.subr.mxu0 0.0
  %761 = vmatpush1.msra.mxu0 0.0
  %762 = vmatprep.subr.mxu0 0.0
  %763 = vmatpush1.msra.mxu0 0.0
  %764 = vmatprep.subr.mxu0 0.0
  %765 = vmatpush1.msra.mxu0 0.0
  %766 = vmatprep.subr.mxu0 0.0
  %767 = vmatpush1.msra.mxu0 0.0
  %768 = vmatprep.subr.mxu0 0.0
  %769 = vmatpush1.msra.mxu0 0.0
  %770 = vmatprep.subr.mxu0 0.0
  %771 = vmatpush1.msra.mxu0 0.0
  %772 = vmatprep.subr.mxu0 0.0
  %773 = vmatpush1.msra.mxu0 %v271
  %774 = vmatprep.subr.mxu0 0.0
  %775 = vmatpush1.msra.mxu0 %v270
  %776 = vmatprep.subr.mxu0 0.0
  %777 = vmatpush1.msra.mxu0 %v269
  %778 = vmatprep.subr.mxu0 0.0
  %779 = vmatpush1.msra.mxu0 %v268
  %780 = vmatprep.subr.mxu0 0.0
  %781 = vmatpush2.msra.mxu0 0.0
  %782 = vmatprep.subr.mxu0 0.0
  %783 = vmatpush2.msra.mxu0 0.0
  %784 = vmatprep.subr.mxu0 0.0
  %785 = vmatpush2.msra.mxu0 0.0
  %786 = vmatprep.subr.mxu0 0.0
  %787 = vmatpush2.msra.mxu0 0.0
  %788 = vmatprep.subr.mxu0 0.0
  %789 = vmatpush2.msra.mxu0 0.0
  %790 = vmatprep.subr.mxu0 0.0
  %791 = vmatpush2.msra.mxu0 0.0
  %792 = vmatprep.subr.mxu0 0.0
  %793 = vmatpush2.msra.mxu0 0.0
  %794 = vmatprep.subr.mxu0 0.0
  %795 = vmatpush2.msra.mxu0 0.0
  %796 = vmatprep.subr.mxu0 0.0
  %797 = vmatpush2.msra.mxu0 0.0
  %798 = vmatprep.subr.mxu0 0.0
  %799 = vmatpush2.msra.mxu0 0.0
  %800 = vmatprep.subr.mxu0 0.0
  %801 = vmatpush2.msra.mxu0 0.0
  %802 = vmatprep.subr.mxu0 0.0
  %803 = vmatpush2.msra.mxu0 0.0
  %804 = vmatprep.subr.mxu0 0.0
  %805 = vmatpush2.msra.mxu0 0.0
  %806 = vmatprep.subr.mxu0 0.0
  %807 = vmatpush2.msra.mxu0 0.0
  %808 = vmatprep.subr.mxu0 0.0
  %809 = vmatpush2.msra.mxu0 0.0
  %810 = vmatprep.subr.mxu0 0.0
  %811 = vmatpush2.msra.mxu0 0.0
  %812 = vmatprep.mubr.f32.mxu0 0.0
  %813 = vmatmul.mubr.f32.gmra.mxu0 %v746
  %v814 = vpop.f32.mrf.mxu0
  %v815 = vadd.f32 %v740, %v814
  %v816 = vpop.f32.mrf.mxu0
  %817 = vdwg.mxu0
  %v818 = vadd.f32 %v815, %v540
  %v819 = vxor.u32 %v818, 2147483648
  %v820 = vmul.f32 %v819, 1.442695
  %v821 = vpow.pop %v820
  %v822 = vadd.f32 %v821, 1.0
  %v823 = vrcp.pop %v822
  %v824 = vmul.f32 1.0, %v823
  %v825 = vtanh.pop %v818
  %v826 = vmul.f32 %v824, %v563
  %828 = vrot.lane.b32.xlu0 %v825, 64
  %v829 = vpop.permute.xlu0 %828
  %v831 = vmul.f32 %v824, %v829
  %833 = vrot.lane.b32.xlu0 %v831, 32
  %v834 = vpop.permute.xlu0 %833
  %v836 = vadd.f32 %v826, %v834
  %v837 = vtanh.pop %v836
  %839 = vrot.lane.b32.xlu0 %v837, 64
  %v840 = vpop.permute.xlu0 %839
  %v842 = vmul.f32 %v824, %v840
  %844 = vrot.lane.b32.xlu0 %v842, 32
  %v845 = vpop.permute.xlu0 %844
  %847 = vst.msk [vmem:[#allocation3 + $0x8] sm:$0xff] %vm286, %v845
  %v848 = vld [vmem:[#allocation2 + $0x10] sm:$0xff]
  %849 = vmatprep.subr.mxu0 0.0
  %850 = vmatpush1.msra.mxu0 0.0
  %851 = vmatprep.subr.mxu0 0.0
  %852 = vmatpush1.msra.mxu0 0.0
  %853 = vmatprep.subr.mxu0 0.0
  %854 = vmatpush1.msra.mxu0 0.0
  %855 = vmatprep.subr.mxu0 0.0
  %856 = vmatpush1.msra.mxu0 0.0
  %857 = vmatprep.subr.mxu0 0.0
  %858 = vmatpush1.msra.mxu0 0.0
  %859 = vmatprep.subr.mxu0 0.0
  %860 = vmatpush1.msra.mxu0 0.0
  %861 = vmatprep.subr.mxu0 0.0
  %862 = vmatpush1.msra.mxu0 0.0
  %863 = vmatprep.subr.mxu0 0.0
  %864 = vmatpush1.msra.mxu0 0.0
  %865 = vmatprep.subr.mxu0 0.0
  %866 = vmatpush1.msra.mxu0 0.0
  %867 = vmatprep.subr.mxu0 0.0
  %868 = vmatpush1.msra.mxu0 0.0
  %869 = vmatprep.subr.mxu0 0.0
  %870 = vmatpush1.msra.mxu0 0.0
  %871 = vmatprep.subr.mxu0 0.0
  %872 = vmatpush1.msra.mxu0 0.0
  %873 = vmatprep.subr.mxu0 0.0
  %874 = vmatpush1.msra.mxu0 %v275
  %875 = vmatprep.subr.mxu0 0.0
  %876 = vmatpush1.msra.mxu0 %v274
  %877 = vmatprep.subr.mxu0 0.0
  %878 = vmatpush1.msra.mxu0 %v273
  %879 = vmatprep.subr.mxu0 0.0
  %880 = vmatpush1.msra.mxu0 %v272
  %881 = vmatprep.subr.mxu0 0.0
  %882 = vmatpush2.msra.mxu0 0.0
  %883 = vmatprep.subr.mxu0 0.0
  %884 = vmatpush2.msra.mxu0 0.0
  %885 = vmatprep.subr.mxu0 0.0
  %886 = vmatpush2.msra.mxu0 0.0
  %887 = vmatprep.subr.mxu0 0.0
  %888 = vmatpush2.msra.mxu0 0.0
  %889 = vmatprep.subr.mxu0 0.0
  %890 = vmatpush2.msra.mxu0 0.0
  %891 = vmatprep.subr.mxu0 0.0
  %892 = vmatpush2.msra.mxu0 0.0
  %893 = vmatprep.subr.mxu0 0.0
  %894 = vmatpush2.msra.mxu0 0.0
  %895 = vmatprep.subr.mxu0 0.0
  %896 = vmatpush2.msra.mxu0 0.0
  %897 = vmatprep.subr.mxu0 0.0
  %898 = vmatpush2.msra.mxu0 0.0
  %899 = vmatprep.subr.mxu0 0.0
  %900 = vmatpush2.msra.mxu0 0.0
  %901 = vmatprep.subr.mxu0 0.0
  %902 = vmatpush2.msra.mxu0 0.0
  %903 = vmatprep.subr.mxu0 0.0
  %904 = vmatpush2.msra.mxu0 0.0
  %905 = vmatprep.subr.mxu0 0.0
  %906 = vmatpush2.msra.mxu0 0.0
  %907 = vmatprep.subr.mxu0 0.0
  %908 = vmatpush2.msra.mxu0 0.0
  %909 = vmatprep.subr.mxu0 0.0
  %910 = vmatpush2.msra.mxu0 0.0
  %911 = vmatprep.subr.mxu0 0.0
  %912 = vmatpush2.msra.mxu0 0.0
  %913 = vmatprep.mubr.f32.mxu0 0.0
  %914 = vmatmul.mubr.f32.gmra.mxu0 %v746
  %v915 = vpop.f32.mrf.mxu0
  %v916 = vadd.f32 0.0, %v915
  %v917 = vpop.f32.mrf.mxu0
  %918 = vdwg.mxu0
  %v919 = vadd.f32 %v848, %v916
  %v920 = vxor.u32 %v919, 2147483648
  %v921 = vmul.f32 %v920, 1.442695
  %v922 = vpow.pop %v921
  %v923 = vadd.f32 %v922, 1.0
  %v924 = vrcp.pop %v923
  %v925 = vmul.f32 1.0, %v924
  %v926 = vtanh.pop %v919
  %v927 = vmul.f32 %v925, %v664
  %929 = vrot.lane.b32.xlu0 %v926, 64
  %v930 = vpop.permute.xlu0 %929
  %v932 = vmul.f32 %v925, %v930
  %934 = vrot.lane.b32.xlu0 %v932, 32
  %v935 = vpop.permute.xlu0 %934
  %v937 = vadd.f32 %v927, %v935
  %v938 = vtanh.pop %v937
  %940 = vrot.lane.b32.xlu0 %v938, 64
  %v941 = vpop.permute.xlu0 %940
  %v943 = vmul.f32 %v925, %v941
  %v944 = vsel %vm286, %v845, 0
  %946 = vmatprep.subr.mxu0 0.0
  %947 = vmatpush1.msra.mxu0 0.0
  %948 = vmatprep.subr.mxu0 0.0
  %949 = vmatpush1.msra.mxu0 0.0
  %950 = vmatprep.subr.mxu0 0.0
  %951 = vmatpush1.msra.mxu0 0.0
  %952 = vmatprep.subr.mxu0 0.0
  %953 = vmatpush1.msra.mxu0 0.0
  %954 = vmatprep.subr.mxu0 0.0
  %955 = vmatpush1.msra.mxu0 0.0
  %956 = vmatprep.subr.mxu0 0.0
  %957 = vmatpush1.msra.mxu0 0.0
  %958 = vmatprep.subr.mxu0 0.0
  %959 = vmatpush1.msra.mxu0 0.0
  %960 = vmatprep.subr.mxu0 0.0
  %961 = vmatpush1.msra.mxu0 0.0
  %962 = vmatprep.subr.mxu0 0.0
  %963 = vmatpush1.msra.mxu0 0.0
  %964 = vmatprep.subr.mxu0 0.0
  %965 = vmatpush1.msra.mxu0 0.0
  %966 = vmatprep.subr.mxu0 0.0
  %967 = vmatpush1.msra.mxu0 0.0
  %968 = vmatprep.subr.mxu0 0.0
  %969 = vmatpush1.msra.mxu0 0.0
  %970 = vmatprep.subr.mxu0 0.0
  %971 = vmatpush1.msra.mxu0 %v279
  %972 = vmatprep.subr.mxu0 0.0
  %973 = vmatpush1.msra.mxu0 %v278
  %974 = vmatprep.subr.mxu0 0.0
  %975 = vmatpush1.msra.mxu0 %v277
  %976 = vmatprep.subr.mxu0 0.0
  %977 = vmatpush1.msra.mxu0 %v276
  %978 = vmatprep.subr.mxu0 0.0
  %979 = vmatpush2.msra.mxu0 0.0
  %980 = vmatprep.subr.mxu0 0.0
  %981 = vmatpush2.msra.mxu0 0.0
  %982 = vmatprep.subr.mxu0 0.0
  %983 = vmatpush2.msra.mxu0 0.0
  %984 = vmatprep.subr.mxu0 0.0
  %985 = vmatpush2.msra.mxu0 0.0
  %986 = vmatprep.subr.mxu0 0.0
  %987 = vmatpush2.msra.mxu0 0.0
  %988 = vmatprep.subr.mxu0 0.0
  %989 = vmatpush2.msra.mxu0 0.0
  %990 = vmatprep.subr.mxu0 0.0
  %991 = vmatpush2.msra.mxu0 0.0
  %992 = vmatprep.subr.mxu0 0.0
  %993 = vmatpush2.msra.mxu0 0.0
  %994 = vmatprep.subr.mxu0 0.0
  %995 = vmatpush2.msra.mxu0 0.0
  %996 = vmatprep.subr.mxu0 0.0
  %997 = vmatpush2.msra.mxu0 0.0
  %998 = vmatprep.subr.mxu0 0.0
  %999 = vmatpush2.msra.mxu0 0.0
  %1000 = vmatprep.subr.mxu0 0.0
  %1001 = vmatpush2.msra.mxu0 0.0
  %1002 = vmatprep.subr.mxu0 0.0
  %1003 = vmatpush2.msra.mxu0 0.0
  %1004 = vmatprep.subr.mxu0 0.0
  %1005 = vmatpush2.msra.mxu0 0.0
  %1006 = vmatprep.subr.mxu0 0.0
  %1007 = vmatpush2.msra.mxu0 0.0
  %1008 = vmatprep.subr.mxu0 0.0
  %1009 = vmatpush2.msra.mxu0 0.0
  %1010 = vmatprep.mubr.f32.mxu0 0.0
  %1011 = vmatmul.mubr.f32.gmra.mxu0 %v944
  %v1012 = vpop.f32.mrf.mxu0
  %v1013 = vadd.f32 0.0, %v1012
  %v1014 = vpop.f32.mrf.mxu0
  %1015 = vdwg.mxu0
  %1017 = vrot.lane.b32.xlu0 %v943, 32
  %v1018 = vpop.permute.xlu0 %1017
  %v1019 = vsel %vm286, %v1018, 0
  %1021 = vmatprep.subr.mxu0 0.0
  %1022 = vmatpush1.msra.mxu0 0.0
  %1023 = vmatprep.subr.mxu0 0.0
  %1024 = vmatpush1.msra.mxu0 0.0
  %1025 = vmatprep.subr.mxu0 0.0
  %1026 = vmatpush1.msra.mxu0 0.0
  %1027 = vmatprep.subr.mxu0 0.0
  %1028 = vmatpush1.msra.mxu0 0.0
  %1029 = vmatprep.subr.mxu0 0.0
  %1030 = vmatpush1.msra.mxu0 0.0
  %1031 = vmatprep.subr.mxu0 0.0
  %1032 = vmatpush1.msra.mxu0 0.0
  %1033 = vmatprep.subr.mxu0 0.0
  %1034 = vmatpush1.msra.mxu0 0.0
  %1035 = vmatprep.subr.mxu0 0.0
  %1036 = vmatpush1.msra.mxu0 0.0
  %1037 = vmatprep.subr.mxu0 0.0
  %1038 = vmatpush1.msra.mxu0 0.0
  %1039 = vmatprep.subr.mxu0 0.0
  %1040 = vmatpush1.msra.mxu0 0.0
  %1041 = vmatprep.subr.mxu0 0.0
  %1042 = vmatpush1.msra.mxu0 0.0
  %1043 = vmatprep.subr.mxu0 0.0
  %1044 = vmatpush1.msra.mxu0 0.0
  %1045 = vmatprep.subr.mxu0 0.0
  %1046 = vmatpush1.msra.mxu0 %v271
  %1047 = vmatprep.subr.mxu0 0.0
  %1048 = vmatpush1.msra.mxu0 %v270
  %1049 = vmatprep.subr.mxu0 0.0
  %1050 = vmatpush1.msra.mxu0 %v269
  %1051 = vmatprep.subr.mxu0 0.0
  %1052 = vmatpush1.msra.mxu0 %v268
  %1053 = vmatprep.subr.mxu0 0.0
  %1054 = vmatpush2.msra.mxu0 0.0
  %1055 = vmatprep.subr.mxu0 0.0
  %1056 = vmatpush2.msra.mxu0 0.0
  %1057 = vmatprep.subr.mxu0 0.0
  %1058 = vmatpush2.msra.mxu0 0.0
  %1059 = vmatprep.subr.mxu0 0.0
  %1060 = vmatpush2.msra.mxu0 0.0
  %1061 = vmatprep.subr.mxu0 0.0
  %1062 = vmatpush2.msra.mxu0 0.0
  %1063 = vmatprep.subr.mxu0 0.0
  %1064 = vmatpush2.msra.mxu0 0.0
  %1065 = vmatprep.subr.mxu0 0.0
  %1066 = vmatpush2.msra.mxu0 0.0
  %1067 = vmatprep.subr.mxu0 0.0
  %1068 = vmatpush2.msra.mxu0 0.0
  %1069 = vmatprep.subr.mxu0 0.0
  %1070 = vmatpush2.msra.mxu0 0.0
  %1071 = vmatprep.subr.mxu0 0.0
  %1072 = vmatpush2.msra.mxu0 0.0
  %1073 = vmatprep.subr.mxu0 0.0
  %1074 = vmatpush2.msra.mxu0 0.0
  %1075 = vmatprep.subr.mxu0 0.0
  %1076 = vmatpush2.msra.mxu0 0.0
  %1077 = vmatprep.subr.mxu0 0.0
  %1078 = vmatpush2.msra.mxu0 0.0
  %1079 = vmatprep.subr.mxu0 0.0
  %1080 = vmatpush2.msra.mxu0 0.0
  %1081 = vmatprep.subr.mxu0 0.0
  %1082 = vmatpush2.msra.mxu0 0.0
  %1083 = vmatprep.subr.mxu0 0.0
  %1084 = vmatpush2.msra.mxu0 0.0
  %1085 = vmatprep.mubr.f32.mxu0 0.0
  %1086 = vmatmul.mubr.f32.gmra.mxu0 %v1019
  %v1087 = vpop.f32.mrf.mxu0
  %v1088 = vadd.f32 %v1013, %v1087
  %v1089 = vpop.f32.mrf.mxu0
  %1090 = vdwg.mxu0
  %v1091 = vadd.f32 %v1088, %v540
  %v1092 = vxor.u32 %v1091, 2147483648
  %v1093 = vmul.f32 %v1092, 1.442695
  %v1094 = vpow.pop %v1093
  %v1095 = vadd.f32 %v1094, 1.0
  %v1096 = vrcp.pop %v1095
  %v1097 = vmul.f32 1.0, %v1096
  %v1098 = vtanh.pop %v1091
  %v1099 = vmul.f32 %v1097, %v836
  %1101 = vrot.lane.b32.xlu0 %v1098, 64
  %v1102 = vpop.permute.xlu0 %1101
  %v1104 = vmul.f32 %v1097, %v1102
  %1106 = vrot.lane.b32.xlu0 %v1104, 32
  %v1107 = vpop.permute.xlu0 %1106
  %v1109 = vadd.f32 %v1099, %v1107
  %v1110 = vtanh.pop %v1109
  %1112 = vrot.lane.b32.xlu0 %v1110, 64
  %v1113 = vpop.permute.xlu0 %1112
  %v1115 = vmul.f32 %v1097, %v1113
  %1117 = vrot.lane.b32.xlu0 %v1115, 32
  %v1118 = vpop.permute.xlu0 %1117
  %1120 = vst.msk [vmem:[#allocation3 + $0x10] sm:$0xff] %vm286, %v1118
  %v1121 = vld [vmem:[#allocation2 + $0x18] sm:$0xff]
  %1122 = vmatprep.subr.mxu0 0.0
  %1123 = vmatpush1.msra.mxu0 0.0
  %1124 = vmatprep.subr.mxu0 0.0
  %1125 = vmatpush1.msra.mxu0 0.0
  %1126 = vmatprep.subr.mxu0 0.0
  %1127 = vmatpush1.msra.mxu0 0.0
  %1128 = vmatprep.subr.mxu0 0.0
  %1129 = vmatpush1.msra.mxu0 0.0
  %1130 = vmatprep.subr.mxu0 0.0
  %1131 = vmatpush1.msra.mxu0 0.0
  %1132 = vmatprep.subr.mxu0 0.0
  %1133 = vmatpush1.msra.mxu0 0.0
  %1134 = vmatprep.subr.mxu0 0.0
  %1135 = vmatpush1.msra.mxu0 0.0
  %1136 = vmatprep.subr.mxu0 0.0
  %1137 = vmatpush1.msra.mxu0 0.0
  %1138 = vmatprep.subr.mxu0 0.0
  %1139 = vmatpush1.msra.mxu0 0.0
  %1140 = vmatprep.subr.mxu0 0.0
  %1141 = vmatpush1.msra.mxu0 0.0
  %1142 = vmatprep.subr.mxu0 0.0
  %1143 = vmatpush1.msra.mxu0 0.0
  %1144 = vmatprep.subr.mxu0 0.0
  %1145 = vmatpush1.msra.mxu0 0.0
  %1146 = vmatprep.subr.mxu0 0.0
  %1147 = vmatpush1.msra.mxu0 %v275
  %1148 = vmatprep.subr.mxu0 0.0
  %1149 = vmatpush1.msra.mxu0 %v274
  %1150 = vmatprep.subr.mxu0 0.0
  %1151 = vmatpush1.msra.mxu0 %v273
  %1152 = vmatprep.subr.mxu0 0.0
  %1153 = vmatpush1.msra.mxu0 %v272
  %1154 = vmatprep.subr.mxu0 0.0
  %1155 = vmatpush2.msra.mxu0 0.0
  %1156 = vmatprep.subr.mxu0 0.0
  %1157 = vmatpush2.msra.mxu0 0.0
  %1158 = vmatprep.subr.mxu0 0.0
  %1159 = vmatpush2.msra.mxu0 0.0
  %1160 = vmatprep.subr.mxu0 0.0
  %1161 = vmatpush2.msra.mxu0 0.0
  %1162 = vmatprep.subr.mxu0 0.0
  %1163 = vmatpush2.msra.mxu0 0.0
  %1164 = vmatprep.subr.mxu0 0.0
  %1165 = vmatpush2.msra.mxu0 0.0
  %1166 = vmatprep.subr.mxu0 0.0
  %1167 = vmatpush2.msra.mxu0 0.0
  %1168 = vmatprep.subr.mxu0 0.0
  %1169 = vmatpush2.msra.mxu0 0.0
  %1170 = vmatprep.subr.mxu0 0.0
  %1171 = vmatpush2.msra.mxu0 0.0
  %1172 = vmatprep.subr.mxu0 0.0
  %1173 = vmatpush2.msra.mxu0 0.0
  %1174 = vmatprep.subr.mxu0 0.0
  %1175 = vmatpush2.msra.mxu0 0.0
  %1176 = vmatprep.subr.mxu0 0.0
  %1177 = vmatpush2.msra.mxu0 0.0
  %1178 = vmatprep.subr.mxu0 0.0
  %1179 = vmatpush2.msra.mxu0 0.0
  %1180 = vmatprep.subr.mxu0 0.0
  %1181 = vmatpush2.msra.mxu0 0.0
  %1182 = vmatprep.subr.mxu0 0.0
  %1183 = vmatpush2.msra.mxu0 0.0
  %1184 = vmatprep.subr.mxu0 0.0
  %1185 = vmatpush2.msra.mxu0 0.0
  %1186 = vmatprep.mubr.f32.mxu0 0.0
  %1187 = vmatmul.mubr.f32.gmra.mxu0 %v1019
  %v1188 = vpop.f32.mrf.mxu0
  %v1189 = vadd.f32 0.0, %v1188
  %v1190 = vpop.f32.mrf.mxu0
  %1191 = vdwg.mxu0
  %v1192 = vadd.f32 %v1121, %v1189
  %v1193 = vxor.u32 %v1192, 2147483648
  %v1194 = vmul.f32 %v1193, 1.442695
  %v1195 = vpow.pop %v1194
  %v1196 = vadd.f32 %v1195, 1.0
  %v1197 = vrcp.pop %v1196
  %v1198 = vmul.f32 1.0, %v1197
  %v1199 = vtanh.pop %v1192
  %v1200 = vmul.f32 %v1198, %v937
  %1202 = vrot.lane.b32.xlu0 %v1199, 64
  %v1203 = vpop.permute.xlu0 %1202
  %v1205 = vmul.f32 %v1198, %v1203
  %1207 = vrot.lane.b32.xlu0 %v1205, 32
  %v1208 = vpop.permute.xlu0 %1207
  %v1210 = vadd.f32 %v1200, %v1208
  %v1211 = vtanh.pop %v1210
  %1213 = vrot.lane.b32.xlu0 %v1211, 64
  %v1214 = vpop.permute.xlu0 %1213
  %v1216 = vmul.f32 %v1198, %v1214
  %v1217 = vsel %vm286, %v1118, 0
  %1219 = vmatprep.subr.mxu0 0.0
  %1220 = vmatpush1.msra.mxu0 0.0
  %1221 = vmatprep.subr.mxu0 0.0
  %1222 = vmatpush1.msra.mxu0 0.0
  %1223 = vmatprep.subr.mxu0 0.0
  %1224 = vmatpush1.msra.mxu0 0.0
  %1225 = vmatprep.subr.mxu0 0.0
  %1226 = vmatpush1.msra.mxu0 0.0
  %1227 = vmatprep.subr.mxu0 0.0
  %1228 = vmatpush1.msra.mxu0 0.0
  %1229 = vmatprep.subr.mxu0 0.0
  %1230 = vmatpush1.msra.mxu0 0.0
  %1231 = vmatprep.subr.mxu0 0.0
  %1232 = vmatpush1.msra.mxu0 0.0
  %1233 = vmatprep.subr.mxu0 0.0
  %1234 = vmatpush1.msra.mxu0 0.0
  %1235 = vmatprep.subr.mxu0 0.0
  %1236 = vmatpush1.msra.mxu0 0.0
  %1237 = vmatprep.subr.mxu0 0.0
  %1238 = vmatpush1.msra.mxu0 0.0
  %1239 = vmatprep.subr.mxu0 0.0
  %1240 = vmatpush1.msra.mxu0 0.0
  %1241 = vmatprep.subr.mxu0 0.0
  %1242 = vmatpush1.msra.mxu0 0.0
  %1243 = vmatprep.subr.mxu0 0.0
  %1244 = vmatpush1.msra.mxu0 %v279
  %1245 = vmatprep.subr.mxu0 0.0
  %1246 = vmatpush1.msra.mxu0 %v278
  %1247 = vmatprep.subr.mxu0 0.0
  %1248 = vmatpush1.msra.mxu0 %v277
  %1249 = vmatprep.subr.mxu0 0.0
  %1250 = vmatpush1.msra.mxu0 %v276
  %1251 = vmatprep.subr.mxu0 0.0
  %1252 = vmatpush2.msra.mxu0 0.0
  %1253 = vmatprep.subr.mxu0 0.0
  %1254 = vmatpush2.msra.mxu0 0.0
  %1255 = vmatprep.subr.mxu0 0.0
  %1256 = vmatpush2.msra.mxu0 0.0
  %1257 = vmatprep.subr.mxu0 0.0
  %1258 = vmatpush2.msra.mxu0 0.0
  %1259 = vmatprep.subr.mxu0 0.0
  %1260 = vmatpush2.msra.mxu0 0.0
  %1261 = vmatprep.subr.mxu0 0.0
  %1262 = vmatpush2.msra.mxu0 0.0
  %1263 = vmatprep.subr.mxu0 0.0
  %1264 = vmatpush2.msra.mxu0 0.0
  %1265 = vmatprep.subr.mxu0 0.0
  %1266 = vmatpush2.msra.mxu0 0.0
  %1267 = vmatprep.subr.mxu0 0.0
  %1268 = vmatpush2.msra.mxu0 0.0
  %1269 = vmatprep.subr.mxu0 0.0
  %1270 = vmatpush2.msra.mxu0 0.0
  %1271 = vmatprep.subr.mxu0 0.0
  %1272 = vmatpush2.msra.mxu0 0.0
  %1273 = vmatprep.subr.mxu0 0.0
  %1274 = vmatpush2.msra.mxu0 0.0
  %1275 = vmatprep.subr.mxu0 0.0
  %1276 = vmatpush2.msra.mxu0 0.0
  %1277 = vmatprep.subr.mxu0 0.0
  %1278 = vmatpush2.msra.mxu0 0.0
  %1279 = vmatprep.subr.mxu0 0.0
  %1280 = vmatpush2.msra.mxu0 0.0
  %1281 = vmatprep.subr.mxu0 0.0
  %1282 = vmatpush2.msra.mxu0 0.0
  %1283 = vmatprep.mubr.f32.mxu0 0.0
  %1284 = vmatmul.mubr.f32.gmra.mxu0 %v1217
  %v1285 = vpop.f32.mrf.mxu0
  %v1286 = vadd.f32 0.0, %v1285
  %v1287 = vpop.f32.mrf.mxu0
  %1288 = vdwg.mxu0
  %1290 = vrot.lane.b32.xlu0 %v1216, 32
  %v1291 = vpop.permute.xlu0 %1290
  %v1292 = vsel %vm286, %v1291, 0
  %1294 = vmatprep.subr.mxu0 0.0
  %1295 = vmatpush1.msra.mxu0 0.0
  %1296 = vmatprep.subr.mxu0 0.0
  %1297 = vmatpush1.msra.mxu0 0.0
  %1298 = vmatprep.subr.mxu0 0.0
  %1299 = vmatpush1.msra.mxu0 0.0
  %1300 = vmatprep.subr.mxu0 0.0
  %1301 = vmatpush1.msra.mxu0 0.0
  %1302 = vmatprep.subr.mxu0 0.0
  %1303 = vmatpush1.msra.mxu0 0.0
  %1304 = vmatprep.subr.mxu0 0.0
  %1305 = vmatpush1.msra.mxu0 0.0
  %1306 = vmatprep.subr.mxu0 0.0
  %1307 = vmatpush1.msra.mxu0 0.0
  %1308 = vmatprep.subr.mxu0 0.0
  %1309 = vmatpush1.msra.mxu0 0.0
  %1310 = vmatprep.subr.mxu0 0.0
  %1311 = vmatpush1.msra.mxu0 0.0
  %1312 = vmatprep.subr.mxu0 0.0
  %1313 = vmatpush1.msra.mxu0 0.0
  %1314 = vmatprep.subr.mxu0 0.0
  %1315 = vmatpush1.msra.mxu0 0.0
  %1316 = vmatprep.subr.mxu0 0.0
  %1317 = vmatpush1.msra.mxu0 0.0
  %1318 = vmatprep.subr.mxu0 0.0
  %1319 = vmatpush1.msra.mxu0 %v271
  %1320 = vmatprep.subr.mxu0 0.0
  %1321 = vmatpush1.msra.mxu0 %v270
  %1322 = vmatprep.subr.mxu0 0.0
  %1323 = vmatpush1.msra.mxu0 %v269
  %1324 = vmatprep.subr.mxu0 0.0
  %1325 = vmatpush1.msra.mxu0 %v268
  %1326 = vmatprep.subr.mxu0 0.0
  %1327 = vmatpush2.msra.mxu0 0.0
  %1328 = vmatprep.subr.mxu0 0.0
  %1329 = vmatpush2.msra.mxu0 0.0
  %1330 = vmatprep.subr.mxu0 0.0
  %1331 = vmatpush2.msra.mxu0 0.0
  %1332 = vmatprep.subr.mxu0 0.0
  %1333 = vmatpush2.msra.mxu0 0.0
  %1334 = vmatprep.subr.mxu0 0.0
  %1335 = vmatpush2.msra.mxu0 0.0
  %1336 = vmatprep.subr.mxu0 0.0
  %1337 = vmatpush2.msra.mxu0 0.0
  %1338 = vmatprep.subr.mxu0 0.0
  %1339 = vmatpush2.msra.mxu0 0.0
  %1340 = vmatprep.subr.mxu0 0.0
  %1341 = vmatpush2.msra.mxu0 0.0
  %1342 = vmatprep.subr.mxu0 0.0
  %1343 = vmatpush2.msra.mxu0 0.0
  %1344 = vmatprep.subr.mxu0 0.0
  %1345 = vmatpush2.msra.mxu0 0.0
  %1346 = vmatprep.subr.mxu0 0.0
  %1347 = vmatpush2.msra.mxu0 0.0
  %1348 = vmatprep.subr.mxu0 0.0
  %1349 = vmatpush2.msra.mxu0 0.0
  %1350 = vmatprep.subr.mxu0 0.0
  %1351 = vmatpush2.msra.mxu0 0.0
  %1352 = vmatprep.subr.mxu0 0.0
  %1353 = vmatpush2.msra.mxu0 0.0
  %1354 = vmatprep.subr.mxu0 0.0
  %1355 = vmatpush2.msra.mxu0 0.0
  %1356 = vmatprep.subr.mxu0 0.0
  %1357 = vmatpush2.msra.mxu0 0.0
  %1358 = vmatprep.mubr.f32.mxu0 0.0
  %1359 = vmatmul.mubr.f32.gmra.mxu0 %v1292
  %v1360 = vpop.f32.mrf.mxu0
  %v1361 = vadd.f32 %v1286, %v1360
  %v1362 = vpop.f32.mrf.mxu0
  %1363 = vdwg.mxu0
  %v1364 = vadd.f32 %v1361, %v540
  %v1365 = vxor.u32 %v1364, 2147483648
  %v1366 = vmul.f32 %v1365, 1.442695
  %v1367 = vpow.pop %v1366
  %v1368 = vadd.f32 %v1367, 1.0
  %v1369 = vrcp.pop %v1368
  %v1370 = vmul.f32 1.0, %v1369
  %v1371 = vtanh.pop %v1364
  %v1372 = vmul.f32 %v1370, %v1109
  %1374 = vrot.lane.b32.xlu0 %v1371, 64
  %v1375 = vpop.permute.xlu0 %1374
  %v1377 = vmul.f32 %v1370, %v1375
  %1379 = vrot.lane.b32.xlu0 %v1377, 32
  %v1380 = vpop.permute.xlu0 %1379
  %v1382 = vadd.f32 %v1372, %v1380
  %v1383 = vtanh.pop %v1382
  %1385 = vrot.lane.b32.xlu0 %v1383, 64
  %v1386 = vpop.permute.xlu0 %1385
  %v1388 = vmul.f32 %v1370, %v1386
  %1390 = vrot.lane.b32.xlu0 %v1388, 32
  %v1391 = vpop.permute.xlu0 %1390
  %1393 = vst.msk [vmem:[#allocation3 + $0x18] sm:$0xff] %vm286, %v1391
  %v1394 = vld [vmem:[#allocation2 + $0x20] sm:$0xff]
  %1395 = vmatprep.subr.mxu0 0.0
  %1396 = vmatpush1.msra.mxu0 0.0
  %1397 = vmatprep.subr.mxu0 0.0
  %1398 = vmatpush1.msra.mxu0 0.0
  %1399 = vmatprep.subr.mxu0 0.0
  %1400 = vmatpush1.msra.mxu0 0.0
  %1401 = vmatprep.subr.mxu0 0.0
  %1402 = vmatpush1.msra.mxu0 0.0
  %1403 = vmatprep.subr.mxu0 0.0
  %1404 = vmatpush1.msra.mxu0 0.0
  %1405 = vmatprep.subr.mxu0 0.0
  %1406 = vmatpush1.msra.mxu0 0.0
  %1407 = vmatprep.subr.mxu0 0.0
  %1408 = vmatpush1.msra.mxu0 0.0
  %1409 = vmatprep.subr.mxu0 0.0
  %1410 = vmatpush1.msra.mxu0 0.0
  %1411 = vmatprep.subr.mxu0 0.0
  %1412 = vmatpush1.msra.mxu0 0.0
  %1413 = vmatprep.subr.mxu0 0.0
  %1414 = vmatpush1.msra.mxu0 0.0
  %1415 = vmatprep.subr.mxu0 0.0
  %1416 = vmatpush1.msra.mxu0 0.0
  %1417 = vmatprep.subr.mxu0 0.0
  %1418 = vmatpush1.msra.mxu0 0.0
  %1419 = vmatprep.subr.mxu0 0.0
  %1420 = vmatpush1.msra.mxu0 %v275
  %1421 = vmatprep.subr.mxu0 0.0
  %1422 = vmatpush1.msra.mxu0 %v274
  %1423 = vmatprep.subr.mxu0 0.0
  %1424 = vmatpush1.msra.mxu0 %v273
  %1425 = vmatprep.subr.mxu0 0.0
  %1426 = vmatpush1.msra.mxu0 %v272
  %1427 = vmatprep.subr.mxu0 0.0
  %1428 = vmatpush2.msra.mxu0 0.0
  %1429 = vmatprep.subr.mxu0 0.0
  %1430 = vmatpush2.msra.mxu0 0.0
  %1431 = vmatprep.subr.mxu0 0.0
  %1432 = vmatpush2.msra.mxu0 0.0
  %1433 = vmatprep.subr.mxu0 0.0
  %1434 = vmatpush2.msra.mxu0 0.0
  %1435 = vmatprep.subr.mxu0 0.0
  %1436 = vmatpush2.msra.mxu0 0.0
  %1437 = vmatprep.subr.mxu0 0.0
  %1438 = vmatpush2.msra.mxu0 0.0
  %1439 = vmatprep.subr.mxu0 0.0
  %1440 = vmatpush2.msra.mxu0 0.0
  %1441 = vmatprep.subr.mxu0 0.0
  %1442 = vmatpush2.msra.mxu0 0.0
  %1443 = vmatprep.subr.mxu0 0.0
  %1444 = vmatpush2.msra.mxu0 0.0
  %1445 = vmatprep.subr.mxu0 0.0
  %1446 = vmatpush2.msra.mxu0 0.0
  %1447 = vmatprep.subr.mxu0 0.0
  %1448 = vmatpush2.msra.mxu0 0.0
  %1449 = vmatprep.subr.mxu0 0.0
  %1450 = vmatpush2.msra.mxu0 0.0
  %1451 = vmatprep.subr.mxu0 0.0
  %1452 = vmatpush2.msra.mxu0 0.0
  %1453 = vmatprep.subr.mxu0 0.0
  %1454 = vmatpush2.msra.mxu0 0.0
  %1455 = vmatprep.subr.mxu0 0.0
  %1456 = vmatpush2.msra.mxu0 0.0
  %1457 = vmatprep.subr.mxu0 0.0
  %1458 = vmatpush2.msra.mxu0 0.0
  %1459 = vmatprep.mubr.f32.mxu0 0.0
  %1460 = vmatmul.mubr.f32.gmra.mxu0 %v1292
  %v1461 = vpop.f32.mrf.mxu0
  %v1462 = vadd.f32 0.0, %v1461
  %v1463 = vpop.f32.mrf.mxu0
  %1464 = vdwg.mxu0
  %v1465 = vadd.f32 %v1394, %v1462
  %v1466 = vxor.u32 %v1465, 2147483648
  %v1467 = vmul.f32 %v1466, 1.442695
  %v1468 = vpow.pop %v1467
  %v1469 = vadd.f32 %v1468, 1.0
  %v1470 = vrcp.pop %v1469
  %v1471 = vmul.f32 1.0, %v1470
  %v1472 = vtanh.pop %v1465
  %v1473 = vmul.f32 %v1471, %v1210
  %1475 = vrot.lane.b32.xlu0 %v1472, 64
  %v1476 = vpop.permute.xlu0 %1475
  %v1478 = vmul.f32 %v1471, %v1476
  %1480 = vrot.lane.b32.xlu0 %v1478, 32
  %v1481 = vpop.permute.xlu0 %1480
  %v1483 = vadd.f32 %v1473, %v1481
  %v1484 = vtanh.pop %v1483
  %1486 = vrot.lane.b32.xlu0 %v1484, 64
  %v1487 = vpop.permute.xlu0 %1486
  %v1489 = vmul.f32 %v1471, %v1487
  %v1490 = vsel %vm286, %v1391, 0
  %1492 = vmatprep.subr.mxu0 0.0
  %1493 = vmatpush1.msra.mxu0 0.0
  %1494 = vmatprep.subr.mxu0 0.0
  %1495 = vmatpush1.msra.mxu0 0.0
  %1496 = vmatprep.subr.mxu0 0.0
  %1497 = vmatpush1.msra.mxu0 0.0
  %1498 = vmatprep.subr.mxu0 0.0
  %1499 = vmatpush1.msra.mxu0 0.0
  %1500 = vmatprep.subr.mxu0 0.0
  %1501 = vmatpush1.msra.mxu0 0.0
  %1502 = vmatprep.subr.mxu0 0.0
  %1503 = vmatpush1.msra.mxu0 0.0
  %1504 = vmatprep.subr.mxu0 0.0
  %1505 = vmatpush1.msra.mxu0 0.0
  %1506 = vmatprep.subr.mxu0 0.0
  %1507 = vmatpush1.msra.mxu0 0.0
  %1508 = vmatprep.subr.mxu0 0.0
  %1509 = vmatpush1.msra.mxu0 0.0
  %1510 = vmatprep.subr.mxu0 0.0
  %1511 = vmatpush1.msra.mxu0 0.0
  %1512 = vmatprep.subr.mxu0 0.0
  %1513 = vmatpush1.msra.mxu0 0.0
  %1514 = vmatprep.subr.mxu0 0.0
  %1515 = vmatpush1.msra.mxu0 0.0
  %1516 = vmatprep.subr.mxu0 0.0
  %1517 = vmatpush1.msra.mxu0 %v279
  %1518 = vmatprep.subr.mxu0 0.0
  %1519 = vmatpush1.msra.mxu0 %v278
  %1520 = vmatprep.subr.mxu0 0.0
  %1521 = vmatpush1.msra.mxu0 %v277
  %1522 = vmatprep.subr.mxu0 0.0
  %1523 = vmatpush1.msra.mxu0 %v276
  %1524 = vmatprep.subr.mxu0 0.0
  %1525 = vmatpush2.msra.mxu0 0.0
  %1526 = vmatprep.subr.mxu0 0.0
  %1527 = vmatpush2.msra.mxu0 0.0
  %1528 = vmatprep.subr.mxu0 0.0
  %1529 = vmatpush2.msra.mxu0 0.0
  %1530 = vmatprep.subr.mxu0 0.0
  %1531 = vmatpush2.msra.mxu0 0.0
  %1532 = vmatprep.subr.mxu0 0.0
  %1533 = vmatpush2.msra.mxu0 0.0
  %1534 = vmatprep.subr.mxu0 0.0
  %1535 = vmatpush2.msra.mxu0 0.0
  %1536 = vmatprep.subr.mxu0 0.0
  %1537 = vmatpush2.msra.mxu0 0.0
  %1538 = vmatprep.subr.mxu0 0.0
  %1539 = vmatpush2.msra.mxu0 0.0
  %1540 = vmatprep.subr.mxu0 0.0
  %1541 = vmatpush2.msra.mxu0 0.0
  %1542 = vmatprep.subr.mxu0 0.0
  %1543 = vmatpush2.msra.mxu0 0.0
  %1544 = vmatprep.subr.mxu0 0.0
  %1545 = vmatpush2.msra.mxu0 0.0
  %1546 = vmatprep.subr.mxu0 0.0
  %1547 = vmatpush2.msra.mxu0 0.0
  %1548 = vmatprep.subr.mxu0 0.0
  %1549 = vmatpush2.msra.mxu0 0.0
  %1550 = vmatprep.subr.mxu0 0.0
  %1551 = vmatpush2.msra.mxu0 0.0
  %1552 = vmatprep.subr.mxu0 0.0
  %1553 = vmatpush2.msra.mxu0 0.0
  %1554 = vmatprep.subr.mxu0 0.0
  %1555 = vmatpush2.msra.mxu0 0.0
  %1556 = vmatprep.mubr.f32.mxu0 0.0
  %1557 = vmatmul.mubr.f32.gmra.mxu0 %v1490
  %v1558 = vpop.f32.mrf.mxu0
  %v1559 = vadd.f32 0.0, %v1558
  %v1560 = vpop.f32.mrf.mxu0
  %1561 = vdwg.mxu0
  %1563 = vrot.lane.b32.xlu0 %v1489, 32
  %v1564 = vpop.permute.xlu0 %1563
  %v1565 = vsel %vm286, %v1564, 0
  %1567 = vmatprep.subr.mxu0 0.0
  %1568 = vmatpush1.msra.mxu0 0.0
  %1569 = vmatprep.subr.mxu0 0.0
  %1570 = vmatpush1.msra.mxu0 0.0
  %1571 = vmatprep.subr.mxu0 0.0
  %1572 = vmatpush1.msra.mxu0 0.0
  %1573 = vmatprep.subr.mxu0 0.0
  %1574 = vmatpush1.msra.mxu0 0.0
  %1575 = vmatprep.subr.mxu0 0.0
  %1576 = vmatpush1.msra.mxu0 0.0
  %1577 = vmatprep.subr.mxu0 0.0
  %1578 = vmatpush1.msra.mxu0 0.0
  %1579 = vmatprep.subr.mxu0 0.0
  %1580 = vmatpush1.msra.mxu0 0.0
  %1581 = vmatprep.subr.mxu0 0.0
  %1582 = vmatpush1.msra.mxu0 0.0
  %1583 = vmatprep.subr.mxu0 0.0
  %1584 = vmatpush1.msra.mxu0 0.0
  %1585 = vmatprep.subr.mxu0 0.0
  %1586 = vmatpush1.msra.mxu0 0.0
  %1587 = vmatprep.subr.mxu0 0.0
  %1588 = vmatpush1.msra.mxu0 0.0
  %1589 = vmatprep.subr.mxu0 0.0
  %1590 = vmatpush1.msra.mxu0 0.0
  %1591 = vmatprep.subr.mxu0 0.0
  %1592 = vmatpush1.msra.mxu0 %v271
  %1593 = vmatprep.subr.mxu0 0.0
  %1594 = vmatpush1.msra.mxu0 %v270
  %1595 = vmatprep.subr.mxu0 0.0
  %1596 = vmatpush1.msra.mxu0 %v269
  %1597 = vmatprep.subr.mxu0 0.0
  %1598 = vmatpush1.msra.mxu0 %v268
  %1599 = vmatprep.subr.mxu0 0.0
  %1600 = vmatpush2.msra.mxu0 0.0
  %1601 = vmatprep.subr.mxu0 0.0
  %1602 = vmatpush2.msra.mxu0 0.0
  %1603 = vmatprep.subr.mxu0 0.0
  %1604 = vmatpush2.msra.mxu0 0.0
  %1605 = vmatprep.subr.mxu0 0.0
  %1606 = vmatpush2.msra.mxu0 0.0
  %1607 = vmatprep.subr.mxu0 0.0
  %1608 = vmatpush2.msra.mxu0 0.0
  %1609 = vmatprep.subr.mxu0 0.0
  %1610 = vmatpush2.msra.mxu0 0.0
  %1611 = vmatprep.subr.mxu0 0.0
  %1612 = vmatpush2.msra.mxu0 0.0
  %1613 = vmatprep.subr.mxu0 0.0
  %1614 = vmatpush2.msra.mxu0 0.0
  %1615 = vmatprep.subr.mxu0 0.0
  %1616 = vmatpush2.msra.mxu0 0.0
  %1617 = vmatprep.subr.mxu0 0.0
  %1618 = vmatpush2.msra.mxu0 0.0
  %1619 = vmatprep.subr.mxu0 0.0
  %1620 = vmatpush2.msra.mxu0 0.0
  %1621 = vmatprep.subr.mxu0 0.0
  %1622 = vmatpush2.msra.mxu0 0.0
  %1623 = vmatprep.subr.mxu0 0.0
  %1624 = vmatpush2.msra.mxu0 0.0
  %1625 = vmatprep.subr.mxu0 0.0
  %1626 = vmatpush2.msra.mxu0 0.0
  %1627 = vmatprep.subr.mxu0 0.0
  %1628 = vmatpush2.msra.mxu0 0.0
  %1629 = vmatprep.subr.mxu0 0.0
  %1630 = vmatpush2.msra.mxu0 0.0
  %1631 = vmatprep.mubr.f32.mxu0 0.0
  %1632 = vmatmul.mubr.f32.gmra.mxu0 %v1565
  %v1633 = vpop.f32.mrf.mxu0
  %v1634 = vadd.f32 %v1559, %v1633
  %v1635 = vpop.f32.mrf.mxu0
  %1636 = vdwg.mxu0
  %v1637 = vadd.f32 %v1634, %v540
  %v1638 = vxor.u32 %v1637, 2147483648
  %v1639 = vmul.f32 %v1638, 1.442695
  %v1640 = vpow.pop %v1639
  %v1641 = vadd.f32 %v1640, 1.0
  %v1642 = vrcp.pop %v1641
  %v1643 = vmul.f32 1.0, %v1642
  %v1644 = vtanh.pop %v1637
  %v1645 = vmul.f32 %v1643, %v1382
  %1647 = vrot.lane.b32.xlu0 %v1644, 64
  %v1648 = vpop.permute.xlu0 %1647
  %v1650 = vmul.f32 %v1643, %v1648
  %1652 = vrot.lane.b32.xlu0 %v1650, 32
  %v1653 = vpop.permute.xlu0 %1652
  %v1655 = vadd.f32 %v1645, %v1653
  %v1656 = vtanh.pop %v1655
  %1658 = vrot.lane.b32.xlu0 %v1656, 64
  %v1659 = vpop.permute.xlu0 %1658
  %v1661 = vmul.f32 %v1643, %v1659
  %1663 = vrot.lane.b32.xlu0 %v1661, 32
  %v1664 = vpop.permute.xlu0 %1663
  %1666 = vst.msk [vmem:[#allocation3 + $0x20] sm:$0xff] %vm286, %v1664
  %v1667 = vld [vmem:[#allocation2 + $0x28] sm:$0xff]
  %1668 = vmatprep.subr.mxu0 0.0
  %1669 = vmatpush1.msra.mxu0 0.0
  %1670 = vmatprep.subr.mxu0 0.0
  %1671 = vmatpush1.msra.mxu0 0.0
  %1672 = vmatprep.subr.mxu0 0.0
  %1673 = vmatpush1.msra.mxu0 0.0
  %1674 = vmatprep.subr.mxu0 0.0
  %1675 = vmatpush1.msra.mxu0 0.0
  %1676 = vmatprep.subr.mxu0 0.0
  %1677 = vmatpush1.msra.mxu0 0.0
  %1678 = vmatprep.subr.mxu0 0.0
  %1679 = vmatpush1.msra.mxu0 0.0
  %1680 = vmatprep.subr.mxu0 0.0
  %1681 = vmatpush1.msra.mxu0 0.0
  %1682 = vmatprep.subr.mxu0 0.0
  %1683 = vmatpush1.msra.mxu0 0.0
  %1684 = vmatprep.subr.mxu0 0.0
  %1685 = vmatpush1.msra.mxu0 0.0
  %1686 = vmatprep.subr.mxu0 0.0
  %1687 = vmatpush1.msra.mxu0 0.0
  %1688 = vmatprep.subr.mxu0 0.0
  %1689 = vmatpush1.msra.mxu0 0.0
  %1690 = vmatprep.subr.mxu0 0.0
  %1691 = vmatpush1.msra.mxu0 0.0
  %1692 = vmatprep.subr.mxu0 0.0
  %1693 = vmatpush1.msra.mxu0 %v275
  %1694 = vmatprep.subr.mxu0 0.0
  %1695 = vmatpush1.msra.mxu0 %v274
  %1696 = vmatprep.subr.mxu0 0.0
  %1697 = vmatpush1.msra.mxu0 %v273
  %1698 = vmatprep.subr.mxu0 0.0
  %1699 = vmatpush1.msra.mxu0 %v272
  %1700 = vmatprep.subr.mxu0 0.0
  %1701 = vmatpush2.msra.mxu0 0.0
  %1702 = vmatprep.subr.mxu0 0.0
  %1703 = vmatpush2.msra.mxu0 0.0
  %1704 = vmatprep.subr.mxu0 0.0
  %1705 = vmatpush2.msra.mxu0 0.0
  %1706 = vmatprep.subr.mxu0 0.0
  %1707 = vmatpush2.msra.mxu0 0.0
  %1708 = vmatprep.subr.mxu0 0.0
  %1709 = vmatpush2.msra.mxu0 0.0
  %1710 = vmatprep.subr.mxu0 0.0
  %1711 = vmatpush2.msra.mxu0 0.0
  %1712 = vmatprep.subr.mxu0 0.0
  %1713 = vmatpush2.msra.mxu0 0.0
  %1714 = vmatprep.subr.mxu0 0.0
  %1715 = vmatpush2.msra.mxu0 0.0
  %1716 = vmatprep.subr.mxu0 0.0
  %1717 = vmatpush2.msra.mxu0 0.0
  %1718 = vmatprep.subr.mxu0 0.0
  %1719 = vmatpush2.msra.mxu0 0.0
  %1720 = vmatprep.subr.mxu0 0.0
  %1721 = vmatpush2.msra.mxu0 0.0
  %1722 = vmatprep.subr.mxu0 0.0
  %1723 = vmatpush2.msra.mxu0 0.0
  %1724 = vmatprep.subr.mxu0 0.0
  %1725 = vmatpush2.msra.mxu0 0.0
  %1726 = vmatprep.subr.mxu0 0.0
  %1727 = vmatpush2.msra.mxu0 0.0
  %1728 = vmatprep.subr.mxu0 0.0
  %1729 = vmatpush2.msra.mxu0 0.0
  %1730 = vmatprep.subr.mxu0 0.0
  %1731 = vmatpush2.msra.mxu0 0.0
  %1732 = vmatprep.mubr.f32.mxu0 0.0
  %1733 = vmatmul.mubr.f32.gmra.mxu0 %v1565
  %v1734 = vpop.f32.mrf.mxu0
  %v1735 = vadd.f32 0.0, %v1734
  %v1736 = vpop.f32.mrf.mxu0
  %1737 = vdwg.mxu0
  %v1738 = vadd.f32 %v1667, %v1735
  %v1739 = vxor.u32 %v1738, 2147483648
  %v1740 = vmul.f32 %v1739, 1.442695
  %v1741 = vpow.pop %v1740
  %v1742 = vadd.f32 %v1741, 1.0
  %v1743 = vrcp.pop %v1742
  %v1744 = vmul.f32 1.0, %v1743
  %v1745 = vtanh.pop %v1738
  %v1746 = vmul.f32 %v1744, %v1483
  %1748 = vrot.lane.b32.xlu0 %v1745, 64
  %v1749 = vpop.permute.xlu0 %1748
  %v1751 = vmul.f32 %v1744, %v1749
  %1753 = vrot.lane.b32.xlu0 %v1751, 32
  %v1754 = vpop.permute.xlu0 %1753
  %v1756 = vadd.f32 %v1746, %v1754
  %v1757 = vtanh.pop %v1756
  %1759 = vrot.lane.b32.xlu0 %v1757, 64
  %v1760 = vpop.permute.xlu0 %1759
  %v1762 = vmul.f32 %v1744, %v1760
  %v1763 = vsel %vm286, %v1664, 0
  %1765 = vmatprep.subr.mxu0 0.0
  %1766 = vmatpush1.msra.mxu0 0.0
  %1767 = vmatprep.subr.mxu0 0.0
  %1768 = vmatpush1.msra.mxu0 0.0
  %1769 = vmatprep.subr.mxu0 0.0
  %1770 = vmatpush1.msra.mxu0 0.0
  %1771 = vmatprep.subr.mxu0 0.0
  %1772 = vmatpush1.msra.mxu0 0.0
  %1773 = vmatprep.subr.mxu0 0.0
  %1774 = vmatpush1.msra.mxu0 0.0
  %1775 = vmatprep.subr.mxu0 0.0
  %1776 = vmatpush1.msra.mxu0 0.0
  %1777 = vmatprep.subr.mxu0 0.0
  %1778 = vmatpush1.msra.mxu0 0.0
  %1779 = vmatprep.subr.mxu0 0.0
  %1780 = vmatpush1.msra.mxu0 0.0
  %1781 = vmatprep.subr.mxu0 0.0
  %1782 = vmatpush1.msra.mxu0 0.0
  %1783 = vmatprep.subr.mxu0 0.0
  %1784 = vmatpush1.msra.mxu0 0.0
  %1785 = vmatprep.subr.mxu0 0.0
  %1786 = vmatpush1.msra.mxu0 0.0
  %1787 = vmatprep.subr.mxu0 0.0
  %1788 = vmatpush1.msra.mxu0 0.0
  %1789 = vmatprep.subr.mxu0 0.0
  %1790 = vmatpush1.msra.mxu0 %v279
  %1791 = vmatprep.subr.mxu0 0.0
  %1792 = vmatpush1.msra.mxu0 %v278
  %1793 = vmatprep.subr.mxu0 0.0
  %1794 = vmatpush1.msra.mxu0 %v277
  %1795 = vmatprep.subr.mxu0 0.0
  %1796 = vmatpush1.msra.mxu0 %v276
  %1797 = vmatprep.subr.mxu0 0.0
  %1798 = vmatpush2.msra.mxu0 0.0
  %1799 = vmatprep.subr.mxu0 0.0
  %1800 = vmatpush2.msra.mxu0 0.0
  %1801 = vmatprep.subr.mxu0 0.0
  %1802 = vmatpush2.msra.mxu0 0.0
  %1803 = vmatprep.subr.mxu0 0.0
  %1804 = vmatpush2.msra.mxu0 0.0
  %1805 = vmatprep.subr.mxu0 0.0
  %1806 = vmatpush2.msra.mxu0 0.0
  %1807 = vmatprep.subr.mxu0 0.0
  %1808 = vmatpush2.msra.mxu0 0.0
  %1809 = vmatprep.subr.mxu0 0.0
  %1810 = vmatpush2.msra.mxu0 0.0
  %1811 = vmatprep.subr.mxu0 0.0
  %1812 = vmatpush2.msra.mxu0 0.0
  %1813 = vmatprep.subr.mxu0 0.0
  %1814 = vmatpush2.msra.mxu0 0.0
  %1815 = vmatprep.subr.mxu0 0.0
  %1816 = vmatpush2.msra.mxu0 0.0
  %1817 = vmatprep.subr.mxu0 0.0
  %1818 = vmatpush2.msra.mxu0 0.0
  %1819 = vmatprep.subr.mxu0 0.0
  %1820 = vmatpush2.msra.mxu0 0.0
  %1821 = vmatprep.subr.mxu0 0.0
  %1822 = vmatpush2.msra.mxu0 0.0
  %1823 = vmatprep.subr.mxu0 0.0
  %1824 = vmatpush2.msra.mxu0 0.0
  %1825 = vmatprep.subr.mxu0 0.0
  %1826 = vmatpush2.msra.mxu0 0.0
  %1827 = vmatprep.subr.mxu0 0.0
  %1828 = vmatpush2.msra.mxu0 0.0
  %1829 = vmatprep.mubr.f32.mxu0 0.0
  %1830 = vmatmul.mubr.f32.gmra.mxu0 %v1763
  %v1831 = vpop.f32.mrf.mxu0
  %v1832 = vadd.f32 0.0, %v1831
  %v1833 = vpop.f32.mrf.mxu0
  %1834 = vdwg.mxu0
  %1836 = vrot.lane.b32.xlu0 %v1762, 32
  %v1837 = vpop.permute.xlu0 %1836
  %v1838 = vsel %vm286, %v1837, 0
  %1840 = vmatprep.subr.mxu0 0.0
  %1841 = vmatpush1.msra.mxu0 0.0
  %1842 = vmatprep.subr.mxu0 0.0
  %1843 = vmatpush1.msra.mxu0 0.0
  %1844 = vmatprep.subr.mxu0 0.0
  %1845 = vmatpush1.msra.mxu0 0.0
  %1846 = vmatprep.subr.mxu0 0.0
  %1847 = vmatpush1.msra.mxu0 0.0
  %1848 = vmatprep.subr.mxu0 0.0
  %1849 = vmatpush1.msra.mxu0 0.0
  %1850 = vmatprep.subr.mxu0 0.0
  %1851 = vmatpush1.msra.mxu0 0.0
  %1852 = vmatprep.subr.mxu0 0.0
  %1853 = vmatpush1.msra.mxu0 0.0
  %1854 = vmatprep.subr.mxu0 0.0
  %1855 = vmatpush1.msra.mxu0 0.0
  %1856 = vmatprep.subr.mxu0 0.0
  %1857 = vmatpush1.msra.mxu0 0.0
  %1858 = vmatprep.subr.mxu0 0.0
  %1859 = vmatpush1.msra.mxu0 0.0
  %1860 = vmatprep.subr.mxu0 0.0
  %1861 = vmatpush1.msra.mxu0 0.0
  %1862 = vmatprep.subr.mxu0 0.0
  %1863 = vmatpush1.msra.mxu0 0.0
  %1864 = vmatprep.subr.mxu0 0.0
  %1865 = vmatpush1.msra.mxu0 %v271
  %1866 = vmatprep.subr.mxu0 0.0
  %1867 = vmatpush1.msra.mxu0 %v270
  %1868 = vmatprep.subr.mxu0 0.0
  %1869 = vmatpush1.msra.mxu0 %v269
  %1870 = vmatprep.subr.mxu0 0.0
  %1871 = vmatpush1.msra.mxu0 %v268
  %1872 = vmatprep.subr.mxu0 0.0
  %1873 = vmatpush2.msra.mxu0 0.0
  %1874 = vmatprep.subr.mxu0 0.0
  %1875 = vmatpush2.msra.mxu0 0.0
  %1876 = vmatprep.subr.mxu0 0.0
  %1877 = vmatpush2.msra.mxu0 0.0
  %1878 = vmatprep.subr.mxu0 0.0
  %1879 = vmatpush2.msra.mxu0 0.0
  %1880 = vmatprep.subr.mxu0 0.0
  %1881 = vmatpush2.msra.mxu0 0.0
  %1882 = vmatprep.subr.mxu0 0.0
  %1883 = vmatpush2.msra.mxu0 0.0
  %1884 = vmatprep.subr.mxu0 0.0
  %1885 = vmatpush2.msra.mxu0 0.0
  %1886 = vmatprep.subr.mxu0 0.0
  %1887 = vmatpush2.msra.mxu0 0.0
  %1888 = vmatprep.subr.mxu0 0.0
  %1889 = vmatpush2.msra.mxu0 0.0
  %1890 = vmatprep.subr.mxu0 0.0
  %1891 = vmatpush2.msra.mxu0 0.0
  %1892 = vmatprep.subr.mxu0 0.0
  %1893 = vmatpush2.msra.mxu0 0.0
  %1894 = vmatprep.subr.mxu0 0.0
  %1895 = vmatpush2.msra.mxu0 0.0
  %1896 = vmatprep.subr.mxu0 0.0
  %1897 = vmatpush2.msra.mxu0 0.0
  %1898 = vmatprep.subr.mxu0 0.0
  %1899 = vmatpush2.msra.mxu0 0.0
  %1900 = vmatprep.subr.mxu0 0.0
  %1901 = vmatpush2.msra.mxu0 0.0
  %1902 = vmatprep.subr.mxu0 0.0
  %1903 = vmatpush2.msra.mxu0 0.0
  %1904 = vmatprep.mubr.f32.mxu0 0.0
  %1905 = vmatmul.mubr.f32.gmra.mxu0 %v1838
  %v1906 = vpop.f32.mrf.mxu0
  %v1907 = vadd.f32 %v1832, %v1906
  %v1908 = vpop.f32.mrf.mxu0
  %1909 = vdwg.mxu0
  %v1910 = vadd.f32 %v1907, %v540
  %v1911 = vxor.u32 %v1910, 2147483648
  %v1912 = vmul.f32 %v1911, 1.442695
  %v1913 = vpow.pop %v1912
  %v1914 = vadd.f32 %v1913, 1.0
  %v1915 = vrcp.pop %v1914
  %v1916 = vmul.f32 1.0, %v1915
  %v1917 = vtanh.pop %v1910
  %v1918 = vmul.f32 %v1916, %v1655
  %1920 = vrot.lane.b32.xlu0 %v1917, 64
  %v1921 = vpop.permute.xlu0 %1920
  %v1923 = vmul.f32 %v1916, %v1921
  %1925 = vrot.lane.b32.xlu0 %v1923, 32
  %v1926 = vpop.permute.xlu0 %1925
  %v1928 = vadd.f32 %v1918, %v1926
  %v1929 = vtanh.pop %v1928
  %1931 = vrot.lane.b32.xlu0 %v1929, 64
  %v1932 = vpop.permute.xlu0 %1931
  %v1934 = vmul.f32 %v1916, %v1932
  %1936 = vrot.lane.b32.xlu0 %v1934, 32
  %v1937 = vpop.permute.xlu0 %1936
  %1939 = vst.msk [vmem:[#allocation3 + $0x28] sm:$0xff] %vm286, %v1937
  %v1940 = vld [vmem:[#allocation2 + $0x30] sm:$0xff]
  %1941 = vmatprep.subr.mxu0 0.0
  %1942 = vmatpush1.msra.mxu0 0.0
  %1943 = vmatprep.subr.mxu0 0.0
  %1944 = vmatpush1.msra.mxu0 0.0
  %1945 = vmatprep.subr.mxu0 0.0
  %1946 = vmatpush1.msra.mxu0 0.0
  %1947 = vmatprep.subr.mxu0 0.0
  %1948 = vmatpush1.msra.mxu0 0.0
  %1949 = vmatprep.subr.mxu0 0.0
  %1950 = vmatpush1.msra.mxu0 0.0
  %1951 = vmatprep.subr.mxu0 0.0
  %1952 = vmatpush1.msra.mxu0 0.0
  %1953 = vmatprep.subr.mxu0 0.0
  %1954 = vmatpush1.msra.mxu0 0.0
  %1955 = vmatprep.subr.mxu0 0.0
  %1956 = vmatpush1.msra.mxu0 0.0
  %1957 = vmatprep.subr.mxu0 0.0
  %1958 = vmatpush1.msra.mxu0 0.0
  %1959 = vmatprep.subr.mxu0 0.0
  %1960 = vmatpush1.msra.mxu0 0.0
  %1961 = vmatprep.subr.mxu0 0.0
  %1962 = vmatpush1.msra.mxu0 0.0
  %1963 = vmatprep.subr.mxu0 0.0
  %1964 = vmatpush1.msra.mxu0 0.0
  %1965 = vmatprep.subr.mxu0 0.0
  %1966 = vmatpush1.msra.mxu0 %v275
  %1967 = vmatprep.subr.mxu0 0.0
  %1968 = vmatpush1.msra.mxu0 %v274
  %1969 = vmatprep.subr.mxu0 0.0
  %1970 = vmatpush1.msra.mxu0 %v273
  %1971 = vmatprep.subr.mxu0 0.0
  %1972 = vmatpush1.msra.mxu0 %v272
  %1973 = vmatprep.subr.mxu0 0.0
  %1974 = vmatpush2.msra.mxu0 0.0
  %1975 = vmatprep.subr.mxu0 0.0
  %1976 = vmatpush2.msra.mxu0 0.0
  %1977 = vmatprep.subr.mxu0 0.0
  %1978 = vmatpush2.msra.mxu0 0.0
  %1979 = vmatprep.subr.mxu0 0.0
  %1980 = vmatpush2.msra.mxu0 0.0
  %1981 = vmatprep.subr.mxu0 0.0
  %1982 = vmatpush2.msra.mxu0 0.0
  %1983 = vmatprep.subr.mxu0 0.0
  %1984 = vmatpush2.msra.mxu0 0.0
  %1985 = vmatprep.subr.mxu0 0.0
  %1986 = vmatpush2.msra.mxu0 0.0
  %1987 = vmatprep.subr.mxu0 0.0
  %1988 = vmatpush2.msra.mxu0 0.0
  %1989 = vmatprep.subr.mxu0 0.0
  %1990 = vmatpush2.msra.mxu0 0.0
  %1991 = vmatprep.subr.mxu0 0.0
  %1992 = vmatpush2.msra.mxu0 0.0
  %1993 = vmatprep.subr.mxu0 0.0
  %1994 = vmatpush2.msra.mxu0 0.0
  %1995 = vmatprep.subr.mxu0 0.0
  %1996 = vmatpush2.msra.mxu0 0.0
  %1997 = vmatprep.subr.mxu0 0.0
  %1998 = vmatpush2.msra.mxu0 0.0
  %1999 = vmatprep.subr.mxu0 0.0
  %2000 = vmatpush2.msra.mxu0 0.0
  %2001 = vmatprep.subr.mxu0 0.0
  %2002 = vmatpush2.msra.mxu0 0.0
  %2003 = vmatprep.subr.mxu0 0.0
  %2004 = vmatpush2.msra.mxu0 0.0
  %2005 = vmatprep.mubr.f32.mxu0 0.0
  %2006 = vmatmul.mubr.f32.gmra.mxu0 %v1838
  %v2007 = vpop.f32.mrf.mxu0
  %v2008 = vadd.f32 0.0, %v2007
  %v2009 = vpop.f32.mrf.mxu0
  %2010 = vdwg.mxu0
  %v2011 = vadd.f32 %v1940, %v2008
  %v2012 = vxor.u32 %v2011, 2147483648
  %v2013 = vmul.f32 %v2012, 1.442695
  %v2014 = vpow.pop %v2013
  %v2015 = vadd.f32 %v2014, 1.0
  %v2016 = vrcp.pop %v2015
  %v2017 = vmul.f32 1.0, %v2016
  %v2018 = vtanh.pop %v2011
  %v2019 = vmul.f32 %v2017, %v1756
  %2021 = vrot.lane.b32.xlu0 %v2018, 64
  %v2022 = vpop.permute.xlu0 %2021
  %v2024 = vmul.f32 %v2017, %v2022
  %2026 = vrot.lane.b32.xlu0 %v2024, 32
  %v2027 = vpop.permute.xlu0 %2026
  %v2029 = vadd.f32 %v2019, %v2027
  %v2030 = vtanh.pop %v2029
  %2032 = vrot.lane.b32.xlu0 %v2030, 64
  %v2033 = vpop.permute.xlu0 %2032
  %v2035 = vmul.f32 %v2017, %v2033
  %v2036 = vsel %vm286, %v1937, 0
  %2038 = vmatprep.subr.mxu0 0.0
  %2039 = vmatpush1.msra.mxu0 0.0
  %2040 = vmatprep.subr.mxu0 0.0
  %2041 = vmatpush1.msra.mxu0 0.0
  %2042 = vmatprep.subr.mxu0 0.0
  %2043 = vmatpush1.msra.mxu0 0.0
  %2044 = vmatprep.subr.mxu0 0.0
  %2045 = vmatpush1.msra.mxu0 0.0
  %2046 = vmatprep.subr.mxu0 0.0
  %2047 = vmatpush1.msra.mxu0 0.0
  %2048 = vmatprep.subr.mxu0 0.0
  %2049 = vmatpush1.msra.mxu0 0.0
  %2050 = vmatprep.subr.mxu0 0.0
  %2051 = vmatpush1.msra.mxu0 0.0
  %2052 = vmatprep.subr.mxu0 0.0
  %2053 = vmatpush1.msra.mxu0 0.0
  %2054 = vmatprep.subr.mxu0 0.0
  %2055 = vmatpush1.msra.mxu0 0.0
  %2056 = vmatprep.subr.mxu0 0.0
  %2057 = vmatpush1.msra.mxu0 0.0
  %2058 = vmatprep.subr.mxu0 0.0
  %2059 = vmatpush1.msra.mxu0 0.0
  %2060 = vmatprep.subr.mxu0 0.0
  %2061 = vmatpush1.msra.mxu0 0.0
  %2062 = vmatprep.subr.mxu0 0.0
  %2063 = vmatpush1.msra.mxu0 %v279
  %2064 = vmatprep.subr.mxu0 0.0
  %2065 = vmatpush1.msra.mxu0 %v278
  %2066 = vmatprep.subr.mxu0 0.0
  %2067 = vmatpush1.msra.mxu0 %v277
  %2068 = vmatprep.subr.mxu0 0.0
  %2069 = vmatpush1.msra.mxu0 %v276
  %2070 = vmatprep.subr.mxu0 0.0
  %2071 = vmatpush2.msra.mxu0 0.0
  %2072 = vmatprep.subr.mxu0 0.0
  %2073 = vmatpush2.msra.mxu0 0.0
  %2074 = vmatprep.subr.mxu0 0.0
  %2075 = vmatpush2.msra.mxu0 0.0
  %2076 = vmatprep.subr.mxu0 0.0
  %2077 = vmatpush2.msra.mxu0 0.0
  %2078 = vmatprep.subr.mxu0 0.0
  %2079 = vmatpush2.msra.mxu0 0.0
  %2080 = vmatprep.subr.mxu0 0.0
  %2081 = vmatpush2.msra.mxu0 0.0
  %2082 = vmatprep.subr.mxu0 0.0
  %2083 = vmatpush2.msra.mxu0 0.0
  %2084 = vmatprep.subr.mxu0 0.0
  %2085 = vmatpush2.msra.mxu0 0.0
  %2086 = vmatprep.subr.mxu0 0.0
  %2087 = vmatpush2.msra.mxu0 0.0
  %2088 = vmatprep.subr.mxu0 0.0
  %2089 = vmatpush2.msra.mxu0 0.0
  %2090 = vmatprep.subr.mxu0 0.0
  %2091 = vmatpush2.msra.mxu0 0.0
  %2092 = vmatprep.subr.mxu0 0.0
  %2093 = vmatpush2.msra.mxu0 0.0
  %2094 = vmatprep.subr.mxu0 0.0
  %2095 = vmatpush2.msra.mxu0 0.0
  %2096 = vmatprep.subr.mxu0 0.0
  %2097 = vmatpush2.msra.mxu0 0.0
  %2098 = vmatprep.subr.mxu0 0.0
  %2099 = vmatpush2.msra.mxu0 0.0
  %2100 = vmatprep.subr.mxu0 0.0
  %2101 = vmatpush2.msra.mxu0 0.0
  %2102 = vmatprep.mubr.f32.mxu0 0.0
  %2103 = vmatmul.mubr.f32.gmra.mxu0 %v2036
  %v2104 = vpop.f32.mrf.mxu0
  %v2105 = vadd.f32 0.0, %v2104
  %v2106 = vpop.f32.mrf.mxu0
  %2107 = vdwg.mxu0
  %2109 = vrot.lane.b32.xlu0 %v2035, 32
  %v2110 = vpop.permute.xlu0 %2109
  %v2111 = vsel %vm286, %v2110, 0
  %2113 = vmatprep.subr.mxu0 0.0
  %2114 = vmatpush1.msra.mxu0 0.0
  %2115 = vmatprep.subr.mxu0 0.0
  %2116 = vmatpush1.msra.mxu0 0.0
  %2117 = vmatprep.subr.mxu0 0.0
  %2118 = vmatpush1.msra.mxu0 0.0
  %2119 = vmatprep.subr.mxu0 0.0
  %2120 = vmatpush1.msra.mxu0 0.0
  %2121 = vmatprep.subr.mxu0 0.0
  %2122 = vmatpush1.msra.mxu0 0.0
  %2123 = vmatprep.subr.mxu0 0.0
  %2124 = vmatpush1.msra.mxu0 0.0
  %2125 = vmatprep.subr.mxu0 0.0
  %2126 = vmatpush1.msra.mxu0 0.0
  %2127 = vmatprep.subr.mxu0 0.0
  %2128 = vmatpush1.msra.mxu0 0.0
  %2129 = vmatprep.subr.mxu0 0.0
  %2130 = vmatpush1.msra.mxu0 0.0
  %2131 = vmatprep.subr.mxu0 0.0
  %2132 = vmatpush1.msra.mxu0 0.0
  %2133 = vmatprep.subr.mxu0 0.0
  %2134 = vmatpush1.msra.mxu0 0.0
  %2135 = vmatprep.subr.mxu0 0.0
  %2136 = vmatpush1.msra.mxu0 0.0
  %2137 = vmatprep.subr.mxu0 0.0
  %2138 = vmatpush1.msra.mxu0 %v271
  %2139 = vmatprep.subr.mxu0 0.0
  %2140 = vmatpush1.msra.mxu0 %v270
  %2141 = vmatprep.subr.mxu0 0.0
  %2142 = vmatpush1.msra.mxu0 %v269
  %2143 = vmatprep.subr.mxu0 0.0
  %2144 = vmatpush1.msra.mxu0 %v268
  %2145 = vmatprep.subr.mxu0 0.0
  %2146 = vmatpush2.msra.mxu0 0.0
  %2147 = vmatprep.subr.mxu0 0.0
  %2148 = vmatpush2.msra.mxu0 0.0
  %2149 = vmatprep.subr.mxu0 0.0
  %2150 = vmatpush2.msra.mxu0 0.0
  %2151 = vmatprep.subr.mxu0 0.0
  %2152 = vmatpush2.msra.mxu0 0.0
  %2153 = vmatprep.subr.mxu0 0.0
  %2154 = vmatpush2.msra.mxu0 0.0
  %2155 = vmatprep.subr.mxu0 0.0
  %2156 = vmatpush2.msra.mxu0 0.0
  %2157 = vmatprep.subr.mxu0 0.0
  %2158 = vmatpush2.msra.mxu0 0.0
  %2159 = vmatprep.subr.mxu0 0.0
  %2160 = vmatpush2.msra.mxu0 0.0
  %2161 = vmatprep.subr.mxu0 0.0
  %2162 = vmatpush2.msra.mxu0 0.0
  %2163 = vmatprep.subr.mxu0 0.0
  %2164 = vmatpush2.msra.mxu0 0.0
  %2165 = vmatprep.subr.mxu0 0.0
  %2166 = vmatpush2.msra.mxu0 0.0
  %2167 = vmatprep.subr.mxu0 0.0
  %2168 = vmatpush2.msra.mxu0 0.0
  %2169 = vmatprep.subr.mxu0 0.0
  %2170 = vmatpush2.msra.mxu0 0.0
  %2171 = vmatprep.subr.mxu0 0.0
  %2172 = vmatpush2.msra.mxu0 0.0
  %2173 = vmatprep.subr.mxu0 0.0
  %2174 = vmatpush2.msra.mxu0 0.0
  %2175 = vmatprep.subr.mxu0 0.0
  %2176 = vmatpush2.msra.mxu0 0.0
  %2177 = vmatprep.mubr.f32.mxu0 0.0
  %2178 = vmatmul.mubr.f32.gmra.mxu0 %v2111
  %v2179 = vpop.f32.mrf.mxu0
  %v2180 = vadd.f32 %v2105, %v2179
  %v2181 = vpop.f32.mrf.mxu0
  %2182 = vdwg.mxu0
  %v2183 = vadd.f32 %v2180, %v540
  %v2184 = vxor.u32 %v2183, 2147483648
  %v2185 = vmul.f32 %v2184, 1.442695
  %v2186 = vpow.pop %v2185
  %v2187 = vadd.f32 %v2186, 1.0
  %v2188 = vrcp.pop %v2187
  %v2189 = vmul.f32 1.0, %v2188
  %v2190 = vtanh.pop %v2183
  %v2191 = vmul.f32 %v2189, %v1928
  %2193 = vrot.lane.b32.xlu0 %v2190, 64
  %v2194 = vpop.permute.xlu0 %2193
  %v2196 = vmul.f32 %v2189, %v2194
  %2198 = vrot.lane.b32.xlu0 %v2196, 32
  %v2199 = vpop.permute.xlu0 %2198
  %v2201 = vadd.f32 %v2191, %v2199
  %v2202 = vtanh.pop %v2201
  %2204 = vrot.lane.b32.xlu0 %v2202, 64
  %v2205 = vpop.permute.xlu0 %2204
  %v2207 = vmul.f32 %v2189, %v2205
  %2209 = vrot.lane.b32.xlu0 %v2207, 32
  %v2210 = vpop.permute.xlu0 %2209
  %2212 = vst.msk [vmem:[#allocation3 + $0x30] sm:$0xff] %vm286, %v2210
  %v2213 = vld [vmem:[#allocation2 + $0x38] sm:$0xff]
  %2214 = vmatprep.subr.mxu0 0.0
  %2215 = vmatpush1.msra.mxu0 0.0
  %2216 = vmatprep.subr.mxu0 0.0
  %2217 = vmatpush1.msra.mxu0 0.0
  %2218 = vmatprep.subr.mxu0 0.0
  %2219 = vmatpush1.msra.mxu0 0.0
  %2220 = vmatprep.subr.mxu0 0.0
  %2221 = vmatpush1.msra.mxu0 0.0
  %2222 = vmatprep.subr.mxu0 0.0
  %2223 = vmatpush1.msra.mxu0 0.0
  %2224 = vmatprep.subr.mxu0 0.0
  %2225 = vmatpush1.msra.mxu0 0.0
  %2226 = vmatprep.subr.mxu0 0.0
  %2227 = vmatpush1.msra.mxu0 0.0
  %2228 = vmatprep.subr.mxu0 0.0
  %2229 = vmatpush1.msra.mxu0 0.0
  %2230 = vmatprep.subr.mxu0 0.0
  %2231 = vmatpush1.msra.mxu0 0.0
  %2232 = vmatprep.subr.mxu0 0.0
  %2233 = vmatpush1.msra.mxu0 0.0
  %2234 = vmatprep.subr.mxu0 0.0
  %2235 = vmatpush1.msra.mxu0 0.0
  %2236 = vmatprep.subr.mxu0 0.0
  %2237 = vmatpush1.msra.mxu0 0.0
  %2238 = vmatprep.subr.mxu0 0.0
  %2239 = vmatpush1.msra.mxu0 %v275
  %2240 = vmatprep.subr.mxu0 0.0
  %2241 = vmatpush1.msra.mxu0 %v274
  %2242 = vmatprep.subr.mxu0 0.0
  %2243 = vmatpush1.msra.mxu0 %v273
  %2244 = vmatprep.subr.mxu0 0.0
  %2245 = vmatpush1.msra.mxu0 %v272
  %2246 = vmatprep.subr.mxu0 0.0
  %2247 = vmatpush2.msra.mxu0 0.0
  %2248 = vmatprep.subr.mxu0 0.0
  %2249 = vmatpush2.msra.mxu0 0.0
  %2250 = vmatprep.subr.mxu0 0.0
  %2251 = vmatpush2.msra.mxu0 0.0
  %2252 = vmatprep.subr.mxu0 0.0
  %2253 = vmatpush2.msra.mxu0 0.0
  %2254 = vmatprep.subr.mxu0 0.0
  %2255 = vmatpush2.msra.mxu0 0.0
  %2256 = vmatprep.subr.mxu0 0.0
  %2257 = vmatpush2.msra.mxu0 0.0
  %2258 = vmatprep.subr.mxu0 0.0
  %2259 = vmatpush2.msra.mxu0 0.0
  %2260 = vmatprep.subr.mxu0 0.0
  %2261 = vmatpush2.msra.mxu0 0.0
  %2262 = vmatprep.subr.mxu0 0.0
  %2263 = vmatpush2.msra.mxu0 0.0
  %2264 = vmatprep.subr.mxu0 0.0
  %2265 = vmatpush2.msra.mxu0 0.0
  %2266 = vmatprep.subr.mxu0 0.0
  %2267 = vmatpush2.msra.mxu0 0.0
  %2268 = vmatprep.subr.mxu0 0.0
  %2269 = vmatpush2.msra.mxu0 0.0
  %2270 = vmatprep.subr.mxu0 0.0
  %2271 = vmatpush2.msra.mxu0 0.0
  %2272 = vmatprep.subr.mxu0 0.0
  %2273 = vmatpush2.msra.mxu0 0.0
  %2274 = vmatprep.subr.mxu0 0.0
  %2275 = vmatpush2.msra.mxu0 0.0
  %2276 = vmatprep.subr.mxu0 0.0
  %2277 = vmatpush2.msra.mxu0 0.0
  %2278 = vmatprep.mubr.f32.mxu0 0.0
  %2279 = vmatmul.mubr.f32.gmra.mxu0 %v2111
  %v2280 = vpop.f32.mrf.mxu0
  %v2281 = vadd.f32 0.0, %v2280
  %v2282 = vpop.f32.mrf.mxu0
  %2283 = vdwg.mxu0
  %v2284 = vadd.f32 %v2213, %v2281
  %v2285 = vxor.u32 %v2284, 2147483648
  %v2286 = vmul.f32 %v2285, 1.442695
  %v2287 = vpow.pop %v2286
  %v2288 = vadd.f32 %v2287, 1.0
  %v2289 = vrcp.pop %v2288
  %v2290 = vmul.f32 1.0, %v2289
  %v2291 = vtanh.pop %v2284
  %v2292 = vmul.f32 %v2290, %v2029
  %2294 = vrot.lane.b32.xlu0 %v2291, 64
  %v2295 = vpop.permute.xlu0 %2294
  %v2297 = vmul.f32 %v2290, %v2295
  %2299 = vrot.lane.b32.xlu0 %v2297, 32
  %v2300 = vpop.permute.xlu0 %2299
  %v2302 = vadd.f32 %v2292, %v2300
  %v2303 = vtanh.pop %v2302
  %2305 = vrot.lane.b32.xlu0 %v2303, 64
  %v2306 = vpop.permute.xlu0 %2305
  %v2308 = vmul.f32 %v2290, %v2306
  %v2309 = vsel %vm286, %v2210, 0
  %2311 = vmatprep.subr.mxu0 0.0
  %2312 = vmatpush1.msra.mxu0 0.0
  %2313 = vmatprep.subr.mxu0 0.0
  %2314 = vmatpush1.msra.mxu0 0.0
  %2315 = vmatprep.subr.mxu0 0.0
  %2316 = vmatpush1.msra.mxu0 0.0
  %2317 = vmatprep.subr.mxu0 0.0
  %2318 = vmatpush1.msra.mxu0 0.0
  %2319 = vmatprep.subr.mxu0 0.0
  %2320 = vmatpush1.msra.mxu0 0.0
  %2321 = vmatprep.subr.mxu0 0.0
  %2322 = vmatpush1.msra.mxu0 0.0
  %2323 = vmatprep.subr.mxu0 0.0
  %2324 = vmatpush1.msra.mxu0 0.0
  %2325 = vmatprep.subr.mxu0 0.0
  %2326 = vmatpush1.msra.mxu0 0.0
  %2327 = vmatprep.subr.mxu0 0.0
  %2328 = vmatpush1.msra.mxu0 0.0
  %2329 = vmatprep.subr.mxu0 0.0
  %2330 = vmatpush1.msra.mxu0 0.0
  %2331 = vmatprep.subr.mxu0 0.0
  %2332 = vmatpush1.msra.mxu0 0.0
  %2333 = vmatprep.subr.mxu0 0.0
  %2334 = vmatpush1.msra.mxu0 0.0
  %2335 = vmatprep.subr.mxu0 0.0
  %2336 = vmatpush1.msra.mxu0 %v279
  %2337 = vmatprep.subr.mxu0 0.0
  %2338 = vmatpush1.msra.mxu0 %v278
  %2339 = vmatprep.subr.mxu0 0.0
  %2340 = vmatpush1.msra.mxu0 %v277
  %2341 = vmatprep.subr.mxu0 0.0
  %2342 = vmatpush1.msra.mxu0 %v276
  %2343 = vmatprep.subr.mxu0 0.0
  %2344 = vmatpush2.msra.mxu0 0.0
  %2345 = vmatprep.subr.mxu0 0.0
  %2346 = vmatpush2.msra.mxu0 0.0
  %2347 = vmatprep.subr.mxu0 0.0
  %2348 = vmatpush2.msra.mxu0 0.0
  %2349 = vmatprep.subr.mxu0 0.0
  %2350 = vmatpush2.msra.mxu0 0.0
  %2351 = vmatprep.subr.mxu0 0.0
  %2352 = vmatpush2.msra.mxu0 0.0
  %2353 = vmatprep.subr.mxu0 0.0
  %2354 = vmatpush2.msra.mxu0 0.0
  %2355 = vmatprep.subr.mxu0 0.0
  %2356 = vmatpush2.msra.mxu0 0.0
  %2357 = vmatprep.subr.mxu0 0.0
  %2358 = vmatpush2.msra.mxu0 0.0
  %2359 = vmatprep.subr.mxu0 0.0
  %2360 = vmatpush2.msra.mxu0 0.0
  %2361 = vmatprep.subr.mxu0 0.0
  %2362 = vmatpush2.msra.mxu0 0.0
  %2363 = vmatprep.subr.mxu0 0.0
  %2364 = vmatpush2.msra.mxu0 0.0
  %2365 = vmatprep.subr.mxu0 0.0
  %2366 = vmatpush2.msra.mxu0 0.0
  %2367 = vmatprep.subr.mxu0 0.0
  %2368 = vmatpush2.msra.mxu0 0.0
  %2369 = vmatprep.subr.mxu0 0.0
  %2370 = vmatpush2.msra.mxu0 0.0
  %2371 = vmatprep.subr.mxu0 0.0
  %2372 = vmatpush2.msra.mxu0 0.0
  %2373 = vmatprep.subr.mxu0 0.0
  %2374 = vmatpush2.msra.mxu0 0.0
  %2375 = vmatprep.mubr.f32.mxu0 0.0
  %2376 = vmatmul.mubr.f32.gmra.mxu0 %v2309
  %v2377 = vpop.f32.mrf.mxu0
  %v2378 = vadd.f32 0.0, %v2377
  %v2379 = vpop.f32.mrf.mxu0
  %2380 = vdwg.mxu0
  %2382 = vrot.lane.b32.xlu0 %v2308, 32
  %v2383 = vpop.permute.xlu0 %2382
  %v2384 = vsel %vm286, %v2383, 0
  %2386 = vmatprep.subr.mxu0 0.0
  %2387 = vmatpush1.msra.mxu0 0.0
  %2388 = vmatprep.subr.mxu0 0.0
  %2389 = vmatpush1.msra.mxu0 0.0
  %2390 = vmatprep.subr.mxu0 0.0
  %2391 = vmatpush1.msra.mxu0 0.0
  %2392 = vmatprep.subr.mxu0 0.0
  %2393 = vmatpush1.msra.mxu0 0.0
  %2394 = vmatprep.subr.mxu0 0.0
  %2395 = vmatpush1.msra.mxu0 0.0
  %2396 = vmatprep.subr.mxu0 0.0
  %2397 = vmatpush1.msra.mxu0 0.0
  %2398 = vmatprep.subr.mxu0 0.0
  %2399 = vmatpush1.msra.mxu0 0.0
  %2400 = vmatprep.subr.mxu0 0.0
  %2401 = vmatpush1.msra.mxu0 0.0
  %2402 = vmatprep.subr.mxu0 0.0
  %2403 = vmatpush1.msra.mxu0 0.0
  %2404 = vmatprep.subr.mxu0 0.0
  %2405 = vmatpush1.msra.mxu0 0.0
  %2406 = vmatprep.subr.mxu0 0.0
  %2407 = vmatpush1.msra.mxu0 0.0
  %2408 = vmatprep.subr.mxu0 0.0
  %2409 = vmatpush1.msra.mxu0 0.0
  %2410 = vmatprep.subr.mxu0 0.0
  %2411 = vmatpush1.msra.mxu0 %v271
  %2412 = vmatprep.subr.mxu0 0.0
  %2413 = vmatpush1.msra.mxu0 %v270
  %2414 = vmatprep.subr.mxu0 0.0
  %2415 = vmatpush1.msra.mxu0 %v269
  %2416 = vmatprep.subr.mxu0 0.0
  %2417 = vmatpush1.msra.mxu0 %v268
  %2418 = vmatprep.subr.mxu0 0.0
  %2419 = vmatpush2.msra.mxu0 0.0
  %2420 = vmatprep.subr.mxu0 0.0
  %2421 = vmatpush2.msra.mxu0 0.0
  %2422 = vmatprep.subr.mxu0 0.0
  %2423 = vmatpush2.msra.mxu0 0.0
  %2424 = vmatprep.subr.mxu0 0.0
  %2425 = vmatpush2.msra.mxu0 0.0
  %2426 = vmatprep.subr.mxu0 0.0
  %2427 = vmatpush2.msra.mxu0 0.0
  %2428 = vmatprep.subr.mxu0 0.0
  %2429 = vmatpush2.msra.mxu0 0.0
  %2430 = vmatprep.subr.mxu0 0.0
  %2431 = vmatpush2.msra.mxu0 0.0
  %2432 = vmatprep.subr.mxu0 0.0
  %2433 = vmatpush2.msra.mxu0 0.0
  %2434 = vmatprep.subr.mxu0 0.0
  %2435 = vmatpush2.msra.mxu0 0.0
  %2436 = vmatprep.subr.mxu0 0.0
  %2437 = vmatpush2.msra.mxu0 0.0
  %2438 = vmatprep.subr.mxu0 0.0
  %2439 = vmatpush2.msra.mxu0 0.0
  %2440 = vmatprep.subr.mxu0 0.0
  %2441 = vmatpush2.msra.mxu0 0.0
  %2442 = vmatprep.subr.mxu0 0.0
  %2443 = vmatpush2.msra.mxu0 0.0
  %2444 = vmatprep.subr.mxu0 0.0
  %2445 = vmatpush2.msra.mxu0 0.0
  %2446 = vmatprep.subr.mxu0 0.0
  %2447 = vmatpush2.msra.mxu0 0.0
  %2448 = vmatprep.subr.mxu0 0.0
  %2449 = vmatpush2.msra.mxu0 0.0
  %2450 = vmatprep.mubr.f32.mxu0 0.0
  %2451 = vmatmul.mubr.f32.gmra.mxu0 %v2384
  %v2452 = vpop.f32.mrf.mxu0
  %v2453 = vadd.f32 %v2378, %v2452
  %v2454 = vpop.f32.mrf.mxu0
  %2455 = vdwg.mxu0
  %v2456 = vadd.f32 %v2453, %v540
  %v2457 = vxor.u32 %v2456, 2147483648
  %v2458 = vmul.f32 %v2457, 1.442695
  %v2459 = vpow.pop %v2458
  %v2460 = vadd.f32 %v2459, 1.0
  %v2461 = vrcp.pop %v2460
  %v2462 = vmul.f32 1.0, %v2461
  %v2463 = vtanh.pop %v2456
  %v2464 = vmul.f32 %v2462, %v2201
  %2466 = vrot.lane.b32.xlu0 %v2463, 64
  %v2467 = vpop.permute.xlu0 %2466
  %v2469 = vmul.f32 %v2462, %v2467
  %2471 = vrot.lane.b32.xlu0 %v2469, 32
  %v2472 = vpop.permute.xlu0 %2471
  %v2474 = vadd.f32 %v2464, %v2472
  %v2475 = vtanh.pop %v2474
  %2477 = vrot.lane.b32.xlu0 %v2475, 64
  %v2478 = vpop.permute.xlu0 %2477
  %v2480 = vmul.f32 %v2462, %v2478
  %2482 = vrot.lane.b32.xlu0 %v2480, 32
  %v2483 = vpop.permute.xlu0 %2482
  %2485 = vst.msk [vmem:[#allocation3 + $0x38] sm:$0xff] %vm286, %v2483
  %v2486 = vld [vmem:[#allocation2 + $0x40] sm:$0xff]
  %2487 = vmatprep.subr.mxu0 0.0
  %2488 = vmatpush1.msra.mxu0 0.0
  %2489 = vmatprep.subr.mxu0 0.0
  %2490 = vmatpush1.msra.mxu0 0.0
  %2491 = vmatprep.subr.mxu0 0.0
  %2492 = vmatpush1.msra.mxu0 0.0
  %2493 = vmatprep.subr.mxu0 0.0
  %2494 = vmatpush1.msra.mxu0 0.0
  %2495 = vmatprep.subr.mxu0 0.0
  %2496 = vmatpush1.msra.mxu0 0.0
  %2497 = vmatprep.subr.mxu0 0.0
  %2498 = vmatpush1.msra.mxu0 0.0
  %2499 = vmatprep.subr.mxu0 0.0
  %2500 = vmatpush1.msra.mxu0 0.0
  %2501 = vmatprep.subr.mxu0 0.0
  %2502 = vmatpush1.msra.mxu0 0.0
  %2503 = vmatprep.subr.mxu0 0.0
  %2504 = vmatpush1.msra.mxu0 0.0
  %2505 = vmatprep.subr.mxu0 0.0
  %2506 = vmatpush1.msra.mxu0 0.0
  %2507 = vmatprep.subr.mxu0 0.0
  %2508 = vmatpush1.msra.mxu0 0.0
  %2509 = vmatprep.subr.mxu0 0.0
  %2510 = vmatpush1.msra.mxu0 0.0
  %2511 = vmatprep.subr.mxu0 0.0
  %2512 = vmatpush1.msra.mxu0 %v275
  %2513 = vmatprep.subr.mxu0 0.0
  %2514 = vmatpush1.msra.mxu0 %v274
  %2515 = vmatprep.subr.mxu0 0.0
  %2516 = vmatpush1.msra.mxu0 %v273
  %2517 = vmatprep.subr.mxu0 0.0
  %2518 = vmatpush1.msra.mxu0 %v272
  %2519 = vmatprep.subr.mxu0 0.0
  %2520 = vmatpush2.msra.mxu0 0.0
  %2521 = vmatprep.subr.mxu0 0.0
  %2522 = vmatpush2.msra.mxu0 0.0
  %2523 = vmatprep.subr.mxu0 0.0
  %2524 = vmatpush2.msra.mxu0 0.0
  %2525 = vmatprep.subr.mxu0 0.0
  %2526 = vmatpush2.msra.mxu0 0.0
  %2527 = vmatprep.subr.mxu0 0.0
  %2528 = vmatpush2.msra.mxu0 0.0
  %2529 = vmatprep.subr.mxu0 0.0
  %2530 = vmatpush2.msra.mxu0 0.0
  %2531 = vmatprep.subr.mxu0 0.0
  %2532 = vmatpush2.msra.mxu0 0.0
  %2533 = vmatprep.subr.mxu0 0.0
  %2534 = vmatpush2.msra.mxu0 0.0
  %2535 = vmatprep.subr.mxu0 0.0
  %2536 = vmatpush2.msra.mxu0 0.0
  %2537 = vmatprep.subr.mxu0 0.0
  %2538 = vmatpush2.msra.mxu0 0.0
  %2539 = vmatprep.subr.mxu0 0.0
  %2540 = vmatpush2.msra.mxu0 0.0
  %2541 = vmatprep.subr.mxu0 0.0
  %2542 = vmatpush2.msra.mxu0 0.0
  %2543 = vmatprep.subr.mxu0 0.0
  %2544 = vmatpush2.msra.mxu0 0.0
  %2545 = vmatprep.subr.mxu0 0.0
  %2546 = vmatpush2.msra.mxu0 0.0
  %2547 = vmatprep.subr.mxu0 0.0
  %2548 = vmatpush2.msra.mxu0 0.0
  %2549 = vmatprep.subr.mxu0 0.0
  %2550 = vmatpush2.msra.mxu0 0.0
  %2551 = vmatprep.mubr.f32.mxu0 0.0
  %2552 = vmatmul.mubr.f32.gmra.mxu0 %v2384
  %v2553 = vpop.f32.mrf.mxu0
  %v2554 = vadd.f32 0.0, %v2553
  %v2555 = vpop.f32.mrf.mxu0
  %2556 = vdwg.mxu0
  %v2557 = vadd.f32 %v2486, %v2554
  %v2558 = vxor.u32 %v2557, 2147483648
  %v2559 = vmul.f32 %v2558, 1.442695
  %v2560 = vpow.pop %v2559
  %v2561 = vadd.f32 %v2560, 1.0
  %v2562 = vrcp.pop %v2561
  %v2563 = vmul.f32 1.0, %v2562
  %v2564 = vtanh.pop %v2557
  %v2565 = vmul.f32 %v2563, %v2302
  %2567 = vrot.lane.b32.xlu0 %v2564, 64
  %v2568 = vpop.permute.xlu0 %2567
  %v2570 = vmul.f32 %v2563, %v2568
  %2572 = vrot.lane.b32.xlu0 %v2570, 32
  %v2573 = vpop.permute.xlu0 %2572
  %v2575 = vadd.f32 %v2565, %v2573
  %v2576 = vtanh.pop %v2575
  %2578 = vrot.lane.b32.xlu0 %v2576, 64
  %v2579 = vpop.permute.xlu0 %2578
  %v2581 = vmul.f32 %v2563, %v2579
  %v2582 = vsel %vm286, %v2483, 0
  %2584 = vmatprep.subr.mxu0 0.0
  %2585 = vmatpush1.msra.mxu0 0.0
  %2586 = vmatprep.subr.mxu0 0.0
  %2587 = vmatpush1.msra.mxu0 0.0
  %2588 = vmatprep.subr.mxu0 0.0
  %2589 = vmatpush1.msra.mxu0 0.0
  %2590 = vmatprep.subr.mxu0 0.0
  %2591 = vmatpush1.msra.mxu0 0.0
  %2592 = vmatprep.subr.mxu0 0.0
  %2593 = vmatpush1.msra.mxu0 0.0
  %2594 = vmatprep.subr.mxu0 0.0
  %2595 = vmatpush1.msra.mxu0 0.0
  %2596 = vmatprep.subr.mxu0 0.0
  %2597 = vmatpush1.msra.mxu0 0.0
  %2598 = vmatprep.subr.mxu0 0.0
  %2599 = vmatpush1.msra.mxu0 0.0
  %2600 = vmatprep.subr.mxu0 0.0
  %2601 = vmatpush1.msra.mxu0 0.0
  %2602 = vmatprep.subr.mxu0 0.0
  %2603 = vmatpush1.msra.mxu0 0.0
  %2604 = vmatprep.subr.mxu0 0.0
  %2605 = vmatpush1.msra.mxu0 0.0
  %2606 = vmatprep.subr.mxu0 0.0
  %2607 = vmatpush1.msra.mxu0 0.0
  %2608 = vmatprep.subr.mxu0 0.0
  %2609 = vmatpush1.msra.mxu0 %v279
  %2610 = vmatprep.subr.mxu0 0.0
  %2611 = vmatpush1.msra.mxu0 %v278
  %2612 = vmatprep.subr.mxu0 0.0
  %2613 = vmatpush1.msra.mxu0 %v277
  %2614 = vmatprep.subr.mxu0 0.0
  %2615 = vmatpush1.msra.mxu0 %v276
  %2616 = vmatprep.subr.mxu0 0.0
  %2617 = vmatpush2.msra.mxu0 0.0
  %2618 = vmatprep.subr.mxu0 0.0
  %2619 = vmatpush2.msra.mxu0 0.0
  %2620 = vmatprep.subr.mxu0 0.0
  %2621 = vmatpush2.msra.mxu0 0.0
  %2622 = vmatprep.subr.mxu0 0.0
  %2623 = vmatpush2.msra.mxu0 0.0
  %2624 = vmatprep.subr.mxu0 0.0
  %2625 = vmatpush2.msra.mxu0 0.0
  %2626 = vmatprep.subr.mxu0 0.0
  %2627 = vmatpush2.msra.mxu0 0.0
  %2628 = vmatprep.subr.mxu0 0.0
  %2629 = vmatpush2.msra.mxu0 0.0
  %2630 = vmatprep.subr.mxu0 0.0
  %2631 = vmatpush2.msra.mxu0 0.0
  %2632 = vmatprep.subr.mxu0 0.0
  %2633 = vmatpush2.msra.mxu0 0.0
  %2634 = vmatprep.subr.mxu0 0.0
  %2635 = vmatpush2.msra.mxu0 0.0
  %2636 = vmatprep.subr.mxu0 0.0
  %2637 = vmatpush2.msra.mxu0 0.0
  %2638 = vmatprep.subr.mxu0 0.0
  %2639 = vmatpush2.msra.mxu0 0.0
  %2640 = vmatprep.subr.mxu0 0.0
  %2641 = vmatpush2.msra.mxu0 0.0
  %2642 = vmatprep.subr.mxu0 0.0
  %2643 = vmatpush2.msra.mxu0 0.0
  %2644 = vmatprep.subr.mxu0 0.0
  %2645 = vmatpush2.msra.mxu0 0.0
  %2646 = vmatprep.subr.mxu0 0.0
  %2647 = vmatpush2.msra.mxu0 0.0
  %2648 = vmatprep.mubr.f32.mxu0 0.0
  %2649 = vmatmul.mubr.f32.gmra.mxu0 %v2582
  %v2650 = vpop.f32.mrf.mxu0
  %v2651 = vadd.f32 0.0, %v2650
  %v2652 = vpop.f32.mrf.mxu0
  %2653 = vdwg.mxu0
  %2655 = vrot.lane.b32.xlu0 %v2581, 32
  %v2656 = vpop.permute.xlu0 %2655
  %v2657 = vsel %vm286, %v2656, 0
  %2659 = vmatprep.subr.mxu0 0.0
  %2660 = vmatpush1.msra.mxu0 0.0
  %2661 = vmatprep.subr.mxu0 0.0
  %2662 = vmatpush1.msra.mxu0 0.0
  %2663 = vmatprep.subr.mxu0 0.0
  %2664 = vmatpush1.msra.mxu0 0.0
  %2665 = vmatprep.subr.mxu0 0.0
  %2666 = vmatpush1.msra.mxu0 0.0
  %2667 = vmatprep.subr.mxu0 0.0
  %2668 = vmatpush1.msra.mxu0 0.0
  %2669 = vmatprep.subr.mxu0 0.0
  %2670 = vmatpush1.msra.mxu0 0.0
  %2671 = vmatprep.subr.mxu0 0.0
  %2672 = vmatpush1.msra.mxu0 0.0
  %2673 = vmatprep.subr.mxu0 0.0
  %2674 = vmatpush1.msra.mxu0 0.0
  %2675 = vmatprep.subr.mxu0 0.0
  %2676 = vmatpush1.msra.mxu0 0.0
  %2677 = vmatprep.subr.mxu0 0.0
  %2678 = vmatpush1.msra.mxu0 0.0
  %2679 = vmatprep.subr.mxu0 0.0
  %2680 = vmatpush1.msra.mxu0 0.0
  %2681 = vmatprep.subr.mxu0 0.0
  %2682 = vmatpush1.msra.mxu0 0.0
  %2683 = vmatprep.subr.mxu0 0.0
  %2684 = vmatpush1.msra.mxu0 %v271
  %2685 = vmatprep.subr.mxu0 0.0
  %2686 = vmatpush1.msra.mxu0 %v270
  %2687 = vmatprep.subr.mxu0 0.0
  %2688 = vmatpush1.msra.mxu0 %v269
  %2689 = vmatprep.subr.mxu0 0.0
  %2690 = vmatpush1.msra.mxu0 %v268
  %2691 = vmatprep.subr.mxu0 0.0
  %2692 = vmatpush2.msra.mxu0 0.0
  %2693 = vmatprep.subr.mxu0 0.0
  %2694 = vmatpush2.msra.mxu0 0.0
  %2695 = vmatprep.subr.mxu0 0.0
  %2696 = vmatpush2.msra.mxu0 0.0
  %2697 = vmatprep.subr.mxu0 0.0
  %2698 = vmatpush2.msra.mxu0 0.0
  %2699 = vmatprep.subr.mxu0 0.0
  %2700 = vmatpush2.msra.mxu0 0.0
  %2701 = vmatprep.subr.mxu0 0.0
  %2702 = vmatpush2.msra.mxu0 0.0
  %2703 = vmatprep.subr.mxu0 0.0
  %2704 = vmatpush2.msra.mxu0 0.0
  %2705 = vmatprep.subr.mxu0 0.0
  %2706 = vmatpush2.msra.mxu0 0.0
  %2707 = vmatprep.subr.mxu0 0.0
  %2708 = vmatpush2.msra.mxu0 0.0
  %2709 = vmatprep.subr.mxu0 0.0
  %2710 = vmatpush2.msra.mxu0 0.0
  %2711 = vmatprep.subr.mxu0 0.0
  %2712 = vmatpush2.msra.mxu0 0.0
  %2713 = vmatprep.subr.mxu0 0.0
  %2714 = vmatpush2.msra.mxu0 0.0
  %2715 = vmatprep.subr.mxu0 0.0
  %2716 = vmatpush2.msra.mxu0 0.0
  %2717 = vmatprep.subr.mxu0 0.0
  %2718 = vmatpush2.msra.mxu0 0.0
  %2719 = vmatprep.subr.mxu0 0.0
  %2720 = vmatpush2.msra.mxu0 0.0
  %2721 = vmatprep.subr.mxu0 0.0
  %2722 = vmatpush2.msra.mxu0 0.0
  %2723 = vmatprep.mubr.f32.mxu0 0.0
  %2724 = vmatmul.mubr.f32.gmra.mxu0 %v2657
  %v2725 = vpop.f32.mrf.mxu0
  %v2726 = vadd.f32 %v2651, %v2725
  %v2727 = vpop.f32.mrf.mxu0
  %2728 = vdwg.mxu0
  %v2729 = vadd.f32 %v2726, %v540
  %v2730 = vxor.u32 %v2729, 2147483648
  %v2731 = vmul.f32 %v2730, 1.442695
  %v2732 = vpow.pop %v2731
  %v2733 = vadd.f32 %v2732, 1.0
  %v2734 = vrcp.pop %v2733
  %v2735 = vmul.f32 1.0, %v2734
  %v2736 = vtanh.pop %v2729
  %v2737 = vmul.f32 %v2735, %v2474
  %2739 = vrot.lane.b32.xlu0 %v2736, 64
  %v2740 = vpop.permute.xlu0 %2739
  %v2742 = vmul.f32 %v2735, %v2740
  %2744 = vrot.lane.b32.xlu0 %v2742, 32
  %v2745 = vpop.permute.xlu0 %2744
  %v2747 = vadd.f32 %v2737, %v2745
  %v2748 = vtanh.pop %v2747
  %2750 = vrot.lane.b32.xlu0 %v2748, 64
  %v2751 = vpop.permute.xlu0 %2750
  %v2753 = vmul.f32 %v2735, %v2751
  %2755 = vrot.lane.b32.xlu0 %v2753, 32
  %v2756 = vpop.permute.xlu0 %2755
  %2758 = vst.msk [vmem:[#allocation3 + $0x40] sm:$0xff] %vm286, %v2756
  %v2759 = vld [vmem:[#allocation2 + $0x48] sm:$0xff]
  %2760 = vmatprep.subr.mxu0 0.0
  %2761 = vmatpush1.msra.mxu0 0.0
  %2762 = vmatprep.subr.mxu0 0.0
  %2763 = vmatpush1.msra.mxu0 0.0
  %2764 = vmatprep.subr.mxu0 0.0
  %2765 = vmatpush1.msra.mxu0 0.0
  %2766 = vmatprep.subr.mxu0 0.0
  %2767 = vmatpush1.msra.mxu0 0.0
  %2768 = vmatprep.subr.mxu0 0.0
  %2769 = vmatpush1.msra.mxu0 0.0
  %2770 = vmatprep.subr.mxu0 0.0
  %2771 = vmatpush1.msra.mxu0 0.0
  %2772 = vmatprep.subr.mxu0 0.0
  %2773 = vmatpush1.msra.mxu0 0.0
  %2774 = vmatprep.subr.mxu0 0.0
  %2775 = vmatpush1.msra.mxu0 0.0
  %2776 = vmatprep.subr.mxu0 0.0
  %2777 = vmatpush1.msra.mxu0 0.0
  %2778 = vmatprep.subr.mxu0 0.0
  %2779 = vmatpush1.msra.mxu0 0.0
  %2780 = vmatprep.subr.mxu0 0.0
  %2781 = vmatpush1.msra.mxu0 0.0
  %2782 = vmatprep.subr.mxu0 0.0
  %2783 = vmatpush1.msra.mxu0 0.0
  %2784 = vmatprep.subr.mxu0 0.0
  %2785 = vmatpush1.msra.mxu0 %v275
  %2786 = vmatprep.subr.mxu0 0.0
  %2787 = vmatpush1.msra.mxu0 %v274
  %2788 = vmatprep.subr.mxu0 0.0
  %2789 = vmatpush1.msra.mxu0 %v273
  %2790 = vmatprep.subr.mxu0 0.0
  %2791 = vmatpush1.msra.mxu0 %v272
  %2792 = vmatprep.subr.mxu0 0.0
  %2793 = vmatpush2.msra.mxu0 0.0
  %2794 = vmatprep.subr.mxu0 0.0
  %2795 = vmatpush2.msra.mxu0 0.0
  %2796 = vmatprep.subr.mxu0 0.0
  %2797 = vmatpush2.msra.mxu0 0.0
  %2798 = vmatprep.subr.mxu0 0.0
  %2799 = vmatpush2.msra.mxu0 0.0
  %2800 = vmatprep.subr.mxu0 0.0
  %2801 = vmatpush2.msra.mxu0 0.0
  %2802 = vmatprep.subr.mxu0 0.0
  %2803 = vmatpush2.msra.mxu0 0.0
  %2804 = vmatprep.subr.mxu0 0.0
  %2805 = vmatpush2.msra.mxu0 0.0
  %2806 = vmatprep.subr.mxu0 0.0
  %2807 = vmatpush2.msra.mxu0 0.0
  %2808 = vmatprep.subr.mxu0 0.0
  %2809 = vmatpush2.msra.mxu0 0.0
  %2810 = vmatprep.subr.mxu0 0.0
  %2811 = vmatpush2.msra.mxu0 0.0
  %2812 = vmatprep.subr.mxu0 0.0
  %2813 = vmatpush2.msra.mxu0 0.0
  %2814 = vmatprep.subr.mxu0 0.0
  %2815 = vmatpush2.msra.mxu0 0.0
  %2816 = vmatprep.subr.mxu0 0.0
  %2817 = vmatpush2.msra.mxu0 0.0
  %2818 = vmatprep.subr.mxu0 0.0
  %2819 = vmatpush2.msra.mxu0 0.0
  %2820 = vmatprep.subr.mxu0 0.0
  %2821 = vmatpush2.msra.mxu0 0.0
  %2822 = vmatprep.subr.mxu0 0.0
  %2823 = vmatpush2.msra.mxu0 0.0
  %2824 = vmatprep.mubr.f32.mxu0 0.0
  %2825 = vmatmul.mubr.f32.gmra.mxu0 %v2657
  %v2826 = vpop.f32.mrf.mxu0
  %v2827 = vadd.f32 0.0, %v2826
  %v2828 = vpop.f32.mrf.mxu0
  %2829 = vdwg.mxu0
  %v2830 = vadd.f32 %v2759, %v2827
  %v2831 = vxor.u32 %v2830, 2147483648
  %v2832 = vmul.f32 %v2831, 1.442695
  %v2833 = vpow.pop %v2832
  %v2834 = vadd.f32 %v2833, 1.0
  %v2835 = vrcp.pop %v2834
  %v2836 = vmul.f32 1.0, %v2835
  %v2837 = vtanh.pop %v2830
  %v2838 = vmul.f32 %v2836, %v2575
  %2840 = vrot.lane.b32.xlu0 %v2837, 64
  %v2841 = vpop.permute.xlu0 %2840
  %v2843 = vmul.f32 %v2836, %v2841
  %2845 = vrot.lane.b32.xlu0 %v2843, 32
  %v2846 = vpop.permute.xlu0 %2845
  %v2848 = vadd.f32 %v2838, %v2846
  %v2849 = vtanh.pop %v2848
  %2851 = vrot.lane.b32.xlu0 %v2849, 64
  %v2852 = vpop.permute.xlu0 %2851
  %v2854 = vmul.f32 %v2836, %v2852
  %v2855 = vsel %vm286, %v2756, 0
  %2857 = vmatprep.subr.mxu0 0.0
  %2858 = vmatpush1.msra.mxu0 0.0
  %2859 = vmatprep.subr.mxu0 0.0
  %2860 = vmatpush1.msra.mxu0 0.0
  %2861 = vmatprep.subr.mxu0 0.0
  %2862 = vmatpush1.msra.mxu0 0.0
  %2863 = vmatprep.subr.mxu0 0.0
  %2864 = vmatpush1.msra.mxu0 0.0
  %2865 = vmatprep.subr.mxu0 0.0
  %2866 = vmatpush1.msra.mxu0 0.0
  %2867 = vmatprep.subr.mxu0 0.0
  %2868 = vmatpush1.msra.mxu0 0.0
  %2869 = vmatprep.subr.mxu0 0.0
  %2870 = vmatpush1.msra.mxu0 0.0
  %2871 = vmatprep.subr.mxu0 0.0
  %2872 = vmatpush1.msra.mxu0 0.0
  %2873 = vmatprep.subr.mxu0 0.0
  %2874 = vmatpush1.msra.mxu0 0.0
  %2875 = vmatprep.subr.mxu0 0.0
  %2876 = vmatpush1.msra.mxu0 0.0
  %2877 = vmatprep.subr.mxu0 0.0
  %2878 = vmatpush1.msra.mxu0 0.0
  %2879 = vmatprep.subr.mxu0 0.0
  %2880 = vmatpush1.msra.mxu0 0.0
  %2881 = vmatprep.subr.mxu0 0.0
  %2882 = vmatpush1.msra.mxu0 %v279
  %2883 = vmatprep.subr.mxu0 0.0
  %2884 = vmatpush1.msra.mxu0 %v278
  %2885 = vmatprep.subr.mxu0 0.0
  %2886 = vmatpush1.msra.mxu0 %v277
  %2887 = vmatprep.subr.mxu0 0.0
  %2888 = vmatpush1.msra.mxu0 %v276
  %2889 = vmatprep.subr.mxu0 0.0
  %2890 = vmatpush2.msra.mxu0 0.0
  %2891 = vmatprep.subr.mxu0 0.0
  %2892 = vmatpush2.msra.mxu0 0.0
  %2893 = vmatprep.subr.mxu0 0.0
  %2894 = vmatpush2.msra.mxu0 0.0
  %2895 = vmatprep.subr.mxu0 0.0
  %2896 = vmatpush2.msra.mxu0 0.0
  %2897 = vmatprep.subr.mxu0 0.0
  %2898 = vmatpush2.msra.mxu0 0.0
  %2899 = vmatprep.subr.mxu0 0.0
  %2900 = vmatpush2.msra.mxu0 0.0
  %2901 = vmatprep.subr.mxu0 0.0
  %2902 = vmatpush2.msra.mxu0 0.0
  %2903 = vmatprep.subr.mxu0 0.0
  %2904 = vmatpush2.msra.mxu0 0.0
  %2905 = vmatprep.subr.mxu0 0.0
  %2906 = vmatpush2.msra.mxu0 0.0
  %2907 = vmatprep.subr.mxu0 0.0
  %2908 = vmatpush2.msra.mxu0 0.0
  %2909 = vmatprep.subr.mxu0 0.0
  %2910 = vmatpush2.msra.mxu0 0.0
  %2911 = vmatprep.subr.mxu0 0.0
  %2912 = vmatpush2.msra.mxu0 0.0
  %2913 = vmatprep.subr.mxu0 0.0
  %2914 = vmatpush2.msra.mxu0 0.0
  %2915 = vmatprep.subr.mxu0 0.0
  %2916 = vmatpush2.msra.mxu0 0.0
  %2917 = vmatprep.subr.mxu0 0.0
  %2918 = vmatpush2.msra.mxu0 0.0
  %2919 = vmatprep.subr.mxu0 0.0
  %2920 = vmatpush2.msra.mxu0 0.0
  %2921 = vmatprep.mubr.f32.mxu0 0.0
  %2922 = vmatmul.mubr.f32.gmra.mxu0 %v2855
  %v2923 = vpop.f32.mrf.mxu0
  %v2924 = vadd.f32 0.0, %v2923
  %v2925 = vpop.f32.mrf.mxu0
  %2926 = vdwg.mxu0
  %2928 = vrot.lane.b32.xlu0 %v2854, 32
  %v2929 = vpop.permute.xlu0 %2928
  %v2930 = vsel %vm286, %v2929, 0
  %2932 = vmatprep.subr.mxu0 0.0
  %2933 = vmatpush1.msra.mxu0 0.0
  %2934 = vmatprep.subr.mxu0 0.0
  %2935 = vmatpush1.msra.mxu0 0.0
  %2936 = vmatprep.subr.mxu0 0.0
  %2937 = vmatpush1.msra.mxu0 0.0
  %2938 = vmatprep.subr.mxu0 0.0
  %2939 = vmatpush1.msra.mxu0 0.0
  %2940 = vmatprep.subr.mxu0 0.0
  %2941 = vmatpush1.msra.mxu0 0.0
  %2942 = vmatprep.subr.mxu0 0.0
  %2943 = vmatpush1.msra.mxu0 0.0
  %2944 = vmatprep.subr.mxu0 0.0
  %2945 = vmatpush1.msra.mxu0 0.0
  %2946 = vmatprep.subr.mxu0 0.0
  %2947 = vmatpush1.msra.mxu0 0.0
  %2948 = vmatprep.subr.mxu0 0.0
  %2949 = vmatpush1.msra.mxu0 0.0
  %2950 = vmatprep.subr.mxu0 0.0
  %2951 = vmatpush1.msra.mxu0 0.0
  %2952 = vmatprep.subr.mxu0 0.0
  %2953 = vmatpush1.msra.mxu0 0.0
  %2954 = vmatprep.subr.mxu0 0.0
  %2955 = vmatpush1.msra.mxu0 0.0
  %2956 = vmatprep.subr.mxu0 0.0
  %2957 = vmatpush1.msra.mxu0 %v271
  %2958 = vmatprep.subr.mxu0 0.0
  %2959 = vmatpush1.msra.mxu0 %v270
  %2960 = vmatprep.subr.mxu0 0.0
  %2961 = vmatpush1.msra.mxu0 %v269
  %2962 = vmatprep.subr.mxu0 0.0
  %2963 = vmatpush1.msra.mxu0 %v268
  %2964 = vmatprep.subr.mxu0 0.0
  %2965 = vmatpush2.msra.mxu0 0.0
  %2966 = vmatprep.subr.mxu0 0.0
  %2967 = vmatpush2.msra.mxu0 0.0
  %2968 = vmatprep.subr.mxu0 0.0
  %2969 = vmatpush2.msra.mxu0 0.0
  %2970 = vmatprep.subr.mxu0 0.0
  %2971 = vmatpush2.msra.mxu0 0.0
  %2972 = vmatprep.subr.mxu0 0.0
  %2973 = vmatpush2.msra.mxu0 0.0
  %2974 = vmatprep.subr.mxu0 0.0
  %2975 = vmatpush2.msra.mxu0 0.0
  %2976 = vmatprep.subr.mxu0 0.0
  %2977 = vmatpush2.msra.mxu0 0.0
  %2978 = vmatprep.subr.mxu0 0.0
  %2979 = vmatpush2.msra.mxu0 0.0
  %2980 = vmatprep.subr.mxu0 0.0
  %2981 = vmatpush2.msra.mxu0 0.0
  %2982 = vmatprep.subr.mxu0 0.0
  %2983 = vmatpush2.msra.mxu0 0.0
  %2984 = vmatprep.subr.mxu0 0.0
  %2985 = vmatpush2.msra.mxu0 0.0
  %2986 = vmatprep.subr.mxu0 0.0
  %2987 = vmatpush2.msra.mxu0 0.0
  %2988 = vmatprep.subr.mxu0 0.0
  %2989 = vmatpush2.msra.mxu0 0.0
  %2990 = vmatprep.subr.mxu0 0.0
  %2991 = vmatpush2.msra.mxu0 0.0
  %2992 = vmatprep.subr.mxu0 0.0
  %2993 = vmatpush2.msra.mxu0 0.0
  %2994 = vmatprep.subr.mxu0 0.0
  %2995 = vmatpush2.msra.mxu0 0.0
  %2996 = vmatprep.mubr.f32.mxu0 0.0
  %2997 = vmatmul.mubr.f32.gmra.mxu0 %v2930
  %v2998 = vpop.f32.mrf.mxu0
  %v2999 = vadd.f32 %v2924, %v2998
  %v3000 = vpop.f32.mrf.mxu0
  %3001 = vdwg.mxu0
  %v3002 = vadd.f32 %v2999, %v540
  %v3003 = vxor.u32 %v3002, 2147483648
  %v3004 = vmul.f32 %v3003, 1.442695
  %v3005 = vpow.pop %v3004
  %v3006 = vadd.f32 %v3005, 1.0
  %v3007 = vrcp.pop %v3006
  %v3008 = vmul.f32 1.0, %v3007
  %v3009 = vtanh.pop %v3002
  %v3010 = vmul.f32 %v3008, %v2747
  %3012 = vrot.lane.b32.xlu0 %v3009, 64
  %v3013 = vpop.permute.xlu0 %3012
  %v3015 = vmul.f32 %v3008, %v3013
  %3017 = vrot.lane.b32.xlu0 %v3015, 32
  %v3018 = vpop.permute.xlu0 %3017
  %v3020 = vadd.f32 %v3010, %v3018
  %v3021 = vtanh.pop %v3020
  %3023 = vrot.lane.b32.xlu0 %v3021, 64
  %v3024 = vpop.permute.xlu0 %3023
  %v3026 = vmul.f32 %v3008, %v3024
  %3028 = vrot.lane.b32.xlu0 %v3026, 32
  %v3029 = vpop.permute.xlu0 %3028
  %3031 = vst.msk [vmem:[#allocation3 + $0x48] sm:$0xff] %vm286, %v3029
  %v3032 = vld [vmem:[#allocation2 + $0x50] sm:$0xff]
  %3033 = vmatprep.subr.mxu0 0.0
  %3034 = vmatpush1.msra.mxu0 0.0
  %3035 = vmatprep.subr.mxu0 0.0
  %3036 = vmatpush1.msra.mxu0 0.0
  %3037 = vmatprep.subr.mxu0 0.0
  %3038 = vmatpush1.msra.mxu0 0.0
  %3039 = vmatprep.subr.mxu0 0.0
  %3040 = vmatpush1.msra.mxu0 0.0
  %3041 = vmatprep.subr.mxu0 0.0
  %3042 = vmatpush1.msra.mxu0 0.0
  %3043 = vmatprep.subr.mxu0 0.0
  %3044 = vmatpush1.msra.mxu0 0.0
  %3045 = vmatprep.subr.mxu0 0.0
  %3046 = vmatpush1.msra.mxu0 0.0
  %3047 = vmatprep.subr.mxu0 0.0
  %3048 = vmatpush1.msra.mxu0 0.0
  %3049 = vmatprep.subr.mxu0 0.0
  %3050 = vmatpush1.msra.mxu0 0.0
  %3051 = vmatprep.subr.mxu0 0.0
  %3052 = vmatpush1.msra.mxu0 0.0
  %3053 = vmatprep.subr.mxu0 0.0
  %3054 = vmatpush1.msra.mxu0 0.0
  %3055 = vmatprep.subr.mxu0 0.0
  %3056 = vmatpush1.msra.mxu0 0.0
  %3057 = vmatprep.subr.mxu0 0.0
  %3058 = vmatpush1.msra.mxu0 %v275
  %3059 = vmatprep.subr.mxu0 0.0
  %3060 = vmatpush1.msra.mxu0 %v274
  %3061 = vmatprep.subr.mxu0 0.0
  %3062 = vmatpush1.msra.mxu0 %v273
  %3063 = vmatprep.subr.mxu0 0.0
  %3064 = vmatpush1.msra.mxu0 %v272
  %3065 = vmatprep.subr.mxu0 0.0
  %3066 = vmatpush2.msra.mxu0 0.0
  %3067 = vmatprep.subr.mxu0 0.0
  %3068 = vmatpush2.msra.mxu0 0.0
  %3069 = vmatprep.subr.mxu0 0.0
  %3070 = vmatpush2.msra.mxu0 0.0
  %3071 = vmatprep.subr.mxu0 0.0
  %3072 = vmatpush2.msra.mxu0 0.0
  %3073 = vmatprep.subr.mxu0 0.0
  %3074 = vmatpush2.msra.mxu0 0.0
  %3075 = vmatprep.subr.mxu0 0.0
  %3076 = vmatpush2.msra.mxu0 0.0
  %3077 = vmatprep.subr.mxu0 0.0
  %3078 = vmatpush2.msra.mxu0 0.0
  %3079 = vmatprep.subr.mxu0 0.0
  %3080 = vmatpush2.msra.mxu0 0.0
  %3081 = vmatprep.subr.mxu0 0.0
  %3082 = vmatpush2.msra.mxu0 0.0
  %3083 = vmatprep.subr.mxu0 0.0
  %3084 = vmatpush2.msra.mxu0 0.0
  %3085 = vmatprep.subr.mxu0 0.0
  %3086 = vmatpush2.msra.mxu0 0.0
  %3087 = vmatprep.subr.mxu0 0.0
  %3088 = vmatpush2.msra.mxu0 0.0
  %3089 = vmatprep.subr.mxu0 0.0
  %3090 = vmatpush2.msra.mxu0 0.0
  %3091 = vmatprep.subr.mxu0 0.0
  %3092 = vmatpush2.msra.mxu0 0.0
  %3093 = vmatprep.subr.mxu0 0.0
  %3094 = vmatpush2.msra.mxu0 0.0
  %3095 = vmatprep.subr.mxu0 0.0
  %3096 = vmatpush2.msra.mxu0 0.0
  %3097 = vmatprep.mubr.f32.mxu0 0.0
  %3098 = vmatmul.mubr.f32.gmra.mxu0 %v2930
  %v3099 = vpop.f32.mrf.mxu0
  %v3100 = vadd.f32 0.0, %v3099
  %v3101 = vpop.f32.mrf.mxu0
  %3102 = vdwg.mxu0
  %v3103 = vadd.f32 %v3032, %v3100
  %v3104 = vxor.u32 %v3103, 2147483648
  %v3105 = vmul.f32 %v3104, 1.442695
  %v3106 = vpow.pop %v3105
  %v3107 = vadd.f32 %v3106, 1.0
  %v3108 = vrcp.pop %v3107
  %v3109 = vmul.f32 1.0, %v3108
  %v3110 = vtanh.pop %v3103
  %v3111 = vmul.f32 %v3109, %v2848
  %3113 = vrot.lane.b32.xlu0 %v3110, 64
  %v3114 = vpop.permute.xlu0 %3113
  %v3116 = vmul.f32 %v3109, %v3114
  %3118 = vrot.lane.b32.xlu0 %v3116, 32
  %v3119 = vpop.permute.xlu0 %3118
  %v3121 = vadd.f32 %v3111, %v3119
  %v3122 = vtanh.pop %v3121
  %3124 = vrot.lane.b32.xlu0 %v3122, 64
  %v3125 = vpop.permute.xlu0 %3124
  %v3127 = vmul.f32 %v3109, %v3125
  %v3128 = vsel %vm286, %v3029, 0
  %3130 = vmatprep.subr.mxu0 0.0
  %3131 = vmatpush1.msra.mxu0 0.0
  %3132 = vmatprep.subr.mxu0 0.0
  %3133 = vmatpush1.msra.mxu0 0.0
  %3134 = vmatprep.subr.mxu0 0.0
  %3135 = vmatpush1.msra.mxu0 0.0
  %3136 = vmatprep.subr.mxu0 0.0
  %3137 = vmatpush1.msra.mxu0 0.0
  %3138 = vmatprep.subr.mxu0 0.0
  %3139 = vmatpush1.msra.mxu0 0.0
  %3140 = vmatprep.subr.mxu0 0.0
  %3141 = vmatpush1.msra.mxu0 0.0
  %3142 = vmatprep.subr.mxu0 0.0
  %3143 = vmatpush1.msra.mxu0 0.0
  %3144 = vmatprep.subr.mxu0 0.0
  %3145 = vmatpush1.msra.mxu0 0.0
  %3146 = vmatprep.subr.mxu0 0.0
  %3147 = vmatpush1.msra.mxu0 0.0
  %3148 = vmatprep.subr.mxu0 0.0
  %3149 = vmatpush1.msra.mxu0 0.0
  %3150 = vmatprep.subr.mxu0 0.0
  %3151 = vmatpush1.msra.mxu0 0.0
  %3152 = vmatprep.subr.mxu0 0.0
  %3153 = vmatpush1.msra.mxu0 0.0
  %3154 = vmatprep.subr.mxu0 0.0
  %3155 = vmatpush1.msra.mxu0 %v279
  %3156 = vmatprep.subr.mxu0 0.0
  %3157 = vmatpush1.msra.mxu0 %v278
  %3158 = vmatprep.subr.mxu0 0.0
  %3159 = vmatpush1.msra.mxu0 %v277
  %3160 = vmatprep.subr.mxu0 0.0
  %3161 = vmatpush1.msra.mxu0 %v276
  %3162 = vmatprep.subr.mxu0 0.0
  %3163 = vmatpush2.msra.mxu0 0.0
  %3164 = vmatprep.subr.mxu0 0.0
  %3165 = vmatpush2.msra.mxu0 0.0
  %3166 = vmatprep.subr.mxu0 0.0
  %3167 = vmatpush2.msra.mxu0 0.0
  %3168 = vmatprep.subr.mxu0 0.0
  %3169 = vmatpush2.msra.mxu0 0.0
  %3170 = vmatprep.subr.mxu0 0.0
  %3171 = vmatpush2.msra.mxu0 0.0
  %3172 = vmatprep.subr.mxu0 0.0
  %3173 = vmatpush2.msra.mxu0 0.0
  %3174 = vmatprep.subr.mxu0 0.0
  %3175 = vmatpush2.msra.mxu0 0.0
  %3176 = vmatprep.subr.mxu0 0.0
  %3177 = vmatpush2.msra.mxu0 0.0
  %3178 = vmatprep.subr.mxu0 0.0
  %3179 = vmatpush2.msra.mxu0 0.0
  %3180 = vmatprep.subr.mxu0 0.0
  %3181 = vmatpush2.msra.mxu0 0.0
  %3182 = vmatprep.subr.mxu0 0.0
  %3183 = vmatpush2.msra.mxu0 0.0
  %3184 = vmatprep.subr.mxu0 0.0
  %3185 = vmatpush2.msra.mxu0 0.0
  %3186 = vmatprep.subr.mxu0 0.0
  %3187 = vmatpush2.msra.mxu0 0.0
  %3188 = vmatprep.subr.mxu0 0.0
  %3189 = vmatpush2.msra.mxu0 0.0
  %3190 = vmatprep.subr.mxu0 0.0
  %3191 = vmatpush2.msra.mxu0 0.0
  %3192 = vmatprep.subr.mxu0 0.0
  %3193 = vmatpush2.msra.mxu0 0.0
  %3194 = vmatprep.mubr.f32.mxu0 0.0
  %3195 = vmatmul.mubr.f32.gmra.mxu0 %v3128
  %v3196 = vpop.f32.mrf.mxu0
  %v3197 = vadd.f32 0.0, %v3196
  %v3198 = vpop.f32.mrf.mxu0
  %3199 = vdwg.mxu0
  %3201 = vrot.lane.b32.xlu0 %v3127, 32
  %v3202 = vpop.permute.xlu0 %3201
  %v3203 = vsel %vm286, %v3202, 0
  %3205 = vmatprep.subr.mxu0 0.0
  %3206 = vmatpush1.msra.mxu0 0.0
  %3207 = vmatprep.subr.mxu0 0.0
  %3208 = vmatpush1.msra.mxu0 0.0
  %3209 = vmatprep.subr.mxu0 0.0
  %3210 = vmatpush1.msra.mxu0 0.0
  %3211 = vmatprep.subr.mxu0 0.0
  %3212 = vmatpush1.msra.mxu0 0.0
  %3213 = vmatprep.subr.mxu0 0.0
  %3214 = vmatpush1.msra.mxu0 0.0
  %3215 = vmatprep.subr.mxu0 0.0
  %3216 = vmatpush1.msra.mxu0 0.0
  %3217 = vmatprep.subr.mxu0 0.0
  %3218 = vmatpush1.msra.mxu0 0.0
  %3219 = vmatprep.subr.mxu0 0.0
  %3220 = vmatpush1.msra.mxu0 0.0
  %3221 = vmatprep.subr.mxu0 0.0
  %3222 = vmatpush1.msra.mxu0 0.0
  %3223 = vmatprep.subr.mxu0 0.0
  %3224 = vmatpush1.msra.mxu0 0.0
  %3225 = vmatprep.subr.mxu0 0.0
  %3226 = vmatpush1.msra.mxu0 0.0
  %3227 = vmatprep.subr.mxu0 0.0
  %3228 = vmatpush1.msra.mxu0 0.0
  %3229 = vmatprep.subr.mxu0 0.0
  %3230 = vmatpush1.msra.mxu0 %v271
  %3231 = vmatprep.subr.mxu0 0.0
  %3232 = vmatpush1.msra.mxu0 %v270
  %3233 = vmatprep.subr.mxu0 0.0
  %3234 = vmatpush1.msra.mxu0 %v269
  %3235 = vmatprep.subr.mxu0 0.0
  %3236 = vmatpush1.msra.mxu0 %v268
  %3237 = vmatprep.subr.mxu0 0.0
  %3238 = vmatpush2.msra.mxu0 0.0
  %3239 = vmatprep.subr.mxu0 0.0
  %3240 = vmatpush2.msra.mxu0 0.0
  %3241 = vmatprep.subr.mxu0 0.0
  %3242 = vmatpush2.msra.mxu0 0.0
  %3243 = vmatprep.subr.mxu0 0.0
  %3244 = vmatpush2.msra.mxu0 0.0
  %3245 = vmatprep.subr.mxu0 0.0
  %3246 = vmatpush2.msra.mxu0 0.0
  %3247 = vmatprep.subr.mxu0 0.0
  %3248 = vmatpush2.msra.mxu0 0.0
  %3249 = vmatprep.subr.mxu0 0.0
  %3250 = vmatpush2.msra.mxu0 0.0
  %3251 = vmatprep.subr.mxu0 0.0
  %3252 = vmatpush2.msra.mxu0 0.0
  %3253 = vmatprep.subr.mxu0 0.0
  %3254 = vmatpush2.msra.mxu0 0.0
  %3255 = vmatprep.subr.mxu0 0.0
  %3256 = vmatpush2.msra.mxu0 0.0
  %3257 = vmatprep.subr.mxu0 0.0
  %3258 = vmatpush2.msra.mxu0 0.0
  %3259 = vmatprep.subr.mxu0 0.0
  %3260 = vmatpush2.msra.mxu0 0.0
  %3261 = vmatprep.subr.mxu0 0.0
  %3262 = vmatpush2.msra.mxu0 0.0
  %3263 = vmatprep.subr.mxu0 0.0
  %3264 = vmatpush2.msra.mxu0 0.0
  %3265 = vmatprep.subr.mxu0 0.0
  %3266 = vmatpush2.msra.mxu0 0.0
  %3267 = vmatprep.subr.mxu0 0.0
  %3268 = vmatpush2.msra.mxu0 0.0
  %3269 = vmatprep.mubr.f32.mxu0 0.0
  %3270 = vmatmul.mubr.f32.gmra.mxu0 %v3203
  %v3271 = vpop.f32.mrf.mxu0
  %v3272 = vadd.f32 %v3197, %v3271
  %v3273 = vpop.f32.mrf.mxu0
  %3274 = vdwg.mxu0
  %v3275 = vadd.f32 %v3272, %v540
  %v3276 = vxor.u32 %v3275, 2147483648
  %v3277 = vmul.f32 %v3276, 1.442695
  %v3278 = vpow.pop %v3277
  %v3279 = vadd.f32 %v3278, 1.0
  %v3280 = vrcp.pop %v3279
  %v3281 = vmul.f32 1.0, %v3280
  %v3282 = vtanh.pop %v3275
  %v3283 = vmul.f32 %v3281, %v3020
  %3285 = vrot.lane.b32.xlu0 %v3282, 64
  %v3286 = vpop.permute.xlu0 %3285
  %v3288 = vmul.f32 %v3281, %v3286
  %3290 = vrot.lane.b32.xlu0 %v3288, 32
  %v3291 = vpop.permute.xlu0 %3290
  %v3293 = vadd.f32 %v3283, %v3291
  %v3294 = vtanh.pop %v3293
  %3296 = vrot.lane.b32.xlu0 %v3294, 64
  %v3297 = vpop.permute.xlu0 %3296
  %v3299 = vmul.f32 %v3281, %v3297
  %3301 = vrot.lane.b32.xlu0 %v3299, 32
  %v3302 = vpop.permute.xlu0 %3301
  %3304 = vst.msk [vmem:[#allocation3 + $0x50] sm:$0xff] %vm286, %v3302
  %v3305 = vld [vmem:[#allocation2 + $0x58] sm:$0xff]
  %3306 = vmatprep.subr.mxu0 0.0
  %3307 = vmatpush1.msra.mxu0 0.0
  %3308 = vmatprep.subr.mxu0 0.0
  %3309 = vmatpush1.msra.mxu0 0.0
  %3310 = vmatprep.subr.mxu0 0.0
  %3311 = vmatpush1.msra.mxu0 0.0
  %3312 = vmatprep.subr.mxu0 0.0
  %3313 = vmatpush1.msra.mxu0 0.0
  %3314 = vmatprep.subr.mxu0 0.0
  %3315 = vmatpush1.msra.mxu0 0.0
  %3316 = vmatprep.subr.mxu0 0.0
  %3317 = vmatpush1.msra.mxu0 0.0
  %3318 = vmatprep.subr.mxu0 0.0
  %3319 = vmatpush1.msra.mxu0 0.0
  %3320 = vmatprep.subr.mxu0 0.0
  %3321 = vmatpush1.msra.mxu0 0.0
  %3322 = vmatprep.subr.mxu0 0.0
  %3323 = vmatpush1.msra.mxu0 0.0
  %3324 = vmatprep.subr.mxu0 0.0
  %3325 = vmatpush1.msra.mxu0 0.0
  %3326 = vmatprep.subr.mxu0 0.0
  %3327 = vmatpush1.msra.mxu0 0.0
  %3328 = vmatprep.subr.mxu0 0.0
  %3329 = vmatpush1.msra.mxu0 0.0
  %3330 = vmatprep.subr.mxu0 0.0
  %3331 = vmatpush1.msra.mxu0 %v275
  %3332 = vmatprep.subr.mxu0 0.0
  %3333 = vmatpush1.msra.mxu0 %v274
  %3334 = vmatprep.subr.mxu0 0.0
  %3335 = vmatpush1.msra.mxu0 %v273
  %3336 = vmatprep.subr.mxu0 0.0
  %3337 = vmatpush1.msra.mxu0 %v272
  %3338 = vmatprep.subr.mxu0 0.0
  %3339 = vmatpush2.msra.mxu0 0.0
  %3340 = vmatprep.subr.mxu0 0.0
  %3341 = vmatpush2.msra.mxu0 0.0
  %3342 = vmatprep.subr.mxu0 0.0
  %3343 = vmatpush2.msra.mxu0 0.0
  %3344 = vmatprep.subr.mxu0 0.0
  %3345 = vmatpush2.msra.mxu0 0.0
  %3346 = vmatprep.subr.mxu0 0.0
  %3347 = vmatpush2.msra.mxu0 0.0
  %3348 = vmatprep.subr.mxu0 0.0
  %3349 = vmatpush2.msra.mxu0 0.0
  %3350 = vmatprep.subr.mxu0 0.0
  %3351 = vmatpush2.msra.mxu0 0.0
  %3352 = vmatprep.subr.mxu0 0.0
  %3353 = vmatpush2.msra.mxu0 0.0
  %3354 = vmatprep.subr.mxu0 0.0
  %3355 = vmatpush2.msra.mxu0 0.0
  %3356 = vmatprep.subr.mxu0 0.0
  %3357 = vmatpush2.msra.mxu0 0.0
  %3358 = vmatprep.subr.mxu0 0.0
  %3359 = vmatpush2.msra.mxu0 0.0
  %3360 = vmatprep.subr.mxu0 0.0
  %3361 = vmatpush2.msra.mxu0 0.0
  %3362 = vmatprep.subr.mxu0 0.0
  %3363 = vmatpush2.msra.mxu0 0.0
  %3364 = vmatprep.subr.mxu0 0.0
  %3365 = vmatpush2.msra.mxu0 0.0
  %3366 = vmatprep.subr.mxu0 0.0
  %3367 = vmatpush2.msra.mxu0 0.0
  %3368 = vmatprep.subr.mxu0 0.0
  %3369 = vmatpush2.msra.mxu0 0.0
  %3370 = vmatprep.mubr.f32.mxu0 0.0
  %3371 = vmatmul.mubr.f32.gmra.mxu0 %v3203
  %v3372 = vpop.f32.mrf.mxu0
  %v3373 = vadd.f32 0.0, %v3372
  %v3374 = vpop.f32.mrf.mxu0
  %3375 = vdwg.mxu0
  %v3376 = vadd.f32 %v3305, %v3373
  %v3377 = vxor.u32 %v3376, 2147483648
  %v3378 = vmul.f32 %v3377, 1.442695
  %v3379 = vpow.pop %v3378
  %v3380 = vadd.f32 %v3379, 1.0
  %v3381 = vrcp.pop %v3380
  %v3382 = vmul.f32 1.0, %v3381
  %v3383 = vtanh.pop %v3376
  %v3384 = vmul.f32 %v3382, %v3121
  %3386 = vrot.lane.b32.xlu0 %v3383, 64
  %v3387 = vpop.permute.xlu0 %3386
  %v3389 = vmul.f32 %v3382, %v3387
  %3391 = vrot.lane.b32.xlu0 %v3389, 32
  %v3392 = vpop.permute.xlu0 %3391
  %v3394 = vadd.f32 %v3384, %v3392
  %v3395 = vtanh.pop %v3394
  %3397 = vrot.lane.b32.xlu0 %v3395, 64
  %v3398 = vpop.permute.xlu0 %3397
  %v3400 = vmul.f32 %v3382, %v3398
  %v3401 = vsel %vm286, %v3302, 0
  %3403 = vmatprep.subr.mxu0 0.0
  %3404 = vmatpush1.msra.mxu0 0.0
  %3405 = vmatprep.subr.mxu0 0.0
  %3406 = vmatpush1.msra.mxu0 0.0
  %3407 = vmatprep.subr.mxu0 0.0
  %3408 = vmatpush1.msra.mxu0 0.0
  %3409 = vmatprep.subr.mxu0 0.0
  %3410 = vmatpush1.msra.mxu0 0.0
  %3411 = vmatprep.subr.mxu0 0.0
  %3412 = vmatpush1.msra.mxu0 0.0
  %3413 = vmatprep.subr.mxu0 0.0
  %3414 = vmatpush1.msra.mxu0 0.0
  %3415 = vmatprep.subr.mxu0 0.0
  %3416 = vmatpush1.msra.mxu0 0.0
  %3417 = vmatprep.subr.mxu0 0.0
  %3418 = vmatpush1.msra.mxu0 0.0
  %3419 = vmatprep.subr.mxu0 0.0
  %3420 = vmatpush1.msra.mxu0 0.0
  %3421 = vmatprep.subr.mxu0 0.0
  %3422 = vmatpush1.msra.mxu0 0.0
  %3423 = vmatprep.subr.mxu0 0.0
  %3424 = vmatpush1.msra.mxu0 0.0
  %3425 = vmatprep.subr.mxu0 0.0
  %3426 = vmatpush1.msra.mxu0 0.0
  %3427 = vmatprep.subr.mxu0 0.0
  %3428 = vmatpush1.msra.mxu0 %v279
  %3429 = vmatprep.subr.mxu0 0.0
  %3430 = vmatpush1.msra.mxu0 %v278
  %3431 = vmatprep.subr.mxu0 0.0
  %3432 = vmatpush1.msra.mxu0 %v277
  %3433 = vmatprep.subr.mxu0 0.0
  %3434 = vmatpush1.msra.mxu0 %v276
  %3435 = vmatprep.subr.mxu0 0.0
  %3436 = vmatpush2.msra.mxu0 0.0
  %3437 = vmatprep.subr.mxu0 0.0
  %3438 = vmatpush2.msra.mxu0 0.0
  %3439 = vmatprep.subr.mxu0 0.0
  %3440 = vmatpush2.msra.mxu0 0.0
  %3441 = vmatprep.subr.mxu0 0.0
  %3442 = vmatpush2.msra.mxu0 0.0
  %3443 = vmatprep.subr.mxu0 0.0
  %3444 = vmatpush2.msra.mxu0 0.0
  %3445 = vmatprep.subr.mxu0 0.0
  %3446 = vmatpush2.msra.mxu0 0.0
  %3447 = vmatprep.subr.mxu0 0.0
  %3448 = vmatpush2.msra.mxu0 0.0
  %3449 = vmatprep.subr.mxu0 0.0
  %3450 = vmatpush2.msra.mxu0 0.0
  %3451 = vmatprep.subr.mxu0 0.0
  %3452 = vmatpush2.msra.mxu0 0.0
  %3453 = vmatprep.subr.mxu0 0.0
  %3454 = vmatpush2.msra.mxu0 0.0
  %3455 = vmatprep.subr.mxu0 0.0
  %3456 = vmatpush2.msra.mxu0 0.0
  %3457 = vmatprep.subr.mxu0 0.0
  %3458 = vmatpush2.msra.mxu0 0.0
  %3459 = vmatprep.subr.mxu0 0.0
  %3460 = vmatpush2.msra.mxu0 0.0
  %3461 = vmatprep.subr.mxu0 0.0
  %3462 = vmatpush2.msra.mxu0 0.0
  %3463 = vmatprep.subr.mxu0 0.0
  %3464 = vmatpush2.msra.mxu0 0.0
  %3465 = vmatprep.subr.mxu0 0.0
  %3466 = vmatpush2.msra.mxu0 0.0
  %3467 = vmatprep.mubr.f32.mxu0 0.0
  %3468 = vmatmul.mubr.f32.gmra.mxu0 %v3401
  %v3469 = vpop.f32.mrf.mxu0
  %v3470 = vadd.f32 0.0, %v3469
  %v3471 = vpop.f32.mrf.mxu0
  %3472 = vdwg.mxu0
  %3474 = vrot.lane.b32.xlu0 %v3400, 32
  %v3475 = vpop.permute.xlu0 %3474
  %v3476 = vsel %vm286, %v3475, 0
  %3478 = vmatprep.subr.mxu0 0.0
  %3479 = vmatpush1.msra.mxu0 0.0
  %3480 = vmatprep.subr.mxu0 0.0
  %3481 = vmatpush1.msra.mxu0 0.0
  %3482 = vmatprep.subr.mxu0 0.0
  %3483 = vmatpush1.msra.mxu0 0.0
  %3484 = vmatprep.subr.mxu0 0.0
  %3485 = vmatpush1.msra.mxu0 0.0
  %3486 = vmatprep.subr.mxu0 0.0
  %3487 = vmatpush1.msra.mxu0 0.0
  %3488 = vmatprep.subr.mxu0 0.0
  %3489 = vmatpush1.msra.mxu0 0.0
  %3490 = vmatprep.subr.mxu0 0.0
  %3491 = vmatpush1.msra.mxu0 0.0
  %3492 = vmatprep.subr.mxu0 0.0
  %3493 = vmatpush1.msra.mxu0 0.0
  %3494 = vmatprep.subr.mxu0 0.0
  %3495 = vmatpush1.msra.mxu0 0.0
  %3496 = vmatprep.subr.mxu0 0.0
  %3497 = vmatpush1.msra.mxu0 0.0
  %3498 = vmatprep.subr.mxu0 0.0
  %3499 = vmatpush1.msra.mxu0 0.0
  %3500 = vmatprep.subr.mxu0 0.0
  %3501 = vmatpush1.msra.mxu0 0.0
  %3502 = vmatprep.subr.mxu0 0.0
  %3503 = vmatpush1.msra.mxu0 %v271
  %3504 = vmatprep.subr.mxu0 0.0
  %3505 = vmatpush1.msra.mxu0 %v270
  %3506 = vmatprep.subr.mxu0 0.0
  %3507 = vmatpush1.msra.mxu0 %v269
  %3508 = vmatprep.subr.mxu0 0.0
  %3509 = vmatpush1.msra.mxu0 %v268
  %3510 = vmatprep.subr.mxu0 0.0
  %3511 = vmatpush2.msra.mxu0 0.0
  %3512 = vmatprep.subr.mxu0 0.0
  %3513 = vmatpush2.msra.mxu0 0.0
  %3514 = vmatprep.subr.mxu0 0.0
  %3515 = vmatpush2.msra.mxu0 0.0
  %3516 = vmatprep.subr.mxu0 0.0
  %3517 = vmatpush2.msra.mxu0 0.0
  %3518 = vmatprep.subr.mxu0 0.0
  %3519 = vmatpush2.msra.mxu0 0.0
  %3520 = vmatprep.subr.mxu0 0.0
  %3521 = vmatpush2.msra.mxu0 0.0
  %3522 = vmatprep.subr.mxu0 0.0
  %3523 = vmatpush2.msra.mxu0 0.0
  %3524 = vmatprep.subr.mxu0 0.0
  %3525 = vmatpush2.msra.mxu0 0.0
  %3526 = vmatprep.subr.mxu0 0.0
  %3527 = vmatpush2.msra.mxu0 0.0
  %3528 = vmatprep.subr.mxu0 0.0
  %3529 = vmatpush2.msra.mxu0 0.0
  %3530 = vmatprep.subr.mxu0 0.0
  %3531 = vmatpush2.msra.mxu0 0.0
  %3532 = vmatprep.subr.mxu0 0.0
  %3533 = vmatpush2.msra.mxu0 0.0
  %3534 = vmatprep.subr.mxu0 0.0
  %3535 = vmatpush2.msra.mxu0 0.0
  %3536 = vmatprep.subr.mxu0 0.0
  %3537 = vmatpush2.msra.mxu0 0.0
  %3538 = vmatprep.subr.mxu0 0.0
  %3539 = vmatpush2.msra.mxu0 0.0
  %3540 = vmatprep.subr.mxu0 0.0
  %3541 = vmatpush2.msra.mxu0 0.0
  %3542 = vmatprep.mubr.f32.mxu0 0.0
  %3543 = vmatmul.mubr.f32.gmra.mxu0 %v3476
  %v3544 = vpop.f32.mrf.mxu0
  %v3545 = vadd.f32 %v3470, %v3544
  %v3546 = vpop.f32.mrf.mxu0
  %3547 = vdwg.mxu0
  %v3548 = vadd.f32 %v3545, %v540
  %v3549 = vxor.u32 %v3548, 2147483648
  %v3550 = vmul.f32 %v3549, 1.442695
  %v3551 = vpow.pop %v3550
  %v3552 = vadd.f32 %v3551, 1.0
  %v3553 = vrcp.pop %v3552
  %v3554 = vmul.f32 1.0, %v3553
  %v3555 = vtanh.pop %v3548
  %v3556 = vmul.f32 %v3554, %v3293
  %3558 = vrot.lane.b32.xlu0 %v3555, 64
  %v3559 = vpop.permute.xlu0 %3558
  %v3561 = vmul.f32 %v3554, %v3559
  %3563 = vrot.lane.b32.xlu0 %v3561, 32
  %v3564 = vpop.permute.xlu0 %3563
  %v3566 = vadd.f32 %v3556, %v3564
  %v3567 = vtanh.pop %v3566
  %3569 = vrot.lane.b32.xlu0 %v3567, 64
  %v3570 = vpop.permute.xlu0 %3569
  %v3572 = vmul.f32 %v3554, %v3570
  %3574 = vrot.lane.b32.xlu0 %v3572, 32
  %v3575 = vpop.permute.xlu0 %3574
  %3577 = vst.msk [vmem:[#allocation3 + $0x58] sm:$0xff] %vm286, %v3575
  %v3578 = vld [vmem:[#allocation2 + $0x60] sm:$0xff]
  %3579 = vmatprep.subr.mxu0 0.0
  %3580 = vmatpush1.msra.mxu0 0.0
  %3581 = vmatprep.subr.mxu0 0.0
  %3582 = vmatpush1.msra.mxu0 0.0
  %3583 = vmatprep.subr.mxu0 0.0
  %3584 = vmatpush1.msra.mxu0 0.0
  %3585 = vmatprep.subr.mxu0 0.0
  %3586 = vmatpush1.msra.mxu0 0.0
  %3587 = vmatprep.subr.mxu0 0.0
  %3588 = vmatpush1.msra.mxu0 0.0
  %3589 = vmatprep.subr.mxu0 0.0
  %3590 = vmatpush1.msra.mxu0 0.0
  %3591 = vmatprep.subr.mxu0 0.0
  %3592 = vmatpush1.msra.mxu0 0.0
  %3593 = vmatprep.subr.mxu0 0.0
  %3594 = vmatpush1.msra.mxu0 0.0
  %3595 = vmatprep.subr.mxu0 0.0
  %3596 = vmatpush1.msra.mxu0 0.0
  %3597 = vmatprep.subr.mxu0 0.0
  %3598 = vmatpush1.msra.mxu0 0.0
  %3599 = vmatprep.subr.mxu0 0.0
  %3600 = vmatpush1.msra.mxu0 0.0
  %3601 = vmatprep.subr.mxu0 0.0
  %3602 = vmatpush1.msra.mxu0 0.0
  %3603 = vmatprep.subr.mxu0 0.0
  %3604 = vmatpush1.msra.mxu0 %v275
  %3605 = vmatprep.subr.mxu0 0.0
  %3606 = vmatpush1.msra.mxu0 %v274
  %3607 = vmatprep.subr.mxu0 0.0
  %3608 = vmatpush1.msra.mxu0 %v273
  %3609 = vmatprep.subr.mxu0 0.0
  %3610 = vmatpush1.msra.mxu0 %v272
  %3611 = vmatprep.subr.mxu0 0.0
  %3612 = vmatpush2.msra.mxu0 0.0
  %3613 = vmatprep.subr.mxu0 0.0
  %3614 = vmatpush2.msra.mxu0 0.0
  %3615 = vmatprep.subr.mxu0 0.0
  %3616 = vmatpush2.msra.mxu0 0.0
  %3617 = vmatprep.subr.mxu0 0.0
  %3618 = vmatpush2.msra.mxu0 0.0
  %3619 = vmatprep.subr.mxu0 0.0
  %3620 = vmatpush2.msra.mxu0 0.0
  %3621 = vmatprep.subr.mxu0 0.0
  %3622 = vmatpush2.msra.mxu0 0.0
  %3623 = vmatprep.subr.mxu0 0.0
  %3624 = vmatpush2.msra.mxu0 0.0
  %3625 = vmatprep.subr.mxu0 0.0
  %3626 = vmatpush2.msra.mxu0 0.0
  %3627 = vmatprep.subr.mxu0 0.0
  %3628 = vmatpush2.msra.mxu0 0.0
  %3629 = vmatprep.subr.mxu0 0.0
  %3630 = vmatpush2.msra.mxu0 0.0
  %3631 = vmatprep.subr.mxu0 0.0
  %3632 = vmatpush2.msra.mxu0 0.0
  %3633 = vmatprep.subr.mxu0 0.0
  %3634 = vmatpush2.msra.mxu0 0.0
  %3635 = vmatprep.subr.mxu0 0.0
  %3636 = vmatpush2.msra.mxu0 0.0
  %3637 = vmatprep.subr.mxu0 0.0
  %3638 = vmatpush2.msra.mxu0 0.0
  %3639 = vmatprep.subr.mxu0 0.0
  %3640 = vmatpush2.msra.mxu0 0.0
  %3641 = vmatprep.subr.mxu0 0.0
  %3642 = vmatpush2.msra.mxu0 0.0
  %3643 = vmatprep.mubr.f32.mxu0 0.0
  %3644 = vmatmul.mubr.f32.gmra.mxu0 %v3476
  %v3645 = vpop.f32.mrf.mxu0
  %v3646 = vadd.f32 0.0, %v3645
  %v3647 = vpop.f32.mrf.mxu0
  %3648 = vdwg.mxu0
  %v3649 = vadd.f32 %v3578, %v3646
  %v3650 = vxor.u32 %v3649, 2147483648
  %v3651 = vmul.f32 %v3650, 1.442695
  %v3652 = vpow.pop %v3651
  %v3653 = vadd.f32 %v3652, 1.0
  %v3654 = vrcp.pop %v3653
  %v3655 = vmul.f32 1.0, %v3654
  %v3656 = vtanh.pop %v3649
  %v3657 = vmul.f32 %v3655, %v3394
  %3659 = vrot.lane.b32.xlu0 %v3656, 64
  %v3660 = vpop.permute.xlu0 %3659
  %v3662 = vmul.f32 %v3655, %v3660
  %3664 = vrot.lane.b32.xlu0 %v3662, 32
  %v3665 = vpop.permute.xlu0 %3664
  %v3667 = vadd.f32 %v3657, %v3665
  %v3668 = vtanh.pop %v3667
  %3670 = vrot.lane.b32.xlu0 %v3668, 64
  %v3671 = vpop.permute.xlu0 %3670
  %v3673 = vmul.f32 %v3655, %v3671
  %v3674 = vsel %vm286, %v3575, 0
  %3676 = vmatprep.subr.mxu0 0.0
  %3677 = vmatpush1.msra.mxu0 0.0
  %3678 = vmatprep.subr.mxu0 0.0
  %3679 = vmatpush1.msra.mxu0 0.0
  %3680 = vmatprep.subr.mxu0 0.0
  %3681 = vmatpush1.msra.mxu0 0.0
  %3682 = vmatprep.subr.mxu0 0.0
  %3683 = vmatpush1.msra.mxu0 0.0
  %3684 = vmatprep.subr.mxu0 0.0
  %3685 = vmatpush1.msra.mxu0 0.0
  %3686 = vmatprep.subr.mxu0 0.0
  %3687 = vmatpush1.msra.mxu0 0.0
  %3688 = vmatprep.subr.mxu0 0.0
  %3689 = vmatpush1.msra.mxu0 0.0
  %3690 = vmatprep.subr.mxu0 0.0
  %3691 = vmatpush1.msra.mxu0 0.0
  %3692 = vmatprep.subr.mxu0 0.0
  %3693 = vmatpush1.msra.mxu0 0.0
  %3694 = vmatprep.subr.mxu0 0.0
  %3695 = vmatpush1.msra.mxu0 0.0
  %3696 = vmatprep.subr.mxu0 0.0
  %3697 = vmatpush1.msra.mxu0 0.0
  %3698 = vmatprep.subr.mxu0 0.0
  %3699 = vmatpush1.msra.mxu0 0.0
  %3700 = vmatprep.subr.mxu0 0.0
  %3701 = vmatpush1.msra.mxu0 %v279
  %3702 = vmatprep.subr.mxu0 0.0
  %3703 = vmatpush1.msra.mxu0 %v278
  %3704 = vmatprep.subr.mxu0 0.0
  %3705 = vmatpush1.msra.mxu0 %v277
  %3706 = vmatprep.subr.mxu0 0.0
  %3707 = vmatpush1.msra.mxu0 %v276
  %3708 = vmatprep.subr.mxu0 0.0
  %3709 = vmatpush2.msra.mxu0 0.0
  %3710 = vmatprep.subr.mxu0 0.0
  %3711 = vmatpush2.msra.mxu0 0.0
  %3712 = vmatprep.subr.mxu0 0.0
  %3713 = vmatpush2.msra.mxu0 0.0
  %3714 = vmatprep.subr.mxu0 0.0
  %3715 = vmatpush2.msra.mxu0 0.0
  %3716 = vmatprep.subr.mxu0 0.0
  %3717 = vmatpush2.msra.mxu0 0.0
  %3718 = vmatprep.subr.mxu0 0.0
  %3719 = vmatpush2.msra.mxu0 0.0
  %3720 = vmatprep.subr.mxu0 0.0
  %3721 = vmatpush2.msra.mxu0 0.0
  %3722 = vmatprep.subr.mxu0 0.0
  %3723 = vmatpush2.msra.mxu0 0.0
  %3724 = vmatprep.subr.mxu0 0.0
  %3725 = vmatpush2.msra.mxu0 0.0
  %3726 = vmatprep.subr.mxu0 0.0
  %3727 = vmatpush2.msra.mxu0 0.0
  %3728 = vmatprep.subr.mxu0 0.0
  %3729 = vmatpush2.msra.mxu0 0.0
  %3730 = vmatprep.subr.mxu0 0.0
  %3731 = vmatpush2.msra.mxu0 0.0
  %3732 = vmatprep.subr.mxu0 0.0
  %3733 = vmatpush2.msra.mxu0 0.0
  %3734 = vmatprep.subr.mxu0 0.0
  %3735 = vmatpush2.msra.mxu0 0.0
  %3736 = vmatprep.subr.mxu0 0.0
  %3737 = vmatpush2.msra.mxu0 0.0
  %3738 = vmatprep.subr.mxu0 0.0
  %3739 = vmatpush2.msra.mxu0 0.0
  %3740 = vmatprep.mubr.f32.mxu0 0.0
  %3741 = vmatmul.mubr.f32.gmra.mxu0 %v3674
  %v3742 = vpop.f32.mrf.mxu0
  %v3743 = vadd.f32 0.0, %v3742
  %v3744 = vpop.f32.mrf.mxu0
  %3745 = vdwg.mxu0
  %3747 = vrot.lane.b32.xlu0 %v3673, 32
  %v3748 = vpop.permute.xlu0 %3747
  %v3749 = vsel %vm286, %v3748, 0
  %3751 = vmatprep.subr.mxu0 0.0
  %3752 = vmatpush1.msra.mxu0 0.0
  %3753 = vmatprep.subr.mxu0 0.0
  %3754 = vmatpush1.msra.mxu0 0.0
  %3755 = vmatprep.subr.mxu0 0.0
  %3756 = vmatpush1.msra.mxu0 0.0
  %3757 = vmatprep.subr.mxu0 0.0
  %3758 = vmatpush1.msra.mxu0 0.0
  %3759 = vmatprep.subr.mxu0 0.0
  %3760 = vmatpush1.msra.mxu0 0.0
  %3761 = vmatprep.subr.mxu0 0.0
  %3762 = vmatpush1.msra.mxu0 0.0
  %3763 = vmatprep.subr.mxu0 0.0
  %3764 = vmatpush1.msra.mxu0 0.0
  %3765 = vmatprep.subr.mxu0 0.0
  %3766 = vmatpush1.msra.mxu0 0.0
  %3767 = vmatprep.subr.mxu0 0.0
  %3768 = vmatpush1.msra.mxu0 0.0
  %3769 = vmatprep.subr.mxu0 0.0
  %3770 = vmatpush1.msra.mxu0 0.0
  %3771 = vmatprep.subr.mxu0 0.0
  %3772 = vmatpush1.msra.mxu0 0.0
  %3773 = vmatprep.subr.mxu0 0.0
  %3774 = vmatpush1.msra.mxu0 0.0
  %3775 = vmatprep.subr.mxu0 0.0
  %3776 = vmatpush1.msra.mxu0 %v271
  %3777 = vmatprep.subr.mxu0 0.0
  %3778 = vmatpush1.msra.mxu0 %v270
  %3779 = vmatprep.subr.mxu0 0.0
  %3780 = vmatpush1.msra.mxu0 %v269
  %3781 = vmatprep.subr.mxu0 0.0
  %3782 = vmatpush1.msra.mxu0 %v268
  %3783 = vmatprep.subr.mxu0 0.0
  %3784 = vmatpush2.msra.mxu0 0.0
  %3785 = vmatprep.subr.mxu0 0.0
  %3786 = vmatpush2.msra.mxu0 0.0
  %3787 = vmatprep.subr.mxu0 0.0
  %3788 = vmatpush2.msra.mxu0 0.0
  %3789 = vmatprep.subr.mxu0 0.0
  %3790 = vmatpush2.msra.mxu0 0.0
  %3791 = vmatprep.subr.mxu0 0.0
  %3792 = vmatpush2.msra.mxu0 0.0
  %3793 = vmatprep.subr.mxu0 0.0
  %3794 = vmatpush2.msra.mxu0 0.0
  %3795 = vmatprep.subr.mxu0 0.0
  %3796 = vmatpush2.msra.mxu0 0.0
  %3797 = vmatprep.subr.mxu0 0.0
  %3798 = vmatpush2.msra.mxu0 0.0
  %3799 = vmatprep.subr.mxu0 0.0
  %3800 = vmatpush2.msra.mxu0 0.0
  %3801 = vmatprep.subr.mxu0 0.0
  %3802 = vmatpush2.msra.mxu0 0.0
  %3803 = vmatprep.subr.mxu0 0.0
  %3804 = vmatpush2.msra.mxu0 0.0
  %3805 = vmatprep.subr.mxu0 0.0
  %3806 = vmatpush2.msra.mxu0 0.0
  %3807 = vmatprep.subr.mxu0 0.0
  %3808 = vmatpush2.msra.mxu0 0.0
  %3809 = vmatprep.subr.mxu0 0.0
  %3810 = vmatpush2.msra.mxu0 0.0
  %3811 = vmatprep.subr.mxu0 0.0
  %3812 = vmatpush2.msra.mxu0 0.0
  %3813 = vmatprep.subr.mxu0 0.0
  %3814 = vmatpush2.msra.mxu0 0.0
  %3815 = vmatprep.mubr.f32.mxu0 0.0
  %3816 = vmatmul.mubr.f32.gmra.mxu0 %v3749
  %v3817 = vpop.f32.mrf.mxu0
  %v3818 = vadd.f32 %v3743, %v3817
  %v3819 = vpop.f32.mrf.mxu0
  %3820 = vdwg.mxu0
  %v3821 = vadd.f32 %v3818, %v540
  %v3822 = vxor.u32 %v3821, 2147483648
  %v3823 = vmul.f32 %v3822, 1.442695
  %v3824 = vpow.pop %v3823
  %v3825 = vadd.f32 %v3824, 1.0
  %v3826 = vrcp.pop %v3825
  %v3827 = vmul.f32 1.0, %v3826
  %v3828 = vtanh.pop %v3821
  %v3829 = vmul.f32 %v3827, %v3566
  %3831 = vrot.lane.b32.xlu0 %v3828, 64
  %v3832 = vpop.permute.xlu0 %3831
  %v3834 = vmul.f32 %v3827, %v3832
  %3836 = vrot.lane.b32.xlu0 %v3834, 32
  %v3837 = vpop.permute.xlu0 %3836
  %v3839 = vadd.f32 %v3829, %v3837
  %v3840 = vtanh.pop %v3839
  %3842 = vrot.lane.b32.xlu0 %v3840, 64
  %v3843 = vpop.permute.xlu0 %3842
  %v3845 = vmul.f32 %v3827, %v3843
  %3847 = vrot.lane.b32.xlu0 %v3845, 32
  %v3848 = vpop.permute.xlu0 %3847
  %3850 = vst.msk [vmem:[#allocation3 + $0x60] sm:$0xff] %vm286, %v3848
  %v3851 = vld [vmem:[#allocation2 + $0x68] sm:$0xff]
  %3852 = vmatprep.subr.mxu0 0.0
  %3853 = vmatpush1.msra.mxu0 0.0
  %3854 = vmatprep.subr.mxu0 0.0
  %3855 = vmatpush1.msra.mxu0 0.0
  %3856 = vmatprep.subr.mxu0 0.0
  %3857 = vmatpush1.msra.mxu0 0.0
  %3858 = vmatprep.subr.mxu0 0.0
  %3859 = vmatpush1.msra.mxu0 0.0
  %3860 = vmatprep.subr.mxu0 0.0
  %3861 = vmatpush1.msra.mxu0 0.0
  %3862 = vmatprep.subr.mxu0 0.0
  %3863 = vmatpush1.msra.mxu0 0.0
  %3864 = vmatprep.subr.mxu0 0.0
  %3865 = vmatpush1.msra.mxu0 0.0
  %3866 = vmatprep.subr.mxu0 0.0
  %3867 = vmatpush1.msra.mxu0 0.0
  %3868 = vmatprep.subr.mxu0 0.0
  %3869 = vmatpush1.msra.mxu0 0.0
  %3870 = vmatprep.subr.mxu0 0.0
  %3871 = vmatpush1.msra.mxu0 0.0
  %3872 = vmatprep.subr.mxu0 0.0
  %3873 = vmatpush1.msra.mxu0 0.0
  %3874 = vmatprep.subr.mxu0 0.0
  %3875 = vmatpush1.msra.mxu0 0.0
  %3876 = vmatprep.subr.mxu0 0.0
  %3877 = vmatpush1.msra.mxu0 %v275
  %3878 = vmatprep.subr.mxu0 0.0
  %3879 = vmatpush1.msra.mxu0 %v274
  %3880 = vmatprep.subr.mxu0 0.0
  %3881 = vmatpush1.msra.mxu0 %v273
  %3882 = vmatprep.subr.mxu0 0.0
  %3883 = vmatpush1.msra.mxu0 %v272
  %3884 = vmatprep.subr.mxu0 0.0
  %3885 = vmatpush2.msra.mxu0 0.0
  %3886 = vmatprep.subr.mxu0 0.0
  %3887 = vmatpush2.msra.mxu0 0.0
  %3888 = vmatprep.subr.mxu0 0.0
  %3889 = vmatpush2.msra.mxu0 0.0
  %3890 = vmatprep.subr.mxu0 0.0
  %3891 = vmatpush2.msra.mxu0 0.0
  %3892 = vmatprep.subr.mxu0 0.0
  %3893 = vmatpush2.msra.mxu0 0.0
  %3894 = vmatprep.subr.mxu0 0.0
  %3895 = vmatpush2.msra.mxu0 0.0
  %3896 = vmatprep.subr.mxu0 0.0
  %3897 = vmatpush2.msra.mxu0 0.0
  %3898 = vmatprep.subr.mxu0 0.0
  %3899 = vmatpush2.msra.mxu0 0.0
  %3900 = vmatprep.subr.mxu0 0.0
  %3901 = vmatpush2.msra.mxu0 0.0
  %3902 = vmatprep.subr.mxu0 0.0
  %3903 = vmatpush2.msra.mxu0 0.0
  %3904 = vmatprep.subr.mxu0 0.0
  %3905 = vmatpush2.msra.mxu0 0.0
  %3906 = vmatprep.subr.mxu0 0.0
  %3907 = vmatpush2.msra.mxu0 0.0
  %3908 = vmatprep.subr.mxu0 0.0
  %3909 = vmatpush2.msra.mxu0 0.0
  %3910 = vmatprep.subr.mxu0 0.0
  %3911 = vmatpush2.msra.mxu0 0.0
  %3912 = vmatprep.subr.mxu0 0.0
  %3913 = vmatpush2.msra.mxu0 0.0
  %3914 = vmatprep.subr.mxu0 0.0
  %3915 = vmatpush2.msra.mxu0 0.0
  %3916 = vmatprep.mubr.f32.mxu0 0.0
  %3917 = vmatmul.mubr.f32.gmra.mxu0 %v3749
  %v3918 = vpop.f32.mrf.mxu0
  %v3919 = vadd.f32 0.0, %v3918
  %v3920 = vpop.f32.mrf.mxu0
  %3921 = vdwg.mxu0
  %v3922 = vadd.f32 %v3851, %v3919
  %v3923 = vxor.u32 %v3922, 2147483648
  %v3924 = vmul.f32 %v3923, 1.442695
  %v3925 = vpow.pop %v3924
  %v3926 = vadd.f32 %v3925, 1.0
  %v3927 = vrcp.pop %v3926
  %v3928 = vmul.f32 1.0, %v3927
  %v3929 = vtanh.pop %v3922
  %v3930 = vmul.f32 %v3928, %v3667
  %3932 = vrot.lane.b32.xlu0 %v3929, 64
  %v3933 = vpop.permute.xlu0 %3932
  %v3935 = vmul.f32 %v3928, %v3933
  %3937 = vrot.lane.b32.xlu0 %v3935, 32
  %v3938 = vpop.permute.xlu0 %3937
  %v3940 = vadd.f32 %v3930, %v3938
  %v3941 = vtanh.pop %v3940
  %3943 = vrot.lane.b32.xlu0 %v3941, 64
  %v3944 = vpop.permute.xlu0 %3943
  %v3946 = vmul.f32 %v3928, %v3944
  %v3947 = vsel %vm286, %v3848, 0
  %3949 = vmatprep.subr.mxu0 0.0
  %3950 = vmatpush1.msra.mxu0 0.0
  %3951 = vmatprep.subr.mxu0 0.0
  %3952 = vmatpush1.msra.mxu0 0.0
  %3953 = vmatprep.subr.mxu0 0.0
  %3954 = vmatpush1.msra.mxu0 0.0
  %3955 = vmatprep.subr.mxu0 0.0
  %3956 = vmatpush1.msra.mxu0 0.0
  %3957 = vmatprep.subr.mxu0 0.0
  %3958 = vmatpush1.msra.mxu0 0.0
  %3959 = vmatprep.subr.mxu0 0.0
  %3960 = vmatpush1.msra.mxu0 0.0
  %3961 = vmatprep.subr.mxu0 0.0
  %3962 = vmatpush1.msra.mxu0 0.0
  %3963 = vmatprep.subr.mxu0 0.0
  %3964 = vmatpush1.msra.mxu0 0.0
  %3965 = vmatprep.subr.mxu0 0.0
  %3966 = vmatpush1.msra.mxu0 0.0
  %3967 = vmatprep.subr.mxu0 0.0
  %3968 = vmatpush1.msra.mxu0 0.0
  %3969 = vmatprep.subr.mxu0 0.0
  %3970 = vmatpush1.msra.mxu0 0.0
  %3971 = vmatprep.subr.mxu0 0.0
  %3972 = vmatpush1.msra.mxu0 0.0
  %3973 = vmatprep.subr.mxu0 0.0
  %3974 = vmatpush1.msra.mxu0 %v279
  %3975 = vmatprep.subr.mxu0 0.0
  %3976 = vmatpush1.msra.mxu0 %v278
  %3977 = vmatprep.subr.mxu0 0.0
  %3978 = vmatpush1.msra.mxu0 %v277
  %3979 = vmatprep.subr.mxu0 0.0
  %3980 = vmatpush1.msra.mxu0 %v276
  %3981 = vmatprep.subr.mxu0 0.0
  %3982 = vmatpush2.msra.mxu0 0.0
  %3983 = vmatprep.subr.mxu0 0.0
  %3984 = vmatpush2.msra.mxu0 0.0
  %3985 = vmatprep.subr.mxu0 0.0
  %3986 = vmatpush2.msra.mxu0 0.0
  %3987 = vmatprep.subr.mxu0 0.0
  %3988 = vmatpush2.msra.mxu0 0.0
  %3989 = vmatprep.subr.mxu0 0.0
  %3990 = vmatpush2.msra.mxu0 0.0
  %3991 = vmatprep.subr.mxu0 0.0
  %3992 = vmatpush2.msra.mxu0 0.0
  %3993 = vmatprep.subr.mxu0 0.0
  %3994 = vmatpush2.msra.mxu0 0.0
  %3995 = vmatprep.subr.mxu0 0.0
  %3996 = vmatpush2.msra.mxu0 0.0
  %3997 = vmatprep.subr.mxu0 0.0
  %3998 = vmatpush2.msra.mxu0 0.0
  %3999 = vmatprep.subr.mxu0 0.0
  %4000 = vmatpush2.msra.mxu0 0.0
  %4001 = vmatprep.subr.mxu0 0.0
  %4002 = vmatpush2.msra.mxu0 0.0
  %4003 = vmatprep.subr.mxu0 0.0
  %4004 = vmatpush2.msra.mxu0 0.0
  %4005 = vmatprep.subr.mxu0 0.0
  %4006 = vmatpush2.msra.mxu0 0.0
  %4007 = vmatprep.subr.mxu0 0.0
  %4008 = vmatpush2.msra.mxu0 0.0
  %4009 = vmatprep.subr.mxu0 0.0
  %4010 = vmatpush2.msra.mxu0 0.0
  %4011 = vmatprep.subr.mxu0 0.0
  %4012 = vmatpush2.msra.mxu0 0.0
  %4013 = vmatprep.mubr.f32.mxu0 0.0
  %4014 = vmatmul.mubr.f32.gmra.mxu0 %v3947
  %v4015 = vpop.f32.mrf.mxu0
  %v4016 = vadd.f32 0.0, %v4015
  %v4017 = vpop.f32.mrf.mxu0
  %4018 = vdwg.mxu0
  %4020 = vrot.lane.b32.xlu0 %v3946, 32
  %v4021 = vpop.permute.xlu0 %4020
  %v4022 = vsel %vm286, %v4021, 0
  %4024 = vmatprep.subr.mxu0 0.0
  %4025 = vmatpush1.msra.mxu0 0.0
  %4026 = vmatprep.subr.mxu0 0.0
  %4027 = vmatpush1.msra.mxu0 0.0
  %4028 = vmatprep.subr.mxu0 0.0
  %4029 = vmatpush1.msra.mxu0 0.0
  %4030 = vmatprep.subr.mxu0 0.0
  %4031 = vmatpush1.msra.mxu0 0.0
  %4032 = vmatprep.subr.mxu0 0.0
  %4033 = vmatpush1.msra.mxu0 0.0
  %4034 = vmatprep.subr.mxu0 0.0
  %4035 = vmatpush1.msra.mxu0 0.0
  %4036 = vmatprep.subr.mxu0 0.0
  %4037 = vmatpush1.msra.mxu0 0.0
  %4038 = vmatprep.subr.mxu0 0.0
  %4039 = vmatpush1.msra.mxu0 0.0
  %4040 = vmatprep.subr.mxu0 0.0
  %4041 = vmatpush1.msra.mxu0 0.0
  %4042 = vmatprep.subr.mxu0 0.0
  %4043 = vmatpush1.msra.mxu0 0.0
  %4044 = vmatprep.subr.mxu0 0.0
  %4045 = vmatpush1.msra.mxu0 0.0
  %4046 = vmatprep.subr.mxu0 0.0
  %4047 = vmatpush1.msra.mxu0 0.0
  %4048 = vmatprep.subr.mxu0 0.0
  %4049 = vmatpush1.msra.mxu0 %v271
  %4050 = vmatprep.subr.mxu0 0.0
  %4051 = vmatpush1.msra.mxu0 %v270
  %4052 = vmatprep.subr.mxu0 0.0
  %4053 = vmatpush1.msra.mxu0 %v269
  %4054 = vmatprep.subr.mxu0 0.0
  %4055 = vmatpush1.msra.mxu0 %v268
  %4056 = vmatprep.subr.mxu0 0.0
  %4057 = vmatpush2.msra.mxu0 0.0
  %4058 = vmatprep.subr.mxu0 0.0
  %4059 = vmatpush2.msra.mxu0 0.0
  %4060 = vmatprep.subr.mxu0 0.0
  %4061 = vmatpush2.msra.mxu0 0.0
  %4062 = vmatprep.subr.mxu0 0.0
  %4063 = vmatpush2.msra.mxu0 0.0
  %4064 = vmatprep.subr.mxu0 0.0
  %4065 = vmatpush2.msra.mxu0 0.0
  %4066 = vmatprep.subr.mxu0 0.0
  %4067 = vmatpush2.msra.mxu0 0.0
  %4068 = vmatprep.subr.mxu0 0.0
  %4069 = vmatpush2.msra.mxu0 0.0
  %4070 = vmatprep.subr.mxu0 0.0
  %4071 = vmatpush2.msra.mxu0 0.0
  %4072 = vmatprep.subr.mxu0 0.0
  %4073 = vmatpush2.msra.mxu0 0.0
  %4074 = vmatprep.subr.mxu0 0.0
  %4075 = vmatpush2.msra.mxu0 0.0
  %4076 = vmatprep.subr.mxu0 0.0
  %4077 = vmatpush2.msra.mxu0 0.0
  %4078 = vmatprep.subr.mxu0 0.0
  %4079 = vmatpush2.msra.mxu0 0.0
  %4080 = vmatprep.subr.mxu0 0.0
  %4081 = vmatpush2.msra.mxu0 0.0
  %4082 = vmatprep.subr.mxu0 0.0
  %4083 = vmatpush2.msra.mxu0 0.0
  %4084 = vmatprep.subr.mxu0 0.0
  %4085 = vmatpush2.msra.mxu0 0.0
  %4086 = vmatprep.subr.mxu0 0.0
  %4087 = vmatpush2.msra.mxu0 0.0
  %4088 = vmatprep.mubr.f32.mxu0 0.0
  %4089 = vmatmul.mubr.f32.gmra.mxu0 %v4022
  %v4090 = vpop.f32.mrf.mxu0
  %v4091 = vadd.f32 %v4016, %v4090
  %v4092 = vpop.f32.mrf.mxu0
  %4093 = vdwg.mxu0
  %v4094 = vadd.f32 %v4091, %v540
  %v4095 = vxor.u32 %v4094, 2147483648
  %v4096 = vmul.f32 %v4095, 1.442695
  %v4097 = vpow.pop %v4096
  %v4098 = vadd.f32 %v4097, 1.0
  %v4099 = vrcp.pop %v4098
  %v4100 = vmul.f32 1.0, %v4099
  %v4101 = vtanh.pop %v4094
  %v4102 = vmul.f32 %v4100, %v3839
  %4104 = vrot.lane.b32.xlu0 %v4101, 64
  %v4105 = vpop.permute.xlu0 %4104
  %v4107 = vmul.f32 %v4100, %v4105
  %4109 = vrot.lane.b32.xlu0 %v4107, 32
  %v4110 = vpop.permute.xlu0 %4109
  %v4112 = vadd.f32 %v4102, %v4110
  %v4113 = vtanh.pop %v4112
  %4115 = vrot.lane.b32.xlu0 %v4113, 64
  %v4116 = vpop.permute.xlu0 %4115
  %v4118 = vmul.f32 %v4100, %v4116
  %4120 = vrot.lane.b32.xlu0 %v4118, 32
  %v4121 = vpop.permute.xlu0 %4120
  %4123 = vst.msk [vmem:[#allocation3 + $0x68] sm:$0xff] %vm286, %v4121
  %v4124 = vld [vmem:[#allocation2 + $0x70] sm:$0xff]
  %4125 = vmatprep.subr.mxu0 0.0
  %4126 = vmatpush1.msra.mxu0 0.0
  %4127 = vmatprep.subr.mxu0 0.0
  %4128 = vmatpush1.msra.mxu0 0.0
  %4129 = vmatprep.subr.mxu0 0.0
  %4130 = vmatpush1.msra.mxu0 0.0
  %4131 = vmatprep.subr.mxu0 0.0
  %4132 = vmatpush1.msra.mxu0 0.0
  %4133 = vmatprep.subr.mxu0 0.0
  %4134 = vmatpush1.msra.mxu0 0.0
  %4135 = vmatprep.subr.mxu0 0.0
  %4136 = vmatpush1.msra.mxu0 0.0
  %4137 = vmatprep.subr.mxu0 0.0
  %4138 = vmatpush1.msra.mxu0 0.0
  %4139 = vmatprep.subr.mxu0 0.0
  %4140 = vmatpush1.msra.mxu0 0.0
  %4141 = vmatprep.subr.mxu0 0.0
  %4142 = vmatpush1.msra.mxu0 0.0
  %4143 = vmatprep.subr.mxu0 0.0
  %4144 = vmatpush1.msra.mxu0 0.0
  %4145 = vmatprep.subr.mxu0 0.0
  %4146 = vmatpush1.msra.mxu0 0.0
  %4147 = vmatprep.subr.mxu0 0.0
  %4148 = vmatpush1.msra.mxu0 0.0
  %4149 = vmatprep.subr.mxu0 0.0
  %4150 = vmatpush1.msra.mxu0 %v275
  %4151 = vmatprep.subr.mxu0 0.0
  %4152 = vmatpush1.msra.mxu0 %v274
  %4153 = vmatprep.subr.mxu0 0.0
  %4154 = vmatpush1.msra.mxu0 %v273
  %4155 = vmatprep.subr.mxu0 0.0
  %4156 = vmatpush1.msra.mxu0 %v272
  %4157 = vmatprep.subr.mxu0 0.0
  %4158 = vmatpush2.msra.mxu0 0.0
  %4159 = vmatprep.subr.mxu0 0.0
  %4160 = vmatpush2.msra.mxu0 0.0
  %4161 = vmatprep.subr.mxu0 0.0
  %4162 = vmatpush2.msra.mxu0 0.0
  %4163 = vmatprep.subr.mxu0 0.0
  %4164 = vmatpush2.msra.mxu0 0.0
  %4165 = vmatprep.subr.mxu0 0.0
  %4166 = vmatpush2.msra.mxu0 0.0
  %4167 = vmatprep.subr.mxu0 0.0
  %4168 = vmatpush2.msra.mxu0 0.0
  %4169 = vmatprep.subr.mxu0 0.0
  %4170 = vmatpush2.msra.mxu0 0.0
  %4171 = vmatprep.subr.mxu0 0.0
  %4172 = vmatpush2.msra.mxu0 0.0
  %4173 = vmatprep.subr.mxu0 0.0
  %4174 = vmatpush2.msra.mxu0 0.0
  %4175 = vmatprep.subr.mxu0 0.0
  %4176 = vmatpush2.msra.mxu0 0.0
  %4177 = vmatprep.subr.mxu0 0.0
  %4178 = vmatpush2.msra.mxu0 0.0
  %4179 = vmatprep.subr.mxu0 0.0
  %4180 = vmatpush2.msra.mxu0 0.0
  %4181 = vmatprep.subr.mxu0 0.0
  %4182 = vmatpush2.msra.mxu0 0.0
  %4183 = vmatprep.subr.mxu0 0.0
  %4184 = vmatpush2.msra.mxu0 0.0
  %4185 = vmatprep.subr.mxu0 0.0
  %4186 = vmatpush2.msra.mxu0 0.0
  %4187 = vmatprep.subr.mxu0 0.0
  %4188 = vmatpush2.msra.mxu0 0.0
  %4189 = vmatprep.mubr.f32.mxu0 0.0
  %4190 = vmatmul.mubr.f32.gmra.mxu0 %v4022
  %v4191 = vpop.f32.mrf.mxu0
  %v4192 = vadd.f32 0.0, %v4191
  %v4193 = vpop.f32.mrf.mxu0
  %4194 = vdwg.mxu0
  %v4195 = vadd.f32 %v4124, %v4192
  %v4196 = vxor.u32 %v4195, 2147483648
  %v4197 = vmul.f32 %v4196, 1.442695
  %v4198 = vpow.pop %v4197
  %v4199 = vadd.f32 %v4198, 1.0
  %v4200 = vrcp.pop %v4199
  %v4201 = vmul.f32 1.0, %v4200
  %v4202 = vtanh.pop %v4195
  %v4203 = vmul.f32 %v4201, %v3940
  %4205 = vrot.lane.b32.xlu0 %v4202, 64
  %v4206 = vpop.permute.xlu0 %4205
  %v4208 = vmul.f32 %v4201, %v4206
  %4210 = vrot.lane.b32.xlu0 %v4208, 32
  %v4211 = vpop.permute.xlu0 %4210
  %v4213 = vadd.f32 %v4203, %v4211
  %v4214 = vtanh.pop %v4213
  %4216 = vrot.lane.b32.xlu0 %v4214, 64
  %v4217 = vpop.permute.xlu0 %4216
  %v4219 = vmul.f32 %v4201, %v4217
  %v4220 = vsel %vm286, %v4121, 0
  %4222 = vmatprep.subr.mxu0 0.0
  %4223 = vmatpush1.msra.mxu0 0.0
  %4224 = vmatprep.subr.mxu0 0.0
  %4225 = vmatpush1.msra.mxu0 0.0
  %4226 = vmatprep.subr.mxu0 0.0
  %4227 = vmatpush1.msra.mxu0 0.0
  %4228 = vmatprep.subr.mxu0 0.0
  %4229 = vmatpush1.msra.mxu0 0.0
  %4230 = vmatprep.subr.mxu0 0.0
  %4231 = vmatpush1.msra.mxu0 0.0
  %4232 = vmatprep.subr.mxu0 0.0
  %4233 = vmatpush1.msra.mxu0 0.0
  %4234 = vmatprep.subr.mxu0 0.0
  %4235 = vmatpush1.msra.mxu0 0.0
  %4236 = vmatprep.subr.mxu0 0.0
  %4237 = vmatpush1.msra.mxu0 0.0
  %4238 = vmatprep.subr.mxu0 0.0
  %4239 = vmatpush1.msra.mxu0 0.0
  %4240 = vmatprep.subr.mxu0 0.0
  %4241 = vmatpush1.msra.mxu0 0.0
  %4242 = vmatprep.subr.mxu0 0.0
  %4243 = vmatpush1.msra.mxu0 0.0
  %4244 = vmatprep.subr.mxu0 0.0
  %4245 = vmatpush1.msra.mxu0 0.0
  %4246 = vmatprep.subr.mxu0 0.0
  %4247 = vmatpush1.msra.mxu0 %v279
  %4248 = vmatprep.subr.mxu0 0.0
  %4249 = vmatpush1.msra.mxu0 %v278
  %4250 = vmatprep.subr.mxu0 0.0
  %4251 = vmatpush1.msra.mxu0 %v277
  %4252 = vmatprep.subr.mxu0 0.0
  %4253 = vmatpush1.msra.mxu0 %v276
  %4254 = vmatprep.subr.mxu0 0.0
  %4255 = vmatpush2.msra.mxu0 0.0
  %4256 = vmatprep.subr.mxu0 0.0
  %4257 = vmatpush2.msra.mxu0 0.0
  %4258 = vmatprep.subr.mxu0 0.0
  %4259 = vmatpush2.msra.mxu0 0.0
  %4260 = vmatprep.subr.mxu0 0.0
  %4261 = vmatpush2.msra.mxu0 0.0
  %4262 = vmatprep.subr.mxu0 0.0
  %4263 = vmatpush2.msra.mxu0 0.0
  %4264 = vmatprep.subr.mxu0 0.0
  %4265 = vmatpush2.msra.mxu0 0.0
  %4266 = vmatprep.subr.mxu0 0.0
  %4267 = vmatpush2.msra.mxu0 0.0
  %4268 = vmatprep.subr.mxu0 0.0
  %4269 = vmatpush2.msra.mxu0 0.0
  %4270 = vmatprep.subr.mxu0 0.0
  %4271 = vmatpush2.msra.mxu0 0.0
  %4272 = vmatprep.subr.mxu0 0.0
  %4273 = vmatpush2.msra.mxu0 0.0
  %4274 = vmatprep.subr.mxu0 0.0
  %4275 = vmatpush2.msra.mxu0 0.0
  %4276 = vmatprep.subr.mxu0 0.0
  %4277 = vmatpush2.msra.mxu0 0.0
  %4278 = vmatprep.subr.mxu0 0.0
  %4279 = vmatpush2.msra.mxu0 0.0
  %4280 = vmatprep.subr.mxu0 0.0
  %4281 = vmatpush2.msra.mxu0 0.0
  %4282 = vmatprep.subr.mxu0 0.0
  %4283 = vmatpush2.msra.mxu0 0.0
  %4284 = vmatprep.subr.mxu0 0.0
  %4285 = vmatpush2.msra.mxu0 0.0
  %4286 = vmatprep.mubr.f32.mxu0 0.0
  %4287 = vmatmul.mubr.f32.gmra.mxu0 %v4220
  %v4288 = vpop.f32.mrf.mxu0
  %v4289 = vadd.f32 0.0, %v4288
  %v4290 = vpop.f32.mrf.mxu0
  %4291 = vdwg.mxu0
  %4293 = vrot.lane.b32.xlu0 %v4219, 32
  %v4294 = vpop.permute.xlu0 %4293
  %v4295 = vsel %vm286, %v4294, 0
  %4297 = vmatprep.subr.mxu0 0.0
  %4298 = vmatpush1.msra.mxu0 0.0
  %4299 = vmatprep.subr.mxu0 0.0
  %4300 = vmatpush1.msra.mxu0 0.0
  %4301 = vmatprep.subr.mxu0 0.0
  %4302 = vmatpush1.msra.mxu0 0.0
  %4303 = vmatprep.subr.mxu0 0.0
  %4304 = vmatpush1.msra.mxu0 0.0
  %4305 = vmatprep.subr.mxu0 0.0
  %4306 = vmatpush1.msra.mxu0 0.0
  %4307 = vmatprep.subr.mxu0 0.0
  %4308 = vmatpush1.msra.mxu0 0.0
  %4309 = vmatprep.subr.mxu0 0.0
  %4310 = vmatpush1.msra.mxu0 0.0
  %4311 = vmatprep.subr.mxu0 0.0
  %4312 = vmatpush1.msra.mxu0 0.0
  %4313 = vmatprep.subr.mxu0 0.0
  %4314 = vmatpush1.msra.mxu0 0.0
  %4315 = vmatprep.subr.mxu0 0.0
  %4316 = vmatpush1.msra.mxu0 0.0
  %4317 = vmatprep.subr.mxu0 0.0
  %4318 = vmatpush1.msra.mxu0 0.0
  %4319 = vmatprep.subr.mxu0 0.0
  %4320 = vmatpush1.msra.mxu0 0.0
  %4321 = vmatprep.subr.mxu0 0.0
  %4322 = vmatpush1.msra.mxu0 %v271
  %4323 = vmatprep.subr.mxu0 0.0
  %4324 = vmatpush1.msra.mxu0 %v270
  %4325 = vmatprep.subr.mxu0 0.0
  %4326 = vmatpush1.msra.mxu0 %v269
  %4327 = vmatprep.subr.mxu0 0.0
  %4328 = vmatpush1.msra.mxu0 %v268
  %4329 = vmatprep.subr.mxu0 0.0
  %4330 = vmatpush2.msra.mxu0 0.0
  %4331 = vmatprep.subr.mxu0 0.0
  %4332 = vmatpush2.msra.mxu0 0.0
  %4333 = vmatprep.subr.mxu0 0.0
  %4334 = vmatpush2.msra.mxu0 0.0
  %4335 = vmatprep.subr.mxu0 0.0
  %4336 = vmatpush2.msra.mxu0 0.0
  %4337 = vmatprep.subr.mxu0 0.0
  %4338 = vmatpush2.msra.mxu0 0.0
  %4339 = vmatprep.subr.mxu0 0.0
  %4340 = vmatpush2.msra.mxu0 0.0
  %4341 = vmatprep.subr.mxu0 0.0
  %4342 = vmatpush2.msra.mxu0 0.0
  %4343 = vmatprep.subr.mxu0 0.0
  %4344 = vmatpush2.msra.mxu0 0.0
  %4345 = vmatprep.subr.mxu0 0.0
  %4346 = vmatpush2.msra.mxu0 0.0
  %4347 = vmatprep.subr.mxu0 0.0
  %4348 = vmatpush2.msra.mxu0 0.0
  %4349 = vmatprep.subr.mxu0 0.0
  %4350 = vmatpush2.msra.mxu0 0.0
  %4351 = vmatprep.subr.mxu0 0.0
  %4352 = vmatpush2.msra.mxu0 0.0
  %4353 = vmatprep.subr.mxu0 0.0
  %4354 = vmatpush2.msra.mxu0 0.0
  %4355 = vmatprep.subr.mxu0 0.0
  %4356 = vmatpush2.msra.mxu0 0.0
  %4357 = vmatprep.subr.mxu0 0.0
  %4358 = vmatpush2.msra.mxu0 0.0
  %4359 = vmatprep.subr.mxu0 0.0
  %4360 = vmatpush2.msra.mxu0 0.0
  %4361 = vmatprep.mubr.f32.mxu0 0.0
  %4362 = vmatmul.mubr.f32.gmra.mxu0 %v4295
  %v4363 = vpop.f32.mrf.mxu0
  %v4364 = vadd.f32 %v4289, %v4363
  %v4365 = vpop.f32.mrf.mxu0
  %4366 = vdwg.mxu0
  %v4367 = vadd.f32 %v4364, %v540
  %v4368 = vxor.u32 %v4367, 2147483648
  %v4369 = vmul.f32 %v4368, 1.442695
  %v4370 = vpow.pop %v4369
  %v4371 = vadd.f32 %v4370, 1.0
  %v4372 = vrcp.pop %v4371
  %v4373 = vmul.f32 1.0, %v4372
  %v4374 = vtanh.pop %v4367
  %v4375 = vmul.f32 %v4373, %v4112
  %4377 = vrot.lane.b32.xlu0 %v4374, 64
  %v4378 = vpop.permute.xlu0 %4377
  %v4380 = vmul.f32 %v4373, %v4378
  %4382 = vrot.lane.b32.xlu0 %v4380, 32
  %v4383 = vpop.permute.xlu0 %4382
  %v4385 = vadd.f32 %v4375, %v4383
  %v4386 = vtanh.pop %v4385
  %4388 = vrot.lane.b32.xlu0 %v4386, 64
  %v4389 = vpop.permute.xlu0 %4388
  %v4391 = vmul.f32 %v4373, %v4389
  %4393 = vrot.lane.b32.xlu0 %v4391, 32
  %v4394 = vpop.permute.xlu0 %4393
  %4396 = vst.msk [vmem:[#allocation3 + $0x70] sm:$0xff] %vm286, %v4394
  %v4397 = vld [vmem:[#allocation2 + $0x78] sm:$0xff]
  %4398 = vmatprep.subr.mxu0 0.0
  %4399 = vmatpush1.msra.mxu0 0.0
  %4400 = vmatprep.subr.mxu0 0.0
  %4401 = vmatpush1.msra.mxu0 0.0
  %4402 = vmatprep.subr.mxu0 0.0
  %4403 = vmatpush1.msra.mxu0 0.0
  %4404 = vmatprep.subr.mxu0 0.0
  %4405 = vmatpush1.msra.mxu0 0.0
  %4406 = vmatprep.subr.mxu0 0.0
  %4407 = vmatpush1.msra.mxu0 0.0
  %4408 = vmatprep.subr.mxu0 0.0
  %4409 = vmatpush1.msra.mxu0 0.0
  %4410 = vmatprep.subr.mxu0 0.0
  %4411 = vmatpush1.msra.mxu0 0.0
  %4412 = vmatprep.subr.mxu0 0.0
  %4413 = vmatpush1.msra.mxu0 0.0
  %4414 = vmatprep.subr.mxu0 0.0
  %4415 = vmatpush1.msra.mxu0 0.0
  %4416 = vmatprep.subr.mxu0 0.0
  %4417 = vmatpush1.msra.mxu0 0.0
  %4418 = vmatprep.subr.mxu0 0.0
  %4419 = vmatpush1.msra.mxu0 0.0
  %4420 = vmatprep.subr.mxu0 0.0
  %4421 = vmatpush1.msra.mxu0 0.0
  %4422 = vmatprep.subr.mxu0 0.0
  %4423 = vmatpush1.msra.mxu0 %v275
  %4424 = vmatprep.subr.mxu0 0.0
  %4425 = vmatpush1.msra.mxu0 %v274
  %4426 = vmatprep.subr.mxu0 0.0
  %4427 = vmatpush1.msra.mxu0 %v273
  %4428 = vmatprep.subr.mxu0 0.0
  %4429 = vmatpush1.msra.mxu0 %v272
  %4430 = vmatprep.subr.mxu0 0.0
  %4431 = vmatpush2.msra.mxu0 0.0
  %4432 = vmatprep.subr.mxu0 0.0
  %4433 = vmatpush2.msra.mxu0 0.0
  %4434 = vmatprep.subr.mxu0 0.0
  %4435 = vmatpush2.msra.mxu0 0.0
  %4436 = vmatprep.subr.mxu0 0.0
  %4437 = vmatpush2.msra.mxu0 0.0
  %4438 = vmatprep.subr.mxu0 0.0
  %4439 = vmatpush2.msra.mxu0 0.0
  %4440 = vmatprep.subr.mxu0 0.0
  %4441 = vmatpush2.msra.mxu0 0.0
  %4442 = vmatprep.subr.mxu0 0.0
  %4443 = vmatpush2.msra.mxu0 0.0
  %4444 = vmatprep.subr.mxu0 0.0
  %4445 = vmatpush2.msra.mxu0 0.0
  %4446 = vmatprep.subr.mxu0 0.0
  %4447 = vmatpush2.msra.mxu0 0.0
  %4448 = vmatprep.subr.mxu0 0.0
  %4449 = vmatpush2.msra.mxu0 0.0
  %4450 = vmatprep.subr.mxu0 0.0
  %4451 = vmatpush2.msra.mxu0 0.0
  %4452 = vmatprep.subr.mxu0 0.0
  %4453 = vmatpush2.msra.mxu0 0.0
  %4454 = vmatprep.subr.mxu0 0.0
  %4455 = vmatpush2.msra.mxu0 0.0
  %4456 = vmatprep.subr.mxu0 0.0
  %4457 = vmatpush2.msra.mxu0 0.0
  %4458 = vmatprep.subr.mxu0 0.0
  %4459 = vmatpush2.msra.mxu0 0.0
  %4460 = vmatprep.subr.mxu0 0.0
  %4461 = vmatpush2.msra.mxu0 0.0
  %4462 = vmatprep.mubr.f32.mxu0 0.0
  %4463 = vmatmul.mubr.f32.gmra.mxu0 %v4295
  %v4464 = vpop.f32.mrf.mxu0
  %v4465 = vadd.f32 0.0, %v4464
  %v4466 = vpop.f32.mrf.mxu0
  %4467 = vdwg.mxu0
  %v4468 = vadd.f32 %v4397, %v4465
  %v4469 = vxor.u32 %v4468, 2147483648
  %v4470 = vmul.f32 %v4469, 1.442695
  %v4471 = vpow.pop %v4470
  %v4472 = vadd.f32 %v4471, 1.0
  %v4473 = vrcp.pop %v4472
  %v4474 = vmul.f32 1.0, %v4473
  %v4475 = vtanh.pop %v4468
  %v4476 = vmul.f32 %v4474, %v4213
  %4478 = vrot.lane.b32.xlu0 %v4475, 64
  %v4479 = vpop.permute.xlu0 %4478
  %v4481 = vmul.f32 %v4474, %v4479
  %4483 = vrot.lane.b32.xlu0 %v4481, 32
  %v4484 = vpop.permute.xlu0 %4483
  %v4486 = vadd.f32 %v4476, %v4484
  %v4487 = vtanh.pop %v4486
  %4489 = vrot.lane.b32.xlu0 %v4487, 64
  %v4490 = vpop.permute.xlu0 %4489
  %v4492 = vmul.f32 %v4474, %v4490
  %v4493 = vsel %vm286, %v4394, 0
  %4495 = vmatprep.subr.mxu0 0.0
  %4496 = vmatpush1.msra.mxu0 0.0
  %4497 = vmatprep.subr.mxu0 0.0
  %4498 = vmatpush1.msra.mxu0 0.0
  %4499 = vmatprep.subr.mxu0 0.0
  %4500 = vmatpush1.msra.mxu0 0.0
  %4501 = vmatprep.subr.mxu0 0.0
  %4502 = vmatpush1.msra.mxu0 0.0
  %4503 = vmatprep.subr.mxu0 0.0
  %4504 = vmatpush1.msra.mxu0 0.0
  %4505 = vmatprep.subr.mxu0 0.0
  %4506 = vmatpush1.msra.mxu0 0.0
  %4507 = vmatprep.subr.mxu0 0.0
  %4508 = vmatpush1.msra.mxu0 0.0
  %4509 = vmatprep.subr.mxu0 0.0
  %4510 = vmatpush1.msra.mxu0 0.0
  %4511 = vmatprep.subr.mxu0 0.0
  %4512 = vmatpush1.msra.mxu0 0.0
  %4513 = vmatprep.subr.mxu0 0.0
  %4514 = vmatpush1.msra.mxu0 0.0
  %4515 = vmatprep.subr.mxu0 0.0
  %4516 = vmatpush1.msra.mxu0 0.0
  %4517 = vmatprep.subr.mxu0 0.0
  %4518 = vmatpush1.msra.mxu0 0.0
  %4519 = vmatprep.subr.mxu0 0.0
  %4520 = vmatpush1.msra.mxu0 %v279
  %4521 = vmatprep.subr.mxu0 0.0
  %4522 = vmatpush1.msra.mxu0 %v278
  %4523 = vmatprep.subr.mxu0 0.0
  %4524 = vmatpush1.msra.mxu0 %v277
  %4525 = vmatprep.subr.mxu0 0.0
  %4526 = vmatpush1.msra.mxu0 %v276
  %4527 = vmatprep.subr.mxu0 0.0
  %4528 = vmatpush2.msra.mxu0 0.0
  %4529 = vmatprep.subr.mxu0 0.0
  %4530 = vmatpush2.msra.mxu0 0.0
  %4531 = vmatprep.subr.mxu0 0.0
  %4532 = vmatpush2.msra.mxu0 0.0
  %4533 = vmatprep.subr.mxu0 0.0
  %4534 = vmatpush2.msra.mxu0 0.0
  %4535 = vmatprep.subr.mxu0 0.0
  %4536 = vmatpush2.msra.mxu0 0.0
  %4537 = vmatprep.subr.mxu0 0.0
  %4538 = vmatpush2.msra.mxu0 0.0
  %4539 = vmatprep.subr.mxu0 0.0
  %4540 = vmatpush2.msra.mxu0 0.0
  %4541 = vmatprep.subr.mxu0 0.0
  %4542 = vmatpush2.msra.mxu0 0.0
  %4543 = vmatprep.subr.mxu0 0.0
  %4544 = vmatpush2.msra.mxu0 0.0
  %4545 = vmatprep.subr.mxu0 0.0
  %4546 = vmatpush2.msra.mxu0 0.0
  %4547 = vmatprep.subr.mxu0 0.0
  %4548 = vmatpush2.msra.mxu0 0.0
  %4549 = vmatprep.subr.mxu0 0.0
  %4550 = vmatpush2.msra.mxu0 0.0
  %4551 = vmatprep.subr.mxu0 0.0
  %4552 = vmatpush2.msra.mxu0 0.0
  %4553 = vmatprep.subr.mxu0 0.0
  %4554 = vmatpush2.msra.mxu0 0.0
  %4555 = vmatprep.subr.mxu0 0.0
  %4556 = vmatpush2.msra.mxu0 0.0
  %4557 = vmatprep.subr.mxu0 0.0
  %4558 = vmatpush2.msra.mxu0 0.0
  %4559 = vmatprep.mubr.f32.mxu0 0.0
  %4560 = vmatmul.mubr.f32.gmra.mxu0 %v4493
  %v4561 = vpop.f32.mrf.mxu0
  %v4562 = vadd.f32 0.0, %v4561
  %v4563 = vpop.f32.mrf.mxu0
  %4564 = vdwg.mxu0
  %4566 = vrot.lane.b32.xlu0 %v4492, 32
  %v4567 = vpop.permute.xlu0 %4566
  %v4568 = vsel %vm286, %v4567, 0
  %4570 = vmatprep.subr.mxu0 0.0
  %4571 = vmatpush1.msra.mxu0 0.0
  %4572 = vmatprep.subr.mxu0 0.0
  %4573 = vmatpush1.msra.mxu0 0.0
  %4574 = vmatprep.subr.mxu0 0.0
  %4575 = vmatpush1.msra.mxu0 0.0
  %4576 = vmatprep.subr.mxu0 0.0
  %4577 = vmatpush1.msra.mxu0 0.0
  %4578 = vmatprep.subr.mxu0 0.0
  %4579 = vmatpush1.msra.mxu0 0.0
  %4580 = vmatprep.subr.mxu0 0.0
  %4581 = vmatpush1.msra.mxu0 0.0
  %4582 = vmatprep.subr.mxu0 0.0
  %4583 = vmatpush1.msra.mxu0 0.0
  %4584 = vmatprep.subr.mxu0 0.0
  %4585 = vmatpush1.msra.mxu0 0.0
  %4586 = vmatprep.subr.mxu0 0.0
  %4587 = vmatpush1.msra.mxu0 0.0
  %4588 = vmatprep.subr.mxu0 0.0
  %4589 = vmatpush1.msra.mxu0 0.0
  %4590 = vmatprep.subr.mxu0 0.0
  %4591 = vmatpush1.msra.mxu0 0.0
  %4592 = vmatprep.subr.mxu0 0.0
  %4593 = vmatpush1.msra.mxu0 0.0
  %4594 = vmatprep.subr.mxu0 0.0
  %4595 = vmatpush1.msra.mxu0 %v271
  %4596 = vmatprep.subr.mxu0 0.0
  %4597 = vmatpush1.msra.mxu0 %v270
  %4598 = vmatprep.subr.mxu0 0.0
  %4599 = vmatpush1.msra.mxu0 %v269
  %4600 = vmatprep.subr.mxu0 0.0
  %4601 = vmatpush1.msra.mxu0 %v268
  %4602 = vmatprep.subr.mxu0 0.0
  %4603 = vmatpush2.msra.mxu0 0.0
  %4604 = vmatprep.subr.mxu0 0.0
  %4605 = vmatpush2.msra.mxu0 0.0
  %4606 = vmatprep.subr.mxu0 0.0
  %4607 = vmatpush2.msra.mxu0 0.0
  %4608 = vmatprep.subr.mxu0 0.0
  %4609 = vmatpush2.msra.mxu0 0.0
  %4610 = vmatprep.subr.mxu0 0.0
  %4611 = vmatpush2.msra.mxu0 0.0
  %4612 = vmatprep.subr.mxu0 0.0
  %4613 = vmatpush2.msra.mxu0 0.0
  %4614 = vmatprep.subr.mxu0 0.0
  %4615 = vmatpush2.msra.mxu0 0.0
  %4616 = vmatprep.subr.mxu0 0.0
  %4617 = vmatpush2.msra.mxu0 0.0
  %4618 = vmatprep.subr.mxu0 0.0
  %4619 = vmatpush2.msra.mxu0 0.0
  %4620 = vmatprep.subr.mxu0 0.0
  %4621 = vmatpush2.msra.mxu0 0.0
  %4622 = vmatprep.subr.mxu0 0.0
  %4623 = vmatpush2.msra.mxu0 0.0
  %4624 = vmatprep.subr.mxu0 0.0
  %4625 = vmatpush2.msra.mxu0 0.0
  %4626 = vmatprep.subr.mxu0 0.0
  %4627 = vmatpush2.msra.mxu0 0.0
  %4628 = vmatprep.subr.mxu0 0.0
  %4629 = vmatpush2.msra.mxu0 0.0
  %4630 = vmatprep.subr.mxu0 0.0
  %4631 = vmatpush2.msra.mxu0 0.0
  %4632 = vmatprep.subr.mxu0 0.0
  %4633 = vmatpush2.msra.mxu0 0.0
  %4634 = vmatprep.mubr.f32.mxu0 0.0
  %4635 = vmatmul.mubr.f32.gmra.mxu0 %v4568
  %v4636 = vpop.f32.mrf.mxu0
  %v4637 = vadd.f32 %v4562, %v4636
  %v4638 = vpop.f32.mrf.mxu0
  %4639 = vdwg.mxu0
  %v4640 = vadd.f32 %v4637, %v540
  %v4641 = vxor.u32 %v4640, 2147483648
  %v4642 = vmul.f32 %v4641, 1.442695
  %v4643 = vpow.pop %v4642
  %v4644 = vadd.f32 %v4643, 1.0
  %v4645 = vrcp.pop %v4644
  %v4646 = vmul.f32 1.0, %v4645
  %v4647 = vtanh.pop %v4640
  %v4648 = vmul.f32 %v4646, %v4385
  %4650 = vrot.lane.b32.xlu0 %v4647, 64
  %v4651 = vpop.permute.xlu0 %4650
  %v4653 = vmul.f32 %v4646, %v4651
  %4655 = vrot.lane.b32.xlu0 %v4653, 32
  %v4656 = vpop.permute.xlu0 %4655
  %v4658 = vadd.f32 %v4648, %v4656
  %v4659 = vtanh.pop %v4658
  %4661 = vrot.lane.b32.xlu0 %v4659, 64
  %v4662 = vpop.permute.xlu0 %4661
  %v4664 = vmul.f32 %v4646, %v4662
  %4666 = vrot.lane.b32.xlu0 %v4664, 32
  %v4667 = vpop.permute.xlu0 %4666
  %4669 = vst.msk [vmem:[#allocation3 + $0x78] sm:$0xff] %vm286, %v4667
  %4671 = vst.msk [vmem:[#allocation4] sm:$0xff] %vm286, %v4567
  %4673 = vrot.lane.b32.xlu0 %v4486, 96
  %v4674 = vpop.permute.xlu0 %4673
  %4676 = vst.msk [vmem:[#allocation5] sm:$0xff] %vm286, %v4674
  %4677 = vst.msk [vmem:[#allocation6] sm:$0xff] %vm286, %v4667
  %4679 = vrot.lane.b32.xlu0 %v4658, 96
  %v4680 = vpop.permute.xlu0 %4679
  %4682 = vst.msk [vmem:[#allocation7] sm:$0xff] %vm286, %v4680
  %v4683 = vld [vmem:[#allocation3] sm:$0xff]
  %v4684 = vld [vmem:[#allocation3 + $0x8] sm:$0xff]
  %v4685 = vld [vmem:[#allocation3 + $0x10] sm:$0xff]
  %v4686 = vld [vmem:[#allocation3 + $0x18] sm:$0xff]
  %v4687 = vld [vmem:[#allocation3 + $0x20] sm:$0xff]
  %v4688 = vld [vmem:[#allocation3 + $0x28] sm:$0xff]
  %v4689 = vld [vmem:[#allocation3 + $0x30] sm:$0xff]
  %v4690 = vld [vmem:[#allocation3 + $0x38] sm:$0xff]
  %v4691 = vld [vmem:[#allocation3 + $0x40] sm:$0xff]
  %v4692 = vld [vmem:[#allocation3 + $0x48] sm:$0xff]
  %v4693 = vld [vmem:[#allocation3 + $0x50] sm:$0xff]
  %v4694 = vld [vmem:[#allocation3 + $0x58] sm:$0xff]
  %v4695 = vld [vmem:[#allocation3 + $0x60] sm:$0xff]
  %v4696 = vld [vmem:[#allocation3 + $0x68] sm:$0xff]
  %v4697 = vld [vmem:[#allocation3 + $0x70] sm:$0xff]
  %v4698 = vld [vmem:[#allocation3 + $0x78] sm:$0xff]
  %v4699 = vld [vmem:[%s3] sm:$0xff]
  %v4700 = vld [vmem:[%s3 + $0x8] sm:$0xff]
  %v4701 = vld [vmem:[%s3 + $0x10] sm:$0xff]
  %v4702 = vld [vmem:[%s3 + $0x18] sm:$0xff]
  %v4703 = vld [vmem:[%s4] sm:$0x1]
  %v4705 = vlaneseq
  %v4706 = vshrl.u32 %v4705, 7
  %v4707 = vsub.s32 0, %v4706
  %v4708 = vrot.slane %v4703, %v4707
  %v4711 = vsel %vm286, %v4683, 0
  %v4714 = vsel %vm286, %v4684, 0
  %v4717 = vsel %vm286, %v4685, 0
  %v4720 = vsel %vm286, %v4686, 0
  %v4723 = vsel %vm286, %v4687, 0
  %v4726 = vsel %vm286, %v4688, 0
  %v4729 = vsel %vm286, %v4689, 0
  %v4732 = vsel %vm286, %v4690, 0
  %v4735 = vsel %vm286, %v4691, 0
  %v4738 = vsel %vm286, %v4692, 0
  %v4741 = vsel %vm286, %v4693, 0
  %v4744 = vsel %vm286, %v4694, 0
  %v4747 = vsel %vm286, %v4695, 0
  %v4750 = vsel %vm286, %v4696, 0
  %v4753 = vsel %vm286, %v4697, 0
  %v4756 = vsel %vm286, %v4698, 0
  %4758 = vmatprep.subr.mxu0 0.0
  %4759 = vmatpush1.msra.mxu0 0.0
  %4760 = vmatprep.subr.mxu0 0.0
  %4761 = vmatpush1.msra.mxu0 0.0
  %4762 = vmatprep.subr.mxu0 0.0
  %4763 = vmatpush1.msra.mxu0 0.0
  %4764 = vmatprep.subr.mxu0 0.0
  %4765 = vmatpush1.msra.mxu0 0.0
  %4766 = vmatprep.subr.mxu0 0.0
  %4767 = vmatpush1.msra.mxu0 0.0
  %4768 = vmatprep.subr.mxu0 0.0
  %4769 = vmatpush1.msra.mxu0 0.0
  %4770 = vmatprep.subr.mxu0 0.0
  %4771 = vmatpush1.msra.mxu0 0.0
  %4772 = vmatprep.subr.mxu0 0.0
  %4773 = vmatpush1.msra.mxu0 0.0
  %4774 = vmatprep.subr.mxu0 0.0
  %4775 = vmatpush1.msra.mxu0 0.0
  %4776 = vmatprep.subr.mxu0 0.0
  %4777 = vmatpush1.msra.mxu0 0.0
  %4778 = vmatprep.subr.mxu0 0.0
  %4779 = vmatpush1.msra.mxu0 0.0
  %4780 = vmatprep.subr.mxu0 0.0
  %4781 = vmatpush1.msra.mxu0 0.0
  %4782 = vmatprep.subr.mxu0 0.0
  %4783 = vmatpush1.msra.mxu0 %v4702
  %4784 = vmatprep.subr.mxu0 0.0
  %4785 = vmatpush1.msra.mxu0 %v4701
  %4786 = vmatprep.subr.mxu0 0.0
  %4787 = vmatpush1.msra.mxu0 %v4700
  %4788 = vmatprep.subr.mxu0 0.0
  %4789 = vmatpush1.msra.mxu0 %v4699
  %4790 = vmatprep.subr.mxu0 0.0
  %4791 = vmatpush2.msra.mxu0 0.0
  %4792 = vmatprep.subr.mxu0 0.0
  %4793 = vmatpush2.msra.mxu0 0.0
  %4794 = vmatprep.subr.mxu0 0.0
  %4795 = vmatpush2.msra.mxu0 0.0
  %4796 = vmatprep.subr.mxu0 0.0
  %4797 = vmatpush2.msra.mxu0 0.0
  %4798 = vmatprep.subr.mxu0 0.0
  %4799 = vmatpush2.msra.mxu0 0.0
  %4800 = vmatprep.subr.mxu0 0.0
  %4801 = vmatpush2.msra.mxu0 0.0
  %4802 = vmatprep.subr.mxu0 0.0
  %4803 = vmatpush2.msra.mxu0 0.0
  %4804 = vmatprep.subr.mxu0 0.0
  %4805 = vmatpush2.msra.mxu0 0.0
  %4806 = vmatprep.subr.mxu0 0.0
  %4807 = vmatpush2.msra.mxu0 0.0
  %4808 = vmatprep.subr.mxu0 0.0
  %4809 = vmatpush2.msra.mxu0 0.0
  %4810 = vmatprep.subr.mxu0 0.0
  %4811 = vmatpush2.msra.mxu0 0.0
  %4812 = vmatprep.subr.mxu0 0.0
  %4813 = vmatpush2.msra.mxu0 0.0
  %4814 = vmatprep.subr.mxu0 0.0
  %4815 = vmatpush2.msra.mxu0 0.0
  %4816 = vmatprep.subr.mxu0 0.0
  %4817 = vmatpush2.msra.mxu0 0.0
  %4818 = vmatprep.subr.mxu0 0.0
  %4819 = vmatpush2.msra.mxu0 0.0
  %4820 = vmatprep.subr.mxu0 0.0
  %4821 = vmatpush2.msra.mxu0 0.0
  %4822 = vmatprep.mubr.f32.mxu0 0.0
  %4823 = vmatmul.mubr.f32.gmra.mxu0 %v4711
  %v4824 = vpop.f32.mrf.mxu0
  %v4825 = vadd.f32 %v4708, %v4824
  %v4826 = vpop.f32.mrf.mxu0
  %4827 = vmatprep.mubr.f32.mxu0 0.0
  %4828 = vmatmul.mubr.f32.gmra.mxu0 %v4714
  %v4829 = vpop.f32.mrf.mxu0
  %v4830 = vadd.f32 %v4708, %v4829
  %v4831 = vpop.f32.mrf.mxu0
  %4832 = vmatprep.mubr.f32.mxu0 0.0
  %4833 = vmatmul.mubr.f32.gmra.mxu0 %v4717
  %v4834 = vpop.f32.mrf.mxu0
  %v4835 = vadd.f32 %v4708, %v4834
  %v4836 = vpop.f32.mrf.mxu0
  %4837 = vmatprep.mubr.f32.mxu0 0.0
  %4838 = vmatmul.mubr.f32.gmra.mxu0 %v4720
  %v4839 = vpop.f32.mrf.mxu0
  %v4840 = vadd.f32 %v4708, %v4839
  %v4841 = vpop.f32.mrf.mxu0
  %4842 = vmatprep.mubr.f32.mxu0 0.0
  %4843 = vmatmul.mubr.f32.gmra.mxu0 %v4723
  %v4844 = vpop.f32.mrf.mxu0
  %v4845 = vadd.f32 %v4708, %v4844
  %v4846 = vpop.f32.mrf.mxu0
  %4847 = vmatprep.mubr.f32.mxu0 0.0
  %4848 = vmatmul.mubr.f32.gmra.mxu0 %v4726
  %v4849 = vpop.f32.mrf.mxu0
  %v4850 = vadd.f32 %v4708, %v4849
  %v4851 = vpop.f32.mrf.mxu0
  %4852 = vmatprep.mubr.f32.mxu0 0.0
  %4853 = vmatmul.mubr.f32.gmra.mxu0 %v4729
  %v4854 = vpop.f32.mrf.mxu0
  %v4855 = vadd.f32 %v4708, %v4854
  %v4856 = vpop.f32.mrf.mxu0
  %4857 = vmatprep.mubr.f32.mxu0 0.0
  %4858 = vmatmul.mubr.f32.gmra.mxu0 %v4732
  %v4859 = vpop.f32.mrf.mxu0
  %v4860 = vadd.f32 %v4708, %v4859
  %v4861 = vpop.f32.mrf.mxu0
  %4862 = vmatprep.mubr.f32.mxu0 0.0
  %4863 = vmatmul.mubr.f32.gmra.mxu0 %v4735
  %v4864 = vpop.f32.mrf.mxu0
  %v4865 = vadd.f32 %v4708, %v4864
  %v4866 = vpop.f32.mrf.mxu0
  %4867 = vmatprep.mubr.f32.mxu0 0.0
  %4868 = vmatmul.mubr.f32.gmra.mxu0 %v4738
  %v4869 = vpop.f32.mrf.mxu0
  %v4870 = vadd.f32 %v4708, %v4869
  %v4871 = vpop.f32.mrf.mxu0
  %4872 = vmatprep.mubr.f32.mxu0 0.0
  %4873 = vmatmul.mubr.f32.gmra.mxu0 %v4741
  %v4874 = vpop.f32.mrf.mxu0
  %v4875 = vadd.f32 %v4708, %v4874
  %v4876 = vpop.f32.mrf.mxu0
  %4877 = vmatprep.mubr.f32.mxu0 0.0
  %4878 = vmatmul.mubr.f32.gmra.mxu0 %v4744
  %v4879 = vpop.f32.mrf.mxu0
  %v4880 = vadd.f32 %v4708, %v4879
  %v4881 = vpop.f32.mrf.mxu0
  %4882 = vmatprep.mubr.f32.mxu0 0.0
  %4883 = vmatmul.mubr.f32.gmra.mxu0 %v4747
  %v4884 = vpop.f32.mrf.mxu0
  %v4885 = vadd.f32 %v4708, %v4884
  %v4886 = vpop.f32.mrf.mxu0
  %4887 = vmatprep.mubr.f32.mxu0 0.0
  %4888 = vmatmul.mubr.f32.gmra.mxu0 %v4750
  %v4889 = vpop.f32.mrf.mxu0
  %v4890 = vadd.f32 %v4708, %v4889
  %v4891 = vpop.f32.mrf.mxu0
  %4892 = vmatprep.mubr.f32.mxu0 0.0
  %4893 = vmatmul.mubr.f32.gmra.mxu0 %v4753
  %v4894 = vpop.f32.mrf.mxu0
  %v4895 = vadd.f32 %v4708, %v4894
  %v4896 = vpop.f32.mrf.mxu0
  %4897 = vmatprep.mubr.f32.mxu0 0.0
  %4898 = vmatmul.mubr.f32.gmra.mxu0 %v4756
  %v4899 = vpop.f32.mrf.mxu0
  %v4900 = vadd.f32 %v4708, %v4899
  %v4901 = vpop.f32.mrf.mxu0
  %4902 = vdwg.mxu0
  %4903 = vmax.xlane.f32.xlu0 %v4825
  %v4904 = vpop.xlane.xlu0 %4903
  %4905 = vmax.xlane.f32.xlu0 %v4830
  %v4906 = vpop.xlane.xlu0 %4905
  %4907 = vmax.xlane.f32.xlu0 %v4835
  %v4908 = vpop.xlane.xlu0 %4907
  %4909 = vmax.xlane.f32.xlu0 %v4840
  %v4910 = vpop.xlane.xlu0 %4909
  %4911 = vmax.xlane.f32.xlu0 %v4845
  %v4912 = vpop.xlane.xlu0 %4911
  %4913 = vmax.xlane.f32.xlu0 %v4850
  %v4914 = vpop.xlane.xlu0 %4913
  %4915 = vmax.xlane.f32.xlu0 %v4855
  %v4916 = vpop.xlane.xlu0 %4915
  %4917 = vmax.xlane.f32.xlu0 %v4860
  %v4918 = vpop.xlane.xlu0 %4917
  %4919 = vmax.xlane.f32.xlu0 %v4865
  %v4920 = vpop.xlane.xlu0 %4919
  %4921 = vmax.xlane.f32.xlu0 %v4870
  %v4922 = vpop.xlane.xlu0 %4921
  %4923 = vmax.xlane.f32.xlu0 %v4875
  %v4924 = vpop.xlane.xlu0 %4923
  %4925 = vmax.xlane.f32.xlu0 %v4880
  %v4926 = vpop.xlane.xlu0 %4925
  %4927 = vmax.xlane.f32.xlu0 %v4885
  %v4928 = vpop.xlane.xlu0 %4927
  %4929 = vmax.xlane.f32.xlu0 %v4890
  %v4930 = vpop.xlane.xlu0 %4929
  %4931 = vmax.xlane.f32.xlu0 %v4895
  %v4932 = vpop.xlane.xlu0 %4931
  %4933 = vmax.xlane.f32.xlu0 %v4900
  %v4934 = vpop.xlane.xlu0 %4933
  %v4935 = vsub.f32 %v4825, %v4904
  %v4936 = vsub.f32 %v4830, %v4906
  %v4937 = vsub.f32 %v4835, %v4908
  %v4938 = vsub.f32 %v4840, %v4910
  %v4939 = vsub.f32 %v4845, %v4912
  %v4940 = vsub.f32 %v4850, %v4914
  %v4941 = vsub.f32 %v4855, %v4916
  %v4942 = vsub.f32 %v4860, %v4918
  %v4943 = vsub.f32 %v4865, %v4920
  %v4944 = vsub.f32 %v4870, %v4922
  %v4945 = vsub.f32 %v4875, %v4924
  %v4946 = vsub.f32 %v4880, %v4926
  %v4947 = vsub.f32 %v4885, %v4928
  %v4948 = vsub.f32 %v4890, %v4930
  %v4949 = vsub.f32 %v4895, %v4932
  %v4950 = vsub.f32 %v4900, %v4934
  %v4951 = vmul.f32 %v4935, 1.442695
  %v4952 = vpow.pop %v4951
  %v4953 = vmul.f32 %v4936, 1.442695
  %v4954 = vpow.pop %v4953
  %v4955 = vmul.f32 %v4937, 1.442695
  %v4956 = vpow.pop %v4955
  %v4957 = vmul.f32 %v4938, 1.442695
  %v4958 = vpow.pop %v4957
  %v4959 = vmul.f32 %v4939, 1.442695
  %v4960 = vpow.pop %v4959
  %v4961 = vmul.f32 %v4940, 1.442695
  %v4962 = vpow.pop %v4961
  %v4963 = vmul.f32 %v4941, 1.442695
  %v4964 = vpow.pop %v4963
  %v4965 = vmul.f32 %v4942, 1.442695
  %v4966 = vpow.pop %v4965
  %v4967 = vmul.f32 %v4943, 1.442695
  %v4968 = vpow.pop %v4967
  %v4969 = vmul.f32 %v4944, 1.442695
  %v4970 = vpow.pop %v4969
  %v4971 = vmul.f32 %v4945, 1.442695
  %v4972 = vpow.pop %v4971
  %v4973 = vmul.f32 %v4946, 1.442695
  %v4974 = vpow.pop %v4973
  %v4975 = vmul.f32 %v4947, 1.442695
  %v4976 = vpow.pop %v4975
  %v4977 = vmul.f32 %v4948, 1.442695
  %v4978 = vpow.pop %v4977
  %v4979 = vmul.f32 %v4949, 1.442695
  %v4980 = vpow.pop %v4979
  %v4981 = vmul.f32 %v4950, 1.442695
  %v4982 = vpow.pop %v4981
  %4983 = vadd.xlane.f32.xlu0 %v4952
  %v4984 = vpop.xlane.xlu0 %4983
  %4985 = vadd.xlane.f32.xlu0 %v4954
  %v4986 = vpop.xlane.xlu0 %4985
  %4987 = vadd.xlane.f32.xlu0 %v4956
  %v4988 = vpop.xlane.xlu0 %4987
  %4989 = vadd.xlane.f32.xlu0 %v4958
  %v4990 = vpop.xlane.xlu0 %4989
  %4991 = vadd.xlane.f32.xlu0 %v4960
  %v4992 = vpop.xlane.xlu0 %4991
  %4993 = vadd.xlane.f32.xlu0 %v4962
  %v4994 = vpop.xlane.xlu0 %4993
  %4995 = vadd.xlane.f32.xlu0 %v4964
  %v4996 = vpop.xlane.xlu0 %4995
  %4997 = vadd.xlane.f32.xlu0 %v4966
  %v4998 = vpop.xlane.xlu0 %4997
  %4999 = vadd.xlane.f32.xlu0 %v4968
  %v5000 = vpop.xlane.xlu0 %4999
  %5001 = vadd.xlane.f32.xlu0 %v4970
  %v5002 = vpop.xlane.xlu0 %5001
  %5003 = vadd.xlane.f32.xlu0 %v4972
  %v5004 = vpop.xlane.xlu0 %5003
  %5005 = vadd.xlane.f32.xlu0 %v4974
  %v5006 = vpop.xlane.xlu0 %5005
  %5007 = vadd.xlane.f32.xlu0 %v4976
  %v5008 = vpop.xlane.xlu0 %5007
  %5009 = vadd.xlane.f32.xlu0 %v4978
  %v5010 = vpop.xlane.xlu0 %5009
  %5011 = vadd.xlane.f32.xlu0 %v4980
  %v5012 = vpop.xlane.xlu0 %5011
  %5013 = vadd.xlane.f32.xlu0 %v4982
  %v5014 = vpop.xlane.xlu0 %5013
  %v5015 = vlog2.pop %v4984
  %v5016 = vmul.f32 %v5015, 0.6931472
  %v5017 = vlog2.pop %v4986
  %v5018 = vmul.f32 %v5017, 0.6931472
  %v5019 = vlog2.pop %v4988
  %v5020 = vmul.f32 %v5019, 0.6931472
  %v5021 = vlog2.pop %v4990
  %v5022 = vmul.f32 %v5021, 0.6931472
  %v5023 = vlog2.pop %v4992
  %v5024 = vmul.f32 %v5023, 0.6931472
  %v5025 = vlog2.pop %v4994
  %v5026 = vmul.f32 %v5025, 0.6931472
  %v5027 = vlog2.pop %v4996
  %v5028 = vmul.f32 %v5027, 0.6931472
  %v5029 = vlog2.pop %v4998
  %v5030 = vmul.f32 %v5029, 0.6931472
  %v5031 = vlog2.pop %v5000
  %v5032 = vmul.f32 %v5031, 0.6931472
  %v5033 = vlog2.pop %v5002
  %v5034 = vmul.f32 %v5033, 0.6931472
  %v5035 = vlog2.pop %v5004
  %v5036 = vmul.f32 %v5035, 0.6931472
  %v5037 = vlog2.pop %v5006
  %v5038 = vmul.f32 %v5037, 0.6931472
  %v5039 = vlog2.pop %v5008
  %v5040 = vmul.f32 %v5039, 0.6931472
  %v5041 = vlog2.pop %v5010
  %v5042 = vmul.f32 %v5041, 0.6931472
  %v5043 = vlog2.pop %v5012
  %v5044 = vmul.f32 %v5043, 0.6931472
  %v5045 = vlog2.pop %v5014
  %v5046 = vmul.f32 %v5045, 0.6931472
  %v5047 = vsub.f32 %v4935, %v5016
  %v5048 = vsub.f32 %v4936, %v5018
  %v5049 = vsub.f32 %v4937, %v5020
  %v5050 = vsub.f32 %v4938, %v5022
  %v5051 = vsub.f32 %v4939, %v5024
  %v5052 = vsub.f32 %v4940, %v5026
  %v5053 = vsub.f32 %v4941, %v5028
  %v5054 = vsub.f32 %v4942, %v5030
  %v5055 = vsub.f32 %v4943, %v5032
  %v5056 = vsub.f32 %v4944, %v5034
  %v5057 = vsub.f32 %v4945, %v5036
  %v5058 = vsub.f32 %v4946, %v5038
  %v5059 = vsub.f32 %v4947, %v5040
  %v5060 = vsub.f32 %v4948, %v5042
  %v5061 = vsub.f32 %v4949, %v5044
  %v5062 = vsub.f32 %v4950, %v5046
  %5063 = vst [vmem:[%s5] sm:$0xff] %v5047
  %5064 = vst [vmem:[%s5 + $0x8] sm:$0xff] %v5048
  %5065 = vst [vmem:[%s5 + $0x10] sm:$0xff] %v5049
  %5066 = vst [vmem:[%s5 + $0x18] sm:$0xff] %v5050
  %5067 = vst [vmem:[%s5 + $0x20] sm:$0xff] %v5051
  %5068 = vst [vmem:[%s5 + $0x28] sm:$0xff] %v5052
  %5069 = vst [vmem:[%s5 + $0x30] sm:$0xff] %v5053
  %5070 = vst [vmem:[%s5 + $0x38] sm:$0xff] %v5054
  %5071 = vst [vmem:[%s5 + $0x40] sm:$0xff] %v5055
  %5072 = vst [vmem:[%s5 + $0x48] sm:$0xff] %v5056
  %5073 = vst [vmem:[%s5 + $0x50] sm:$0xff] %v5057
  %5074 = vst [vmem:[%s5 + $0x58] sm:$0xff] %v5058
  %5075 = vst [vmem:[%s5 + $0x60] sm:$0xff] %v5059
  %5076 = vst [vmem:[%s5 + $0x68] sm:$0xff] %v5060
  %5077 = vst [vmem:[%s5 + $0x70] sm:$0xff] %v5061
  %5078 = vst [vmem:[%s5 + $0x78] sm:$0xff] %v5062
  // Predicated region
  $region26: #{lstm_asr_forward.1} parent=0 // pred_check
    _
  $region27: #{lstm_asr_forward.1} parent=0 // pred_check_branch
    %5080 = sbr.rel (0) target = $region29
  $region28: #{lstm_asr_forward.1} parent=0 // pred_region
    _
  $region29: #{lstm_asr_forward.1} parent=0 // pred_fallthru
    _
  // Predicated region
  $region30: #{lstm_asr_forward.1} parent=0 // pred_check
    _
  $region31: #{lstm_asr_forward.1} parent=0 // pred_check_branch
    %5082 = sbr.rel (0) target = $region33
  $region32: #{lstm_asr_forward.1} parent=0 // pred_region
    _
  $region33: #{lstm_asr_forward.1} parent=0 // pred_fallthru
    _

</llo_original>
